<compile_context>
chip_gen: v5e
topology: v5e:2x2
jax: 0.10.0
libtpu: 0.0.40
codegen_flags: <defaults>
</compile_context>

<pallas_src>
import functools

import numpy as np
import jax
import jax.numpy as jnp
from jax import lax
from jax.experimental import pallas as pl
from jax.experimental.pallas import tpu as pltpu

D = 10        # ts window length
STRIDE = 10   # ts window stride
D_POOL = 3    # pooling kernel (with w == 3 windows -> a single pooled value)
S_POOL = 3    # pooling stride
N_SERIES = 9  # n (module default)
EPS_BN = 1e-5


def _round_up(v, m):
    return (v + m - 1) // m * m


def _pair_layout(n):
    """Pack the per-shift pair blocks (shift s=1..n-1, n-s rows each) into
    8-row slots so every block *starts* at a vreg-aligned sublane offset.

    Returns (offs, region_rows, pad_runs) where offs[s] is the row offset of
    shift s within the region and pad_runs are (offset, length) holes that the
    kernel must zero (they are read by the head / pooled epilogue)."""
    sizes = {s: n - s for s in range(1, n)}
    order = sorted(sizes, key=lambda s: -sizes[s])
    offs, used, pos = {}, set(), 0
    for s in order:
        if s in used:
            continue
        blk = [s]
        used.add(s)
        total = sizes[s]
        room = (-total) % 8
        for t in order:
            if t in used or sizes[t] > room:
                continue
            blk.append(t)
            used.add(t)
            total += sizes[t]
            room -= sizes[t]
        p = pos
        for t in blk:
            offs[t] = p
            p += sizes[t]
        pos += _round_up(total, 8)
    covered = np.zeros(pos, dtype=bool)
    for s, o in offs.items():
        covered[o:o + sizes[s]] = True
    pad_runs, i0 = [], None
    for i in range(pos + 1):
        c = covered[i] if i < pos else True
        if (not c) and i0 is None:
            i0 = i
        elif c and i0 is not None:
            pad_runs.append((i0, i - i0))
            i0 = None
    return offs, pos, pad_runs


# --------------------------------------------------------------------------
# Kernel 1: windowed feature extraction, batch on the lane axis
# --------------------------------------------------------------------------
def _feature_kernel(x_ref, out_ref, *, n, d, stride, w, group, tb,
                    shift_offs, cov0, corr0, vec0, pad_runs):
    """x_ref: (T, n, TB) f32 ; out_ref: ((w+3)*group, TB) f32.

    Per-window group layout (group rows, 8-aligned sub-blocks):
      [cov0 , cov0 +R): per-shift cov blocks      (R = pair region, packed)
      [corr0, corr0+R): per-shift corr blocks
      [vec0 + 0n..5n): std(ddof=1), zscore, return, decay-linear, window-mean
      remaining rows: zero padding.
    Groups w..w+2 hold avg / max / min over the w windows of the raw rows
    (BatchNorm1 is a positive-scale affine so it commutes with the pooling and
    is folded downstream together with BatchNorm2 into the Linear weights).
    """
    inv_d = 1.0 / d
    inv_dm1 = 1.0 / (d - 1)
    wsum = d * (d + 1) / 2.0

    # zero constants for the padding holes (hoisted, reused across windows)
    zpads = {k: jnp.zeros((k, tb), jnp.float32)
             for k in {r[1] for r in pad_runs} | ({group - (vec0 + 5 * n)}
                                                  if group > vec0 + 5 * n else set())}

    for i in range(w):                                   # w == 3, static unroll
        s0 = i * stride
        base = i * group

        # window mean: plain VPU adds over the leading (time) axis
        acc = x_ref[s0]
        for t in range(1, d):
            acc = acc + x_ref[s0 + t]
        mean = acc * inv_d                               # (n, TB)

        # one pass over the window: centered sum-of-squares, per-shift Gram
        # products (no per-pair sublane broadcasts), decay-linear.
        sq = None
        dec = None
        gram = [None] * n                                # gram[s], s = 1..n-1
        for t in range(d):
            c = x_ref[s0 + t]                            # (n, TB)
            xc = c - mean
            sq = xc * xc if sq is None else sq + xc * xc
            wd = (t + 1) / wsum
            dec = wd * c if dec is None else dec + wd * c
            for s in range(1, n):                        # 8 shifts, VPU + 1 realign
                p = xc[:n - s, :] * xc[s:, :]            # (n-s, TB)
                gram[s] = p if gram[s] is None else gram[s] + p

        # EUP rsqrt instead of sqrt + divide chains
        inv_std_pop = lax.rsqrt(sq * inv_d)              # population (pearson/cov)
        var_unb = sq * inv_dm1
        inv_std_unb = lax.rsqrt(var_unb)
        std_unb = jnp.sqrt(var_unb)                      # torch.std (ddof=1)
        zscore = mean * inv_std_unb
        first = x_ref[s0]
        last = x_ref[s0 + d - 1]
        ret = (last - first) / first - 1.0               # matches reference (incl. -1)

        # per-shift cov / corr blocks at packed, vreg-aligned slot offsets
        for s in range(1, n):
            k = n - s
            o = shift_offs[s]
            cov_s = gram[s] * inv_d                      # (k, TB)
            corr_s = cov_s * (inv_std_pop[:k, :] * inv_std_pop[s:, :])
            out_ref[base + cov0 + o:base + cov0 + o + k, :] = cov_s
            out_ref[base + corr0 + o:base + corr0 + o + k, :] = corr_s
        for (o, k) in pad_runs:                          # zero the packing holes
            out_ref[base + cov0 + o:base + cov0 + o + k, :] = zpads[k]
            out_ref[base + corr0 + o:base + corr0 + o + k, :] = zpads[k]

        v0 = base + vec0
        out_ref[v0:v0 + n, :] = std_unb
        out_ref[v0 + n:v0 + 2 * n, :] = zscore
        out_ref[v0 + 2 * n:v0 + 3 * n, :] = ret
        out_ref[v0 + 3 * n:v0 + 4 * n, :] = dec
        out_ref[v0 + 4 * n:v0 + 5 * n, :] = mean         # == AvgPool1d(d, stride)
        if group > vec0 + 5 * n:
            k = group - (vec0 + 5 * n)
            out_ref[v0 + 5 * n:base + group, :] = zpads[k]

    # pooled groups: avg / max / min over the w windows of the RAW rows,
    # processed in 8-row strips to keep the live vreg set bounded.
    STRIP = 8
    for r in range(group // STRIP):
        o = r * STRIP
        g0 = out_ref[o:o + STRIP, :]
        favg, fmax, fmin = g0, g0, g0
        for i in range(1, w):
            gi = out_ref[i * group + o:i * group + o + STRIP, :]
            favg = favg + gi
            fmax = jnp.maximum(fmax, gi)
            fmin = jnp.minimum(fmin, gi)
        out_ref[w * group + o:w * group + o + STRIP, :] = favg * (1.0 / w)
        out_ref[(w + 1) * group + o:(w + 1) * group + o + STRIP, :] = fmax
        out_ref[(w + 2) * group + o:(w + 2) * group + o + STRIP, :] = fmin


def extract_features(x_t, *, n, T, w, group, tb, shift_offs, cov0, corr0, vec0,
                     pad_runs):
    """x_t: (T, n, Bp) with Bp a multiple of tb -> ((w+3)*group, Bp) slab."""
    Bp = x_t.shape[-1]
    rows = (w + 3) * group
    kern = functools.partial(_feature_kernel, n=n, d=D, stride=STRIDE, w=w,
                             group=group, tb=tb, shift_offs=shift_offs,
                             cov0=cov0, corr0=corr0, vec0=vec0,
                             pad_runs=pad_runs)
    return pl.pallas_call(
        kern,
        out_shape=jax.ShapeDtypeStruct((rows, Bp), jnp.float32),
        grid=(Bp // tb,),
        in_specs=[pl.BlockSpec((T, n, tb), lambda b: (0, 0, b))],
        out_specs=pl.BlockSpec((rows, tb), lambda b: (0, b)),
        compiler_params=pltpu.CompilerParams(
            dimension_semantics=("parallel",)),
    )(x_t)


# --------------------------------------------------------------------------
# Kernel 2: fused head (BN/pool/concat already folded into the weights)
#   h = relu(W1_eff @ slab + b1_eff);  out = W2 @ h + b2     (batch on lanes)
# The head is slab-HBM bound (AI ~ 15 flop/byte), so tile size — not MXU row
# utilization — is what matters; weights use constant index_maps.
# --------------------------------------------------------------------------
def _head_kernel(s_ref, w1_ref, b1_ref, w2_ref, b2_ref, o_ref):
    h = jnp.dot(w1_ref[...], s_ref[...],
                preferred_element_type=jnp.float32) + b1_ref[...]   # (H, TB)
    h = jnp.maximum(h, 0.0)
    # TODO(synk): nn.Dropout(p=0.5) is stochastic in training mode; applied as
    # identity (eval-mode behaviour) to keep the kernel deterministic.
    o_ref[...] = jnp.dot(w2_ref[...], h,
                         preferred_element_type=jnp.float32) + b2_ref[...]


def head(slab, w1_eff_t, b1_eff, w2_t, b2, *, tb):
    rows, Bp = slab.shape
    hidden = w1_eff_t.shape[0]
    return pl.pallas_call(
        _head_kernel,
        out_shape=jax.ShapeDtypeStruct((1, Bp), jnp.float32),
        grid=(Bp // tb,),
        in_specs=[
            pl.BlockSpec((rows, tb), lambda b: (0, b)),
            pl.BlockSpec((hidden, rows), lambda b: (0, 0)),
            pl.BlockSpec((hidden, 1), lambda b: (0, 0)),
            pl.BlockSpec((1, hidden), lambda b: (0, 0)),
            pl.BlockSpec((1, 1), lambda b: (0, 0)),
        ],
        out_specs=pl.BlockSpec((1, tb), lambda b: (0, b)),
        compiler_params=pltpu.CompilerParams(
            dimension_semantics=("parallel",)),
    )(slab, w1_eff_t, b1_eff, w2_t, b2)


# --------------------------------------------------------------------------
# Plain-JAX glue: BN statistics (single fused masked pass) + weight folding
# --------------------------------------------------------------------------
def _rowmap(n, w, group, shift_offs, cov0, corr0, vec0):
    """Torch feature-vector index (0..701) -> raw-slab row (concat order)."""
    h = n * (n - 1) // 2
    pair_off = []
    for j in range(n - 1):
        for k2 in range(j + 1, n):
            pair_off.append(shift_offs[k2 - j] + j)

    def goff(e, c):
        if e == 0:
            return corr0 + pair_off[c]
        if e == 1:
            return cov0 + pair_off[c]
        return vec0 + (e - 2) * n + c        # std, zscore, return, decay, avgpool

    counts = [h, h, n, n, n, n, n]
    rows = []
    for e in range(7):                        # features_fe: flatten of (C, w)
        for c in range(counts[e]):
            for t in range(w):
                rows.append(t * group + goff(e, c))
    for e in range(7):                        # features_p: avg, max, min (wp == 1)
        for p in range(3):
            for c in range(counts[e]):
                rows.append((w + p) * group + goff(e, c))
    return np.asarray(rows, dtype=np.int32)


def alphanet_forward(x, params, *, block_b_feat=None, block_b_head=None,
                     batch_last=False):
    if batch_last:
        # caller already provides (T, n, B) — skips the XLA-side transpose pass
        T, n, B = x.shape
        x_t = x
    else:
        B, n, T = x.shape
        x_t = jnp.transpose(x, (2, 1, 0))             # (T, n, B)

    w = (T - D) // STRIDE + 1
    if w != 3:
        raise ValueError("AlphaNet v1 hard-codes n_in for w == 3 windows (use T == 30).")
    h = n * (n - 1) // 2
    hidden = params["w1"].shape[1]

    # per-window slab layout (packed, 8-aligned)
    shift_offs, pair_region, pad_runs = _pair_layout(n)
    cov0 = 0
    corr0 = pair_region
    vec0 = 2 * pair_region
    group = _round_up(vec0 + 5 * n, 8)                # 128 rows for n == 9
    rows = (w + 3) * group                            # 768 slab rows

    # ---- batch tiles (lane axis), decoupled per kernel --------------------
    # kernel 1: small tile so Gram/sq/dec accumulators fit the 64-vreg file
    tb_feat = block_b_feat if block_b_feat is not None else (128 if B <= 256 else 256)
    Bp = _round_up(B, tb_feat)
    # kernel 2: HBM-bound -> large tile, but keep >= 2 grid steps (v7x megacore)
    if block_b_head is not None:
        tb_head = block_b_head
        Bp = _round_up(Bp, tb_head)
    elif Bp >= 2 * tb_feat:
        tb_head = min(1024, Bp // 2)
        tb_head = max(tb_feat, (tb_head // tb_feat) * tb_feat)
        while Bp % tb_head:
            tb_head -= tb_feat
    else:
        tb_head = tb_feat

    # batch-last (lane-dense) layout; edge-pad keeps padded lanes finite — they
    # are masked out of the BN statistics and sliced off at the end.
    if Bp != B:
        x_t = jnp.pad(x_t, ((0, 0), (0, 0), (0, Bp - B)), mode="edge")

    slab = extract_features(x_t, n=n, T=T, w=w, group=group, tb=tb_feat,
                            shift_offs=shift_offs, cov0=cov0, corr0=corr0,
                            vec0=vec0, pad_runs=pad_runs)          # (rows, Bp)

    valid = jnp.arange(Bp) < B

    # ---- BatchNorm1 statistics (training mode: biased batch stats over
    # (batch, w); single fused masked pass, var = E[x^2] - E[x]^2). Padding
    # rows hold zeros -> finite stats -> they fold against zero W1 rows.
    win = slab[:w * group].reshape(w, group, Bp)
    xm = jnp.where(valid[None, None, :], win, 0.0)
    cnt1 = float(w * B)
    mu1 = jnp.sum(xm, axis=(0, 2)) / cnt1                          # (group,)
    var1 = jnp.maximum(jnp.sum(xm * xm, axis=(0, 2)) / cnt1 - mu1 * mu1, 0.0)
    s1 = lax.rsqrt(var1 + EPS_BN)

    # ---- BatchNorm2 on pooled values, composed with BN1 into per-row affines
    def _bn2_affine(raw):                                          # raw: (group, Bp)
        pm = jnp.where(valid[None, :], raw, 0.0)
        ex = jnp.sum(pm, axis=1) / B
        exx = jnp.sum(pm * pm, axis=1) / B
        mu2 = (ex - mu1) * s1                                      # stats of BN1-normalized
        var2 = jnp.maximum(exx - ex * ex, 0.0) * (s1 * s1)
        s2 = lax.rsqrt(var2 + EPS_BN)
        return s1 * s2, -(mu1 * s1 + mu2) * s2                     # normalized = a*raw + b

    a_avg, b_avg = _bn2_affine(slab[w * group:(w + 1) * group])
    a_max, b_max = _bn2_affine(slab[(w + 1) * group:(w + 2) * group])
    a_min, b_min = _bn2_affine(slab[(w + 2) * group:(w + 3) * group])

    A = jnp.concatenate([s1] * w + [a_avg, a_max, a_min])          # (rows,)
    Bv = jnp.concatenate([-mu1 * s1] * w + [b_avg, b_max, b_min])  # (rows,)

    # ---- fold BN affines + flatten/concat permutation into Linear(702, 30)
    rowmap = _rowmap(n, w, group, shift_offs, cov0, corr0, vec0)
    W1p = jnp.zeros((rows, hidden), jnp.float32).at[rowmap].set(params["w1"])
    w1_eff_t = (W1p * A[:, None]).T                                # (hidden, rows)
    b1_eff = (Bv @ W1p + params["b1"].reshape(-1)).reshape(hidden, 1)
    w2_t = params["w2"].reshape(hidden, 1).T                       # (1, hidden)
    b2 = params["b2"].reshape(1, 1)

    out = head(slab, w1_eff_t, b1_eff, w2_t, b2, tb=tb_head)       # (1, Bp)
    return out[0, :B].reshape(B, 1)


def init_params(key, n_in, hidden=30):
    # deterministic synthetic init: trunc_normal_ weights (as in the module),
    # torch-Linear-style uniform biases
    k1, k2, k3, k4 = jax.random.split(key, 4)
    w1 = jax.random.truncated_normal(k1, -2.0, 2.0, (n_in, hidden), jnp.float32)
    b1 = jax.random.uniform(k2, (1, hidden), jnp.float32, -1.0, 1.0) / jnp.sqrt(n_in)
    w2 = jax.random.truncated_normal(k3, -2.0, 2.0, (hidden, 1), jnp.float32)
    b2 = jax.random.uniform(k4, (1, 1), jnp.float32, -1.0, 1.0) / jnp.sqrt(float(hidden))
    return {"w1": w1, "b1": b1, "w2": w2, "b2": b2}


if __name__ == "__main__":
    key = jax.random.PRNGKey(0)
    kx, kp = jax.random.split(key)

    B, n, T = 2, N_SERIES, 30             # T=30 -> w=3 windows -> n_in = 702
    x = jax.random.normal(kx, (B, n, T), dtype=jnp.float32)

    h = n * (n - 1) // 2
    n_in = 2 * (h * 2 * 3 + n * 5 * 3)    # 702, as hard-coded in the module
    params = init_params(kp, n_in)

    fwd = jax.jit(alphanet_forward)
    out = jax.block_until_ready(fwd(x, params))
    assert out.shape == (B, 1) and out.dtype == jnp.float32
    assert bool(jnp.all(jnp.isfinite(out)))
    print("KERNEL_OK")
</pallas_src>

<mosaic_0001>
module attributes {stable_mosaic.version = 11 : i64} {
  func.func @_feature_kernel(%arg0: i32, %arg1: memref<30x9x128xf32, #tpu.memory_space<vmem>>, %arg2: memref<768x128xf32, #tpu.memory_space<vmem>>) attributes {dimension_semantics = [#tpu.dimension_semantics<parallel>], iteration_bounds = array<i64: 1>, scalar_prefetch = 0 : i64, scratch_operands = 0 : i64, tpu.core_type = #tpu.core_type<tc>, window_params = [{transform_indices = @transform_0, window_bounds = array<i64: 30, 9, 128>}, {transform_indices = @transform_1, window_bounds = array<i64: 768, 128>}]} {
    %cst = arith.constant 0.000000e+00 : f32
    %0 = vector.broadcast %cst : f32 to vector<3x128xf32>
    %cst_0 = arith.constant 0.000000e+00 : f32
    %1 = vector.broadcast %cst_0 : f32 to vector<4x128xf32>
    %c0 = arith.constant 0 : index
    %c0_1 = arith.constant 0 : index
    %c0_2 = arith.constant 0 : index
    %2 = vector.load %arg1[%c0, %c0_1, %c0_2] : memref<30x9x128xf32, #tpu.memory_space<vmem>>, vector<1x9x128xf32>
    %3 = vector.shape_cast %2 : vector<1x9x128xf32> to vector<9x128xf32>
    %c1 = arith.constant 1 : index
    %c0_3 = arith.constant 0 : index
    %c0_4 = arith.constant 0 : index
    %4 = vector.load %arg1[%c1, %c0_3, %c0_4] : memref<30x9x128xf32, #tpu.memory_space<vmem>>, vector<1x9x128xf32>
    %5 = vector.shape_cast %4 : vector<1x9x128xf32> to vector<9x128xf32>
    %6 = arith.addf %3, %5 : vector<9x128xf32>
    %c2 = arith.constant 2 : index
    %c0_5 = arith.constant 0 : index
    %c0_6 = arith.constant 0 : index
    %7 = vector.load %arg1[%c2, %c0_5, %c0_6] : memref<30x9x128xf32, #tpu.memory_space<vmem>>, vector<1x9x128xf32>
    %8 = vector.shape_cast %7 : vector<1x9x128xf32> to vector<9x128xf32>
    %9 = arith.addf %6, %8 : vector<9x128xf32>
    %c3 = arith.constant 3 : index
    %c0_7 = arith.constant 0 : index
    %c0_8 = arith.constant 0 : index
    %10 = vector.load %arg1[%c3, %c0_7, %c0_8] : memref<30x9x128xf32, #tpu.memory_space<vmem>>, vector<1x9x128xf32>
    %11 = vector.shape_cast %10 : vector<1x9x128xf32> to vector<9x128xf32>
    %12 = arith.addf %9, %11 : vector<9x128xf32>
    %c4 = arith.constant 4 : index
    %c0_9 = arith.constant 0 : index
    %c0_10 = arith.constant 0 : index
    %13 = vector.load %arg1[%c4, %c0_9, %c0_10] : memref<30x9x128xf32, #tpu.memory_space<vmem>>, vector<1x9x128xf32>
    %14 = vector.shape_cast %13 : vector<1x9x128xf32> to vector<9x128xf32>
    %15 = arith.addf %12, %14 : vector<9x128xf32>
    %c5 = arith.constant 5 : index
    %c0_11 = arith.constant 0 : index
    %c0_12 = arith.constant 0 : index
    %16 = vector.load %arg1[%c5, %c0_11, %c0_12] : memref<30x9x128xf32, #tpu.memory_space<vmem>>, vector<1x9x128xf32>
    %17 = vector.shape_cast %16 : vector<1x9x128xf32> to vector<9x128xf32>
    %18 = arith.addf %15, %17 : vector<9x128xf32>
    %c6 = arith.constant 6 : index
    %c0_13 = arith.constant 0 : index
    %c0_14 = arith.constant 0 : index
    %19 = vector.load %arg1[%c6, %c0_13, %c0_14] : memref<30x9x128xf32, #tpu.memory_space<vmem>>, vector<1x9x128xf32>
    %20 = vector.shape_cast %19 : vector<1x9x128xf32> to vector<9x128xf32>
    %21 = arith.addf %18, %20 : vector<9x128xf32>
    %c7 = arith.constant 7 : index
    %c0_15 = arith.constant 0 : index
    %c0_16 = arith.constant 0 : index
    %22 = vector.load %arg1[%c7, %c0_15, %c0_16] : memref<30x9x128xf32, #tpu.memory_space<vmem>>, vector<1x9x128xf32>
    %23 = vector.shape_cast %22 : vector<1x9x128xf32> to vector<9x128xf32>
    %24 = arith.addf %21, %23 : vector<9x128xf32>
    %c8 = arith.constant 8 : index
    %c0_17 = arith.constant 0 : index
    %c0_18 = arith.constant 0 : index
    %25 = vector.load %arg1[%c8, %c0_17, %c0_18] : memref<30x9x128xf32, #tpu.memory_space<vmem>>, vector<1x9x128xf32>
    %26 = vector.shape_cast %25 : vector<1x9x128xf32> to vector<9x128xf32>
    %27 = arith.addf %24, %26 : vector<9x128xf32>
    %c9 = arith.constant 9 : index
    %c0_19 = arith.constant 0 : index
    %c0_20 = arith.constant 0 : index
    %28 = vector.load %arg1[%c9, %c0_19, %c0_20] : memref<30x9x128xf32, #tpu.memory_space<vmem>>, vector<1x9x128xf32>
    %29 = vector.shape_cast %28 : vector<1x9x128xf32> to vector<9x128xf32>
    %30 = arith.addf %27, %29 : vector<9x128xf32>
    %cst_21 = arith.constant 1.000000e-01 : f32
    %31 = vector.broadcast %cst_21 : f32 to vector<9x128xf32>
    %32 = arith.mulf %30, %31 : vector<9x128xf32>
    %c0_22 = arith.constant 0 : index
    %c0_23 = arith.constant 0 : index
    %c0_24 = arith.constant 0 : index
    %33 = vector.load %arg1[%c0_22, %c0_23, %c0_24] : memref<30x9x128xf32, #tpu.memory_space<vmem>>, vector<1x9x128xf32>
    %34 = vector.shape_cast %33 : vector<1x9x128xf32> to vector<9x128xf32>
    %35 = arith.subf %34, %32 : vector<9x128xf32>
    %36 = arith.mulf %35, %35 : vector<9x128xf32>
    %cst_25 = arith.constant 0.0181818176 : f32
    %37 = vector.broadcast %cst_25 : f32 to vector<9x128xf32>
    %38 = arith.mulf %37, %34 : vector<9x128xf32>
    %39 = vector.extract_strided_slice %35 {offsets = [0, 0], sizes = [8, 128], strides = [1, 1]} : vector<9x128xf32> to vector<8x128xf32>
    %40 = vector.extract_strided_slice %35 {offsets = [1, 0], sizes = [8, 128], strides = [1, 1]} : vector<9x128xf32> to vector<8x128xf32>
    %41 = arith.mulf %39, %40 : vector<8x128xf32>
    %42 = vector.extract_strided_slice %35 {offsets = [0, 0], sizes = [7, 128], strides = [1, 1]} : vector<9x128xf32> to vector<7x128xf32>
    %43 = vector.extract_strided_slice %35 {offsets = [2, 0], sizes = [7, 128], strides = [1, 1]} : vector<9x128xf32> to vector<7x128xf32>
    %44 = arith.mulf %42, %43 : vector<7x128xf32>
    %45 = vector.extract_strided_slice %35 {offsets = [0, 0], sizes = [6, 128], strides = [1, 1]} : vector<9x128xf32> to vector<6x128xf32>
    %46 = vector.extract_strided_slice %35 {offsets = [3, 0], sizes = [6, 128], strides = [1, 1]} : vector<9x128xf32> to vector<6x128xf32>
    %47 = arith.mulf %45, %46 : vector<6x128xf32>
    %48 = vector.extract_strided_slice %35 {offsets = [0, 0], sizes = [5, 128], strides = [1, 1]} : vector<9x128xf32> to vector<5x128xf32>
    %49 = vector.extract_strided_slice %35 {offsets = [4, 0], sizes = [5, 128], strides = [1, 1]} : vector<9x128xf32> to vector<5x128xf32>
    %50 = arith.mulf %48, %49 : vector<5x128xf32>
    %51 = vector.extract_strided_slice %35 {offsets = [0, 0], sizes = [4, 128], strides = [1, 1]} : vector<9x128xf32> to vector<4x128xf32>
    %52 = vector.extract_strided_slice %35 {offsets = [5, 0], sizes = [4, 128], strides = [1, 1]} : vector<9x128xf32> to vector<4x128xf32>
    %53 = arith.mulf %51, %52 : vector<4x128xf32>
    %54 = vector.extract_strided_slice %35 {offsets = [0, 0], sizes = [3, 128], strides = [1, 1]} : vector<9x128xf32> to vector<3x128xf32>
    %55 = vector.extract_strided_slice %35 {offsets = [6, 0], sizes = [3, 128], strides = [1, 1]} : vector<9x128xf32> to vector<3x128xf32>
    %56 = arith.mulf %54, %55 : vector<3x128xf32>
    %57 = vector.extract_strided_slice %35 {offsets = [0, 0], sizes = [2, 128], strides = [1, 1]} : vector<9x128xf32> to vector<2x128xf32>
    %58 = vector.extract_strided_slice %35 {offsets = [7, 0], sizes = [2, 128], strides = [1, 1]} : vector<9x128xf32> to vector<2x128xf32>
    %59 = arith.mulf %57, %58 : vector<2x128xf32>
    %60 = vector.extract_strided_slice %35 {offsets = [0, 0], sizes = [1, 128], strides = [1, 1]} : vector<9x128xf32> to vector<1x128xf32>
    %61 = vector.extract_strided_slice %35 {offsets = [8, 0], sizes = [1, 128], strides = [1, 1]} : vector<9x128xf32> to vector<1x128xf32>
    %62 = arith.mulf %60, %61 : vector<1x128xf32>
    %c1_26 = arith.constant 1 : index
    %c0_27 = arith.constant 0 : index
    %c0_28 = arith.constant 0 : index
    %63 = vector.load %arg1[%c1_26, %c0_27, %c0_28] : memref<30x9x128xf32, #tpu.memory_space<vmem>>, vector<1x9x128xf32>
    %64 = vector.shape_cast %63 : vector<1x9x128xf32> to vector<9x128xf32>
    %65 = arith.subf %64, %32 : vector<9x128xf32>
    %66 = arith.mulf %65, %65 : vector<9x128xf32>
    %67 = arith.addf %36, %66 : vector<9x128xf32>
    %cst_29 = arith.constant 0.0363636352 : f32
    %68 = vector.broadcast %cst_29 : f32 to vector<9x128xf32>
    %69 = arith.mulf %68, %64 : vector<9x128xf32>
    %70 = arith.addf %38, %69 : vector<9x128xf32>
    %71 = vector.extract_strided_slice %65 {offsets = [0, 0], sizes = [8, 128], strides = [1, 1]} : vector<9x128xf32> to vector<8x128xf32>
    %72 = vector.extract_strided_slice %65 {offsets = [1, 0], sizes = [8, 128], strides = [1, 1]} : vector<9x128xf32> to vector<8x128xf32>
    %73 = arith.mulf %71, %72 : vector<8x128xf32>
    %74 = arith.addf %41, %73 : vector<8x128xf32>
    %75 = vector.extract_strided_slice %65 {offsets = [0, 0], sizes = [7, 128], strides = [1, 1]} : vector<9x128xf32> to vector<7x128xf32>
    %76 = vector.extract_strided_slice %65 {offsets = [2, 0], sizes = [7, 128], strides = [1, 1]} : vector<9x128xf32> to vector<7x128xf32>
    %77 = arith.mulf %75, %76 : vector<7x128xf32>
    %78 = arith.addf %44, %77 : vector<7x128xf32>
    %79 = vector.extract_strided_slice %65 {offsets = [0, 0], sizes = [6, 128], strides = [1, 1]} : vector<9x128xf32> to vector<6x128xf32>
    %80 = vector.extract_strided_slice %65 {offsets = [3, 0], sizes = [6, 128], strides = [1, 1]} : vector<9x128xf32> to vector<6x128xf32>
    %81 = arith.mulf %79, %80 : vector<6x128xf32>
    %82 = arith.addf %47, %81 : vector<6x128xf32>
    %83 = vector.extract_strided_slice %65 {offsets = [0, 0], sizes = [5, 128], strides = [1, 1]} : vector<9x128xf32> to vector<5x128xf32>
    %84 = vector.extract_strided_slice %65 {offsets = [4, 0], sizes = [5, 128], strides = [1, 1]} : vector<9x128xf32> to vector<5x128xf32>
    %85 = arith.mulf %83, %84 : vector<5x128xf32>
    %86 = arith.addf %50, %85 : vector<5x128xf32>
    %87 = vector.extract_strided_slice %65 {offsets = [0, 0], sizes = [4, 128], strides = [1, 1]} : vector<9x128xf32> to vector<4x128xf32>
    %88 = vector.extract_strided_slice %65 {offsets = [5, 0], sizes = [4, 128], strides = [1, 1]} : vector<9x128xf32> to vector<4x128xf32>
    %89 = arith.mulf %87, %88 : vector<4x128xf32>
    %90 = arith.addf %53, %89 : vector<4x128xf32>
    %91 = vector.extract_strided_slice %65 {offsets = [0, 0], sizes = [3, 128], strides = [1, 1]} : vector<9x128xf32> to vector<3x128xf32>
    %92 = vector.extract_strided_slice %65 {offsets = [6, 0], sizes = [3, 128], strides = [1, 1]} : vector<9x128xf32> to vector<3x128xf32>
    %93 = arith.mulf %91, %92 : vector<3x128xf32>
    %94 = arith.addf %56, %93 : vector<3x128xf32>
    %95 = vector.extract_strided_slice %65 {offsets = [0, 0], sizes = [2, 128], strides = [1, 1]} : vector<9x128xf32> to vector<2x128xf32>
    %96 = vector.extract_strided_slice %65 {offsets = [7, 0], sizes = [2, 128], strides = [1, 1]} : vector<9x128xf32> to vector<2x128xf32>
    %97 = arith.mulf %95, %96 : vector<2x128xf32>
    %98 = arith.addf %59, %97 : vector<2x128xf32>
    %99 = vector.extract_strided_slice %65 {offsets = [0, 0], sizes = [1, 128], strides = [1, 1]} : vector<9x128xf32> to vector<1x128xf32>
    %100 = vector.extract_strided_slice %65 {offsets = [8, 0], sizes = [1, 128], strides = [1, 1]} : vector<9x128xf32> to vector<1x128xf32>
    %101 = arith.mulf %99, %100 : vector<1x128xf32>
    %102 = arith.addf %62, %101 : vector<1x128xf32>
    %c2_30 = arith.constant 2 : index
    %c0_31 = arith.constant 0 : index
    %c0_32 = arith.constant 0 : index
    %103 = vector.load %arg1[%c2_30, %c0_31, %c0_32] : memref<30x9x128xf32, #tpu.memory_space<vmem>>, vector<1x9x128xf32>
    %104 = vector.shape_cast %103 : vector<1x9x128xf32> to vector<9x128xf32>
    %105 = arith.subf %104, %32 : vector<9x128xf32>
    %106 = arith.mulf %105, %105 : vector<9x128xf32>
    %107 = arith.addf %67, %106 : vector<9x128xf32>
    %cst_33 = arith.constant 0.0545454547 : f32
    %108 = vector.broadcast %cst_33 : f32 to vector<9x128xf32>
    %109 = arith.mulf %108, %104 : vector<9x128xf32>
    %110 = arith.addf %70, %109 : vector<9x128xf32>
    %111 = vector.extract_strided_slice %105 {offsets = [0, 0], sizes = [8, 128], strides = [1, 1]} : vector<9x128xf32> to vector<8x128xf32>
    %112 = vector.extract_strided_slice %105 {offsets = [1, 0], sizes = [8, 128], strides = [1, 1]} : vector<9x128xf32> to vector<8x128xf32>
    %113 = arith.mulf %111, %112 : vector<8x128xf32>
    %114 = arith.addf %74, %113 : vector<8x128xf32>
    %115 = vector.extract_strided_slice %105 {offsets = [0, 0], sizes = [7, 128], strides = [1, 1]} : vector<9x128xf32> to vector<7x128xf32>
    %116 = vector.extract_strided_slice %105 {offsets = [2, 0], sizes = [7, 128], strides = [1, 1]} : vector<9x128xf32> to vector<7x128xf32>
    %117 = arith.mulf %115, %116 : vector<7x128xf32>
    %118 = arith.addf %78, %117 : vector<7x128xf32>
    %119 = vector.extract_strided_slice %105 {offsets = [0, 0], sizes = [6, 128], strides = [1, 1]} : vector<9x128xf32> to vector<6x128xf32>
    %120 = vector.extract_strided_slice %105 {offsets = [3, 0], sizes = [6, 128], strides = [1, 1]} : vector<9x128xf32> to vector<6x128xf32>
    %121 = arith.mulf %119, %120 : vector<6x128xf32>
    %122 = arith.addf %82, %121 : vector<6x128xf32>
    %123 = vector.extract_strided_slice %105 {offsets = [0, 0], sizes = [5, 128], strides = [1, 1]} : vector<9x128xf32> to vector<5x128xf32>
    %124 = vector.extract_strided_slice %105 {offsets = [4, 0], sizes = [5, 128], strides = [1, 1]} : vector<9x128xf32> to vector<5x128xf32>
    %125 = arith.mulf %123, %124 : vector<5x128xf32>
    %126 = arith.addf %86, %125 : vector<5x128xf32>
    %127 = vector.extract_strided_slice %105 {offsets = [0, 0], sizes = [4, 128], strides = [1, 1]} : vector<9x128xf32> to vector<4x128xf32>
    %128 = vector.extract_strided_slice %105 {offsets = [5, 0], sizes = [4, 128], strides = [1, 1]} : vector<9x128xf32> to vector<4x128xf32>
    %129 = arith.mulf %127, %128 : vector<4x128xf32>
    %130 = arith.addf %90, %129 : vector<4x128xf32>
    %131 = vector.extract_strided_slice %105 {offsets = [0, 0], sizes = [3, 128], strides = [1, 1]} : vector<9x128xf32> to vector<3x128xf32>
    %132 = vector.extract_strided_slice %105 {offsets = [6, 0], sizes = [3, 128], strides = [1, 1]} : vector<9x128xf32> to vector<3x128xf32>
    %133 = arith.mulf %131, %132 : vector<3x128xf32>
    %134 = arith.addf %94, %133 : vector<3x128xf32>
    %135 = vector.extract_strided_slice %105 {offsets = [0, 0], sizes = [2, 128], strides = [1, 1]} : vector<9x128xf32> to vector<2x128xf32>
    %136 = vector.extract_strided_slice %105 {offsets = [7, 0], sizes = [2, 128], strides = [1, 1]} : vector<9x128xf32> to vector<2x128xf32>
    %137 = arith.mulf %135, %136 : vector<2x128xf32>
    %138 = arith.addf %98, %137 : vector<2x128xf32>
    %139 = vector.extract_strided_slice %105 {offsets = [0, 0], sizes = [1, 128], strides = [1, 1]} : vector<9x128xf32> to vector<1x128xf32>
    %140 = vector.extract_strided_slice %105 {offsets = [8, 0], sizes = [1, 128], strides = [1, 1]} : vector<9x128xf32> to vector<1x128xf32>
    %141 = arith.mulf %139, %140 : vector<1x128xf32>
    %142 = arith.addf %102, %141 : vector<1x128xf32>
    %c3_34 = arith.constant 3 : index
    %c0_35 = arith.constant 0 : index
    %c0_36 = arith.constant 0 : index
    %143 = vector.load %arg1[%c3_34, %c0_35, %c0_36] : memref<30x9x128xf32, #tpu.memory_space<vmem>>, vector<1x9x128xf32>
    %144 = vector.shape_cast %143 : vector<1x9x128xf32> to vector<9x128xf32>
    %145 = arith.subf %144, %32 : vector<9x128xf32>
    %146 = arith.mulf %145, %145 : vector<9x128xf32>
    %147 = arith.addf %107, %146 : vector<9x128xf32>
    %cst_37 = arith.constant 0.0727272704 : f32
    %148 = vector.broadcast %cst_37 : f32 to vector<9x128xf32>
    %149 = arith.mulf %148, %144 : vector<9x128xf32>
    %150 = arith.addf %110, %149 : vector<9x128xf32>
    %151 = vector.extract_strided_slice %145 {offsets = [0, 0], sizes = [8, 128], strides = [1, 1]} : vector<9x128xf32> to vector<8x128xf32>
    %152 = vector.extract_strided_slice %145 {offsets = [1, 0], sizes = [8, 128], strides = [1, 1]} : vector<9x128xf32> to vector<8x128xf32>
    %153 = arith.mulf %151, %152 : vector<8x128xf32>
    %154 = arith.addf %114, %153 : vector<8x128xf32>
    %155 = vector.extract_strided_slice %145 {offsets = [0, 0], sizes = [7, 128], strides = [1, 1]} : vector<9x128xf32> to vector<7x128xf32>
    %156 = vector.extract_strided_slice %145 {offsets = [2, 0], sizes = [7, 128], strides = [1, 1]} : vector<9x128xf32> to vector<7x128xf32>
    %157 = arith.mulf %155, %156 : vector<7x128xf32>
    %158 = arith.addf %118, %157 : vector<7x128xf32>
    %159 = vector.extract_strided_slice %145 {offsets = [0, 0], sizes = [6, 128], strides = [1, 1]} : vector<9x128xf32> to vector<6x128xf32>
    %160 = vector.extract_strided_slice %145 {offsets = [3, 0], sizes = [6, 128], strides = [1, 1]} : vector<9x128xf32> to vector<6x128xf32>
    %161 = arith.mulf %159, %160 : vector<6x128xf32>
    %162 = arith.addf %122, %161 : vector<6x128xf32>
    %163 = vector.extract_strided_slice %145 {offsets = [0, 0], sizes = [5, 128], strides = [1, 1]} : vector<9x128xf32> to vector<5x128xf32>
    %164 = vector.extract_strided_slice %145 {offsets = [4, 0], sizes = [5, 128], strides = [1, 1]} : vector<9x128xf32> to vector<5x128xf32>
    %165 = arith.mulf %163, %164 : vector<5x128xf32>
    %166 = arith.addf %126, %165 : vector<5x128xf32>
    %167 = vector.extract_strided_slice %145 {offsets = [0, 0], sizes = [4, 128], strides = [1, 1]} : vector<9x128xf32> to vector<4x128xf32>
    %168 = vector.extract_strided_slice %145 {offsets = [5, 0], sizes = [4, 128], strides = [1, 1]} : vector<9x128xf32> to vector<4x128xf32>
    %169 = arith.mulf %167, %168 : vector<4x128xf32>
    %170 = arith.addf %130, %169 : vector<4x128xf32>
    %171 = vector.extract_strided_slice %145 {offsets = [0, 0], sizes = [3, 128], strides = [1, 1]} : vector<9x128xf32> to vector<3x128xf32>
    %172 = vector.extract_strided_slice %145 {offsets = [6, 0], sizes = [3, 128], strides = [1, 1]} : vector<9x128xf32> to vector<3x128xf32>
    %173 = arith.mulf %171, %172 : vector<3x128xf32>
    %174 = arith.addf %134, %173 : vector<3x128xf32>
    %175 = vector.extract_strided_slice %145 {offsets = [0, 0], sizes = [2, 128], strides = [1, 1]} : vector<9x128xf32> to vector<2x128xf32>
    %176 = vector.extract_strided_slice %145 {offsets = [7, 0], sizes = [2, 128], strides = [1, 1]} : vector<9x128xf32> to vector<2x128xf32>
    %177 = arith.mulf %175, %176 : vector<2x128xf32>
    %178 = arith.addf %138, %177 : vector<2x128xf32>
    %179 = vector.extract_strided_slice %145 {offsets = [0, 0], sizes = [1, 128], strides = [1, 1]} : vector<9x128xf32> to vector<1x128xf32>
    %180 = vector.extract_strided_slice %145 {offsets = [8, 0], sizes = [1, 128], strides = [1, 1]} : vector<9x128xf32> to vector<1x128xf32>
    %181 = arith.mulf %179, %180 : vector<1x128xf32>
    %182 = arith.addf %142, %181 : vector<1x128xf32>
    %c4_38 = arith.constant 4 : index
    %c0_39 = arith.constant 0 : index
    %c0_40 = arith.constant 0 : index
    %183 = vector.load %arg1[%c4_38, %c0_39, %c0_40] : memref<30x9x128xf32, #tpu.memory_space<vmem>>, vector<1x9x128xf32>
    %184 = vector.shape_cast %183 : vector<1x9x128xf32> to vector<9x128xf32>
    %185 = arith.subf %184, %32 : vector<9x128xf32>
    %186 = arith.mulf %185, %185 : vector<9x128xf32>
    %187 = arith.addf %147, %186 : vector<9x128xf32>
    %cst_41 = arith.constant 0.0909090936 : f32
    %188 = vector.broadcast %cst_41 : f32 to vector<9x128xf32>
    %189 = arith.mulf %188, %184 : vector<9x128xf32>
    %190 = arith.addf %150, %189 : vector<9x128xf32>
    %191 = vector.extract_strided_slice %185 {offsets = [0, 0], sizes = [8, 128], strides = [1, 1]} : vector<9x128xf32> to vector<8x128xf32>
    %192 = vector.extract_strided_slice %185 {offsets = [1, 0], sizes = [8, 128], strides = [1, 1]} : vector<9x128xf32> to vector<8x128xf32>
    %193 = arith.mulf %191, %192 : vector<8x128xf32>
    %194 = arith.addf %154, %193 : vector<8x128xf32>
    %195 = vector.extract_strided_slice %185 {offsets = [0, 0], sizes = [7, 128], strides = [1, 1]} : vector<9x128xf32> to vector<7x128xf32>
    %196 = vector.extract_strided_slice %185 {offsets = [2, 0], sizes = [7, 128], strides = [1, 1]} : vector<9x128xf32> to vector<7x128xf32>
    %197 = arith.mulf %195, %196 : vector<7x128xf32>
    %198 = arith.addf %158, %197 : vector<7x128xf32>
    %199 = vector.extract_strided_slice %185 {offsets = [0, 0], sizes = [6, 128], strides = [1, 1]} : vector<9x128xf32> to vector<6x128xf32>
    %200 = vector.extract_strided_slice %185 {offsets = [3, 0], sizes = [6, 128], strides = [1, 1]} : vector<9x128xf32> to vector<6x128xf32>
    %201 = arith.mulf %199, %200 : vector<6x128xf32>
    %202 = arith.addf %162, %201 : vector<6x128xf32>
    %203 = vector.extract_strided_slice %185 {offsets = [0, 0], sizes = [5, 128], strides = [1, 1]} : vector<9x128xf32> to vector<5x128xf32>
    %204 = vector.extract_strided_slice %185 {offsets = [4, 0], sizes = [5, 128], strides = [1, 1]} : vector<9x128xf32> to vector<5x128xf32>
    %205 = arith.mulf %203, %204 : vector<5x128xf32>
    %206 = arith.addf %166, %205 : vector<5x128xf32>
    %207 = vector.extract_strided_slice %185 {offsets = [0, 0], sizes = [4, 128], strides = [1, 1]} : vector<9x128xf32> to vector<4x128xf32>
    %208 = vector.extract_strided_slice %185 {offsets = [5, 0], sizes = [4, 128], strides = [1, 1]} : vector<9x128xf32> to vector<4x128xf32>
    %209 = arith.mulf %207, %208 : vector<4x128xf32>
    %210 = arith.addf %170, %209 : vector<4x128xf32>
    %211 = vector.extract_strided_slice %185 {offsets = [0, 0], sizes = [3, 128], strides = [1, 1]} : vector<9x128xf32> to vector<3x128xf32>
    %212 = vector.extract_strided_slice %185 {offsets = [6, 0], sizes = [3, 128], strides = [1, 1]} : vector<9x128xf32> to vector<3x128xf32>
    %213 = arith.mulf %211, %212 : vector<3x128xf32>
    %214 = arith.addf %174, %213 : vector<3x128xf32>
    %215 = vector.extract_strided_slice %185 {offsets = [0, 0], sizes = [2, 128], strides = [1, 1]} : vector<9x128xf32> to vector<2x128xf32>
    %216 = vector.extract_strided_slice %185 {offsets = [7, 0], sizes = [2, 128], strides = [1, 1]} : vector<9x128xf32> to vector<2x128xf32>
    %217 = arith.mulf %215, %216 : vector<2x128xf32>
    %218 = arith.addf %178, %217 : vector<2x128xf32>
    %219 = vector.extract_strided_slice %185 {offsets = [0, 0], sizes = [1, 128], strides = [1, 1]} : vector<9x128xf32> to vector<1x128xf32>
    %220 = vector.extract_strided_slice %185 {offsets = [8, 0], sizes = [1, 128], strides = [1, 1]} : vector<9x128xf32> to vector<1x128xf32>
    %221 = arith.mulf %219, %220 : vector<1x128xf32>
    %222 = arith.addf %182, %221 : vector<1x128xf32>
    %c5_42 = arith.constant 5 : index
    %c0_43 = arith.constant 0 : index
    %c0_44 = arith.constant 0 : index
    %223 = vector.load %arg1[%c5_42, %c0_43, %c0_44] : memref<30x9x128xf32, #tpu.memory_space<vmem>>, vector<1x9x128xf32>
    %224 = vector.shape_cast %223 : vector<1x9x128xf32> to vector<9x128xf32>
    %225 = arith.subf %224, %32 : vector<9x128xf32>
    %226 = arith.mulf %225, %225 : vector<9x128xf32>
    %227 = arith.addf %187, %226 : vector<9x128xf32>
    %cst_45 = arith.constant 0.109090909 : f32
    %228 = vector.broadcast %cst_45 : f32 to vector<9x128xf32>
    %229 = arith.mulf %228, %224 : vector<9x128xf32>
    %230 = arith.addf %190, %229 : vector<9x128xf32>
    %231 = vector.extract_strided_slice %225 {offsets = [0, 0], sizes = [8, 128], strides = [1, 1]} : vector<9x128xf32> to vector<8x128xf32>
    %232 = vector.extract_strided_slice %225 {offsets = [1, 0], sizes = [8, 128], strides = [1, 1]} : vector<9x128xf32> to vector<8x128xf32>
    %233 = arith.mulf %231, %232 : vector<8x128xf32>
    %234 = arith.addf %194, %233 : vector<8x128xf32>
    %235 = vector.extract_strided_slice %225 {offsets = [0, 0], sizes = [7, 128], strides = [1, 1]} : vector<9x128xf32> to vector<7x128xf32>
    %236 = vector.extract_strided_slice %225 {offsets = [2, 0], sizes = [7, 128], strides = [1, 1]} : vector<9x128xf32> to vector<7x128xf32>
    %237 = arith.mulf %235, %236 : vector<7x128xf32>
    %238 = arith.addf %198, %237 : vector<7x128xf32>
    %239 = vector.extract_strided_slice %225 {offsets = [0, 0], sizes = [6, 128], strides = [1, 1]} : vector<9x128xf32> to vector<6x128xf32>
    %240 = vector.extract_strided_slice %225 {offsets = [3, 0], sizes = [6, 128], strides = [1, 1]} : vector<9x128xf32> to vector<6x128xf32>
    %241 = arith.mulf %239, %240 : vector<6x128xf32>
    %242 = arith.addf %202, %241 : vector<6x128xf32>
    %243 = vector.extract_strided_slice %225 {offsets = [0, 0], sizes = [5, 128], strides = [1, 1]} : vector<9x128xf32> to vector<5x128xf32>
    %244 = vector.extract_strided_slice %225 {offsets = [4, 0], sizes = [5, 128], strides = [1, 1]} : vector<9x128xf32> to vector<5x128xf32>
    %245 = arith.mulf %243, %244 : vector<5x128xf32>
    %246 = arith.addf %206, %245 : vector<5x128xf32>
    %247 = vector.extract_strided_slice %225 {offsets = [0, 0], sizes = [4, 128], strides = [1, 1]} : vector<9x128xf32> to vector<4x128xf32>
    %248 = vector.extract_strided_slice %225 {offsets = [5, 0], sizes = [4, 128], strides = [1, 1]} : vector<9x128xf32> to vector<4x128xf32>
    %249 = arith.mulf %247, %248 : vector<4x128xf32>
    %250 = arith.addf %210, %249 : vector<4x128xf32>
    %251 = vector.extract_strided_slice %225 {offsets = [0, 0], sizes = [3, 128], strides = [1, 1]} : vector<9x128xf32> to vector<3x128xf32>
    %252 = vector.extract_strided_slice %225 {offsets = [6, 0], sizes = [3, 128], strides = [1, 1]} : vector<9x128xf32> to vector<3x128xf32>
    %253 = arith.mulf %251, %252 : vector<3x128xf32>
    %254 = arith.addf %214, %253 : vector<3x128xf32>
    %255 = vector.extract_strided_slice %225 {offsets = [0, 0], sizes = [2, 128], strides = [1, 1]} : vector<9x128xf32> to vector<2x128xf32>
    %256 = vector.extract_strided_slice %225 {offsets = [7, 0], sizes = [2, 128], strides = [1, 1]} : vector<9x128xf32> to vector<2x128xf32>
    %257 = arith.mulf %255, %256 : vector<2x128xf32>
    %258 = arith.addf %218, %257 : vector<2x128xf32>
    %259 = vector.extract_strided_slice %225 {offsets = [0, 0], sizes = [1, 128], strides = [1, 1]} : vector<9x128xf32> to vector<1x128xf32>
    %260 = vector.extract_strided_slice %225 {offsets = [8, 0], sizes = [1, 128], strides = [1, 1]} : vector<9x128xf32> to vector<1x128xf32>
    %261 = arith.mulf %259, %260 : vector<1x128xf32>
    %262 = arith.addf %222, %261 : vector<1x128xf32>
    %c6_46 = arith.constant 6 : index
    %c0_47 = arith.constant 0 : index
    %c0_48 = arith.constant 0 : index
    %263 = vector.load %arg1[%c6_46, %c0_47, %c0_48] : memref<30x9x128xf32, #tpu.memory_space<vmem>>, vector<1x9x128xf32>
    %264 = vector.shape_cast %263 : vector<1x9x128xf32> to vector<9x128xf32>
    %265 = arith.subf %264, %32 : vector<9x128xf32>
    %266 = arith.mulf %265, %265 : vector<9x128xf32>
    %267 = arith.addf %227, %266 : vector<9x128xf32>
    %cst_49 = arith.constant 0.127272725 : f32
    %268 = vector.broadcast %cst_49 : f32 to vector<9x128xf32>
    %269 = arith.mulf %268, %264 : vector<9x128xf32>
    %270 = arith.addf %230, %269 : vector<9x128xf32>
    %271 = vector.extract_strided_slice %265 {offsets = [0, 0], sizes = [8, 128], strides = [1, 1]} : vector<9x128xf32> to vector<8x128xf32>
    %272 = vector.extract_strided_slice %265 {offsets = [1, 0], sizes = [8, 128], strides = [1, 1]} : vector<9x128xf32> to vector<8x128xf32>
    %273 = arith.mulf %271, %272 : vector<8x128xf32>
    %274 = arith.addf %234, %273 : vector<8x128xf32>
    %275 = vector.extract_strided_slice %265 {offsets = [0, 0], sizes = [7, 128], strides = [1, 1]} : vector<9x128xf32> to vector<7x128xf32>
    %276 = vector.extract_strided_slice %265 {offsets = [2, 0], sizes = [7, 128], strides = [1, 1]} : vector<9x128xf32> to vector<7x128xf32>
    %277 = arith.mulf %275, %276 : vector<7x128xf32>
    %278 = arith.addf %238, %277 : vector<7x128xf32>
    %279 = vector.extract_strided_slice %265 {offsets = [0, 0], sizes = [6, 128], strides = [1, 1]} : vector<9x128xf32> to vector<6x128xf32>
    %280 = vector.extract_strided_slice %265 {offsets = [3, 0], sizes = [6, 128], strides = [1, 1]} : vector<9x128xf32> to vector<6x128xf32>
    %281 = arith.mulf %279, %280 : vector<6x128xf32>
    %282 = arith.addf %242, %281 : vector<6x128xf32>
    %283 = vector.extract_strided_slice %265 {offsets = [0, 0], sizes = [5, 128], strides = [1, 1]} : vector<9x128xf32> to vector<5x128xf32>
    %284 = vector.extract_strided_slice %265 {offsets = [4, 0], sizes = [5, 128], strides = [1, 1]} : vector<9x128xf32> to vector<5x128xf32>
    %285 = arith.mulf %283, %284 : vector<5x128xf32>
    %286 = arith.addf %246, %285 : vector<5x128xf32>
    %287 = vector.extract_strided_slice %265 {offsets = [0, 0], sizes = [4, 128], strides = [1, 1]} : vector<9x128xf32> to vector<4x128xf32>
    %288 = vector.extract_strided_slice %265 {offsets = [5, 0], sizes = [4, 128], strides = [1, 1]} : vector<9x128xf32> to vector<4x128xf32>
    %289 = arith.mulf %287, %288 : vector<4x128xf32>
    %290 = arith.addf %250, %289 : vector<4x128xf32>
    %291 = vector.extract_strided_slice %265 {offsets = [0, 0], sizes = [3, 128], strides = [1, 1]} : vector<9x128xf32> to vector<3x128xf32>
    %292 = vector.extract_strided_slice %265 {offsets = [6, 0], sizes = [3, 128], strides = [1, 1]} : vector<9x128xf32> to vector<3x128xf32>
    %293 = arith.mulf %291, %292 : vector<3x128xf32>
    %294 = arith.addf %254, %293 : vector<3x128xf32>
    %295 = vector.extract_strided_slice %265 {offsets = [0, 0], sizes = [2, 128], strides = [1, 1]} : vector<9x128xf32> to vector<2x128xf32>
    %296 = vector.extract_strided_slice %265 {offsets = [7, 0], sizes = [2, 128], strides = [1, 1]} : vector<9x128xf32> to vector<2x128xf32>
    %297 = arith.mulf %295, %296 : vector<2x128xf32>
    %298 = arith.addf %258, %297 : vector<2x128xf32>
    %299 = vector.extract_strided_slice %265 {offsets = [0, 0], sizes = [1, 128], strides = [1, 1]} : vector<9x128xf32> to vector<1x128xf32>
    %300 = vector.extract_strided_slice %265 {offsets = [8, 0], sizes = [1, 128], strides = [1, 1]} : vector<9x128xf32> to vector<1x128xf32>
    %301 = arith.mulf %299, %300 : vector<1x128xf32>
    %302 = arith.addf %262, %301 : vector<1x128xf32>
    %c7_50 = arith.constant 7 : index
    %c0_51 = arith.constant 0 : index
    %c0_52 = arith.constant 0 : index
    %303 = vector.load %arg1[%c7_50, %c0_51, %c0_52] : memref<30x9x128xf32, #tpu.memory_space<vmem>>, vector<1x9x128xf32>
    %304 = vector.shape_cast %303 : vector<1x9x128xf32> to vector<9x128xf32>
    %305 = arith.subf %304, %32 : vector<9x128xf32>
    %306 = arith.mulf %305, %305 : vector<9x128xf32>
    %307 = arith.addf %267, %306 : vector<9x128xf32>
    %cst_53 = arith.constant 0.145454541 : f32
    %308 = vector.broadcast %cst_53 : f32 to vector<9x128xf32>
    %309 = arith.mulf %308, %304 : vector<9x128xf32>
    %310 = arith.addf %270, %309 : vector<9x128xf32>
    %311 = vector.extract_strided_slice %305 {offsets = [0, 0], sizes = [8, 128], strides = [1, 1]} : vector<9x128xf32> to vector<8x128xf32>
    %312 = vector.extract_strided_slice %305 {offsets = [1, 0], sizes = [8, 128], strides = [1, 1]} : vector<9x128xf32> to vector<8x128xf32>
    %313 = arith.mulf %311, %312 : vector<8x128xf32>
    %314 = arith.addf %274, %313 : vector<8x128xf32>
    %315 = vector.extract_strided_slice %305 {offsets = [0, 0], sizes = [7, 128], strides = [1, 1]} : vector<9x128xf32> to vector<7x128xf32>
    %316 = vector.extract_strided_slice %305 {offsets = [2, 0], sizes = [7, 128], strides = [1, 1]} : vector<9x128xf32> to vector<7x128xf32>
    %317 = arith.mulf %315, %316 : vector<7x128xf32>
    %318 = arith.addf %278, %317 : vector<7x128xf32>
    %319 = vector.extract_strided_slice %305 {offsets = [0, 0], sizes = [6, 128], strides = [1, 1]} : vector<9x128xf32> to vector<6x128xf32>
    %320 = vector.extract_strided_slice %305 {offsets = [3, 0], sizes = [6, 128], strides = [1, 1]} : vector<9x128xf32> to vector<6x128xf32>
    %321 = arith.mulf %319, %320 : vector<6x128xf32>
    %322 = arith.addf %282, %321 : vector<6x128xf32>
    %323 = vector.extract_strided_slice %305 {offsets = [0, 0], sizes = [5, 128], strides = [1, 1]} : vector<9x128xf32> to vector<5x128xf32>
    %324 = vector.extract_strided_slice %305 {offsets = [4, 0], sizes = [5, 128], strides = [1, 1]} : vector<9x128xf32> to vector<5x128xf32>
    %325 = arith.mulf %323, %324 : vector<5x128xf32>
    %326 = arith.addf %286, %325 : vector<5x128xf32>
    %327 = vector.extract_strided_slice %305 {offsets = [0, 0], sizes = [4, 128], strides = [1, 1]} : vector<9x128xf32> to vector<4x128xf32>
    %328 = vector.extract_strided_slice %305 {offsets = [5, 0], sizes = [4, 128], strides = [1, 1]} : vector<9x128xf32> to vector<4x128xf32>
    %329 = arith.mulf %327, %328 : vector<4x128xf32>
    %330 = arith.addf %290, %329 : vector<4x128xf32>
    %331 = vector.extract_strided_slice %305 {offsets = [0, 0], sizes = [3, 128], strides = [1, 1]} : vector<9x128xf32> to vector<3x128xf32>
    %332 = vector.extract_strided_slice %305 {offsets = [6, 0], sizes = [3, 128], strides = [1, 1]} : vector<9x128xf32> to vector<3x128xf32>
    %333 = arith.mulf %331, %332 : vector<3x128xf32>
    %334 = arith.addf %294, %333 : vector<3x128xf32>
    %335 = vector.extract_strided_slice %305 {offsets = [0, 0], sizes = [2, 128], strides = [1, 1]} : vector<9x128xf32> to vector<2x128xf32>
    %336 = vector.extract_strided_slice %305 {offsets = [7, 0], sizes = [2, 128], strides = [1, 1]} : vector<9x128xf32> to vector<2x128xf32>
    %337 = arith.mulf %335, %336 : vector<2x128xf32>
    %338 = arith.addf %298, %337 : vector<2x128xf32>
    %339 = vector.extract_strided_slice %305 {offsets = [0, 0], sizes = [1, 128], strides = [1, 1]} : vector<9x128xf32> to vector<1x128xf32>
    %340 = vector.extract_strided_slice %305 {offsets = [8, 0], sizes = [1, 128], strides = [1, 1]} : vector<9x128xf32> to vector<1x128xf32>
    %341 = arith.mulf %339, %340 : vector<1x128xf32>
    %342 = arith.addf %302, %341 : vector<1x128xf32>
    %c8_54 = arith.constant 8 : index
    %c0_55 = arith.constant 0 : index
    %c0_56 = arith.constant 0 : index
    %343 = vector.load %arg1[%c8_54, %c0_55, %c0_56] : memref<30x9x128xf32, #tpu.memory_space<vmem>>, vector<1x9x128xf32>
    %344 = vector.shape_cast %343 : vector<1x9x128xf32> to vector<9x128xf32>
    %345 = arith.subf %344, %32 : vector<9x128xf32>
    %346 = arith.mulf %345, %345 : vector<9x128xf32>
    %347 = arith.addf %307, %346 : vector<9x128xf32>
    %cst_57 = arith.constant 0.163636357 : f32
    %348 = vector.broadcast %cst_57 : f32 to vector<9x128xf32>
    %349 = arith.mulf %348, %344 : vector<9x128xf32>
    %350 = arith.addf %310, %349 : vector<9x128xf32>
    %351 = vector.extract_strided_slice %345 {offsets = [0, 0], sizes = [8, 128], strides = [1, 1]} : vector<9x128xf32> to vector<8x128xf32>
    %352 = vector.extract_strided_slice %345 {offsets = [1, 0], sizes = [8, 128], strides = [1, 1]} : vector<9x128xf32> to vector<8x128xf32>
    %353 = arith.mulf %351, %352 : vector<8x128xf32>
    %354 = arith.addf %314, %353 : vector<8x128xf32>
    %355 = vector.extract_strided_slice %345 {offsets = [0, 0], sizes = [7, 128], strides = [1, 1]} : vector<9x128xf32> to vector<7x128xf32>
    %356 = vector.extract_strided_slice %345 {offsets = [2, 0], sizes = [7, 128], strides = [1, 1]} : vector<9x128xf32> to vector<7x128xf32>
    %357 = arith.mulf %355, %356 : vector<7x128xf32>
    %358 = arith.addf %318, %357 : vector<7x128xf32>
    %359 = vector.extract_strided_slice %345 {offsets = [0, 0], sizes = [6, 128], strides = [1, 1]} : vector<9x128xf32> to vector<6x128xf32>
    %360 = vector.extract_strided_slice %345 {offsets = [3, 0], sizes = [6, 128], strides = [1, 1]} : vector<9x128xf32> to vector<6x128xf32>
    %361 = arith.mulf %359, %360 : vector<6x128xf32>
    %362 = arith.addf %322, %361 : vector<6x128xf32>
    %363 = vector.extract_strided_slice %345 {offsets = [0, 0], sizes = [5, 128], strides = [1, 1]} : vector<9x128xf32> to vector<5x128xf32>
    %364 = vector.extract_strided_slice %345 {offsets = [4, 0], sizes = [5, 128], strides = [1, 1]} : vector<9x128xf32> to vector<5x128xf32>
    %365 = arith.mulf %363, %364 : vector<5x128xf32>
    %366 = arith.addf %326, %365 : vector<5x128xf32>
    %367 = vector.extract_strided_slice %345 {offsets = [0, 0], sizes = [4, 128], strides = [1, 1]} : vector<9x128xf32> to vector<4x128xf32>
    %368 = vector.extract_strided_slice %345 {offsets = [5, 0], sizes = [4, 128], strides = [1, 1]} : vector<9x128xf32> to vector<4x128xf32>
    %369 = arith.mulf %367, %368 : vector<4x128xf32>
    %370 = arith.addf %330, %369 : vector<4x128xf32>
    %371 = vector.extract_strided_slice %345 {offsets = [0, 0], sizes = [3, 128], strides = [1, 1]} : vector<9x128xf32> to vector<3x128xf32>
    %372 = vector.extract_strided_slice %345 {offsets = [6, 0], sizes = [3, 128], strides = [1, 1]} : vector<9x128xf32> to vector<3x128xf32>
    %373 = arith.mulf %371, %372 : vector<3x128xf32>
    %374 = arith.addf %334, %373 : vector<3x128xf32>
    %375 = vector.extract_strided_slice %345 {offsets = [0, 0], sizes = [2, 128], strides = [1, 1]} : vector<9x128xf32> to vector<2x128xf32>
    %376 = vector.extract_strided_slice %345 {offsets = [7, 0], sizes = [2, 128], strides = [1, 1]} : vector<9x128xf32> to vector<2x128xf32>
    %377 = arith.mulf %375, %376 : vector<2x128xf32>
    %378 = arith.addf %338, %377 : vector<2x128xf32>
    %379 = vector.extract_strided_slice %345 {offsets = [0, 0], sizes = [1, 128], strides = [1, 1]} : vector<9x128xf32> to vector<1x128xf32>
    %380 = vector.extract_strided_slice %345 {offsets = [8, 0], sizes = [1, 128], strides = [1, 1]} : vector<9x128xf32> to vector<1x128xf32>
    %381 = arith.mulf %379, %380 : vector<1x128xf32>
    %382 = arith.addf %342, %381 : vector<1x128xf32>
    %c9_58 = arith.constant 9 : index
    %c0_59 = arith.constant 0 : index
    %c0_60 = arith.constant 0 : index
    %383 = vector.load %arg1[%c9_58, %c0_59, %c0_60] : memref<30x9x128xf32, #tpu.memory_space<vmem>>, vector<1x9x128xf32>
    %384 = vector.shape_cast %383 : vector<1x9x128xf32> to vector<9x128xf32>
    %385 = arith.subf %384, %32 : vector<9x128xf32>
    %386 = arith.mulf %385, %385 : vector<9x128xf32>
    %387 = arith.addf %347, %386 : vector<9x128xf32>
    %cst_61 = arith.constant 0.181818187 : f32
    %388 = vector.broadcast %cst_61 : f32 to vector<9x128xf32>
    %389 = arith.mulf %388, %384 : vector<9x128xf32>
    %390 = arith.addf %350, %389 : vector<9x128xf32>
    %391 = vector.extract_strided_slice %385 {offsets = [0, 0], sizes = [8, 128], strides = [1, 1]} : vector<9x128xf32> to vector<8x128xf32>
    %392 = vector.extract_strided_slice %385 {offsets = [1, 0], sizes = [8, 128], strides = [1, 1]} : vector<9x128xf32> to vector<8x128xf32>
    %393 = arith.mulf %391, %392 : vector<8x128xf32>
    %394 = arith.addf %354, %393 : vector<8x128xf32>
    %395 = vector.extract_strided_slice %385 {offsets = [0, 0], sizes = [7, 128], strides = [1, 1]} : vector<9x128xf32> to vector<7x128xf32>
    %396 = vector.extract_strided_slice %385 {offsets = [2, 0], sizes = [7, 128], strides = [1, 1]} : vector<9x128xf32> to vector<7x128xf32>
    %397 = arith.mulf %395, %396 : vector<7x128xf32>
    %398 = arith.addf %358, %397 : vector<7x128xf32>
    %399 = vector.extract_strided_slice %385 {offsets = [0, 0], sizes = [6, 128], strides = [1, 1]} : vector<9x128xf32> to vector<6x128xf32>
    %400 = vector.extract_strided_slice %385 {offsets = [3, 0], sizes = [6, 128], strides = [1, 1]} : vector<9x128xf32> to vector<6x128xf32>
    %401 = arith.mulf %399, %400 : vector<6x128xf32>
    %402 = arith.addf %362, %401 : vector<6x128xf32>
    %403 = vector.extract_strided_slice %385 {offsets = [0, 0], sizes = [5, 128], strides = [1, 1]} : vector<9x128xf32> to vector<5x128xf32>
    %404 = vector.extract_strided_slice %385 {offsets = [4, 0], sizes = [5, 128], strides = [1, 1]} : vector<9x128xf32> to vector<5x128xf32>
    %405 = arith.mulf %403, %404 : vector<5x128xf32>
    %406 = arith.addf %366, %405 : vector<5x128xf32>
    %407 = vector.extract_strided_slice %385 {offsets = [0, 0], sizes = [4, 128], strides = [1, 1]} : vector<9x128xf32> to vector<4x128xf32>
    %408 = vector.extract_strided_slice %385 {offsets = [5, 0], sizes = [4, 128], strides = [1, 1]} : vector<9x128xf32> to vector<4x128xf32>
    %409 = arith.mulf %407, %408 : vector<4x128xf32>
    %410 = arith.addf %370, %409 : vector<4x128xf32>
    %411 = vector.extract_strided_slice %385 {offsets = [0, 0], sizes = [3, 128], strides = [1, 1]} : vector<9x128xf32> to vector<3x128xf32>
    %412 = vector.extract_strided_slice %385 {offsets = [6, 0], sizes = [3, 128], strides = [1, 1]} : vector<9x128xf32> to vector<3x128xf32>
    %413 = arith.mulf %411, %412 : vector<3x128xf32>
    %414 = arith.addf %374, %413 : vector<3x128xf32>
    %415 = vector.extract_strided_slice %385 {offsets = [0, 0], sizes = [2, 128], strides = [1, 1]} : vector<9x128xf32> to vector<2x128xf32>
    %416 = vector.extract_strided_slice %385 {offsets = [7, 0], sizes = [2, 128], strides = [1, 1]} : vector<9x128xf32> to vector<2x128xf32>
    %417 = arith.mulf %415, %416 : vector<2x128xf32>
    %418 = arith.addf %378, %417 : vector<2x128xf32>
    %419 = vector.extract_strided_slice %385 {offsets = [0, 0], sizes = [1, 128], strides = [1, 1]} : vector<9x128xf32> to vector<1x128xf32>
    %420 = vector.extract_strided_slice %385 {offsets = [8, 0], sizes = [1, 128], strides = [1, 1]} : vector<9x128xf32> to vector<1x128xf32>
    %421 = arith.mulf %419, %420 : vector<1x128xf32>
    %422 = arith.addf %382, %421 : vector<1x128xf32>
    %cst_62 = arith.constant 1.000000e-01 : f32
    %423 = vector.broadcast %cst_62 : f32 to vector<9x128xf32>
    %424 = arith.mulf %387, %423 : vector<9x128xf32>
    %425 = math.rsqrt %424 : vector<9x128xf32>
    %cst_63 = arith.constant 0.111111112 : f32
    %426 = vector.broadcast %cst_63 : f32 to vector<9x128xf32>
    %427 = arith.mulf %387, %426 : vector<9x128xf32>
    %428 = math.rsqrt %427 : vector<9x128xf32>
    %429 = math.sqrt %427 : vector<9x128xf32>
    %430 = arith.mulf %32, %428 : vector<9x128xf32>
    %c0_64 = arith.constant 0 : index
    %c0_65 = arith.constant 0 : index
    %c0_66 = arith.constant 0 : index
    %431 = vector.load %arg1[%c0_64, %c0_65, %c0_66] : memref<30x9x128xf32, #tpu.memory_space<vmem>>, vector<1x9x128xf32>
    %432 = vector.shape_cast %431 : vector<1x9x128xf32> to vector<9x128xf32>
    %c9_67 = arith.constant 9 : index
    %c0_68 = arith.constant 0 : index
    %c0_69 = arith.constant 0 : index
    %433 = vector.load %arg1[%c9_67, %c0_68, %c0_69] : memref<30x9x128xf32, #tpu.memory_space<vmem>>, vector<1x9x128xf32>
    %434 = vector.shape_cast %433 : vector<1x9x128xf32> to vector<9x128xf32>
    %435 = arith.subf %434, %432 : vector<9x128xf32>
    %436 = arith.divf %435, %432 : vector<9x128xf32>
    %cst_70 = arith.constant 1.000000e+00 : f32
    %437 = vector.broadcast %cst_70 : f32 to vector<9x128xf32>
    %438 = arith.subf %436, %437 : vector<9x128xf32>
    %cst_71 = arith.constant 1.000000e-01 : f32
    %439 = vector.broadcast %cst_71 : f32 to vector<8x128xf32>
    %440 = arith.mulf %394, %439 : vector<8x128xf32>
    %441 = vector.extract_strided_slice %425 {offsets = [0, 0], sizes = [8, 128], strides = [1, 1]} : vector<9x128xf32> to vector<8x128xf32>
    %442 = vector.extract_strided_slice %425 {offsets = [1, 0], sizes = [8, 128], strides = [1, 1]} : vector<9x128xf32> to vector<8x128xf32>
    %443 = arith.mulf %441, %442 : vector<8x128xf32>
    %444 = arith.mulf %440, %443 : vector<8x128xf32>
    %c0_72 = arith.constant 0 : index
    %c0_73 = arith.constant 0 : index
    %445 = vector.load %arg2[%c0_72, %c0_73] : memref<768x128xf32, #tpu.memory_space<vmem>>, vector<8x128xf32>
    tpu.vector_store %arg2[%c0_72, %c0_73], %440 {strides = array<i32>} : memref<768x128xf32, #tpu.memory_space<vmem>>, vector<8x128xf32>,
    %c40 = arith.constant 40 : index
    %c0_74 = arith.constant 0 : index
    %446 = vector.load %arg2[%c40, %c0_74] : memref<768x128xf32, #tpu.memory_space<vmem>>, vector<8x128xf32>
    tpu.vector_store %arg2[%c40, %c0_74], %444 {strides = array<i32>} : memref<768x128xf32, #tpu.memory_space<vmem>>, vector<8x128xf32>,
    %cst_75 = arith.constant 1.000000e-01 : f32
    %447 = vector.broadcast %cst_75 : f32 to vector<7x128xf32>
    %448 = arith.mulf %398, %447 : vector<7x128xf32>
    %449 = vector.extract_strided_slice %425 {offsets = [0, 0], sizes = [7, 128], strides = [1, 1]} : vector<9x128xf32> to vector<7x128xf32>
    %450 = vector.extract_strided_slice %425 {offsets = [2, 0], sizes = [7, 128], strides = [1, 1]} : vector<9x128xf32> to vector<7x128xf32>
    %451 = arith.mulf %449, %450 : vector<7x128xf32>
    %452 = arith.mulf %448, %451 : vector<7x128xf32>
    %c8_76 = arith.constant 8 : index
    %c0_77 = arith.constant 0 : index
    %453 = vector.load %arg2[%c8_76, %c0_77] : memref<768x128xf32, #tpu.memory_space<vmem>>, vector<7x128xf32>
    tpu.vector_store %arg2[%c8_76, %c0_77], %448 {strides = array<i32>} : memref<768x128xf32, #tpu.memory_space<vmem>>, vector<7x128xf32>,
    %c48 = arith.constant 48 : index
    %c0_78 = arith.constant 0 : index
    %454 = vector.load %arg2[%c48, %c0_78] : memref<768x128xf32, #tpu.memory_space<vmem>>, vector<7x128xf32>
    tpu.vector_store %arg2[%c48, %c0_78], %452 {strides = array<i32>} : memref<768x128xf32, #tpu.memory_space<vmem>>, vector<7x128xf32>,
    %cst_79 = arith.constant 1.000000e-01 : f32
    %455 = vector.broadcast %cst_79 : f32 to vector<6x128xf32>
    %456 = arith.mulf %402, %455 : vector<6x128xf32>
    %457 = vector.extract_strided_slice %425 {offsets = [0, 0], sizes = [6, 128], strides = [1, 1]} : vector<9x128xf32> to vector<6x128xf32>
    %458 = vector.extract_strided_slice %425 {offsets = [3, 0], sizes = [6, 128], strides = [1, 1]} : vector<9x128xf32> to vector<6x128xf32>
    %459 = arith.mulf %457, %458 : vector<6x128xf32>
    %460 = arith.mulf %456, %459 : vector<6x128xf32>
    %c16 = arith.constant 16 : index
    %c0_80 = arith.constant 0 : index
    %461 = vector.load %arg2[%c16, %c0_80] : memref<768x128xf32, #tpu.memory_space<vmem>>, vector<6x128xf32>
    tpu.vector_store %arg2[%c16, %c0_80], %456 {strides = array<i32>} : memref<768x128xf32, #tpu.memory_space<vmem>>, vector<6x128xf32>,
    %c56 = arith.constant 56 : index
    %c0_81 = arith.constant 0 : index
    %462 = vector.load %arg2[%c56, %c0_81] : memref<768x128xf32, #tpu.memory_space<vmem>>, vector<6x128xf32>
    tpu.vector_store %arg2[%c56, %c0_81], %460 {strides = array<i32>} : memref<768x128xf32, #tpu.memory_space<vmem>>, vector<6x128xf32>,
    %cst_82 = arith.constant 1.000000e-01 : f32
    %463 = vector.broadcast %cst_82 : f32 to vector<5x128xf32>
    %464 = arith.mulf %406, %463 : vector<5x128xf32>
    %465 = vector.extract_strided_slice %425 {offsets = [0, 0], sizes = [5, 128], strides = [1, 1]} : vector<9x128xf32> to vector<5x128xf32>
    %466 = vector.extract_strided_slice %425 {offsets = [4, 0], sizes = [5, 128], strides = [1, 1]} : vector<9x128xf32> to vector<5x128xf32>
    %467 = arith.mulf %465, %466 : vector<5x128xf32>
    %468 = arith.mulf %464, %467 : vector<5x128xf32>
    %c24 = arith.constant 24 : index
    %c0_83 = arith.constant 0 : index
    %469 = vector.load %arg2[%c24, %c0_83] : memref<768x128xf32, #tpu.memory_space<vmem>>, vector<5x128xf32>
    tpu.vector_store %arg2[%c24, %c0_83], %464 {strides = array<i32>} : memref<768x128xf32, #tpu.memory_space<vmem>>, vector<5x128xf32>,
    %c64 = arith.constant 64 : index
    %c0_84 = arith.constant 0 : index
    %470 = vector.load %arg2[%c64, %c0_84] : memref<768x128xf32, #tpu.memory_space<vmem>>, vector<5x128xf32>
    tpu.vector_store %arg2[%c64, %c0_84], %468 {strides = array<i32>} : memref<768x128xf32, #tpu.memory_space<vmem>>, vector<5x128xf32>,
    %cst_85 = arith.constant 1.000000e-01 : f32
    %471 = vector.broadcast %cst_85 : f32 to vector<4x128xf32>
    %472 = arith.mulf %410, %471 : vector<4x128xf32>
    %473 = vector.extract_strided_slice %425 {offsets = [0, 0], sizes = [4, 128], strides = [1, 1]} : vector<9x128xf32> to vector<4x128xf32>
    %474 = vector.extract_strided_slice %425 {offsets = [5, 0], sizes = [4, 128], strides = [1, 1]} : vector<9x128xf32> to vector<4x128xf32>
    %475 = arith.mulf %473, %474 : vector<4x128xf32>
    %476 = arith.mulf %472, %475 : vector<4x128xf32>
    %c32 = arith.constant 32 : index
    %c0_86 = arith.constant 0 : index
    %477 = vector.load %arg2[%c32, %c0_86] : memref<768x128xf32, #tpu.memory_space<vmem>>, vector<4x128xf32>
    tpu.vector_store %arg2[%c32, %c0_86], %472 {strides = array<i32>} : memref<768x128xf32, #tpu.memory_space<vmem>>, vector<4x128xf32>,
    %c72 = arith.constant 72 : index
    %c0_87 = arith.constant 0 : index
    %478 = vector.load %arg2[%c72, %c0_87] : memref<768x128xf32, #tpu.memory_space<vmem>>, vector<4x128xf32>
    tpu.vector_store %arg2[%c72, %c0_87], %476 {strides = array<i32>} : memref<768x128xf32, #tpu.memory_space<vmem>>, vector<4x128xf32>,
    %cst_88 = arith.constant 1.000000e-01 : f32
    %479 = vector.broadcast %cst_88 : f32 to vector<3x128xf32>
    %480 = arith.mulf %414, %479 : vector<3x128xf32>
    %481 = vector.extract_strided_slice %425 {offsets = [0, 0], sizes = [3, 128], strides = [1, 1]} : vector<9x128xf32> to vector<3x128xf32>
    %482 = vector.extract_strided_slice %425 {offsets = [6, 0], sizes = [3, 128], strides = [1, 1]} : vector<9x128xf32> to vector<3x128xf32>
    %483 = arith.mulf %481, %482 : vector<3x128xf32>
    %484 = arith.mulf %480, %483 : vector<3x128xf32>
    %c29 = arith.constant 29 : index
    %c0_89 = arith.constant 0 : index
    %485 = vector.load %arg2[%c29, %c0_89] : memref<768x128xf32, #tpu.memory_space<vmem>>, vector<3x128xf32>
    tpu.vector_store %arg2[%c29, %c0_89], %480 {strides = array<i32>} : memref<768x128xf32, #tpu.memory_space<vmem>>, vector<3x128xf32>,
    %c69 = arith.constant 69 : index
    %c0_90 = arith.constant 0 : index
    %486 = vector.load %arg2[%c69, %c0_90] : memref<768x128xf32, #tpu.memory_space<vmem>>, vector<3x128xf32>
    tpu.vector_store %arg2[%c69, %c0_90], %484 {strides = array<i32>} : memref<768x128xf32, #tpu.memory_space<vmem>>, vector<3x128xf32>,
    %cst_91 = arith.constant 1.000000e-01 : f32
    %487 = vector.broadcast %cst_91 : f32 to vector<2x128xf32>
    %488 = arith.mulf %418, %487 : vector<2x128xf32>
    %489 = vector.extract_strided_slice %425 {offsets = [0, 0], sizes = [2, 128], strides = [1, 1]} : vector<9x128xf32> to vector<2x128xf32>
    %490 = vector.extract_strided_slice %425 {offsets = [7, 0], sizes = [2, 128], strides = [1, 1]} : vector<9x128xf32> to vector<2x128xf32>
    %491 = arith.mulf %489, %490 : vector<2x128xf32>
    %492 = arith.mulf %488, %491 : vector<2x128xf32>
    %c22 = arith.constant 22 : index
    %c0_92 = arith.constant 0 : index
    %493 = vector.load %arg2[%c22, %c0_92] : memref<768x128xf32, #tpu.memory_space<vmem>>, vector<2x128xf32>
    tpu.vector_store %arg2[%c22, %c0_92], %488 {strides = array<i32>} : memref<768x128xf32, #tpu.memory_space<vmem>>, vector<2x128xf32>,
    %c62 = arith.constant 62 : index
    %c0_93 = arith.constant 0 : index
    %494 = vector.load %arg2[%c62, %c0_93] : memref<768x128xf32, #tpu.memory_space<vmem>>, vector<2x128xf32>
    tpu.vector_store %arg2[%c62, %c0_93], %492 {strides = array<i32>} : memref<768x128xf32, #tpu.memory_space<vmem>>, vector<2x128xf32>,
    %cst_94 = arith.constant 1.000000e-01 : f32
    %495 = vector.broadcast %cst_94 : f32 to vector<1x128xf32>
    %496 = arith.mulf %422, %495 : vector<1x128xf32>
    %497 = vector.extract_strided_slice %425 {offsets = [0, 0], sizes = [1, 128], strides = [1, 1]} : vector<9x128xf32> to vector<1x128xf32>
    %498 = vector.extract_strided_slice %425 {offsets = [8, 0], sizes = [1, 128], strides = [1, 1]} : vector<9x128xf32> to vector<1x128xf32>
    %499 = arith.mulf %497, %498 : vector<1x128xf32>
    %500 = arith.mulf %496, %499 : vector<1x128xf32>
    %c15 = arith.constant 15 : index
    %c0_95 = arith.constant 0 : index
    %501 = vector.load %arg2[%c15, %c0_95] : memref<768x128xf32, #tpu.memory_space<vmem>>, vector<1x128xf32>
    tpu.vector_store %arg2[%c15, %c0_95], %496 {strides = array<i32>} : memref<768x128xf32, #tpu.memory_space<vmem>>, vector<1x128xf32>,
    %c55 = arith.constant 55 : index
    %c0_96 = arith.constant 0 : index
    %502 = vector.load %arg2[%c55, %c0_96] : memref<768x128xf32, #tpu.memory_space<vmem>>, vector<1x128xf32>
    tpu.vector_store %arg2[%c55, %c0_96], %500 {strides = array<i32>} : memref<768x128xf32, #tpu.memory_space<vmem>>, vector<1x128xf32>,
    %c36 = arith.constant 36 : index
    %c0_97 = arith.constant 0 : index
    %503 = vector.load %arg2[%c36, %c0_97] : memref<768x128xf32, #tpu.memory_space<vmem>>, vector<4x128xf32>
    tpu.vector_store %arg2[%c36, %c0_97], %1 {strides = array<i32>} : memref<768x128xf32, #tpu.memory_space<vmem>>, vector<4x128xf32>,
    %c76 = arith.constant 76 : index
    %c0_98 = arith.constant 0 : index
    %504 = vector.load %arg2[%c76, %c0_98] : memref<768x128xf32, #tpu.memory_space<vmem>>, vector<4x128xf32>
    tpu.vector_store %arg2[%c76, %c0_98], %1 {strides = array<i32>} : memref<768x128xf32, #tpu.memory_space<vmem>>, vector<4x128xf32>,
    %c80 = arith.constant 80 : index
    %c0_99 = arith.constant 0 : index
    %505 = vector.load %arg2[%c80, %c0_99] : memref<768x128xf32, #tpu.memory_space<vmem>>, vector<9x128xf32>
    tpu.vector_store %arg2[%c80, %c0_99], %429 {strides = array<i32>} : memref<768x128xf32, #tpu.memory_space<vmem>>, vector<9x128xf32>,
    %c89 = arith.constant 89 : index
    %c0_100 = arith.constant 0 : index
    %506 = vector.load %arg2[%c89, %c0_100] : memref<768x128xf32, #tpu.memory_space<vmem>>, vector<9x128xf32>
    tpu.vector_store %arg2[%c89, %c0_100], %430 {strides = array<i32>} : memref<768x128xf32, #tpu.memory_space<vmem>>, vector<9x128xf32>,
    %c98 = arith.constant 98 : index
    %c0_101 = arith.constant 0 : index
    %507 = vector.load %arg2[%c98, %c0_101] : memref<768x128xf32, #tpu.memory_space<vmem>>, vector<9x128xf32>
    tpu.vector_store %arg2[%c98, %c0_101], %438 {strides = array<i32>} : memref<768x128xf32, #tpu.memory_space<vmem>>, vector<9x128xf32>,
    %c107 = arith.constant 107 : index
    %c0_102 = arith.constant 0 : index
    %508 = vector.load %arg2[%c107, %c0_102] : memref<768x128xf32, #tpu.memory_space<vmem>>, vector<9x128xf32>
    tpu.vector_store %arg2[%c107, %c0_102], %390 {strides = array<i32>} : memref<768x128xf32, #tpu.memory_space<vmem>>, vector<9x128xf32>,
    %c116 = arith.constant 116 : index
    %c0_103 = arith.constant 0 : index
    %509 = vector.load %arg2[%c116, %c0_103] : memref<768x128xf32, #tpu.memory_space<vmem>>, vector<9x128xf32>
    tpu.vector_store %arg2[%c116, %c0_103], %32 {strides = array<i32>} : memref<768x128xf32, #tpu.memory_space<vmem>>, vector<9x128xf32>,
    %c125 = arith.constant 125 : index
    %c0_104 = arith.constant 0 : index
    %510 = vector.load %arg2[%c125, %c0_104] : memref<768x128xf32, #tpu.memory_space<vmem>>, vector<3x128xf32>
    tpu.vector_store %arg2[%c125, %c0_104], %0 {strides = array<i32>} : memref<768x128xf32, #tpu.memory_space<vmem>>, vector<3x128xf32>,
    %c10 = arith.constant 10 : index
    %c0_105 = arith.constant 0 : index
    %c0_106 = arith.constant 0 : index
    %511 = vector.load %arg1[%c10, %c0_105, %c0_106] : memref<30x9x128xf32, #tpu.memory_space<vmem>>, vector<1x9x128xf32>
    %512 = vector.shape_cast %511 : vector<1x9x128xf32> to vector<9x128xf32>
    %c11 = arith.constant 11 : index
    %c0_107 = arith.constant 0 : index
    %c0_108 = arith.constant 0 : index
    %513 = vector.load %arg1[%c11, %c0_107, %c0_108] : memref<30x9x128xf32, #tpu.memory_space<vmem>>, vector<1x9x128xf32>
    %514 = vector.shape_cast %513 : vector<1x9x128xf32> to vector<9x128xf32>
    %515 = arith.addf %512, %514 : vector<9x128xf32>
    %c12 = arith.constant 12 : index
    %c0_109 = arith.constant 0 : index
    %c0_110 = arith.constant 0 : index
    %516 = vector.load %arg1[%c12, %c0_109, %c0_110] : memref<30x9x128xf32, #tpu.memory_space<vmem>>, vector<1x9x128xf32>
    %517 = vector.shape_cast %516 : vector<1x9x128xf32> to vector<9x128xf32>
    %518 = arith.addf %515, %517 : vector<9x128xf32>
    %c13 = arith.constant 13 : index
    %c0_111 = arith.constant 0 : index
    %c0_112 = arith.constant 0 : index
    %519 = vector.load %arg1[%c13, %c0_111, %c0_112] : memref<30x9x128xf32, #tpu.memory_space<vmem>>, vector<1x9x128xf32>
    %520 = vector.shape_cast %519 : vector<1x9x128xf32> to vector<9x128xf32>
    %521 = arith.addf %518, %520 : vector<9x128xf32>
    %c14 = arith.constant 14 : index
    %c0_113 = arith.constant 0 : index
    %c0_114 = arith.constant 0 : index
    %522 = vector.load %arg1[%c14, %c0_113, %c0_114] : memref<30x9x128xf32, #tpu.memory_space<vmem>>, vector<1x9x128xf32>
    %523 = vector.shape_cast %522 : vector<1x9x128xf32> to vector<9x128xf32>
    %524 = arith.addf %521, %523 : vector<9x128xf32>
    %c15_115 = arith.constant 15 : index
    %c0_116 = arith.constant 0 : index
    %c0_117 = arith.constant 0 : index
    %525 = vector.load %arg1[%c15_115, %c0_116, %c0_117] : memref<30x9x128xf32, #tpu.memory_space<vmem>>, vector<1x9x128xf32>
    %526 = vector.shape_cast %525 : vector<1x9x128xf32> to vector<9x128xf32>
    %527 = arith.addf %524, %526 : vector<9x128xf32>
    %c16_118 = arith.constant 16 : index
    %c0_119 = arith.constant 0 : index
    %c0_120 = arith.constant 0 : index
    %528 = vector.load %arg1[%c16_118, %c0_119, %c0_120] : memref<30x9x128xf32, #tpu.memory_space<vmem>>, vector<1x9x128xf32>
    %529 = vector.shape_cast %528 : vector<1x9x128xf32> to vector<9x128xf32>
    %530 = arith.addf %527, %529 : vector<9x128xf32>
    %c17 = arith.constant 17 : index
    %c0_121 = arith.constant 0 : index
    %c0_122 = arith.constant 0 : index
    %531 = vector.load %arg1[%c17, %c0_121, %c0_122] : memref<30x9x128xf32, #tpu.memory_space<vmem>>, vector<1x9x128xf32>
    %532 = vector.shape_cast %531 : vector<1x9x128xf32> to vector<9x128xf32>
    %533 = arith.addf %530, %532 : vector<9x128xf32>
    %c18 = arith.constant 18 : index
    %c0_123 = arith.constant 0 : index
    %c0_124 = arith.constant 0 : index
    %534 = vector.load %arg1[%c18, %c0_123, %c0_124] : memref<30x9x128xf32, #tpu.memory_space<vmem>>, vector<1x9x128xf32>
    %535 = vector.shape_cast %534 : vector<1x9x128xf32> to vector<9x128xf32>
    %536 = arith.addf %533, %535 : vector<9x128xf32>
    %c19 = arith.constant 19 : index
    %c0_125 = arith.constant 0 : index
    %c0_126 = arith.constant 0 : index
    %537 = vector.load %arg1[%c19, %c0_125, %c0_126] : memref<30x9x128xf32, #tpu.memory_space<vmem>>, vector<1x9x128xf32>
    %538 = vector.shape_cast %537 : vector<1x9x128xf32> to vector<9x128xf32>
    %539 = arith.addf %536, %538 : vector<9x128xf32>
    %cst_127 = arith.constant 1.000000e-01 : f32
    %540 = vector.broadcast %cst_127 : f32 to vector<9x128xf32>
    %541 = arith.mulf %539, %540 : vector<9x128xf32>
    %c10_128 = arith.constant 10 : index
    %c0_129 = arith.constant 0 : index
    %c0_130 = arith.constant 0 : index
    %542 = vector.load %arg1[%c10_128, %c0_129, %c0_130] : memref<30x9x128xf32, #tpu.memory_space<vmem>>, vector<1x9x128xf32>
    %543 = vector.shape_cast %542 : vector<1x9x128xf32> to vector<9x128xf32>
    %544 = arith.subf %543, %541 : vector<9x128xf32>
    %545 = arith.mulf %544, %544 : vector<9x128xf32>
    %cst_131 = arith.constant 0.0181818176 : f32
    %546 = vector.broadcast %cst_131 : f32 to vector<9x128xf32>
    %547 = arith.mulf %546, %543 : vector<9x128xf32>
    %548 = vector.extract_strided_slice %544 {offsets = [0, 0], sizes = [8, 128], strides = [1, 1]} : vector<9x128xf32> to vector<8x128xf32>
    %549 = vector.extract_strided_slice %544 {offsets = [1, 0], sizes = [8, 128], strides = [1, 1]} : vector<9x128xf32> to vector<8x128xf32>
    %550 = arith.mulf %548, %549 : vector<8x128xf32>
    %551 = vector.extract_strided_slice %544 {offsets = [0, 0], sizes = [7, 128], strides = [1, 1]} : vector<9x128xf32> to vector<7x128xf32>
    %552 = vector.extract_strided_slice %544 {offsets = [2, 0], sizes = [7, 128], strides = [1, 1]} : vector<9x128xf32> to vector<7x128xf32>
    %553 = arith.mulf %551, %552 : vector<7x128xf32>
    %554 = vector.extract_strided_slice %544 {offsets = [0, 0], sizes = [6, 128], strides = [1, 1]} : vector<9x128xf32> to vector<6x128xf32>
    %555 = vector.extract_strided_slice %544 {offsets = [3, 0], sizes = [6, 128], strides = [1, 1]} : vector<9x128xf32> to vector<6x128xf32>
    %556 = arith.mulf %554, %555 : vector<6x128xf32>
    %557 = vector.extract_strided_slice %544 {offsets = [0, 0], sizes = [5, 128], strides = [1, 1]} : vector<9x128xf32> to vector<5x128xf32>
    %558 = vector.extract_strided_slice %544 {offsets = [4, 0], sizes = [5, 128], strides = [1, 1]} : vector<9x128xf32> to vector<5x128xf32>
    %559 = arith.mulf %557, %558 : vector<5x128xf32>
    %560 = vector.extract_strided_slice %544 {offsets = [0, 0], sizes = [4, 128], strides = [1, 1]} : vector<9x128xf32> to vector<4x128xf32>
    %561 = vector.extract_strided_slice %544 {offsets = [5, 0], sizes = [4, 128], strides = [1, 1]} : vector<9x128xf32> to vector<4x128xf32>
    %562 = arith.mulf %560, %561 : vector<4x128xf32>
    %563 = vector.extract_strided_slice %544 {offsets = [0, 0], sizes = [3, 128], strides = [1, 1]} : vector<9x128xf32> to vector<3x128xf32>
    %564 = vector.extract_strided_slice %544 {offsets = [6, 0], sizes = [3, 128], strides = [1, 1]} : vector<9x128xf32> to vector<3x128xf32>
    %565 = arith.mulf %563, %564 : vector<3x128xf32>
    %566 = vector.extract_strided_slice %544 {offsets = [0, 0], sizes = [2, 128], strides = [1, 1]} : vector<9x128xf32> to vector<2x128xf32>
    %567 = vector.extract_strided_slice %544 {offsets = [7, 0], sizes = [2, 128], strides = [1, 1]} : vector<9x128xf32> to vector<2x128xf32>
    %568 = arith.mulf %566, %567 : vector<2x128xf32>
    %569 = vector.extract_strided_slice %544 {offsets = [0, 0], sizes = [1, 128], strides = [1, 1]} : vector<9x128xf32> to vector<1x128xf32>
    %570 = vector.extract_strided_slice %544 {offsets = [8, 0], sizes = [1, 128], strides = [1, 1]} : vector<9x128xf32> to vector<1x128xf32>
    %571 = arith.mulf %569, %570 : vector<1x128xf32>
    %c11_132 = arith.constant 11 : index
    %c0_133 = arith.constant 0 : index
    %c0_134 = arith.constant 0 : index
    %572 = vector.load %arg1[%c11_132, %c0_133, %c0_134] : memref<30x9x128xf32, #tpu.memory_space<vmem>>, vector<1x9x128xf32>
    %573 = vector.shape_cast %572 : vector<1x9x128xf32> to vector<9x128xf32>
    %574 = arith.subf %573, %541 : vector<9x128xf32>
    %575 = arith.mulf %574, %574 : vector<9x128xf32>
    %576 = arith.addf %545, %575 : vector<9x128xf32>
    %cst_135 = arith.constant 0.0363636352 : f32
    %577 = vector.broadcast %cst_135 : f32 to vector<9x128xf32>
    %578 = arith.mulf %577, %573 : vector<9x128xf32>
    %579 = arith.addf %547, %578 : vector<9x128xf32>
    %580 = vector.extract_strided_slice %574 {offsets = [0, 0], sizes = [8, 128], strides = [1, 1]} : vector<9x128xf32> to vector<8x128xf32>
    %581 = vector.extract_strided_slice %574 {offsets = [1, 0], sizes = [8, 128], strides = [1, 1]} : vector<9x128xf32> to vector<8x128xf32>
    %582 = arith.mulf %580, %581 : vector<8x128xf32>
    %583 = arith.addf %550, %582 : vector<8x128xf32>
    %584 = vector.extract_strided_slice %574 {offsets = [0, 0], sizes = [7, 128], strides = [1, 1]} : vector<9x128xf32> to vector<7x128xf32>
    %585 = vector.extract_strided_slice %574 {offsets = [2, 0], sizes = [7, 128], strides = [1, 1]} : vector<9x128xf32> to vector<7x128xf32>
    %586 = arith.mulf %584, %585 : vector<7x128xf32>
    %587 = arith.addf %553, %586 : vector<7x128xf32>
    %588 = vector.extract_strided_slice %574 {offsets = [0, 0], sizes = [6, 128], strides = [1, 1]} : vector<9x128xf32> to vector<6x128xf32>
    %589 = vector.extract_strided_slice %574 {offsets = [3, 0], sizes = [6, 128], strides = [1, 1]} : vector<9x128xf32> to vector<6x128xf32>
    %590 = arith.mulf %588, %589 : vector<6x128xf32>
    %591 = arith.addf %556, %590 : vector<6x128xf32>
    %592 = vector.extract_strided_slice %574 {offsets = [0, 0], sizes = [5, 128], strides = [1, 1]} : vector<9x128xf32> to vector<5x128xf32>
    %593 = vector.extract_strided_slice %574 {offsets = [4, 0], sizes = [5, 128], strides = [1, 1]} : vector<9x128xf32> to vector<5x128xf32>
    %594 = arith.mulf %592, %593 : vector<5x128xf32>
    %595 = arith.addf %559, %594 : vector<5x128xf32>
    %596 = vector.extract_strided_slice %574 {offsets = [0, 0], sizes = [4, 128], strides = [1, 1]} : vector<9x128xf32> to vector<4x128xf32>
    %597 = vector.extract_strided_slice %574 {offsets = [5, 0], sizes = [4, 128], strides = [1, 1]} : vector<9x128xf32> to vector<4x128xf32>
    %598 = arith.mulf %596, %597 : vector<4x128xf32>
    %599 = arith.addf %562, %598 : vector<4x128xf32>
    %600 = vector.extract_strided_slice %574 {offsets = [0, 0], sizes = [3, 128], strides = [1, 1]} : vector<9x128xf32> to vector<3x128xf32>
    %601 = vector.extract_strided_slice %574 {offsets = [6, 0], sizes = [3, 128], strides = [1, 1]} : vector<9x128xf32> to vector<3x128xf32>
    %602 = arith.mulf %600, %601 : vector<3x128xf32>
    %603 = arith.addf %565, %602 : vector<3x128xf32>
    %604 = vector.extract_strided_slice %574 {offsets = [0, 0], sizes = [2, 128], strides = [1, 1]} : vector<9x128xf32> to vector<2x128xf32>
    %605 = vector.extract_strided_slice %574 {offsets = [7, 0], sizes = [2, 128], strides = [1, 1]} : vector<9x128xf32> to vector<2x128xf32>
    %606 = arith.mulf %604, %605 : vector<2x128xf32>
    %607 = arith.addf %568, %606 : vector<2x128xf32>
    %608 = vector.extract_strided_slice %574 {offsets = [0, 0], sizes = [1, 128], strides = [1, 1]} : vector<9x128xf32> to vector<1x128xf32>
    %609 = vector.extract_strided_slice %574 {offsets = [8, 0], sizes = [1, 128], strides = [1, 1]} : vector<9x128xf32> to vector<1x128xf32>
    %610 = arith.mulf %608, %609 : vector<1x128xf32>
    %611 = arith.addf %571, %610 : vector<1x128xf32>
    %c12_136 = arith.constant 12 : index
    %c0_137 = arith.constant 0 : index
    %c0_138 = arith.constant 0 : index
    %612 = vector.load %arg1[%c12_136, %c0_137, %c0_138] : memref<30x9x128xf32, #tpu.memory_space<vmem>>, vector<1x9x128xf32>
    %613 = vector.shape_cast %612 : vector<1x9x128xf32> to vector<9x128xf32>
    %614 = arith.subf %613, %541 : vector<9x128xf32>
    %615 = arith.mulf %614, %614 : vector<9x128xf32>
    %616 = arith.addf %576, %615 : vector<9x128xf32>
    %cst_139 = arith.constant 0.0545454547 : f32
    %617 = vector.broadcast %cst_139 : f32 to vector<9x128xf32>
    %618 = arith.mulf %617, %613 : vector<9x128xf32>
    %619 = arith.addf %579, %618 : vector<9x128xf32>
    %620 = vector.extract_strided_slice %614 {offsets = [0, 0], sizes = [8, 128], strides = [1, 1]} : vector<9x128xf32> to vector<8x128xf32>
    %621 = vector.extract_strided_slice %614 {offsets = [1, 0], sizes = [8, 128], strides = [1, 1]} : vector<9x128xf32> to vector<8x128xf32>
    %622 = arith.mulf %620, %621 : vector<8x128xf32>
    %623 = arith.addf %583, %622 : vector<8x128xf32>
    %624 = vector.extract_strided_slice %614 {offsets = [0, 0], sizes = [7, 128], strides = [1, 1]} : vector<9x128xf32> to vector<7x128xf32>
    %625 = vector.extract_strided_slice %614 {offsets = [2, 0], sizes = [7, 128], strides = [1, 1]} : vector<9x128xf32> to vector<7x128xf32>
    %626 = arith.mulf %624, %625 : vector<7x128xf32>
    %627 = arith.addf %587, %626 : vector<7x128xf32>
    %628 = vector.extract_strided_slice %614 {offsets = [0, 0], sizes = [6, 128], strides = [1, 1]} : vector<9x128xf32> to vector<6x128xf32>
    %629 = vector.extract_strided_slice %614 {offsets = [3, 0], sizes = [6, 128], strides = [1, 1]} : vector<9x128xf32> to vector<6x128xf32>
    %630 = arith.mulf %628, %629 : vector<6x128xf32>
    %631 = arith.addf %591, %630 : vector<6x128xf32>
    %632 = vector.extract_strided_slice %614 {offsets = [0, 0], sizes = [5, 128], strides = [1, 1]} : vector<9x128xf32> to vector<5x128xf32>
    %633 = vector.extract_strided_slice %614 {offsets = [4, 0], sizes = [5, 128], strides = [1, 1]} : vector<9x128xf32> to vector<5x128xf32>
    %634 = arith.mulf %632, %633 : vector<5x128xf32>
    %635 = arith.addf %595, %634 : vector<5x128xf32>
    %636 = vector.extract_strided_slice %614 {offsets = [0, 0], sizes = [4, 128], strides = [1, 1]} : vector<9x128xf32> to vector<4x128xf32>
    %637 = vector.extract_strided_slice %614 {offsets = [5, 0], sizes = [4, 128], strides = [1, 1]} : vector<9x128xf32> to vector<4x128xf32>
    %638 = arith.mulf %636, %637 : vector<4x128xf32>
    %639 = arith.addf %599, %638 : vector<4x128xf32>
    %640 = vector.extract_strided_slice %614 {offsets = [0, 0], sizes = [3, 128], strides = [1, 1]} : vector<9x128xf32> to vector<3x128xf32>
    %641 = vector.extract_strided_slice %614 {offsets = [6, 0], sizes = [3, 128], strides = [1, 1]} : vector<9x128xf32> to vector<3x128xf32>
    %642 = arith.mulf %640, %641 : vector<3x128xf32>
    %643 = arith.addf %603, %642 : vector<3x128xf32>
    %644 = vector.extract_strided_slice %614 {offsets = [0, 0], sizes = [2, 128], strides = [1, 1]} : vector<9x128xf32> to vector<2x128xf32>
    %645 = vector.extract_strided_slice %614 {offsets = [7, 0], sizes = [2, 128], strides = [1, 1]} : vector<9x128xf32> to vector<2x128xf32>
    %646 = arith.mulf %644, %645 : vector<2x128xf32>
    %647 = arith.addf %607, %646 : vector<2x128xf32>
    %648 = vector.extract_strided_slice %614 {offsets = [0, 0], sizes = [1, 128], strides = [1, 1]} : vector<9x128xf32> to vector<1x128xf32>
    %649 = vector.extract_strided_slice %614 {offsets = [8, 0], sizes = [1, 128], strides = [1, 1]} : vector<9x128xf32> to vector<1x128xf32>
    %650 = arith.mulf %648, %649 : vector<1x128xf32>
    %651 = arith.addf %611, %650 : vector<1x128xf32>
    %c13_140 = arith.constant 13 : index
    %c0_141 = arith.constant 0 : index
    %c0_142 = arith.constant 0 : index
    %652 = vector.load %arg1[%c13_140, %c0_141, %c0_142] : memref<30x9x128xf32, #tpu.memory_space<vmem>>, vector<1x9x128xf32>
    %653 = vector.shape_cast %652 : vector<1x9x128xf32> to vector<9x128xf32>
    %654 = arith.subf %653, %541 : vector<9x128xf32>
    %655 = arith.mulf %654, %654 : vector<9x128xf32>
    %656 = arith.addf %616, %655 : vector<9x128xf32>
    %cst_143 = arith.constant 0.0727272704 : f32
    %657 = vector.broadcast %cst_143 : f32 to vector<9x128xf32>
    %658 = arith.mulf %657, %653 : vector<9x128xf32>
    %659 = arith.addf %619, %658 : vector<9x128xf32>
    %660 = vector.extract_strided_slice %654 {offsets = [0, 0], sizes = [8, 128], strides = [1, 1]} : vector<9x128xf32> to vector<8x128xf32>
    %661 = vector.extract_strided_slice %654 {offsets = [1, 0], sizes = [8, 128], strides = [1, 1]} : vector<9x128xf32> to vector<8x128xf32>
    %662 = arith.mulf %660, %661 : vector<8x128xf32>
    %663 = arith.addf %623, %662 : vector<8x128xf32>
    %664 = vector.extract_strided_slice %654 {offsets = [0, 0], sizes = [7, 128], strides = [1, 1]} : vector<9x128xf32> to vector<7x128xf32>
    %665 = vector.extract_strided_slice %654 {offsets = [2, 0], sizes = [7, 128], strides = [1, 1]} : vector<9x128xf32> to vector<7x128xf32>
    %666 = arith.mulf %664, %665 : vector<7x128xf32>
    %667 = arith.addf %627, %666 : vector<7x128xf32>
    %668 = vector.extract_strided_slice %654 {offsets = [0, 0], sizes = [6, 128], strides = [1, 1]} : vector<9x128xf32> to vector<6x128xf32>
    %669 = vector.extract_strided_slice %654 {offsets = [3, 0], sizes = [6, 128], strides = [1, 1]} : vector<9x128xf32> to vector<6x128xf32>
    %670 = arith.mulf %668, %669 : vector<6x128xf32>
    %671 = arith.addf %631, %670 : vector<6x128xf32>
    %672 = vector.extract_strided_slice %654 {offsets = [0, 0], sizes = [5, 128], strides = [1, 1]} : vector<9x128xf32> to vector<5x128xf32>
    %673 = vector.extract_strided_slice %654 {offsets = [4, 0], sizes = [5, 128], strides = [1, 1]} : vector<9x128xf32> to vector<5x128xf32>
    %674 = arith.mulf %672, %673 : vector<5x128xf32>
    %675 = arith.addf %635, %674 : vector<5x128xf32>
    %676 = vector.extract_strided_slice %654 {offsets = [0, 0], sizes = [4, 128], strides = [1, 1]} : vector<9x128xf32> to vector<4x128xf32>
    %677 = vector.extract_strided_slice %654 {offsets = [5, 0], sizes = [4, 128], strides = [1, 1]} : vector<9x128xf32> to vector<4x128xf32>
    %678 = arith.mulf %676, %677 : vector<4x128xf32>
    %679 = arith.addf %639, %678 : vector<4x128xf32>
    %680 = vector.extract_strided_slice %654 {offsets = [0, 0], sizes = [3, 128], strides = [1, 1]} : vector<9x128xf32> to vector<3x128xf32>
    %681 = vector.extract_strided_slice %654 {offsets = [6, 0], sizes = [3, 128], strides = [1, 1]} : vector<9x128xf32> to vector<3x128xf32>
    %682 = arith.mulf %680, %681 : vector<3x128xf32>
    %683 = arith.addf %643, %682 : vector<3x128xf32>
    %684 = vector.extract_strided_slice %654 {offsets = [0, 0], sizes = [2, 128], strides = [1, 1]} : vector<9x128xf32> to vector<2x128xf32>
    %685 = vector.extract_strided_slice %654 {offsets = [7, 0], sizes = [2, 128], strides = [1, 1]} : vector<9x128xf32> to vector<2x128xf32>
    %686 = arith.mulf %684, %685 : vector<2x128xf32>
    %687 = arith.addf %647, %686 : vector<2x128xf32>
    %688 = vector.extract_strided_slice %654 {offsets = [0, 0], sizes = [1, 128], strides = [1, 1]} : vector<9x128xf32> to vector<1x128xf32>
    %689 = vector.extract_strided_slice %654 {offsets = [8, 0], sizes = [1, 128], strides = [1, 1]} : vector<9x128xf32> to vector<1x128xf32>
    %690 = arith.mulf %688, %689 : vector<1x128xf32>
    %691 = arith.addf %651, %690 : vector<1x128xf32>
    %c14_144 = arith.constant 14 : index
    %c0_145 = arith.constant 0 : index
    %c0_146 = arith.constant 0 : index
    %692 = vector.load %arg1[%c14_144, %c0_145, %c0_146] : memref<30x9x128xf32, #tpu.memory_space<vmem>>, vector<1x9x128xf32>
    %693 = vector.shape_cast %692 : vector<1x9x128xf32> to vector<9x128xf32>
    %694 = arith.subf %693, %541 : vector<9x128xf32>
    %695 = arith.mulf %694, %694 : vector<9x128xf32>
    %696 = arith.addf %656, %695 : vector<9x128xf32>
    %cst_147 = arith.constant 0.0909090936 : f32
    %697 = vector.broadcast %cst_147 : f32 to vector<9x128xf32>
    %698 = arith.mulf %697, %693 : vector<9x128xf32>
    %699 = arith.addf %659, %698 : vector<9x128xf32>
    %700 = vector.extract_strided_slice %694 {offsets = [0, 0], sizes = [8, 128], strides = [1, 1]} : vector<9x128xf32> to vector<8x128xf32>
    %701 = vector.extract_strided_slice %694 {offsets = [1, 0], sizes = [8, 128], strides = [1, 1]} : vector<9x128xf32> to vector<8x128xf32>
    %702 = arith.mulf %700, %701 : vector<8x128xf32>
    %703 = arith.addf %663, %702 : vector<8x128xf32>
    %704 = vector.extract_strided_slice %694 {offsets = [0, 0], sizes = [7, 128], strides = [1, 1]} : vector<9x128xf32> to vector<7x128xf32>
    %705 = vector.extract_strided_slice %694 {offsets = [2, 0], sizes = [7, 128], strides = [1, 1]} : vector<9x128xf32> to vector<7x128xf32>
    %706 = arith.mulf %704, %705 : vector<7x128xf32>
    %707 = arith.addf %667, %706 : vector<7x128xf32>
    %708 = vector.extract_strided_slice %694 {offsets = [0, 0], sizes = [6, 128], strides = [1, 1]} : vector<9x128xf32> to vector<6x128xf32>
    %709 = vector.extract_strided_slice %694 {offsets = [3, 0], sizes = [6, 128], strides = [1, 1]} : vector<9x128xf32> to vector<6x128xf32>
    %710 = arith.mulf %708, %709 : vector<6x128xf32>
    %711 = arith.addf %671, %710 : vector<6x128xf32>
    %712 = vector.extract_strided_slice %694 {offsets = [0, 0], sizes = [5, 128], strides = [1, 1]} : vector<9x128xf32> to vector<5x128xf32>
    %713 = vector.extract_strided_slice %694 {offsets = [4, 0], sizes = [5, 128], strides = [1, 1]} : vector<9x128xf32> to vector<5x128xf32>
    %714 = arith.mulf %712, %713 : vector<5x128xf32>
    %715 = arith.addf %675, %714 : vector<5x128xf32>
    %716 = vector.extract_strided_slice %694 {offsets = [0, 0], sizes = [4, 128], strides = [1, 1]} : vector<9x128xf32> to vector<4x128xf32>
    %717 = vector.extract_strided_slice %694 {offsets = [5, 0], sizes = [4, 128], strides = [1, 1]} : vector<9x128xf32> to vector<4x128xf32>
    %718 = arith.mulf %716, %717 : vector<4x128xf32>
    %719 = arith.addf %679, %718 : vector<4x128xf32>
    %720 = vector.extract_strided_slice %694 {offsets = [0, 0], sizes = [3, 128], strides = [1, 1]} : vector<9x128xf32> to vector<3x128xf32>
    %721 = vector.extract_strided_slice %694 {offsets = [6, 0], sizes = [3, 128], strides = [1, 1]} : vector<9x128xf32> to vector<3x128xf32>
    %722 = arith.mulf %720, %721 : vector<3x128xf32>
    %723 = arith.addf %683, %722 : vector<3x128xf32>
    %724 = vector.extract_strided_slice %694 {offsets = [0, 0], sizes = [2, 128], strides = [1, 1]} : vector<9x128xf32> to vector<2x128xf32>
    %725 = vector.extract_strided_slice %694 {offsets = [7, 0], sizes = [2, 128], strides = [1, 1]} : vector<9x128xf32> to vector<2x128xf32>
    %726 = arith.mulf %724, %725 : vector<2x128xf32>
    %727 = arith.addf %687, %726 : vector<2x128xf32>
    %728 = vector.extract_strided_slice %694 {offsets = [0, 0], sizes = [1, 128], strides = [1, 1]} : vector<9x128xf32> to vector<1x128xf32>
    %729 = vector.extract_strided_slice %694 {offsets = [8, 0], sizes = [1, 128], strides = [1, 1]} : vector<9x128xf32> to vector<1x128xf32>
    %730 = arith.mulf %728, %729 : vector<1x128xf32>
    %731 = arith.addf %691, %730 : vector<1x128xf32>
    %c15_148 = arith.constant 15 : index
    %c0_149 = arith.constant 0 : index
    %c0_150 = arith.constant 0 : index
    %732 = vector.load %arg1[%c15_148, %c0_149, %c0_150] : memref<30x9x128xf32, #tpu.memory_space<vmem>>, vector<1x9x128xf32>
    %733 = vector.shape_cast %732 : vector<1x9x128xf32> to vector<9x128xf32>
    %734 = arith.subf %733, %541 : vector<9x128xf32>
    %735 = arith.mulf %734, %734 : vector<9x128xf32>
    %736 = arith.addf %696, %735 : vector<9x128xf32>
    %cst_151 = arith.constant 0.109090909 : f32
    %737 = vector.broadcast %cst_151 : f32 to vector<9x128xf32>
    %738 = arith.mulf %737, %733 : vector<9x128xf32>
    %739 = arith.addf %699, %738 : vector<9x128xf32>
    %740 = vector.extract_strided_slice %734 {offsets = [0, 0], sizes = [8, 128], strides = [1, 1]} : vector<9x128xf32> to vector<8x128xf32>
    %741 = vector.extract_strided_slice %734 {offsets = [1, 0], sizes = [8, 128], strides = [1, 1]} : vector<9x128xf32> to vector<8x128xf32>
    %742 = arith.mulf %740, %741 : vector<8x128xf32>
    %743 = arith.addf %703, %742 : vector<8x128xf32>
    %744 = vector.extract_strided_slice %734 {offsets = [0, 0], sizes = [7, 128], strides = [1, 1]} : vector<9x128xf32> to vector<7x128xf32>
    %745 = vector.extract_strided_slice %734 {offsets = [2, 0], sizes = [7, 128], strides = [1, 1]} : vector<9x128xf32> to vector<7x128xf32>
    %746 = arith.mulf %744, %745 : vector<7x128xf32>
    %747 = arith.addf %707, %746 : vector<7x128xf32>
    %748 = vector.extract_strided_slice %734 {offsets = [0, 0], sizes = [6, 128], strides = [1, 1]} : vector<9x128xf32> to vector<6x128xf32>
    %749 = vector.extract_strided_slice %734 {offsets = [3, 0], sizes = [6, 128], strides = [1, 1]} : vector<9x128xf32> to vector<6x128xf32>
    %750 = arith.mulf %748, %749 : vector<6x128xf32>
    %751 = arith.addf %711, %750 : vector<6x128xf32>
    %752 = vector.extract_strided_slice %734 {offsets = [0, 0], sizes = [5, 128], strides = [1, 1]} : vector<9x128xf32> to vector<5x128xf32>
    %753 = vector.extract_strided_slice %734 {offsets = [4, 0], sizes = [5, 128], strides = [1, 1]} : vector<9x128xf32> to vector<5x128xf32>
    %754 = arith.mulf %752, %753 : vector<5x128xf32>
    %755 = arith.addf %715, %754 : vector<5x128xf32>
    %756 = vector.extract_strided_slice %734 {offsets = [0, 0], sizes = [4, 128], strides = [1, 1]} : vector<9x128xf32> to vector<4x128xf32>
    %757 = vector.extract_strided_slice %734 {offsets = [5, 0], sizes = [4, 128], strides = [1, 1]} : vector<9x128xf32> to vector<4x128xf32>
    %758 = arith.mulf %756, %757 : vector<4x128xf32>
    %759 = arith.addf %719, %758 : vector<4x128xf32>
    %760 = vector.extract_strided_slice %734 {offsets = [0, 0], sizes = [3, 128], strides = [1, 1]} : vector<9x128xf32> to vector<3x128xf32>
    %761 = vector.extract_strided_slice %734 {offsets = [6, 0], sizes = [3, 128], strides = [1, 1]} : vector<9x128xf32> to vector<3x128xf32>
    %762 = arith.mulf %760, %761 : vector<3x128xf32>
    %763 = arith.addf %723, %762 : vector<3x128xf32>
    %764 = vector.extract_strided_slice %734 {offsets = [0, 0], sizes = [2, 128], strides = [1, 1]} : vector<9x128xf32> to vector<2x128xf32>
    %765 = vector.extract_strided_slice %734 {offsets = [7, 0], sizes = [2, 128], strides = [1, 1]} : vector<9x128xf32> to vector<2x128xf32>
    %766 = arith.mulf %764, %765 : vector<2x128xf32>
    %767 = arith.addf %727, %766 : vector<2x128xf32>
    %768 = vector.extract_strided_slice %734 {offsets = [0, 0], sizes = [1, 128], strides = [1, 1]} : vector<9x128xf32> to vector<1x128xf32>
    %769 = vector.extract_strided_slice %734 {offsets = [8, 0], sizes = [1, 128], strides = [1, 1]} : vector<9x128xf32> to vector<1x128xf32>
    %770 = arith.mulf %768, %769 : vector<1x128xf32>
    %771 = arith.addf %731, %770 : vector<1x128xf32>
    %c16_152 = arith.constant 16 : index
    %c0_153 = arith.constant 0 : index
    %c0_154 = arith.constant 0 : index
    %772 = vector.load %arg1[%c16_152, %c0_153, %c0_154] : memref<30x9x128xf32, #tpu.memory_space<vmem>>, vector<1x9x128xf32>
    %773 = vector.shape_cast %772 : vector<1x9x128xf32> to vector<9x128xf32>
    %774 = arith.subf %773, %541 : vector<9x128xf32>
    %775 = arith.mulf %774, %774 : vector<9x128xf32>
    %776 = arith.addf %736, %775 : vector<9x128xf32>
    %cst_155 = arith.constant 0.127272725 : f32
    %777 = vector.broadcast %cst_155 : f32 to vector<9x128xf32>
    %778 = arith.mulf %777, %773 : vector<9x128xf32>
    %779 = arith.addf %739, %778 : vector<9x128xf32>
    %780 = vector.extract_strided_slice %774 {offsets = [0, 0], sizes = [8, 128], strides = [1, 1]} : vector<9x128xf32> to vector<8x128xf32>
    %781 = vector.extract_strided_slice %774 {offsets = [1, 0], sizes = [8, 128], strides = [1, 1]} : vector<9x128xf32> to vector<8x128xf32>
    %782 = arith.mulf %780, %781 : vector<8x128xf32>
    %783 = arith.addf %743, %782 : vector<8x128xf32>
    %784 = vector.extract_strided_slice %774 {offsets = [0, 0], sizes = [7, 128], strides = [1, 1]} : vector<9x128xf32> to vector<7x128xf32>
    %785 = vector.extract_strided_slice %774 {offsets = [2, 0], sizes = [7, 128], strides = [1, 1]} : vector<9x128xf32> to vector<7x128xf32>
    %786 = arith.mulf %784, %785 : vector<7x128xf32>
    %787 = arith.addf %747, %786 : vector<7x128xf32>
    %788 = vector.extract_strided_slice %774 {offsets = [0, 0], sizes = [6, 128], strides = [1, 1]} : vector<9x128xf32> to vector<6x128xf32>
    %789 = vector.extract_strided_slice %774 {offsets = [3, 0], sizes = [6, 128], strides = [1, 1]} : vector<9x128xf32> to vector<6x128xf32>
    %790 = arith.mulf %788, %789 : vector<6x128xf32>
    %791 = arith.addf %751, %790 : vector<6x128xf32>
    %792 = vector.extract_strided_slice %774 {offsets = [0, 0], sizes = [5, 128], strides = [1, 1]} : vector<9x128xf32> to vector<5x128xf32>
    %793 = vector.extract_strided_slice %774 {offsets = [4, 0], sizes = [5, 128], strides = [1, 1]} : vector<9x128xf32> to vector<5x128xf32>
    %794 = arith.mulf %792, %793 : vector<5x128xf32>
    %795 = arith.addf %755, %794 : vector<5x128xf32>
    %796 = vector.extract_strided_slice %774 {offsets = [0, 0], sizes = [4, 128], strides = [1, 1]} : vector<9x128xf32> to vector<4x128xf32>
    %797 = vector.extract_strided_slice %774 {offsets = [5, 0], sizes = [4, 128], strides = [1, 1]} : vector<9x128xf32> to vector<4x128xf32>
    %798 = arith.mulf %796, %797 : vector<4x128xf32>
    %799 = arith.addf %759, %798 : vector<4x128xf32>
    %800 = vector.extract_strided_slice %774 {offsets = [0, 0], sizes = [3, 128], strides = [1, 1]} : vector<9x128xf32> to vector<3x128xf32>
    %801 = vector.extract_strided_slice %774 {offsets = [6, 0], sizes = [3, 128], strides = [1, 1]} : vector<9x128xf32> to vector<3x128xf32>
    %802 = arith.mulf %800, %801 : vector<3x128xf32>
    %803 = arith.addf %763, %802 : vector<3x128xf32>
    %804 = vector.extract_strided_slice %774 {offsets = [0, 0], sizes = [2, 128], strides = [1, 1]} : vector<9x128xf32> to vector<2x128xf32>
    %805 = vector.extract_strided_slice %774 {offsets = [7, 0], sizes = [2, 128], strides = [1, 1]} : vector<9x128xf32> to vector<2x128xf32>
    %806 = arith.mulf %804, %805 : vector<2x128xf32>
    %807 = arith.addf %767, %806 : vector<2x128xf32>
    %808 = vector.extract_strided_slice %774 {offsets = [0, 0], sizes = [1, 128], strides = [1, 1]} : vector<9x128xf32> to vector<1x128xf32>
    %809 = vector.extract_strided_slice %774 {offsets = [8, 0], sizes = [1, 128], strides = [1, 1]} : vector<9x128xf32> to vector<1x128xf32>
    %810 = arith.mulf %808, %809 : vector<1x128xf32>
    %811 = arith.addf %771, %810 : vector<1x128xf32>
    %c17_156 = arith.constant 17 : index
    %c0_157 = arith.constant 0 : index
    %c0_158 = arith.constant 0 : index
    %812 = vector.load %arg1[%c17_156, %c0_157, %c0_158] : memref<30x9x128xf32, #tpu.memory_space<vmem>>, vector<1x9x128xf32>
    %813 = vector.shape_cast %812 : vector<1x9x128xf32> to vector<9x128xf32>
    %814 = arith.subf %813, %541 : vector<9x128xf32>
    %815 = arith.mulf %814, %814 : vector<9x128xf32>
    %816 = arith.addf %776, %815 : vector<9x128xf32>
    %cst_159 = arith.constant 0.145454541 : f32
    %817 = vector.broadcast %cst_159 : f32 to vector<9x128xf32>
    %818 = arith.mulf %817, %813 : vector<9x128xf32>
    %819 = arith.addf %779, %818 : vector<9x128xf32>
    %820 = vector.extract_strided_slice %814 {offsets = [0, 0], sizes = [8, 128], strides = [1, 1]} : vector<9x128xf32> to vector<8x128xf32>
    %821 = vector.extract_strided_slice %814 {offsets = [1, 0], sizes = [8, 128], strides = [1, 1]} : vector<9x128xf32> to vector<8x128xf32>
    %822 = arith.mulf %820, %821 : vector<8x128xf32>
    %823 = arith.addf %783, %822 : vector<8x128xf32>
    %824 = vector.extract_strided_slice %814 {offsets = [0, 0], sizes = [7, 128], strides = [1, 1]} : vector<9x128xf32> to vector<7x128xf32>
    %825 = vector.extract_strided_slice %814 {offsets = [2, 0], sizes = [7, 128], strides = [1, 1]} : vector<9x128xf32> to vector<7x128xf32>
    %826 = arith.mulf %824, %825 : vector<7x128xf32>
    %827 = arith.addf %787, %826 : vector<7x128xf32>
    %828 = vector.extract_strided_slice %814 {offsets = [0, 0], sizes = [6, 128], strides = [1, 1]} : vector<9x128xf32> to vector<6x128xf32>
    %829 = vector.extract_strided_slice %814 {offsets = [3, 0], sizes = [6, 128], strides = [1, 1]} : vector<9x128xf32> to vector<6x128xf32>
    %830 = arith.mulf %828, %829 : vector<6x128xf32>
    %831 = arith.addf %791, %830 : vector<6x128xf32>
    %832 = vector.extract_strided_slice %814 {offsets = [0, 0], sizes = [5, 128], strides = [1, 1]} : vector<9x128xf32> to vector<5x128xf32>
    %833 = vector.extract_strided_slice %814 {offsets = [4, 0], sizes = [5, 128], strides = [1, 1]} : vector<9x128xf32> to vector<5x128xf32>
    %834 = arith.mulf %832, %833 : vector<5x128xf32>
    %835 = arith.addf %795, %834 : vector<5x128xf32>
    %836 = vector.extract_strided_slice %814 {offsets = [0, 0], sizes = [4, 128], strides = [1, 1]} : vector<9x128xf32> to vector<4x128xf32>
    %837 = vector.extract_strided_slice %814 {offsets = [5, 0], sizes = [4, 128], strides = [1, 1]} : vector<9x128xf32> to vector<4x128xf32>
    %838 = arith.mulf %836, %837 : vector<4x128xf32>
    %839 = arith.addf %799, %838 : vector<4x128xf32>
    %840 = vector.extract_strided_slice %814 {offsets = [0, 0], sizes = [3, 128], strides = [1, 1]} : vector<9x128xf32> to vector<3x128xf32>
    %841 = vector.extract_strided_slice %814 {offsets = [6, 0], sizes = [3, 128], strides = [1, 1]} : vector<9x128xf32> to vector<3x128xf32>
    %842 = arith.mulf %840, %841 : vector<3x128xf32>
    %843 = arith.addf %803, %842 : vector<3x128xf32>
    %844 = vector.extract_strided_slice %814 {offsets = [0, 0], sizes = [2, 128], strides = [1, 1]} : vector<9x128xf32> to vector<2x128xf32>
    %845 = vector.extract_strided_slice %814 {offsets = [7, 0], sizes = [2, 128], strides = [1, 1]} : vector<9x128xf32> to vector<2x128xf32>
    %846 = arith.mulf %844, %845 : vector<2x128xf32>
    %847 = arith.addf %807, %846 : vector<2x128xf32>
    %848 = vector.extract_strided_slice %814 {offsets = [0, 0], sizes = [1, 128], strides = [1, 1]} : vector<9x128xf32> to vector<1x128xf32>
    %849 = vector.extract_strided_slice %814 {offsets = [8, 0], sizes = [1, 128], strides = [1, 1]} : vector<9x128xf32> to vector<1x128xf32>
    %850 = arith.mulf %848, %849 : vector<1x128xf32>
    %851 = arith.addf %811, %850 : vector<1x128xf32>
    %c18_160 = arith.constant 18 : index
    %c0_161 = arith.constant 0 : index
    %c0_162 = arith.constant 0 : index
    %852 = vector.load %arg1[%c18_160, %c0_161, %c0_162] : memref<30x9x128xf32, #tpu.memory_space<vmem>>, vector<1x9x128xf32>
    %853 = vector.shape_cast %852 : vector<1x9x128xf32> to vector<9x128xf32>
    %854 = arith.subf %853, %541 : vector<9x128xf32>
    %855 = arith.mulf %854, %854 : vector<9x128xf32>
    %856 = arith.addf %816, %855 : vector<9x128xf32>
    %cst_163 = arith.constant 0.163636357 : f32
    %857 = vector.broadcast %cst_163 : f32 to vector<9x128xf32>
    %858 = arith.mulf %857, %853 : vector<9x128xf32>
    %859 = arith.addf %819, %858 : vector<9x128xf32>
    %860 = vector.extract_strided_slice %854 {offsets = [0, 0], sizes = [8, 128], strides = [1, 1]} : vector<9x128xf32> to vector<8x128xf32>
    %861 = vector.extract_strided_slice %854 {offsets = [1, 0], sizes = [8, 128], strides = [1, 1]} : vector<9x128xf32> to vector<8x128xf32>
    %862 = arith.mulf %860, %861 : vector<8x128xf32>
    %863 = arith.addf %823, %862 : vector<8x128xf32>
    %864 = vector.extract_strided_slice %854 {offsets = [0, 0], sizes = [7, 128], strides = [1, 1]} : vector<9x128xf32> to vector<7x128xf32>
    %865 = vector.extract_strided_slice %854 {offsets = [2, 0], sizes = [7, 128], strides = [1, 1]} : vector<9x128xf32> to vector<7x128xf32>
    %866 = arith.mulf %864, %865 : vector<7x128xf32>
    %867 = arith.addf %827, %866 : vector<7x128xf32>
    %868 = vector.extract_strided_slice %854 {offsets = [0, 0], sizes = [6, 128], strides = [1, 1]} : vector<9x128xf32> to vector<6x128xf32>
    %869 = vector.extract_strided_slice %854 {offsets = [3, 0], sizes = [6, 128], strides = [1, 1]} : vector<9x128xf32> to vector<6x128xf32>
    %870 = arith.mulf %868, %869 : vector<6x128xf32>
    %871 = arith.addf %831, %870 : vector<6x128xf32>
    %872 = vector.extract_strided_slice %854 {offsets = [0, 0], sizes = [5, 128], strides = [1, 1]} : vector<9x128xf32> to vector<5x128xf32>
    %873 = vector.extract_strided_slice %854 {offsets = [4, 0], sizes = [5, 128], strides = [1, 1]} : vector<9x128xf32> to vector<5x128xf32>
    %874 = arith.mulf %872, %873 : vector<5x128xf32>
    %875 = arith.addf %835, %874 : vector<5x128xf32>
    %876 = vector.extract_strided_slice %854 {offsets = [0, 0], sizes = [4, 128], strides = [1, 1]} : vector<9x128xf32> to vector<4x128xf32>
    %877 = vector.extract_strided_slice %854 {offsets = [5, 0], sizes = [4, 128], strides = [1, 1]} : vector<9x128xf32> to vector<4x128xf32>
    %878 = arith.mulf %876, %877 : vector<4x128xf32>
    %879 = arith.addf %839, %878 : vector<4x128xf32>
    %880 = vector.extract_strided_slice %854 {offsets = [0, 0], sizes = [3, 128], strides = [1, 1]} : vector<9x128xf32> to vector<3x128xf32>
    %881 = vector.extract_strided_slice %854 {offsets = [6, 0], sizes = [3, 128], strides = [1, 1]} : vector<9x128xf32> to vector<3x128xf32>
    %882 = arith.mulf %880, %881 : vector<3x128xf32>
    %883 = arith.addf %843, %882 : vector<3x128xf32>
    %884 = vector.extract_strided_slice %854 {offsets = [0, 0], sizes = [2, 128], strides = [1, 1]} : vector<9x128xf32> to vector<2x128xf32>
    %885 = vector.extract_strided_slice %854 {offsets = [7, 0], sizes = [2, 128], strides = [1, 1]} : vector<9x128xf32> to vector<2x128xf32>
    %886 = arith.mulf %884, %885 : vector<2x128xf32>
    %887 = arith.addf %847, %886 : vector<2x128xf32>
    %888 = vector.extract_strided_slice %854 {offsets = [0, 0], sizes = [1, 128], strides = [1, 1]} : vector<9x128xf32> to vector<1x128xf32>
    %889 = vector.extract_strided_slice %854 {offsets = [8, 0], sizes = [1, 128], strides = [1, 1]} : vector<9x128xf32> to vector<1x128xf32>
    %890 = arith.mulf %888, %889 : vector<1x128xf32>
    %891 = arith.addf %851, %890 : vector<1x128xf32>
    %c19_164 = arith.constant 19 : index
    %c0_165 = arith.constant 0 : index
    %c0_166 = arith.constant 0 : index
    %892 = vector.load %arg1[%c19_164, %c0_165, %c0_166] : memref<30x9x128xf32, #tpu.memory_space<vmem>>, vector<1x9x128xf32>
    %893 = vector.shape_cast %892 : vector<1x9x128xf32> to vector<9x128xf32>
    %894 = arith.subf %893, %541 : vector<9x128xf32>
    %895 = arith.mulf %894, %894 : vector<9x128xf32>
    %896 = arith.addf %856, %895 : vector<9x128xf32>
    %cst_167 = arith.constant 0.181818187 : f32
    %897 = vector.broadcast %cst_167 : f32 to vector<9x128xf32>
    %898 = arith.mulf %897, %893 : vector<9x128xf32>
    %899 = arith.addf %859, %898 : vector<9x128xf32>
    %900 = vector.extract_strided_slice %894 {offsets = [0, 0], sizes = [8, 128], strides = [1, 1]} : vector<9x128xf32> to vector<8x128xf32>
    %901 = vector.extract_strided_slice %894 {offsets = [1, 0], sizes = [8, 128], strides = [1, 1]} : vector<9x128xf32> to vector<8x128xf32>
    %902 = arith.mulf %900, %901 : vector<8x128xf32>
    %903 = arith.addf %863, %902 : vector<8x128xf32>
    %904 = vector.extract_strided_slice %894 {offsets = [0, 0], sizes = [7, 128], strides = [1, 1]} : vector<9x128xf32> to vector<7x128xf32>
    %905 = vector.extract_strided_slice %894 {offsets = [2, 0], sizes = [7, 128], strides = [1, 1]} : vector<9x128xf32> to vector<7x128xf32>
    %906 = arith.mulf %904, %905 : vector<7x128xf32>
    %907 = arith.addf %867, %906 : vector<7x128xf32>
    %908 = vector.extract_strided_slice %894 {offsets = [0, 0], sizes = [6, 128], strides = [1, 1]} : vector<9x128xf32> to vector<6x128xf32>
    %909 = vector.extract_strided_slice %894 {offsets = [3, 0], sizes = [6, 128], strides = [1, 1]} : vector<9x128xf32> to vector<6x128xf32>
    %910 = arith.mulf %908, %909 : vector<6x128xf32>
    %911 = arith.addf %871, %910 : vector<6x128xf32>
    %912 = vector.extract_strided_slice %894 {offsets = [0, 0], sizes = [5, 128], strides = [1, 1]} : vector<9x128xf32> to vector<5x128xf32>
    %913 = vector.extract_strided_slice %894 {offsets = [4, 0], sizes = [5, 128], strides = [1, 1]} : vector<9x128xf32> to vector<5x128xf32>
    %914 = arith.mulf %912, %913 : vector<5x128xf32>
    %915 = arith.addf %875, %914 : vector<5x128xf32>
    %916 = vector.extract_strided_slice %894 {offsets = [0, 0], sizes = [4, 128], strides = [1, 1]} : vector<9x128xf32> to vector<4x128xf32>
    %917 = vector.extract_strided_slice %894 {offsets = [5, 0], sizes = [4, 128], strides = [1, 1]} : vector<9x128xf32> to vector<4x128xf32>
    %918 = arith.mulf %916, %917 : vector<4x128xf32>
    %919 = arith.addf %879, %918 : vector<4x128xf32>
    %920 = vector.extract_strided_slice %894 {offsets = [0, 0], sizes = [3, 128], strides = [1, 1]} : vector<9x128xf32> to vector<3x128xf32>
    %921 = vector.extract_strided_slice %894 {offsets = [6, 0], sizes = [3, 128], strides = [1, 1]} : vector<9x128xf32> to vector<3x128xf32>
    %922 = arith.mulf %920, %921 : vector<3x128xf32>
    %923 = arith.addf %883, %922 : vector<3x128xf32>
    %924 = vector.extract_strided_slice %894 {offsets = [0, 0], sizes = [2, 128], strides = [1, 1]} : vector<9x128xf32> to vector<2x128xf32>
    %925 = vector.extract_strided_slice %894 {offsets = [7, 0], sizes = [2, 128], strides = [1, 1]} : vector<9x128xf32> to vector<2x128xf32>
    %926 = arith.mulf %924, %925 : vector<2x128xf32>
    %927 = arith.addf %887, %926 : vector<2x128xf32>
    %928 = vector.extract_strided_slice %894 {offsets = [0, 0], sizes = [1, 128], strides = [1, 1]} : vector<9x128xf32> to vector<1x128xf32>
    %929 = vector.extract_strided_slice %894 {offsets = [8, 0], sizes = [1, 128], strides = [1, 1]} : vector<9x128xf32> to vector<1x128xf32>
    %930 = arith.mulf %928, %929 : vector<1x128xf32>
    %931 = arith.addf %891, %930 : vector<1x128xf32>
    %cst_168 = arith.constant 1.000000e-01 : f32
    %932 = vector.broadcast %cst_168 : f32 to vector<9x128xf32>
    %933 = arith.mulf %896, %932 : vector<9x128xf32>
    %934 = math.rsqrt %933 : vector<9x128xf32>
    %cst_169 = arith.constant 0.111111112 : f32
    %935 = vector.broadcast %cst_169 : f32 to vector<9x128xf32>
    %936 = arith.mulf %896, %935 : vector<9x128xf32>
    %937 = math.rsqrt %936 : vector<9x128xf32>
    %938 = math.sqrt %936 : vector<9x128xf32>
    %939 = arith.mulf %541, %937 : vector<9x128xf32>
    %c10_170 = arith.constant 10 : index
    %c0_171 = arith.constant 0 : index
    %c0_172 = arith.constant 0 : index
    %940 = vector.load %arg1[%c10_170, %c0_171, %c0_172] : memref<30x9x128xf32, #tpu.memory_space<vmem>>, vector<1x9x128xf32>
    %941 = vector.shape_cast %940 : vector<1x9x128xf32> to vector<9x128xf32>
    %c19_173 = arith.constant 19 : index
    %c0_174 = arith.constant 0 : index
    %c0_175 = arith.constant 0 : index
    %942 = vector.load %arg1[%c19_173, %c0_174, %c0_175] : memref<30x9x128xf32, #tpu.memory_space<vmem>>, vector<1x9x128xf32>
    %943 = vector.shape_cast %942 : vector<1x9x128xf32> to vector<9x128xf32>
    %944 = arith.subf %943, %941 : vector<9x128xf32>
    %945 = arith.divf %944, %941 : vector<9x128xf32>
    %cst_176 = arith.constant 1.000000e+00 : f32
    %946 = vector.broadcast %cst_176 : f32 to vector<9x128xf32>
    %947 = arith.subf %945, %946 : vector<9x128xf32>
    %cst_177 = arith.constant 1.000000e-01 : f32
    %948 = vector.broadcast %cst_177 : f32 to vector<8x128xf32>
    %949 = arith.mulf %903, %948 : vector<8x128xf32>
    %950 = vector.extract_strided_slice %934 {offsets = [0, 0], sizes = [8, 128], strides = [1, 1]} : vector<9x128xf32> to vector<8x128xf32>
    %951 = vector.extract_strided_slice %934 {offsets = [1, 0], sizes = [8, 128], strides = [1, 1]} : vector<9x128xf32> to vector<8x128xf32>
    %952 = arith.mulf %950, %951 : vector<8x128xf32>
    %953 = arith.mulf %949, %952 : vector<8x128xf32>
    %c128 = arith.constant 128 : index
    %c0_178 = arith.constant 0 : index
    %954 = vector.load %arg2[%c128, %c0_178] : memref<768x128xf32, #tpu.memory_space<vmem>>, vector<8x128xf32>
    tpu.vector_store %arg2[%c128, %c0_178], %949 {strides = array<i32>} : memref<768x128xf32, #tpu.memory_space<vmem>>, vector<8x128xf32>,
    %c168 = arith.constant 168 : index
    %c0_179 = arith.constant 0 : index
    %955 = vector.load %arg2[%c168, %c0_179] : memref<768x128xf32, #tpu.memory_space<vmem>>, vector<8x128xf32>
    tpu.vector_store %arg2[%c168, %c0_179], %953 {strides = array<i32>} : memref<768x128xf32, #tpu.memory_space<vmem>>, vector<8x128xf32>,
    %cst_180 = arith.constant 1.000000e-01 : f32
    %956 = vector.broadcast %cst_180 : f32 to vector<7x128xf32>
    %957 = arith.mulf %907, %956 : vector<7x128xf32>
    %958 = vector.extract_strided_slice %934 {offsets = [0, 0], sizes = [7, 128], strides = [1, 1]} : vector<9x128xf32> to vector<7x128xf32>
    %959 = vector.extract_strided_slice %934 {offsets = [2, 0], sizes = [7, 128], strides = [1, 1]} : vector<9x128xf32> to vector<7x128xf32>
    %960 = arith.mulf %958, %959 : vector<7x128xf32>
    %961 = arith.mulf %957, %960 : vector<7x128xf32>
    %c136 = arith.constant 136 : index
    %c0_181 = arith.constant 0 : index
    %962 = vector.load %arg2[%c136, %c0_181] : memref<768x128xf32, #tpu.memory_space<vmem>>, vector<7x128xf32>
    tpu.vector_store %arg2[%c136, %c0_181], %957 {strides = array<i32>} : memref<768x128xf32, #tpu.memory_space<vmem>>, vector<7x128xf32>,
    %c176 = arith.constant 176 : index
    %c0_182 = arith.constant 0 : index
    %963 = vector.load %arg2[%c176, %c0_182] : memref<768x128xf32, #tpu.memory_space<vmem>>, vector<7x128xf32>
    tpu.vector_store %arg2[%c176, %c0_182], %961 {strides = array<i32>} : memref<768x128xf32, #tpu.memory_space<vmem>>, vector<7x128xf32>,
    %cst_183 = arith.constant 1.000000e-01 : f32
    %964 = vector.broadcast %cst_183 : f32 to vector<6x128xf32>
    %965 = arith.mulf %911, %964 : vector<6x128xf32>
    %966 = vector.extract_strided_slice %934 {offsets = [0, 0], sizes = [6, 128], strides = [1, 1]} : vector<9x128xf32> to vector<6x128xf32>
    %967 = vector.extract_strided_slice %934 {offsets = [3, 0], sizes = [6, 128], strides = [1, 1]} : vector<9x128xf32> to vector<6x128xf32>
    %968 = arith.mulf %966, %967 : vector<6x128xf32>
    %969 = arith.mulf %965, %968 : vector<6x128xf32>
    %c144 = arith.constant 144 : index
    %c0_184 = arith.constant 0 : index
    %970 = vector.load %arg2[%c144, %c0_184] : memref<768x128xf32, #tpu.memory_space<vmem>>, vector<6x128xf32>
    tpu.vector_store %arg2[%c144, %c0_184], %965 {strides = array<i32>} : memref<768x128xf32, #tpu.memory_space<vmem>>, vector<6x128xf32>,
    %c184 = arith.constant 184 : index
    %c0_185 = arith.constant 0 : index
    %971 = vector.load %arg2[%c184, %c0_185] : memref<768x128xf32, #tpu.memory_space<vmem>>, vector<6x128xf32>
    tpu.vector_store %arg2[%c184, %c0_185], %969 {strides = array<i32>} : memref<768x128xf32, #tpu.memory_space<vmem>>, vector<6x128xf32>,
    %cst_186 = arith.constant 1.000000e-01 : f32
    %972 = vector.broadcast %cst_186 : f32 to vector<5x128xf32>
    %973 = arith.mulf %915, %972 : vector<5x128xf32>
    %974 = vector.extract_strided_slice %934 {offsets = [0, 0], sizes = [5, 128], strides = [1, 1]} : vector<9x128xf32> to vector<5x128xf32>
    %975 = vector.extract_strided_slice %934 {offsets = [4, 0], sizes = [5, 128], strides = [1, 1]} : vector<9x128xf32> to vector<5x128xf32>
    %976 = arith.mulf %974, %975 : vector<5x128xf32>
    %977 = arith.mulf %973, %976 : vector<5x128xf32>
    %c152 = arith.constant 152 : index
    %c0_187 = arith.constant 0 : index
    %978 = vector.load %arg2[%c152, %c0_187] : memref<768x128xf32, #tpu.memory_space<vmem>>, vector<5x128xf32>
    tpu.vector_store %arg2[%c152, %c0_187], %973 {strides = array<i32>} : memref<768x128xf32, #tpu.memory_space<vmem>>, vector<5x128xf32>,
    %c192 = arith.constant 192 : index
    %c0_188 = arith.constant 0 : index
    %979 = vector.load %arg2[%c192, %c0_188] : memref<768x128xf32, #tpu.memory_space<vmem>>, vector<5x128xf32>
    tpu.vector_store %arg2[%c192, %c0_188], %977 {strides = array<i32>} : memref<768x128xf32, #tpu.memory_space<vmem>>, vector<5x128xf32>,
    %cst_189 = arith.constant 1.000000e-01 : f32
    %980 = vector.broadcast %cst_189 : f32 to vector<4x128xf32>
    %981 = arith.mulf %919, %980 : vector<4x128xf32>
    %982 = vector.extract_strided_slice %934 {offsets = [0, 0], sizes = [4, 128], strides = [1, 1]} : vector<9x128xf32> to vector<4x128xf32>
    %983 = vector.extract_strided_slice %934 {offsets = [5, 0], sizes = [4, 128], strides = [1, 1]} : vector<9x128xf32> to vector<4x128xf32>
    %984 = arith.mulf %982, %983 : vector<4x128xf32>
    %985 = arith.mulf %981, %984 : vector<4x128xf32>
    %c160 = arith.constant 160 : index
    %c0_190 = arith.constant 0 : index
    %986 = vector.load %arg2[%c160, %c0_190] : memref<768x128xf32, #tpu.memory_space<vmem>>, vector<4x128xf32>
    tpu.vector_store %arg2[%c160, %c0_190], %981 {strides = array<i32>} : memref<768x128xf32, #tpu.memory_space<vmem>>, vector<4x128xf32>,
    %c200 = arith.constant 200 : index
    %c0_191 = arith.constant 0 : index
    %987 = vector.load %arg2[%c200, %c0_191] : memref<768x128xf32, #tpu.memory_space<vmem>>, vector<4x128xf32>
    tpu.vector_store %arg2[%c200, %c0_191], %985 {strides = array<i32>} : memref<768x128xf32, #tpu.memory_space<vmem>>, vector<4x128xf32>,
    %cst_192 = arith.constant 1.000000e-01 : f32
    %988 = vector.broadcast %cst_192 : f32 to vector<3x128xf32>
    %989 = arith.mulf %923, %988 : vector<3x128xf32>
    %990 = vector.extract_strided_slice %934 {offsets = [0, 0], sizes = [3, 128], strides = [1, 1]} : vector<9x128xf32> to vector<3x128xf32>
    %991 = vector.extract_strided_slice %934 {offsets = [6, 0], sizes = [3, 128], strides = [1, 1]} : vector<9x128xf32> to vector<3x128xf32>
    %992 = arith.mulf %990, %991 : vector<3x128xf32>
    %993 = arith.mulf %989, %992 : vector<3x128xf32>
    %c157 = arith.constant 157 : index
    %c0_193 = arith.constant 0 : index
    %994 = vector.load %arg2[%c157, %c0_193] : memref<768x128xf32, #tpu.memory_space<vmem>>, vector<3x128xf32>
    tpu.vector_store %arg2[%c157, %c0_193], %989 {strides = array<i32>} : memref<768x128xf32, #tpu.memory_space<vmem>>, vector<3x128xf32>,
    %c197 = arith.constant 197 : index
    %c0_194 = arith.constant 0 : index
    %995 = vector.load %arg2[%c197, %c0_194] : memref<768x128xf32, #tpu.memory_space<vmem>>, vector<3x128xf32>
    tpu.vector_store %arg2[%c197, %c0_194], %993 {strides = array<i32>} : memref<768x128xf32, #tpu.memory_space<vmem>>, vector<3x128xf32>,
    %cst_195 = arith.constant 1.000000e-01 : f32
    %996 = vector.broadcast %cst_195 : f32 to vector<2x128xf32>
    %997 = arith.mulf %927, %996 : vector<2x128xf32>
    %998 = vector.extract_strided_slice %934 {offsets = [0, 0], sizes = [2, 128], strides = [1, 1]} : vector<9x128xf32> to vector<2x128xf32>
    %999 = vector.extract_strided_slice %934 {offsets = [7, 0], sizes = [2, 128], strides = [1, 1]} : vector<9x128xf32> to vector<2x128xf32>
    %1000 = arith.mulf %998, %999 : vector<2x128xf32>
    %1001 = arith.mulf %997, %1000 : vector<2x128xf32>
    %c150 = arith.constant 150 : index
    %c0_196 = arith.constant 0 : index
    %1002 = vector.load %arg2[%c150, %c0_196] : memref<768x128xf32, #tpu.memory_space<vmem>>, vector<2x128xf32>
    tpu.vector_store %arg2[%c150, %c0_196], %997 {strides = array<i32>} : memref<768x128xf32, #tpu.memory_space<vmem>>, vector<2x128xf32>,
    %c190 = arith.constant 190 : index
    %c0_197 = arith.constant 0 : index
    %1003 = vector.load %arg2[%c190, %c0_197] : memref<768x128xf32, #tpu.memory_space<vmem>>, vector<2x128xf32>
    tpu.vector_store %arg2[%c190, %c0_197], %1001 {strides = array<i32>} : memref<768x128xf32, #tpu.memory_space<vmem>>, vector<2x128xf32>,
    %cst_198 = arith.constant 1.000000e-01 : f32
    %1004 = vector.broadcast %cst_198 : f32 to vector<1x128xf32>
    %1005 = arith.mulf %931, %1004 : vector<1x128xf32>
    %1006 = vector.extract_strided_slice %934 {offsets = [0, 0], sizes = [1, 128], strides = [1, 1]} : vector<9x128xf32> to vector<1x128xf32>
    %1007 = vector.extract_strided_slice %934 {offsets = [8, 0], sizes = [1, 128], strides = [1, 1]} : vector<9x128xf32> to vector<1x128xf32>
    %1008 = arith.mulf %1006, %1007 : vector<1x128xf32>
    %1009 = arith.mulf %1005, %1008 : vector<1x128xf32>
    %c143 = arith.constant 143 : index
    %c0_199 = arith.constant 0 : index
    %1010 = vector.load %arg2[%c143, %c0_199] : memref<768x128xf32, #tpu.memory_space<vmem>>, vector<1x128xf32>
    tpu.vector_store %arg2[%c143, %c0_199], %1005 {strides = array<i32>} : memref<768x128xf32, #tpu.memory_space<vmem>>, vector<1x128xf32>,
    %c183 = arith.constant 183 : index
    %c0_200 = arith.constant 0 : index
    %1011 = vector.load %arg2[%c183, %c0_200] : memref<768x128xf32, #tpu.memory_space<vmem>>, vector<1x128xf32>
    tpu.vector_store %arg2[%c183, %c0_200], %1009 {strides = array<i32>} : memref<768x128xf32, #tpu.memory_space<vmem>>, vector<1x128xf32>,
    %c164 = arith.constant 164 : index
    %c0_201 = arith.constant 0 : index
    %1012 = vector.load %arg2[%c164, %c0_201] : memref<768x128xf32, #tpu.memory_space<vmem>>, vector<4x128xf32>
    tpu.vector_store %arg2[%c164, %c0_201], %1 {strides = array<i32>} : memref<768x128xf32, #tpu.memory_space<vmem>>, vector<4x128xf32>,
    %c204 = arith.constant 204 : index
    %c0_202 = arith.constant 0 : index
    %1013 = vector.load %arg2[%c204, %c0_202] : memref<768x128xf32, #tpu.memory_space<vmem>>, vector<4x128xf32>
    tpu.vector_store %arg2[%c204, %c0_202], %1 {strides = array<i32>} : memref<768x128xf32, #tpu.memory_space<vmem>>, vector<4x128xf32>,
    %c208 = arith.constant 208 : index
    %c0_203 = arith.constant 0 : index
    %1014 = vector.load %arg2[%c208, %c0_203] : memref<768x128xf32, #tpu.memory_space<vmem>>, vector<9x128xf32>
    tpu.vector_store %arg2[%c208, %c0_203], %938 {strides = array<i32>} : memref<768x128xf32, #tpu.memory_space<vmem>>, vector<9x128xf32>,
    %c217 = arith.constant 217 : index
    %c0_204 = arith.constant 0 : index
    %1015 = vector.load %arg2[%c217, %c0_204] : memref<768x128xf32, #tpu.memory_space<vmem>>, vector<9x128xf32>
    tpu.vector_store %arg2[%c217, %c0_204], %939 {strides = array<i32>} : memref<768x128xf32, #tpu.memory_space<vmem>>, vector<9x128xf32>,
    %c226 = arith.constant 226 : index
    %c0_205 = arith.constant 0 : index
    %1016 = vector.load %arg2[%c226, %c0_205] : memref<768x128xf32, #tpu.memory_space<vmem>>, vector<9x128xf32>
    tpu.vector_store %arg2[%c226, %c0_205], %947 {strides = array<i32>} : memref<768x128xf32, #tpu.memory_space<vmem>>, vector<9x128xf32>,
    %c235 = arith.constant 235 : index
    %c0_206 = arith.constant 0 : index
    %1017 = vector.load %arg2[%c235, %c0_206] : memref<768x128xf32, #tpu.memory_space<vmem>>, vector<9x128xf32>
    tpu.vector_store %arg2[%c235, %c0_206], %899 {strides = array<i32>} : memref<768x128xf32, #tpu.memory_space<vmem>>, vector<9x128xf32>,
    %c244 = arith.constant 244 : index
    %c0_207 = arith.constant 0 : index
    %1018 = vector.load %arg2[%c244, %c0_207] : memref<768x128xf32, #tpu.memory_space<vmem>>, vector<9x128xf32>
    tpu.vector_store %arg2[%c244, %c0_207], %541 {strides = array<i32>} : memref<768x128xf32, #tpu.memory_space<vmem>>, vector<9x128xf32>,
    %c253 = arith.constant 253 : index
    %c0_208 = arith.constant 0 : index
    %1019 = vector.load %arg2[%c253, %c0_208] : memref<768x128xf32, #tpu.memory_space<vmem>>, vector<3x128xf32>
    tpu.vector_store %arg2[%c253, %c0_208], %0 {strides = array<i32>} : memref<768x128xf32, #tpu.memory_space<vmem>>, vector<3x128xf32>,
    %c20 = arith.constant 20 : index
    %c0_209 = arith.constant 0 : index
    %c0_210 = arith.constant 0 : index
    %1020 = vector.load %arg1[%c20, %c0_209, %c0_210] : memref<30x9x128xf32, #tpu.memory_space<vmem>>, vector<1x9x128xf32>
    %1021 = vector.shape_cast %1020 : vector<1x9x128xf32> to vector<9x128xf32>
    %c21 = arith.constant 21 : index
    %c0_211 = arith.constant 0 : index
    %c0_212 = arith.constant 0 : index
    %1022 = vector.load %arg1[%c21, %c0_211, %c0_212] : memref<30x9x128xf32, #tpu.memory_space<vmem>>, vector<1x9x128xf32>
    %1023 = vector.shape_cast %1022 : vector<1x9x128xf32> to vector<9x128xf32>
    %1024 = arith.addf %1021, %1023 : vector<9x128xf32>
    %c22_213 = arith.constant 22 : index
    %c0_214 = arith.constant 0 : index
    %c0_215 = arith.constant 0 : index
    %1025 = vector.load %arg1[%c22_213, %c0_214, %c0_215] : memref<30x9x128xf32, #tpu.memory_space<vmem>>, vector<1x9x128xf32>
    %1026 = vector.shape_cast %1025 : vector<1x9x128xf32> to vector<9x128xf32>
    %1027 = arith.addf %1024, %1026 : vector<9x128xf32>
    %c23 = arith.constant 23 : index
    %c0_216 = arith.constant 0 : index
    %c0_217 = arith.constant 0 : index
    %1028 = vector.load %arg1[%c23, %c0_216, %c0_217] : memref<30x9x128xf32, #tpu.memory_space<vmem>>, vector<1x9x128xf32>
    %1029 = vector.shape_cast %1028 : vector<1x9x128xf32> to vector<9x128xf32>
    %1030 = arith.addf %1027, %1029 : vector<9x128xf32>
    %c24_218 = arith.constant 24 : index
    %c0_219 = arith.constant 0 : index
    %c0_220 = arith.constant 0 : index
    %1031 = vector.load %arg1[%c24_218, %c0_219, %c0_220] : memref<30x9x128xf32, #tpu.memory_space<vmem>>, vector<1x9x128xf32>
    %1032 = vector.shape_cast %1031 : vector<1x9x128xf32> to vector<9x128xf32>
    %1033 = arith.addf %1030, %1032 : vector<9x128xf32>
    %c25 = arith.constant 25 : index
    %c0_221 = arith.constant 0 : index
    %c0_222 = arith.constant 0 : index
    %1034 = vector.load %arg1[%c25, %c0_221, %c0_222] : memref<30x9x128xf32, #tpu.memory_space<vmem>>, vector<1x9x128xf32>
    %1035 = vector.shape_cast %1034 : vector<1x9x128xf32> to vector<9x128xf32>
    %1036 = arith.addf %1033, %1035 : vector<9x128xf32>
    %c26 = arith.constant 26 : index
    %c0_223 = arith.constant 0 : index
    %c0_224 = arith.constant 0 : index
    %1037 = vector.load %arg1[%c26, %c0_223, %c0_224] : memref<30x9x128xf32, #tpu.memory_space<vmem>>, vector<1x9x128xf32>
    %1038 = vector.shape_cast %1037 : vector<1x9x128xf32> to vector<9x128xf32>
    %1039 = arith.addf %1036, %1038 : vector<9x128xf32>
    %c27 = arith.constant 27 : index
    %c0_225 = arith.constant 0 : index
    %c0_226 = arith.constant 0 : index
    %1040 = vector.load %arg1[%c27, %c0_225, %c0_226] : memref<30x9x128xf32, #tpu.memory_space<vmem>>, vector<1x9x128xf32>
    %1041 = vector.shape_cast %1040 : vector<1x9x128xf32> to vector<9x128xf32>
    %1042 = arith.addf %1039, %1041 : vector<9x128xf32>
    %c28 = arith.constant 28 : index
    %c0_227 = arith.constant 0 : index
    %c0_228 = arith.constant 0 : index
    %1043 = vector.load %arg1[%c28, %c0_227, %c0_228] : memref<30x9x128xf32, #tpu.memory_space<vmem>>, vector<1x9x128xf32>
    %1044 = vector.shape_cast %1043 : vector<1x9x128xf32> to vector<9x128xf32>
    %1045 = arith.addf %1042, %1044 : vector<9x128xf32>
    %c29_229 = arith.constant 29 : index
    %c0_230 = arith.constant 0 : index
    %c0_231 = arith.constant 0 : index
    %1046 = vector.load %arg1[%c29_229, %c0_230, %c0_231] : memref<30x9x128xf32, #tpu.memory_space<vmem>>, vector<1x9x128xf32>
    %1047 = vector.shape_cast %1046 : vector<1x9x128xf32> to vector<9x128xf32>
    %1048 = arith.addf %1045, %1047 : vector<9x128xf32>
    %cst_232 = arith.constant 1.000000e-01 : f32
    %1049 = vector.broadcast %cst_232 : f32 to vector<9x128xf32>
    %1050 = arith.mulf %1048, %1049 : vector<9x128xf32>
    %c20_233 = arith.constant 20 : index
    %c0_234 = arith.constant 0 : index
    %c0_235 = arith.constant 0 : index
    %1051 = vector.load %arg1[%c20_233, %c0_234, %c0_235] : memref<30x9x128xf32, #tpu.memory_space<vmem>>, vector<1x9x128xf32>
    %1052 = vector.shape_cast %1051 : vector<1x9x128xf32> to vector<9x128xf32>
    %1053 = arith.subf %1052, %1050 : vector<9x128xf32>
    %1054 = arith.mulf %1053, %1053 : vector<9x128xf32>
    %cst_236 = arith.constant 0.0181818176 : f32
    %1055 = vector.broadcast %cst_236 : f32 to vector<9x128xf32>
    %1056 = arith.mulf %1055, %1052 : vector<9x128xf32>
    %1057 = vector.extract_strided_slice %1053 {offsets = [0, 0], sizes = [8, 128], strides = [1, 1]} : vector<9x128xf32> to vector<8x128xf32>
    %1058 = vector.extract_strided_slice %1053 {offsets = [1, 0], sizes = [8, 128], strides = [1, 1]} : vector<9x128xf32> to vector<8x128xf32>
    %1059 = arith.mulf %1057, %1058 : vector<8x128xf32>
    %1060 = vector.extract_strided_slice %1053 {offsets = [0, 0], sizes = [7, 128], strides = [1, 1]} : vector<9x128xf32> to vector<7x128xf32>
    %1061 = vector.extract_strided_slice %1053 {offsets = [2, 0], sizes = [7, 128], strides = [1, 1]} : vector<9x128xf32> to vector<7x128xf32>
    %1062 = arith.mulf %1060, %1061 : vector<7x128xf32>
    %1063 = vector.extract_strided_slice %1053 {offsets = [0, 0], sizes = [6, 128], strides = [1, 1]} : vector<9x128xf32> to vector<6x128xf32>
    %1064 = vector.extract_strided_slice %1053 {offsets = [3, 0], sizes = [6, 128], strides = [1, 1]} : vector<9x128xf32> to vector<6x128xf32>
    %1065 = arith.mulf %1063, %1064 : vector<6x128xf32>
    %1066 = vector.extract_strided_slice %1053 {offsets = [0, 0], sizes = [5, 128], strides = [1, 1]} : vector<9x128xf32> to vector<5x128xf32>
    %1067 = vector.extract_strided_slice %1053 {offsets = [4, 0], sizes = [5, 128], strides = [1, 1]} : vector<9x128xf32> to vector<5x128xf32>
    %1068 = arith.mulf %1066, %1067 : vector<5x128xf32>
    %1069 = vector.extract_strided_slice %1053 {offsets = [0, 0], sizes = [4, 128], strides = [1, 1]} : vector<9x128xf32> to vector<4x128xf32>
    %1070 = vector.extract_strided_slice %1053 {offsets = [5, 0], sizes = [4, 128], strides = [1, 1]} : vector<9x128xf32> to vector<4x128xf32>
    %1071 = arith.mulf %1069, %1070 : vector<4x128xf32>
    %1072 = vector.extract_strided_slice %1053 {offsets = [0, 0], sizes = [3, 128], strides = [1, 1]} : vector<9x128xf32> to vector<3x128xf32>
    %1073 = vector.extract_strided_slice %1053 {offsets = [6, 0], sizes = [3, 128], strides = [1, 1]} : vector<9x128xf32> to vector<3x128xf32>
    %1074 = arith.mulf %1072, %1073 : vector<3x128xf32>
    %1075 = vector.extract_strided_slice %1053 {offsets = [0, 0], sizes = [2, 128], strides = [1, 1]} : vector<9x128xf32> to vector<2x128xf32>
    %1076 = vector.extract_strided_slice %1053 {offsets = [7, 0], sizes = [2, 128], strides = [1, 1]} : vector<9x128xf32> to vector<2x128xf32>
    %1077 = arith.mulf %1075, %1076 : vector<2x128xf32>
    %1078 = vector.extract_strided_slice %1053 {offsets = [0, 0], sizes = [1, 128], strides = [1, 1]} : vector<9x128xf32> to vector<1x128xf32>
    %1079 = vector.extract_strided_slice %1053 {offsets = [8, 0], sizes = [1, 128], strides = [1, 1]} : vector<9x128xf32> to vector<1x128xf32>
    %1080 = arith.mulf %1078, %1079 : vector<1x128xf32>
    %c21_237 = arith.constant 21 : index
    %c0_238 = arith.constant 0 : index
    %c0_239 = arith.constant 0 : index
    %1081 = vector.load %arg1[%c21_237, %c0_238, %c0_239] : memref<30x9x128xf32, #tpu.memory_space<vmem>>, vector<1x9x128xf32>
    %1082 = vector.shape_cast %1081 : vector<1x9x128xf32> to vector<9x128xf32>
    %1083 = arith.subf %1082, %1050 : vector<9x128xf32>
    %1084 = arith.mulf %1083, %1083 : vector<9x128xf32>
    %1085 = arith.addf %1054, %1084 : vector<9x128xf32>
    %cst_240 = arith.constant 0.0363636352 : f32
    %1086 = vector.broadcast %cst_240 : f32 to vector<9x128xf32>
    %1087 = arith.mulf %1086, %1082 : vector<9x128xf32>
    %1088 = arith.addf %1056, %1087 : vector<9x128xf32>
    %1089 = vector.extract_strided_slice %1083 {offsets = [0, 0], sizes = [8, 128], strides = [1, 1]} : vector<9x128xf32> to vector<8x128xf32>
    %1090 = vector.extract_strided_slice %1083 {offsets = [1, 0], sizes = [8, 128], strides = [1, 1]} : vector<9x128xf32> to vector<8x128xf32>
    %1091 = arith.mulf %1089, %1090 : vector<8x128xf32>
    %1092 = arith.addf %1059, %1091 : vector<8x128xf32>
    %1093 = vector.extract_strided_slice %1083 {offsets = [0, 0], sizes = [7, 128], strides = [1, 1]} : vector<9x128xf32> to vector<7x128xf32>
    %1094 = vector.extract_strided_slice %1083 {offsets = [2, 0], sizes = [7, 128], strides = [1, 1]} : vector<9x128xf32> to vector<7x128xf32>
    %1095 = arith.mulf %1093, %1094 : vector<7x128xf32>
    %1096 = arith.addf %1062, %1095 : vector<7x128xf32>
    %1097 = vector.extract_strided_slice %1083 {offsets = [0, 0], sizes = [6, 128], strides = [1, 1]} : vector<9x128xf32> to vector<6x128xf32>
    %1098 = vector.extract_strided_slice %1083 {offsets = [3, 0], sizes = [6, 128], strides = [1, 1]} : vector<9x128xf32> to vector<6x128xf32>
    %1099 = arith.mulf %1097, %1098 : vector<6x128xf32>
    %1100 = arith.addf %1065, %1099 : vector<6x128xf32>
    %1101 = vector.extract_strided_slice %1083 {offsets = [0, 0], sizes = [5, 128], strides = [1, 1]} : vector<9x128xf32> to vector<5x128xf32>
    %1102 = vector.extract_strided_slice %1083 {offsets = [4, 0], sizes = [5, 128], strides = [1, 1]} : vector<9x128xf32> to vector<5x128xf32>
    %1103 = arith.mulf %1101, %1102 : vector<5x128xf32>
    %1104 = arith.addf %1068, %1103 : vector<5x128xf32>
    %1105 = vector.extract_strided_slice %1083 {offsets = [0, 0], sizes = [4, 128], strides = [1, 1]} : vector<9x128xf32> to vector<4x128xf32>
    %1106 = vector.extract_strided_slice %1083 {offsets = [5, 0], sizes = [4, 128], strides = [1, 1]} : vector<9x128xf32> to vector<4x128xf32>
    %1107 = arith.mulf %1105, %1106 : vector<4x128xf32>
    %1108 = arith.addf %1071, %1107 : vector<4x128xf32>
    %1109 = vector.extract_strided_slice %1083 {offsets = [0, 0], sizes = [3, 128], strides = [1, 1]} : vector<9x128xf32> to vector<3x128xf32>
    %1110 = vector.extract_strided_slice %1083 {offsets = [6, 0], sizes = [3, 128], strides = [1, 1]} : vector<9x128xf32> to vector<3x128xf32>
    %1111 = arith.mulf %1109, %1110 : vector<3x128xf32>
    %1112 = arith.addf %1074, %1111 : vector<3x128xf32>
    %1113 = vector.extract_strided_slice %1083 {offsets = [0, 0], sizes = [2, 128], strides = [1, 1]} : vector<9x128xf32> to vector<2x128xf32>
    %1114 = vector.extract_strided_slice %1083 {offsets = [7, 0], sizes = [2, 128], strides = [1, 1]} : vector<9x128xf32> to vector<2x128xf32>
    %1115 = arith.mulf %1113, %1114 : vector<2x128xf32>
    %1116 = arith.addf %1077, %1115 : vector<2x128xf32>
    %1117 = vector.extract_strided_slice %1083 {offsets = [0, 0], sizes = [1, 128], strides = [1, 1]} : vector<9x128xf32> to vector<1x128xf32>
    %1118 = vector.extract_strided_slice %1083 {offsets = [8, 0], sizes = [1, 128], strides = [1, 1]} : vector<9x128xf32> to vector<1x128xf32>
    %1119 = arith.mulf %1117, %1118 : vector<1x128xf32>
    %1120 = arith.addf %1080, %1119 : vector<1x128xf32>
    %c22_241 = arith.constant 22 : index
    %c0_242 = arith.constant 0 : index
    %c0_243 = arith.constant 0 : index
    %1121 = vector.load %arg1[%c22_241, %c0_242, %c0_243] : memref<30x9x128xf32, #tpu.memory_space<vmem>>, vector<1x9x128xf32>
    %1122 = vector.shape_cast %1121 : vector<1x9x128xf32> to vector<9x128xf32>
    %1123 = arith.subf %1122, %1050 : vector<9x128xf32>
    %1124 = arith.mulf %1123, %1123 : vector<9x128xf32>
    %1125 = arith.addf %1085, %1124 : vector<9x128xf32>
    %cst_244 = arith.constant 0.0545454547 : f32
    %1126 = vector.broadcast %cst_244 : f32 to vector<9x128xf32>
    %1127 = arith.mulf %1126, %1122 : vector<9x128xf32>
    %1128 = arith.addf %1088, %1127 : vector<9x128xf32>
    %1129 = vector.extract_strided_slice %1123 {offsets = [0, 0], sizes = [8, 128], strides = [1, 1]} : vector<9x128xf32> to vector<8x128xf32>
    %1130 = vector.extract_strided_slice %1123 {offsets = [1, 0], sizes = [8, 128], strides = [1, 1]} : vector<9x128xf32> to vector<8x128xf32>
    %1131 = arith.mulf %1129, %1130 : vector<8x128xf32>
    %1132 = arith.addf %1092, %1131 : vector<8x128xf32>
    %1133 = vector.extract_strided_slice %1123 {offsets = [0, 0], sizes = [7, 128], strides = [1, 1]} : vector<9x128xf32> to vector<7x128xf32>
    %1134 = vector.extract_strided_slice %1123 {offsets = [2, 0], sizes = [7, 128], strides = [1, 1]} : vector<9x128xf32> to vector<7x128xf32>
    %1135 = arith.mulf %1133, %1134 : vector<7x128xf32>
    %1136 = arith.addf %1096, %1135 : vector<7x128xf32>
    %1137 = vector.extract_strided_slice %1123 {offsets = [0, 0], sizes = [6, 128], strides = [1, 1]} : vector<9x128xf32> to vector<6x128xf32>
    %1138 = vector.extract_strided_slice %1123 {offsets = [3, 0], sizes = [6, 128], strides = [1, 1]} : vector<9x128xf32> to vector<6x128xf32>
    %1139 = arith.mulf %1137, %1138 : vector<6x128xf32>
    %1140 = arith.addf %1100, %1139 : vector<6x128xf32>
    %1141 = vector.extract_strided_slice %1123 {offsets = [0, 0], sizes = [5, 128], strides = [1, 1]} : vector<9x128xf32> to vector<5x128xf32>
    %1142 = vector.extract_strided_slice %1123 {offsets = [4, 0], sizes = [5, 128], strides = [1, 1]} : vector<9x128xf32> to vector<5x128xf32>
    %1143 = arith.mulf %1141, %1142 : vector<5x128xf32>
    %1144 = arith.addf %1104, %1143 : vector<5x128xf32>
    %1145 = vector.extract_strided_slice %1123 {offsets = [0, 0], sizes = [4, 128], strides = [1, 1]} : vector<9x128xf32> to vector<4x128xf32>
    %1146 = vector.extract_strided_slice %1123 {offsets = [5, 0], sizes = [4, 128], strides = [1, 1]} : vector<9x128xf32> to vector<4x128xf32>
    %1147 = arith.mulf %1145, %1146 : vector<4x128xf32>
    %1148 = arith.addf %1108, %1147 : vector<4x128xf32>
    %1149 = vector.extract_strided_slice %1123 {offsets = [0, 0], sizes = [3, 128], strides = [1, 1]} : vector<9x128xf32> to vector<3x128xf32>
    %1150 = vector.extract_strided_slice %1123 {offsets = [6, 0], sizes = [3, 128], strides = [1, 1]} : vector<9x128xf32> to vector<3x128xf32>
    %1151 = arith.mulf %1149, %1150 : vector<3x128xf32>
    %1152 = arith.addf %1112, %1151 : vector<3x128xf32>
    %1153 = vector.extract_strided_slice %1123 {offsets = [0, 0], sizes = [2, 128], strides = [1, 1]} : vector<9x128xf32> to vector<2x128xf32>
    %1154 = vector.extract_strided_slice %1123 {offsets = [7, 0], sizes = [2, 128], strides = [1, 1]} : vector<9x128xf32> to vector<2x128xf32>
    %1155 = arith.mulf %1153, %1154 : vector<2x128xf32>
    %1156 = arith.addf %1116, %1155 : vector<2x128xf32>
    %1157 = vector.extract_strided_slice %1123 {offsets = [0, 0], sizes = [1, 128], strides = [1, 1]} : vector<9x128xf32> to vector<1x128xf32>
    %1158 = vector.extract_strided_slice %1123 {offsets = [8, 0], sizes = [1, 128], strides = [1, 1]} : vector<9x128xf32> to vector<1x128xf32>
    %1159 = arith.mulf %1157, %1158 : vector<1x128xf32>
    %1160 = arith.addf %1120, %1159 : vector<1x128xf32>
    %c23_245 = arith.constant 23 : index
    %c0_246 = arith.constant 0 : index
    %c0_247 = arith.constant 0 : index
    %1161 = vector.load %arg1[%c23_245, %c0_246, %c0_247] : memref<30x9x128xf32, #tpu.memory_space<vmem>>, vector<1x9x128xf32>
    %1162 = vector.shape_cast %1161 : vector<1x9x128xf32> to vector<9x128xf32>
    %1163 = arith.subf %1162, %1050 : vector<9x128xf32>
    %1164 = arith.mulf %1163, %1163 : vector<9x128xf32>
    %1165 = arith.addf %1125, %1164 : vector<9x128xf32>
    %cst_248 = arith.constant 0.0727272704 : f32
    %1166 = vector.broadcast %cst_248 : f32 to vector<9x128xf32>
    %1167 = arith.mulf %1166, %1162 : vector<9x128xf32>
    %1168 = arith.addf %1128, %1167 : vector<9x128xf32>
    %1169 = vector.extract_strided_slice %1163 {offsets = [0, 0], sizes = [8, 128], strides = [1, 1]} : vector<9x128xf32> to vector<8x128xf32>
    %1170 = vector.extract_strided_slice %1163 {offsets = [1, 0], sizes = [8, 128], strides = [1, 1]} : vector<9x128xf32> to vector<8x128xf32>
    %1171 = arith.mulf %1169, %1170 : vector<8x128xf32>
    %1172 = arith.addf %1132, %1171 : vector<8x128xf32>
    %1173 = vector.extract_strided_slice %1163 {offsets = [0, 0], sizes = [7, 128], strides = [1, 1]} : vector<9x128xf32> to vector<7x128xf32>
    %1174 = vector.extract_strided_slice %1163 {offsets = [2, 0], sizes = [7, 128], strides = [1, 1]} : vector<9x128xf32> to vector<7x128xf32>
    %1175 = arith.mulf %1173, %1174 : vector<7x128xf32>
    %1176 = arith.addf %1136, %1175 : vector<7x128xf32>
    %1177 = vector.extract_strided_slice %1163 {offsets = [0, 0], sizes = [6, 128], strides = [1, 1]} : vector<9x128xf32> to vector<6x128xf32>
    %1178 = vector.extract_strided_slice %1163 {offsets = [3, 0], sizes = [6, 128], strides = [1, 1]} : vector<9x128xf32> to vector<6x128xf32>
    %1179 = arith.mulf %1177, %1178 : vector<6x128xf32>
    %1180 = arith.addf %1140, %1179 : vector<6x128xf32>
    %1181 = vector.extract_strided_slice %1163 {offsets = [0, 0], sizes = [5, 128], strides = [1, 1]} : vector<9x128xf32> to vector<5x128xf32>
    %1182 = vector.extract_strided_slice %1163 {offsets = [4, 0], sizes = [5, 128], strides = [1, 1]} : vector<9x128xf32> to vector<5x128xf32>
    %1183 = arith.mulf %1181, %1182 : vector<5x128xf32>
    %1184 = arith.addf %1144, %1183 : vector<5x128xf32>
    %1185 = vector.extract_strided_slice %1163 {offsets = [0, 0], sizes = [4, 128], strides = [1, 1]} : vector<9x128xf32> to vector<4x128xf32>
    %1186 = vector.extract_strided_slice %1163 {offsets = [5, 0], sizes = [4, 128], strides = [1, 1]} : vector<9x128xf32> to vector<4x128xf32>
    %1187 = arith.mulf %1185, %1186 : vector<4x128xf32>
    %1188 = arith.addf %1148, %1187 : vector<4x128xf32>
    %1189 = vector.extract_strided_slice %1163 {offsets = [0, 0], sizes = [3, 128], strides = [1, 1]} : vector<9x128xf32> to vector<3x128xf32>
    %1190 = vector.extract_strided_slice %1163 {offsets = [6, 0], sizes = [3, 128], strides = [1, 1]} : vector<9x128xf32> to vector<3x128xf32>
    %1191 = arith.mulf %1189, %1190 : vector<3x128xf32>
    %1192 = arith.addf %1152, %1191 : vector<3x128xf32>
    %1193 = vector.extract_strided_slice %1163 {offsets = [0, 0], sizes = [2, 128], strides = [1, 1]} : vector<9x128xf32> to vector<2x128xf32>
    %1194 = vector.extract_strided_slice %1163 {offsets = [7, 0], sizes = [2, 128], strides = [1, 1]} : vector<9x128xf32> to vector<2x128xf32>
    %1195 = arith.mulf %1193, %1194 : vector<2x128xf32>
    %1196 = arith.addf %1156, %1195 : vector<2x128xf32>
    %1197 = vector.extract_strided_slice %1163 {offsets = [0, 0], sizes = [1, 128], strides = [1, 1]} : vector<9x128xf32> to vector<1x128xf32>
    %1198 = vector.extract_strided_slice %1163 {offsets = [8, 0], sizes = [1, 128], strides = [1, 1]} : vector<9x128xf32> to vector<1x128xf32>
    %1199 = arith.mulf %1197, %1198 : vector<1x128xf32>
    %1200 = arith.addf %1160, %1199 : vector<1x128xf32>
    %c24_249 = arith.constant 24 : index
    %c0_250 = arith.constant 0 : index
    %c0_251 = arith.constant 0 : index
    %1201 = vector.load %arg1[%c24_249, %c0_250, %c0_251] : memref<30x9x128xf32, #tpu.memory_space<vmem>>, vector<1x9x128xf32>
    %1202 = vector.shape_cast %1201 : vector<1x9x128xf32> to vector<9x128xf32>
    %1203 = arith.subf %1202, %1050 : vector<9x128xf32>
    %1204 = arith.mulf %1203, %1203 : vector<9x128xf32>
    %1205 = arith.addf %1165, %1204 : vector<9x128xf32>
    %cst_252 = arith.constant 0.0909090936 : f32
    %1206 = vector.broadcast %cst_252 : f32 to vector<9x128xf32>
    %1207 = arith.mulf %1206, %1202 : vector<9x128xf32>
    %1208 = arith.addf %1168, %1207 : vector<9x128xf32>
    %1209 = vector.extract_strided_slice %1203 {offsets = [0, 0], sizes = [8, 128], strides = [1, 1]} : vector<9x128xf32> to vector<8x128xf32>
    %1210 = vector.extract_strided_slice %1203 {offsets = [1, 0], sizes = [8, 128], strides = [1, 1]} : vector<9x128xf32> to vector<8x128xf32>
    %1211 = arith.mulf %1209, %1210 : vector<8x128xf32>
    %1212 = arith.addf %1172, %1211 : vector<8x128xf32>
    %1213 = vector.extract_strided_slice %1203 {offsets = [0, 0], sizes = [7, 128], strides = [1, 1]} : vector<9x128xf32> to vector<7x128xf32>
    %1214 = vector.extract_strided_slice %1203 {offsets = [2, 0], sizes = [7, 128], strides = [1, 1]} : vector<9x128xf32> to vector<7x128xf32>
    %1215 = arith.mulf %1213, %1214 : vector<7x128xf32>
    %1216 = arith.addf %1176, %1215 : vector<7x128xf32>
    %1217 = vector.extract_strided_slice %1203 {offsets = [0, 0], sizes = [6, 128], strides = [1, 1]} : vector<9x128xf32> to vector<6x128xf32>
    %1218 = vector.extract_strided_slice %1203 {offsets = [3, 0], sizes = [6, 128], strides = [1, 1]} : vector<9x128xf32> to vector<6x128xf32>
    %1219 = arith.mulf %1217, %1218 : vector<6x128xf32>
    %1220 = arith.addf %1180, %1219 : vector<6x128xf32>
    %1221 = vector.extract_strided_slice %1203 {offsets = [0, 0], sizes = [5, 128], strides = [1, 1]} : vector<9x128xf32> to vector<5x128xf32>
    %1222 = vector.extract_strided_slice %1203 {offsets = [4, 0], sizes = [5, 128], strides = [1, 1]} : vector<9x128xf32> to vector<5x128xf32>
    %1223 = arith.mulf %1221, %1222 : vector<5x128xf32>
    %1224 = arith.addf %1184, %1223 : vector<5x128xf32>
    %1225 = vector.extract_strided_slice %1203 {offsets = [0, 0], sizes = [4, 128], strides = [1, 1]} : vector<9x128xf32> to vector<4x128xf32>
    %1226 = vector.extract_strided_slice %1203 {offsets = [5, 0], sizes = [4, 128], strides = [1, 1]} : vector<9x128xf32> to vector<4x128xf32>
    %1227 = arith.mulf %1225, %1226 : vector<4x128xf32>
    %1228 = arith.addf %1188, %1227 : vector<4x128xf32>
    %1229 = vector.extract_strided_slice %1203 {offsets = [0, 0], sizes = [3, 128], strides = [1, 1]} : vector<9x128xf32> to vector<3x128xf32>
    %1230 = vector.extract_strided_slice %1203 {offsets = [6, 0], sizes = [3, 128], strides = [1, 1]} : vector<9x128xf32> to vector<3x128xf32>
    %1231 = arith.mulf %1229, %1230 : vector<3x128xf32>
    %1232 = arith.addf %1192, %1231 : vector<3x128xf32>
    %1233 = vector.extract_strided_slice %1203 {offsets = [0, 0], sizes = [2, 128], strides = [1, 1]} : vector<9x128xf32> to vector<2x128xf32>
    %1234 = vector.extract_strided_slice %1203 {offsets = [7, 0], sizes = [2, 128], strides = [1, 1]} : vector<9x128xf32> to vector<2x128xf32>
    %1235 = arith.mulf %1233, %1234 : vector<2x128xf32>
    %1236 = arith.addf %1196, %1235 : vector<2x128xf32>
    %1237 = vector.extract_strided_slice %1203 {offsets = [0, 0], sizes = [1, 128], strides = [1, 1]} : vector<9x128xf32> to vector<1x128xf32>
    %1238 = vector.extract_strided_slice %1203 {offsets = [8, 0], sizes = [1, 128], strides = [1, 1]} : vector<9x128xf32> to vector<1x128xf32>
    %1239 = arith.mulf %1237, %1238 : vector<1x128xf32>
    %1240 = arith.addf %1200, %1239 : vector<1x128xf32>
    %c25_253 = arith.constant 25 : index
    %c0_254 = arith.constant 0 : index
    %c0_255 = arith.constant 0 : index
    %1241 = vector.load %arg1[%c25_253, %c0_254, %c0_255] : memref<30x9x128xf32, #tpu.memory_space<vmem>>, vector<1x9x128xf32>
    %1242 = vector.shape_cast %1241 : vector<1x9x128xf32> to vector<9x128xf32>
    %1243 = arith.subf %1242, %1050 : vector<9x128xf32>
    %1244 = arith.mulf %1243, %1243 : vector<9x128xf32>
    %1245 = arith.addf %1205, %1244 : vector<9x128xf32>
    %cst_256 = arith.constant 0.109090909 : f32
    %1246 = vector.broadcast %cst_256 : f32 to vector<9x128xf32>
    %1247 = arith.mulf %1246, %1242 : vector<9x128xf32>
    %1248 = arith.addf %1208, %1247 : vector<9x128xf32>
    %1249 = vector.extract_strided_slice %1243 {offsets = [0, 0], sizes = [8, 128], strides = [1, 1]} : vector<9x128xf32> to vector<8x128xf32>
    %1250 = vector.extract_strided_slice %1243 {offsets = [1, 0], sizes = [8, 128], strides = [1, 1]} : vector<9x128xf32> to vector<8x128xf32>
    %1251 = arith.mulf %1249, %1250 : vector<8x128xf32>
    %1252 = arith.addf %1212, %1251 : vector<8x128xf32>
    %1253 = vector.extract_strided_slice %1243 {offsets = [0, 0], sizes = [7, 128], strides = [1, 1]} : vector<9x128xf32> to vector<7x128xf32>
    %1254 = vector.extract_strided_slice %1243 {offsets = [2, 0], sizes = [7, 128], strides = [1, 1]} : vector<9x128xf32> to vector<7x128xf32>
    %1255 = arith.mulf %1253, %1254 : vector<7x128xf32>
    %1256 = arith.addf %1216, %1255 : vector<7x128xf32>
    %1257 = vector.extract_strided_slice %1243 {offsets = [0, 0], sizes = [6, 128], strides = [1, 1]} : vector<9x128xf32> to vector<6x128xf32>
    %1258 = vector.extract_strided_slice %1243 {offsets = [3, 0], sizes = [6, 128], strides = [1, 1]} : vector<9x128xf32> to vector<6x128xf32>
    %1259 = arith.mulf %1257, %1258 : vector<6x128xf32>
    %1260 = arith.addf %1220, %1259 : vector<6x128xf32>
    %1261 = vector.extract_strided_slice %1243 {offsets = [0, 0], sizes = [5, 128], strides = [1, 1]} : vector<9x128xf32> to vector<5x128xf32>
    %1262 = vector.extract_strided_slice %1243 {offsets = [4, 0], sizes = [5, 128], strides = [1, 1]} : vector<9x128xf32> to vector<5x128xf32>
    %1263 = arith.mulf %1261, %1262 : vector<5x128xf32>
    %1264 = arith.addf %1224, %1263 : vector<5x128xf32>
    %1265 = vector.extract_strided_slice %1243 {offsets = [0, 0], sizes = [4, 128], strides = [1, 1]} : vector<9x128xf32> to vector<4x128xf32>
    %1266 = vector.extract_strided_slice %1243 {offsets = [5, 0], sizes = [4, 128], strides = [1, 1]} : vector<9x128xf32> to vector<4x128xf32>
    %1267 = arith.mulf %1265, %1266 : vector<4x128xf32>
    %1268 = arith.addf %1228, %1267 : vector<4x128xf32>
    %1269 = vector.extract_strided_slice %1243 {offsets = [0, 0], sizes = [3, 128], strides = [1, 1]} : vector<9x128xf32> to vector<3x128xf32>
    %1270 = vector.extract_strided_slice %1243 {offsets = [6, 0], sizes = [3, 128], strides = [1, 1]} : vector<9x128xf32> to vector<3x128xf32>
    %1271 = arith.mulf %1269, %1270 : vector<3x128xf32>
    %1272 = arith.addf %1232, %1271 : vector<3x128xf32>
    %1273 = vector.extract_strided_slice %1243 {offsets = [0, 0], sizes = [2, 128], strides = [1, 1]} : vector<9x128xf32> to vector<2x128xf32>
    %1274 = vector.extract_strided_slice %1243 {offsets = [7, 0], sizes = [2, 128], strides = [1, 1]} : vector<9x128xf32> to vector<2x128xf32>
    %1275 = arith.mulf %1273, %1274 : vector<2x128xf32>
    %1276 = arith.addf %1236, %1275 : vector<2x128xf32>
    %1277 = vector.extract_strided_slice %1243 {offsets = [0, 0], sizes = [1, 128], strides = [1, 1]} : vector<9x128xf32> to vector<1x128xf32>
    %1278 = vector.extract_strided_slice %1243 {offsets = [8, 0], sizes = [1, 128], strides = [1, 1]} : vector<9x128xf32> to vector<1x128xf32>
    %1279 = arith.mulf %1277, %1278 : vector<1x128xf32>
    %1280 = arith.addf %1240, %1279 : vector<1x128xf32>
    %c26_257 = arith.constant 26 : index
    %c0_258 = arith.constant 0 : index
    %c0_259 = arith.constant 0 : index
    %1281 = vector.load %arg1[%c26_257, %c0_258, %c0_259] : memref<30x9x128xf32, #tpu.memory_space<vmem>>, vector<1x9x128xf32>
    %1282 = vector.shape_cast %1281 : vector<1x9x128xf32> to vector<9x128xf32>
    %1283 = arith.subf %1282, %1050 : vector<9x128xf32>
    %1284 = arith.mulf %1283, %1283 : vector<9x128xf32>
    %1285 = arith.addf %1245, %1284 : vector<9x128xf32>
    %cst_260 = arith.constant 0.127272725 : f32
    %1286 = vector.broadcast %cst_260 : f32 to vector<9x128xf32>
    %1287 = arith.mulf %1286, %1282 : vector<9x128xf32>
    %1288 = arith.addf %1248, %1287 : vector<9x128xf32>
    %1289 = vector.extract_strided_slice %1283 {offsets = [0, 0], sizes = [8, 128], strides = [1, 1]} : vector<9x128xf32> to vector<8x128xf32>
    %1290 = vector.extract_strided_slice %1283 {offsets = [1, 0], sizes = [8, 128], strides = [1, 1]} : vector<9x128xf32> to vector<8x128xf32>
    %1291 = arith.mulf %1289, %1290 : vector<8x128xf32>
    %1292 = arith.addf %1252, %1291 : vector<8x128xf32>
    %1293 = vector.extract_strided_slice %1283 {offsets = [0, 0], sizes = [7, 128], strides = [1, 1]} : vector<9x128xf32> to vector<7x128xf32>
    %1294 = vector.extract_strided_slice %1283 {offsets = [2, 0], sizes = [7, 128], strides = [1, 1]} : vector<9x128xf32> to vector<7x128xf32>
    %1295 = arith.mulf %1293, %1294 : vector<7x128xf32>
    %1296 = arith.addf %1256, %1295 : vector<7x128xf32>
    %1297 = vector.extract_strided_slice %1283 {offsets = [0, 0], sizes = [6, 128], strides = [1, 1]} : vector<9x128xf32> to vector<6x128xf32>
    %1298 = vector.extract_strided_slice %1283 {offsets = [3, 0], sizes = [6, 128], strides = [1, 1]} : vector<9x128xf32> to vector<6x128xf32>
    %1299 = arith.mulf %1297, %1298 : vector<6x128xf32>
    %1300 = arith.addf %1260, %1299 : vector<6x128xf32>
    %1301 = vector.extract_strided_slice %1283 {offsets = [0, 0], sizes = [5, 128], strides = [1, 1]} : vector<9x128xf32> to vector<5x128xf32>
    %1302 = vector.extract_strided_slice %1283 {offsets = [4, 0], sizes = [5, 128], strides = [1, 1]} : vector<9x128xf32> to vector<5x128xf32>
    %1303 = arith.mulf %1301, %1302 : vector<5x128xf32>
    %1304 = arith.addf %1264, %1303 : vector<5x128xf32>
    %1305 = vector.extract_strided_slice %1283 {offsets = [0, 0], sizes = [4, 128], strides = [1, 1]} : vector<9x128xf32> to vector<4x128xf32>
    %1306 = vector.extract_strided_slice %1283 {offsets = [5, 0], sizes = [4, 128], strides = [1, 1]} : vector<9x128xf32> to vector<4x128xf32>
    %1307 = arith.mulf %1305, %1306 : vector<4x128xf32>
    %1308 = arith.addf %1268, %1307 : vector<4x128xf32>
    %1309 = vector.extract_strided_slice %1283 {offsets = [0, 0], sizes = [3, 128], strides = [1, 1]} : vector<9x128xf32> to vector<3x128xf32>
    %1310 = vector.extract_strided_slice %1283 {offsets = [6, 0], sizes = [3, 128], strides = [1, 1]} : vector<9x128xf32> to vector<3x128xf32>
    %1311 = arith.mulf %1309, %1310 : vector<3x128xf32>
    %1312 = arith.addf %1272, %1311 : vector<3x128xf32>
    %1313 = vector.extract_strided_slice %1283 {offsets = [0, 0], sizes = [2, 128], strides = [1, 1]} : vector<9x128xf32> to vector<2x128xf32>
    %1314 = vector.extract_strided_slice %1283 {offsets = [7, 0], sizes = [2, 128], strides = [1, 1]} : vector<9x128xf32> to vector<2x128xf32>
    %1315 = arith.mulf %1313, %1314 : vector<2x128xf32>
    %1316 = arith.addf %1276, %1315 : vector<2x128xf32>
    %1317 = vector.extract_strided_slice %1283 {offsets = [0, 0], sizes = [1, 128], strides = [1, 1]} : vector<9x128xf32> to vector<1x128xf32>
    %1318 = vector.extract_strided_slice %1283 {offsets = [8, 0], sizes = [1, 128], strides = [1, 1]} : vector<9x128xf32> to vector<1x128xf32>
    %1319 = arith.mulf %1317, %1318 : vector<1x128xf32>
    %1320 = arith.addf %1280, %1319 : vector<1x128xf32>
    %c27_261 = arith.constant 27 : index
    %c0_262 = arith.constant 0 : index
    %c0_263 = arith.constant 0 : index
    %1321 = vector.load %arg1[%c27_261, %c0_262, %c0_263] : memref<30x9x128xf32, #tpu.memory_space<vmem>>, vector<1x9x128xf32>
    %1322 = vector.shape_cast %1321 : vector<1x9x128xf32> to vector<9x128xf32>
    %1323 = arith.subf %1322, %1050 : vector<9x128xf32>
    %1324 = arith.mulf %1323, %1323 : vector<9x128xf32>
    %1325 = arith.addf %1285, %1324 : vector<9x128xf32>
    %cst_264 = arith.constant 0.145454541 : f32
    %1326 = vector.broadcast %cst_264 : f32 to vector<9x128xf32>
    %1327 = arith.mulf %1326, %1322 : vector<9x128xf32>
    %1328 = arith.addf %1288, %1327 : vector<9x128xf32>
    %1329 = vector.extract_strided_slice %1323 {offsets = [0, 0], sizes = [8, 128], strides = [1, 1]} : vector<9x128xf32> to vector<8x128xf32>
    %1330 = vector.extract_strided_slice %1323 {offsets = [1, 0], sizes = [8, 128], strides = [1, 1]} : vector<9x128xf32> to vector<8x128xf32>
    %1331 = arith.mulf %1329, %1330 : vector<8x128xf32>
    %1332 = arith.addf %1292, %1331 : vector<8x128xf32>
    %1333 = vector.extract_strided_slice %1323 {offsets = [0, 0], sizes = [7, 128], strides = [1, 1]} : vector<9x128xf32> to vector<7x128xf32>
    %1334 = vector.extract_strided_slice %1323 {offsets = [2, 0], sizes = [7, 128], strides = [1, 1]} : vector<9x128xf32> to vector<7x128xf32>
    %1335 = arith.mulf %1333, %1334 : vector<7x128xf32>
    %1336 = arith.addf %1296, %1335 : vector<7x128xf32>
    %1337 = vector.extract_strided_slice %1323 {offsets = [0, 0], sizes = [6, 128], strides = [1, 1]} : vector<9x128xf32> to vector<6x128xf32>
    %1338 = vector.extract_strided_slice %1323 {offsets = [3, 0], sizes = [6, 128], strides = [1, 1]} : vector<9x128xf32> to vector<6x128xf32>
    %1339 = arith.mulf %1337, %1338 : vector<6x128xf32>
    %1340 = arith.addf %1300, %1339 : vector<6x128xf32>
    %1341 = vector.extract_strided_slice %1323 {offsets = [0, 0], sizes = [5, 128], strides = [1, 1]} : vector<9x128xf32> to vector<5x128xf32>
    %1342 = vector.extract_strided_slice %1323 {offsets = [4, 0], sizes = [5, 128], strides = [1, 1]} : vector<9x128xf32> to vector<5x128xf32>
    %1343 = arith.mulf %1341, %1342 : vector<5x128xf32>
    %1344 = arith.addf %1304, %1343 : vector<5x128xf32>
    %1345 = vector.extract_strided_slice %1323 {offsets = [0, 0], sizes = [4, 128], strides = [1, 1]} : vector<9x128xf32> to vector<4x128xf32>
    %1346 = vector.extract_strided_slice %1323 {offsets = [5, 0], sizes = [4, 128], strides = [1, 1]} : vector<9x128xf32> to vector<4x128xf32>
    %1347 = arith.mulf %1345, %1346 : vector<4x128xf32>
    %1348 = arith.addf %1308, %1347 : vector<4x128xf32>
    %1349 = vector.extract_strided_slice %1323 {offsets = [0, 0], sizes = [3, 128], strides = [1, 1]} : vector<9x128xf32> to vector<3x128xf32>
    %1350 = vector.extract_strided_slice %1323 {offsets = [6, 0], sizes = [3, 128], strides = [1, 1]} : vector<9x128xf32> to vector<3x128xf32>
    %1351 = arith.mulf %1349, %1350 : vector<3x128xf32>
    %1352 = arith.addf %1312, %1351 : vector<3x128xf32>
    %1353 = vector.extract_strided_slice %1323 {offsets = [0, 0], sizes = [2, 128], strides = [1, 1]} : vector<9x128xf32> to vector<2x128xf32>
    %1354 = vector.extract_strided_slice %1323 {offsets = [7, 0], sizes = [2, 128], strides = [1, 1]} : vector<9x128xf32> to vector<2x128xf32>
    %1355 = arith.mulf %1353, %1354 : vector<2x128xf32>
    %1356 = arith.addf %1316, %1355 : vector<2x128xf32>
    %1357 = vector.extract_strided_slice %1323 {offsets = [0, 0], sizes = [1, 128], strides = [1, 1]} : vector<9x128xf32> to vector<1x128xf32>
    %1358 = vector.extract_strided_slice %1323 {offsets = [8, 0], sizes = [1, 128], strides = [1, 1]} : vector<9x128xf32> to vector<1x128xf32>
    %1359 = arith.mulf %1357, %1358 : vector<1x128xf32>
    %1360 = arith.addf %1320, %1359 : vector<1x128xf32>
    %c28_265 = arith.constant 28 : index
    %c0_266 = arith.constant 0 : index
    %c0_267 = arith.constant 0 : index
    %1361 = vector.load %arg1[%c28_265, %c0_266, %c0_267] : memref<30x9x128xf32, #tpu.memory_space<vmem>>, vector<1x9x128xf32>
    %1362 = vector.shape_cast %1361 : vector<1x9x128xf32> to vector<9x128xf32>
    %1363 = arith.subf %1362, %1050 : vector<9x128xf32>
    %1364 = arith.mulf %1363, %1363 : vector<9x128xf32>
    %1365 = arith.addf %1325, %1364 : vector<9x128xf32>
    %cst_268 = arith.constant 0.163636357 : f32
    %1366 = vector.broadcast %cst_268 : f32 to vector<9x128xf32>
    %1367 = arith.mulf %1366, %1362 : vector<9x128xf32>
    %1368 = arith.addf %1328, %1367 : vector<9x128xf32>
    %1369 = vector.extract_strided_slice %1363 {offsets = [0, 0], sizes = [8, 128], strides = [1, 1]} : vector<9x128xf32> to vector<8x128xf32>
    %1370 = vector.extract_strided_slice %1363 {offsets = [1, 0], sizes = [8, 128], strides = [1, 1]} : vector<9x128xf32> to vector<8x128xf32>
    %1371 = arith.mulf %1369, %1370 : vector<8x128xf32>
    %1372 = arith.addf %1332, %1371 : vector<8x128xf32>
    %1373 = vector.extract_strided_slice %1363 {offsets = [0, 0], sizes = [7, 128], strides = [1, 1]} : vector<9x128xf32> to vector<7x128xf32>
    %1374 = vector.extract_strided_slice %1363 {offsets = [2, 0], sizes = [7, 128], strides = [1, 1]} : vector<9x128xf32> to vector<7x128xf32>
    %1375 = arith.mulf %1373, %1374 : vector<7x128xf32>
    %1376 = arith.addf %1336, %1375 : vector<7x128xf32>
    %1377 = vector.extract_strided_slice %1363 {offsets = [0, 0], sizes = [6, 128], strides = [1, 1]} : vector<9x128xf32> to vector<6x128xf32>
    %1378 = vector.extract_strided_slice %1363 {offsets = [3, 0], sizes = [6, 128], strides = [1, 1]} : vector<9x128xf32> to vector<6x128xf32>
    %1379 = arith.mulf %1377, %1378 : vector<6x128xf32>
    %1380 = arith.addf %1340, %1379 : vector<6x128xf32>
    %1381 = vector.extract_strided_slice %1363 {offsets = [0, 0], sizes = [5, 128], strides = [1, 1]} : vector<9x128xf32> to vector<5x128xf32>
    %1382 = vector.extract_strided_slice %1363 {offsets = [4, 0], sizes = [5, 128], strides = [1, 1]} : vector<9x128xf32> to vector<5x128xf32>
    %1383 = arith.mulf %1381, %1382 : vector<5x128xf32>
    %1384 = arith.addf %1344, %1383 : vector<5x128xf32>
    %1385 = vector.extract_strided_slice %1363 {offsets = [0, 0], sizes = [4, 128], strides = [1, 1]} : vector<9x128xf32> to vector<4x128xf32>
    %1386 = vector.extract_strided_slice %1363 {offsets = [5, 0], sizes = [4, 128], strides = [1, 1]} : vector<9x128xf32> to vector<4x128xf32>
    %1387 = arith.mulf %1385, %1386 : vector<4x128xf32>
    %1388 = arith.addf %1348, %1387 : vector<4x128xf32>
    %1389 = vector.extract_strided_slice %1363 {offsets = [0, 0], sizes = [3, 128], strides = [1, 1]} : vector<9x128xf32> to vector<3x128xf32>
    %1390 = vector.extract_strided_slice %1363 {offsets = [6, 0], sizes = [3, 128], strides = [1, 1]} : vector<9x128xf32> to vector<3x128xf32>
    %1391 = arith.mulf %1389, %1390 : vector<3x128xf32>
    %1392 = arith.addf %1352, %1391 : vector<3x128xf32>
    %1393 = vector.extract_strided_slice %1363 {offsets = [0, 0], sizes = [2, 128], strides = [1, 1]} : vector<9x128xf32> to vector<2x128xf32>
    %1394 = vector.extract_strided_slice %1363 {offsets = [7, 0], sizes = [2, 128], strides = [1, 1]} : vector<9x128xf32> to vector<2x128xf32>
    %1395 = arith.mulf %1393, %1394 : vector<2x128xf32>
    %1396 = arith.addf %1356, %1395 : vector<2x128xf32>
    %1397 = vector.extract_strided_slice %1363 {offsets = [0, 0], sizes = [1, 128], strides = [1, 1]} : vector<9x128xf32> to vector<1x128xf32>
    %1398 = vector.extract_strided_slice %1363 {offsets = [8, 0], sizes = [1, 128], strides = [1, 1]} : vector<9x128xf32> to vector<1x128xf32>
    %1399 = arith.mulf %1397, %1398 : vector<1x128xf32>
    %1400 = arith.addf %1360, %1399 : vector<1x128xf32>
    %c29_269 = arith.constant 29 : index
    %c0_270 = arith.constant 0 : index
    %c0_271 = arith.constant 0 : index
    %1401 = vector.load %arg1[%c29_269, %c0_270, %c0_271] : memref<30x9x128xf32, #tpu.memory_space<vmem>>, vector<1x9x128xf32>
    %1402 = vector.shape_cast %1401 : vector<1x9x128xf32> to vector<9x128xf32>
    %1403 = arith.subf %1402, %1050 : vector<9x128xf32>
    %1404 = arith.mulf %1403, %1403 : vector<9x128xf32>
    %1405 = arith.addf %1365, %1404 : vector<9x128xf32>
    %cst_272 = arith.constant 0.181818187 : f32
    %1406 = vector.broadcast %cst_272 : f32 to vector<9x128xf32>
    %1407 = arith.mulf %1406, %1402 : vector<9x128xf32>
    %1408 = arith.addf %1368, %1407 : vector<9x128xf32>
    %1409 = vector.extract_strided_slice %1403 {offsets = [0, 0], sizes = [8, 128], strides = [1, 1]} : vector<9x128xf32> to vector<8x128xf32>
    %1410 = vector.extract_strided_slice %1403 {offsets = [1, 0], sizes = [8, 128], strides = [1, 1]} : vector<9x128xf32> to vector<8x128xf32>
    %1411 = arith.mulf %1409, %1410 : vector<8x128xf32>
    %1412 = arith.addf %1372, %1411 : vector<8x128xf32>
    %1413 = vector.extract_strided_slice %1403 {offsets = [0, 0], sizes = [7, 128], strides = [1, 1]} : vector<9x128xf32> to vector<7x128xf32>
    %1414 = vector.extract_strided_slice %1403 {offsets = [2, 0], sizes = [7, 128], strides = [1, 1]} : vector<9x128xf32> to vector<7x128xf32>
    %1415 = arith.mulf %1413, %1414 : vector<7x128xf32>
    %1416 = arith.addf %1376, %1415 : vector<7x128xf32>
    %1417 = vector.extract_strided_slice %1403 {offsets = [0, 0], sizes = [6, 128], strides = [1, 1]} : vector<9x128xf32> to vector<6x128xf32>
    %1418 = vector.extract_strided_slice %1403 {offsets = [3, 0], sizes = [6, 128], strides = [1, 1]} : vector<9x128xf32> to vector<6x128xf32>
    %1419 = arith.mulf %1417, %1418 : vector<6x128xf32>
    %1420 = arith.addf %1380, %1419 : vector<6x128xf32>
    %1421 = vector.extract_strided_slice %1403 {offsets = [0, 0], sizes = [5, 128], strides = [1, 1]} : vector<9x128xf32> to vector<5x128xf32>
    %1422 = vector.extract_strided_slice %1403 {offsets = [4, 0], sizes = [5, 128], strides = [1, 1]} : vector<9x128xf32> to vector<5x128xf32>
    %1423 = arith.mulf %1421, %1422 : vector<5x128xf32>
    %1424 = arith.addf %1384, %1423 : vector<5x128xf32>
    %1425 = vector.extract_strided_slice %1403 {offsets = [0, 0], sizes = [4, 128], strides = [1, 1]} : vector<9x128xf32> to vector<4x128xf32>
    %1426 = vector.extract_strided_slice %1403 {offsets = [5, 0], sizes = [4, 128], strides = [1, 1]} : vector<9x128xf32> to vector<4x128xf32>
    %1427 = arith.mulf %1425, %1426 : vector<4x128xf32>
    %1428 = arith.addf %1388, %1427 : vector<4x128xf32>
    %1429 = vector.extract_strided_slice %1403 {offsets = [0, 0], sizes = [3, 128], strides = [1, 1]} : vector<9x128xf32> to vector<3x128xf32>
    %1430 = vector.extract_strided_slice %1403 {offsets = [6, 0], sizes = [3, 128], strides = [1, 1]} : vector<9x128xf32> to vector<3x128xf32>
    %1431 = arith.mulf %1429, %1430 : vector<3x128xf32>
    %1432 = arith.addf %1392, %1431 : vector<3x128xf32>
    %1433 = vector.extract_strided_slice %1403 {offsets = [0, 0], sizes = [2, 128], strides = [1, 1]} : vector<9x128xf32> to vector<2x128xf32>
    %1434 = vector.extract_strided_slice %1403 {offsets = [7, 0], sizes = [2, 128], strides = [1, 1]} : vector<9x128xf32> to vector<2x128xf32>
    %1435 = arith.mulf %1433, %1434 : vector<2x128xf32>
    %1436 = arith.addf %1396, %1435 : vector<2x128xf32>
    %1437 = vector.extract_strided_slice %1403 {offsets = [0, 0], sizes = [1, 128], strides = [1, 1]} : vector<9x128xf32> to vector<1x128xf32>
    %1438 = vector.extract_strided_slice %1403 {offsets = [8, 0], sizes = [1, 128], strides = [1, 1]} : vector<9x128xf32> to vector<1x128xf32>
    %1439 = arith.mulf %1437, %1438 : vector<1x128xf32>
    %1440 = arith.addf %1400, %1439 : vector<1x128xf32>
    %cst_273 = arith.constant 1.000000e-01 : f32
    %1441 = vector.broadcast %cst_273 : f32 to vector<9x128xf32>
    %1442 = arith.mulf %1405, %1441 : vector<9x128xf32>
    %1443 = math.rsqrt %1442 : vector<9x128xf32>
    %cst_274 = arith.constant 0.111111112 : f32
    %1444 = vector.broadcast %cst_274 : f32 to vector<9x128xf32>
    %1445 = arith.mulf %1405, %1444 : vector<9x128xf32>
    %1446 = math.rsqrt %1445 : vector<9x128xf32>
    %1447 = math.sqrt %1445 : vector<9x128xf32>
    %1448 = arith.mulf %1050, %1446 : vector<9x128xf32>
    %c20_275 = arith.constant 20 : index
    %c0_276 = arith.constant 0 : index
    %c0_277 = arith.constant 0 : index
    %1449 = vector.load %arg1[%c20_275, %c0_276, %c0_277] : memref<30x9x128xf32, #tpu.memory_space<vmem>>, vector<1x9x128xf32>
    %1450 = vector.shape_cast %1449 : vector<1x9x128xf32> to vector<9x128xf32>
    %c29_278 = arith.constant 29 : index
    %c0_279 = arith.constant 0 : index
    %c0_280 = arith.constant 0 : index
    %1451 = vector.load %arg1[%c29_278, %c0_279, %c0_280] : memref<30x9x128xf32, #tpu.memory_space<vmem>>, vector<1x9x128xf32>
    %1452 = vector.shape_cast %1451 : vector<1x9x128xf32> to vector<9x128xf32>
    %1453 = arith.subf %1452, %1450 : vector<9x128xf32>
    %1454 = arith.divf %1453, %1450 : vector<9x128xf32>
    %cst_281 = arith.constant 1.000000e+00 : f32
    %1455 = vector.broadcast %cst_281 : f32 to vector<9x128xf32>
    %1456 = arith.subf %1454, %1455 : vector<9x128xf32>
    %cst_282 = arith.constant 1.000000e-01 : f32
    %1457 = vector.broadcast %cst_282 : f32 to vector<8x128xf32>
    %1458 = arith.mulf %1412, %1457 : vector<8x128xf32>
    %1459 = vector.extract_strided_slice %1443 {offsets = [0, 0], sizes = [8, 128], strides = [1, 1]} : vector<9x128xf32> to vector<8x128xf32>
    %1460 = vector.extract_strided_slice %1443 {offsets = [1, 0], sizes = [8, 128], strides = [1, 1]} : vector<9x128xf32> to vector<8x128xf32>
    %1461 = arith.mulf %1459, %1460 : vector<8x128xf32>
    %1462 = arith.mulf %1458, %1461 : vector<8x128xf32>
    %c256 = arith.constant 256 : index
    %c0_283 = arith.constant 0 : index
    %1463 = vector.load %arg2[%c256, %c0_283] : memref<768x128xf32, #tpu.memory_space<vmem>>, vector<8x128xf32>
    tpu.vector_store %arg2[%c256, %c0_283], %1458 {strides = array<i32>} : memref<768x128xf32, #tpu.memory_space<vmem>>, vector<8x128xf32>,
    %c296 = arith.constant 296 : index
    %c0_284 = arith.constant 0 : index
    %1464 = vector.load %arg2[%c296, %c0_284] : memref<768x128xf32, #tpu.memory_space<vmem>>, vector<8x128xf32>
    tpu.vector_store %arg2[%c296, %c0_284], %1462 {strides = array<i32>} : memref<768x128xf32, #tpu.memory_space<vmem>>, vector<8x128xf32>,
    %cst_285 = arith.constant 1.000000e-01 : f32
    %1465 = vector.broadcast %cst_285 : f32 to vector<7x128xf32>
    %1466 = arith.mulf %1416, %1465 : vector<7x128xf32>
    %1467 = vector.extract_strided_slice %1443 {offsets = [0, 0], sizes = [7, 128], strides = [1, 1]} : vector<9x128xf32> to vector<7x128xf32>
    %1468 = vector.extract_strided_slice %1443 {offsets = [2, 0], sizes = [7, 128], strides = [1, 1]} : vector<9x128xf32> to vector<7x128xf32>
    %1469 = arith.mulf %1467, %1468 : vector<7x128xf32>
    %1470 = arith.mulf %1466, %1469 : vector<7x128xf32>
    %c264 = arith.constant 264 : index
    %c0_286 = arith.constant 0 : index
    %1471 = vector.load %arg2[%c264, %c0_286] : memref<768x128xf32, #tpu.memory_space<vmem>>, vector<7x128xf32>
    tpu.vector_store %arg2[%c264, %c0_286], %1466 {strides = array<i32>} : memref<768x128xf32, #tpu.memory_space<vmem>>, vector<7x128xf32>,
    %c304 = arith.constant 304 : index
    %c0_287 = arith.constant 0 : index
    %1472 = vector.load %arg2[%c304, %c0_287] : memref<768x128xf32, #tpu.memory_space<vmem>>, vector<7x128xf32>
    tpu.vector_store %arg2[%c304, %c0_287], %1470 {strides = array<i32>} : memref<768x128xf32, #tpu.memory_space<vmem>>, vector<7x128xf32>,
    %cst_288 = arith.constant 1.000000e-01 : f32
    %1473 = vector.broadcast %cst_288 : f32 to vector<6x128xf32>
    %1474 = arith.mulf %1420, %1473 : vector<6x128xf32>
    %1475 = vector.extract_strided_slice %1443 {offsets = [0, 0], sizes = [6, 128], strides = [1, 1]} : vector<9x128xf32> to vector<6x128xf32>
    %1476 = vector.extract_strided_slice %1443 {offsets = [3, 0], sizes = [6, 128], strides = [1, 1]} : vector<9x128xf32> to vector<6x128xf32>
    %1477 = arith.mulf %1475, %1476 : vector<6x128xf32>
    %1478 = arith.mulf %1474, %1477 : vector<6x128xf32>
    %c272 = arith.constant 272 : index
    %c0_289 = arith.constant 0 : index
    %1479 = vector.load %arg2[%c272, %c0_289] : memref<768x128xf32, #tpu.memory_space<vmem>>, vector<6x128xf32>
    tpu.vector_store %arg2[%c272, %c0_289], %1474 {strides = array<i32>} : memref<768x128xf32, #tpu.memory_space<vmem>>, vector<6x128xf32>,
    %c312 = arith.constant 312 : index
    %c0_290 = arith.constant 0 : index
    %1480 = vector.load %arg2[%c312, %c0_290] : memref<768x128xf32, #tpu.memory_space<vmem>>, vector<6x128xf32>
    tpu.vector_store %arg2[%c312, %c0_290], %1478 {strides = array<i32>} : memref<768x128xf32, #tpu.memory_space<vmem>>, vector<6x128xf32>,
    %cst_291 = arith.constant 1.000000e-01 : f32
    %1481 = vector.broadcast %cst_291 : f32 to vector<5x128xf32>
    %1482 = arith.mulf %1424, %1481 : vector<5x128xf32>
    %1483 = vector.extract_strided_slice %1443 {offsets = [0, 0], sizes = [5, 128], strides = [1, 1]} : vector<9x128xf32> to vector<5x128xf32>
    %1484 = vector.extract_strided_slice %1443 {offsets = [4, 0], sizes = [5, 128], strides = [1, 1]} : vector<9x128xf32> to vector<5x128xf32>
    %1485 = arith.mulf %1483, %1484 : vector<5x128xf32>
    %1486 = arith.mulf %1482, %1485 : vector<5x128xf32>
    %c280 = arith.constant 280 : index
    %c0_292 = arith.constant 0 : index
    %1487 = vector.load %arg2[%c280, %c0_292] : memref<768x128xf32, #tpu.memory_space<vmem>>, vector<5x128xf32>
    tpu.vector_store %arg2[%c280, %c0_292], %1482 {strides = array<i32>} : memref<768x128xf32, #tpu.memory_space<vmem>>, vector<5x128xf32>,
    %c320 = arith.constant 320 : index
    %c0_293 = arith.constant 0 : index
    %1488 = vector.load %arg2[%c320, %c0_293] : memref<768x128xf32, #tpu.memory_space<vmem>>, vector<5x128xf32>
    tpu.vector_store %arg2[%c320, %c0_293], %1486 {strides = array<i32>} : memref<768x128xf32, #tpu.memory_space<vmem>>, vector<5x128xf32>,
    %cst_294 = arith.constant 1.000000e-01 : f32
    %1489 = vector.broadcast %cst_294 : f32 to vector<4x128xf32>
    %1490 = arith.mulf %1428, %1489 : vector<4x128xf32>
    %1491 = vector.extract_strided_slice %1443 {offsets = [0, 0], sizes = [4, 128], strides = [1, 1]} : vector<9x128xf32> to vector<4x128xf32>
    %1492 = vector.extract_strided_slice %1443 {offsets = [5, 0], sizes = [4, 128], strides = [1, 1]} : vector<9x128xf32> to vector<4x128xf32>
    %1493 = arith.mulf %1491, %1492 : vector<4x128xf32>
    %1494 = arith.mulf %1490, %1493 : vector<4x128xf32>
    %c288 = arith.constant 288 : index
    %c0_295 = arith.constant 0 : index
    %1495 = vector.load %arg2[%c288, %c0_295] : memref<768x128xf32, #tpu.memory_space<vmem>>, vector<4x128xf32>
    tpu.vector_store %arg2[%c288, %c0_295], %1490 {strides = array<i32>} : memref<768x128xf32, #tpu.memory_space<vmem>>, vector<4x128xf32>,
    %c328 = arith.constant 328 : index
    %c0_296 = arith.constant 0 : index
    %1496 = vector.load %arg2[%c328, %c0_296] : memref<768x128xf32, #tpu.memory_space<vmem>>, vector<4x128xf32>
    tpu.vector_store %arg2[%c328, %c0_296], %1494 {strides = array<i32>} : memref<768x128xf32, #tpu.memory_space<vmem>>, vector<4x128xf32>,
    %cst_297 = arith.constant 1.000000e-01 : f32
    %1497 = vector.broadcast %cst_297 : f32 to vector<3x128xf32>
    %1498 = arith.mulf %1432, %1497 : vector<3x128xf32>
    %1499 = vector.extract_strided_slice %1443 {offsets = [0, 0], sizes = [3, 128], strides = [1, 1]} : vector<9x128xf32> to vector<3x128xf32>
    %1500 = vector.extract_strided_slice %1443 {offsets = [6, 0], sizes = [3, 128], strides = [1, 1]} : vector<9x128xf32> to vector<3x128xf32>
    %1501 = arith.mulf %1499, %1500 : vector<3x128xf32>
    %1502 = arith.mulf %1498, %1501 : vector<3x128xf32>
    %c285 = arith.constant 285 : index
    %c0_298 = arith.constant 0 : index
    %1503 = vector.load %arg2[%c285, %c0_298] : memref<768x128xf32, #tpu.memory_space<vmem>>, vector<3x128xf32>
    tpu.vector_store %arg2[%c285, %c0_298], %1498 {strides = array<i32>} : memref<768x128xf32, #tpu.memory_space<vmem>>, vector<3x128xf32>,
    %c325 = arith.constant 325 : index
    %c0_299 = arith.constant 0 : index
    %1504 = vector.load %arg2[%c325, %c0_299] : memref<768x128xf32, #tpu.memory_space<vmem>>, vector<3x128xf32>
    tpu.vector_store %arg2[%c325, %c0_299], %1502 {strides = array<i32>} : memref<768x128xf32, #tpu.memory_space<vmem>>, vector<3x128xf32>,
    %cst_300 = arith.constant 1.000000e-01 : f32
    %1505 = vector.broadcast %cst_300 : f32 to vector<2x128xf32>
    %1506 = arith.mulf %1436, %1505 : vector<2x128xf32>
    %1507 = vector.extract_strided_slice %1443 {offsets = [0, 0], sizes = [2, 128], strides = [1, 1]} : vector<9x128xf32> to vector<2x128xf32>
    %1508 = vector.extract_strided_slice %1443 {offsets = [7, 0], sizes = [2, 128], strides = [1, 1]} : vector<9x128xf32> to vector<2x128xf32>
    %1509 = arith.mulf %1507, %1508 : vector<2x128xf32>
    %1510 = arith.mulf %1506, %1509 : vector<2x128xf32>
    %c278 = arith.constant 278 : index
    %c0_301 = arith.constant 0 : index
    %1511 = vector.load %arg2[%c278, %c0_301] : memref<768x128xf32, #tpu.memory_space<vmem>>, vector<2x128xf32>
    tpu.vector_store %arg2[%c278, %c0_301], %1506 {strides = array<i32>} : memref<768x128xf32, #tpu.memory_space<vmem>>, vector<2x128xf32>,
    %c318 = arith.constant 318 : index
    %c0_302 = arith.constant 0 : index
    %1512 = vector.load %arg2[%c318, %c0_302] : memref<768x128xf32, #tpu.memory_space<vmem>>, vector<2x128xf32>
    tpu.vector_store %arg2[%c318, %c0_302], %1510 {strides = array<i32>} : memref<768x128xf32, #tpu.memory_space<vmem>>, vector<2x128xf32>,
    %cst_303 = arith.constant 1.000000e-01 : f32
    %1513 = vector.broadcast %cst_303 : f32 to vector<1x128xf32>
    %1514 = arith.mulf %1440, %1513 : vector<1x128xf32>
    %1515 = vector.extract_strided_slice %1443 {offsets = [0, 0], sizes = [1, 128], strides = [1, 1]} : vector<9x128xf32> to vector<1x128xf32>
    %1516 = vector.extract_strided_slice %1443 {offsets = [8, 0], sizes = [1, 128], strides = [1, 1]} : vector<9x128xf32> to vector<1x128xf32>
    %1517 = arith.mulf %1515, %1516 : vector<1x128xf32>
    %1518 = arith.mulf %1514, %1517 : vector<1x128xf32>
    %c271 = arith.constant 271 : index
    %c0_304 = arith.constant 0 : index
    %1519 = vector.load %arg2[%c271, %c0_304] : memref<768x128xf32, #tpu.memory_space<vmem>>, vector<1x128xf32>
    tpu.vector_store %arg2[%c271, %c0_304], %1514 {strides = array<i32>} : memref<768x128xf32, #tpu.memory_space<vmem>>, vector<1x128xf32>,
    %c311 = arith.constant 311 : index
    %c0_305 = arith.constant 0 : index
    %1520 = vector.load %arg2[%c311, %c0_305] : memref<768x128xf32, #tpu.memory_space<vmem>>, vector<1x128xf32>
    tpu.vector_store %arg2[%c311, %c0_305], %1518 {strides = array<i32>} : memref<768x128xf32, #tpu.memory_space<vmem>>, vector<1x128xf32>,
    %c292 = arith.constant 292 : index
    %c0_306 = arith.constant 0 : index
    %1521 = vector.load %arg2[%c292, %c0_306] : memref<768x128xf32, #tpu.memory_space<vmem>>, vector<4x128xf32>
    tpu.vector_store %arg2[%c292, %c0_306], %1 {strides = array<i32>} : memref<768x128xf32, #tpu.memory_space<vmem>>, vector<4x128xf32>,
    %c332 = arith.constant 332 : index
    %c0_307 = arith.constant 0 : index
    %1522 = vector.load %arg2[%c332, %c0_307] : memref<768x128xf32, #tpu.memory_space<vmem>>, vector<4x128xf32>
    tpu.vector_store %arg2[%c332, %c0_307], %1 {strides = array<i32>} : memref<768x128xf32, #tpu.memory_space<vmem>>, vector<4x128xf32>,
    %c336 = arith.constant 336 : index
    %c0_308 = arith.constant 0 : index
    %1523 = vector.load %arg2[%c336, %c0_308] : memref<768x128xf32, #tpu.memory_space<vmem>>, vector<9x128xf32>
    tpu.vector_store %arg2[%c336, %c0_308], %1447 {strides = array<i32>} : memref<768x128xf32, #tpu.memory_space<vmem>>, vector<9x128xf32>,
    %c345 = arith.constant 345 : index
    %c0_309 = arith.constant 0 : index
    %1524 = vector.load %arg2[%c345, %c0_309] : memref<768x128xf32, #tpu.memory_space<vmem>>, vector<9x128xf32>
    tpu.vector_store %arg2[%c345, %c0_309], %1448 {strides = array<i32>} : memref<768x128xf32, #tpu.memory_space<vmem>>, vector<9x128xf32>,
    %c354 = arith.constant 354 : index
    %c0_310 = arith.constant 0 : index
    %1525 = vector.load %arg2[%c354, %c0_310] : memref<768x128xf32, #tpu.memory_space<vmem>>, vector<9x128xf32>
    tpu.vector_store %arg2[%c354, %c0_310], %1456 {strides = array<i32>} : memref<768x128xf32, #tpu.memory_space<vmem>>, vector<9x128xf32>,
    %c363 = arith.constant 363 : index
    %c0_311 = arith.constant 0 : index
    %1526 = vector.load %arg2[%c363, %c0_311] : memref<768x128xf32, #tpu.memory_space<vmem>>, vector<9x128xf32>
    tpu.vector_store %arg2[%c363, %c0_311], %1408 {strides = array<i32>} : memref<768x128xf32, #tpu.memory_space<vmem>>, vector<9x128xf32>,
    %c372 = arith.constant 372 : index
    %c0_312 = arith.constant 0 : index
    %1527 = vector.load %arg2[%c372, %c0_312] : memref<768x128xf32, #tpu.memory_space<vmem>>, vector<9x128xf32>
    tpu.vector_store %arg2[%c372, %c0_312], %1050 {strides = array<i32>} : memref<768x128xf32, #tpu.memory_space<vmem>>, vector<9x128xf32>,
    %c381 = arith.constant 381 : index
    %c0_313 = arith.constant 0 : index
    %1528 = vector.load %arg2[%c381, %c0_313] : memref<768x128xf32, #tpu.memory_space<vmem>>, vector<3x128xf32>
    tpu.vector_store %arg2[%c381, %c0_313], %0 {strides = array<i32>} : memref<768x128xf32, #tpu.memory_space<vmem>>, vector<3x128xf32>,
    %c0_314 = arith.constant 0 : index
    %c0_315 = arith.constant 0 : index
    %1529 = vector.load %arg2[%c0_314, %c0_315] : memref<768x128xf32, #tpu.memory_space<vmem>>, vector<8x128xf32>
    %c128_316 = arith.constant 128 : index
    %c0_317 = arith.constant 0 : index
    %1530 = vector.load %arg2[%c128_316, %c0_317] : memref<768x128xf32, #tpu.memory_space<vmem>>, vector<8x128xf32>
    %1531 = arith.addf %1529, %1530 : vector<8x128xf32>
    %1532 = arith.maximumf %1529, %1530 : vector<8x128xf32>
    %1533 = arith.minimumf %1529, %1530 : vector<8x128xf32>
    %c256_318 = arith.constant 256 : index
    %c0_319 = arith.constant 0 : index
    %1534 = vector.load %arg2[%c256_318, %c0_319] : memref<768x128xf32, #tpu.memory_space<vmem>>, vector<8x128xf32>
    %1535 = arith.addf %1531, %1534 : vector<8x128xf32>
    %1536 = arith.maximumf %1532, %1534 : vector<8x128xf32>
    %1537 = arith.minimumf %1533, %1534 : vector<8x128xf32>
    %cst_320 = arith.constant 0.333333343 : f32
    %1538 = vector.broadcast %cst_320 : f32 to vector<8x128xf32>
    %1539 = arith.mulf %1535, %1538 : vector<8x128xf32>
    %c384 = arith.constant 384 : index
    %c0_321 = arith.constant 0 : index
    %1540 = vector.load %arg2[%c384, %c0_321] : memref<768x128xf32, #tpu.memory_space<vmem>>, vector<8x128xf32>
    tpu.vector_store %arg2[%c384, %c0_321], %1539 {strides = array<i32>} : memref<768x128xf32, #tpu.memory_space<vmem>>, vector<8x128xf32>,
    %c512 = arith.constant 512 : index
    %c0_322 = arith.constant 0 : index
    %1541 = vector.load %arg2[%c512, %c0_322] : memref<768x128xf32, #tpu.memory_space<vmem>>, vector<8x128xf32>
    tpu.vector_store %arg2[%c512, %c0_322], %1536 {strides = array<i32>} : memref<768x128xf32, #tpu.memory_space<vmem>>, vector<8x128xf32>,
    %c640 = arith.constant 640 : index
    %c0_323 = arith.constant 0 : index
    %1542 = vector.load %arg2[%c640, %c0_323] : memref<768x128xf32, #tpu.memory_space<vmem>>, vector<8x128xf32>
    tpu.vector_store %arg2[%c640, %c0_323], %1537 {strides = array<i32>} : memref<768x128xf32, #tpu.memory_space<vmem>>, vector<8x128xf32>,
    %c8_324 = arith.constant 8 : index
    %c0_325 = arith.constant 0 : index
    %1543 = vector.load %arg2[%c8_324, %c0_325] : memref<768x128xf32, #tpu.memory_space<vmem>>, vector<8x128xf32>
    %c136_326 = arith.constant 136 : index
    %c0_327 = arith.constant 0 : index
    %1544 = vector.load %arg2[%c136_326, %c0_327] : memref<768x128xf32, #tpu.memory_space<vmem>>, vector<8x128xf32>
    %1545 = arith.addf %1543, %1544 : vector<8x128xf32>
    %1546 = arith.maximumf %1543, %1544 : vector<8x128xf32>
    %1547 = arith.minimumf %1543, %1544 : vector<8x128xf32>
    %c264_328 = arith.constant 264 : index
    %c0_329 = arith.constant 0 : index
    %1548 = vector.load %arg2[%c264_328, %c0_329] : memref<768x128xf32, #tpu.memory_space<vmem>>, vector<8x128xf32>
    %1549 = arith.addf %1545, %1548 : vector<8x128xf32>
    %1550 = arith.maximumf %1546, %1548 : vector<8x128xf32>
    %1551 = arith.minimumf %1547, %1548 : vector<8x128xf32>
    %cst_330 = arith.constant 0.333333343 : f32
    %1552 = vector.broadcast %cst_330 : f32 to vector<8x128xf32>
    %1553 = arith.mulf %1549, %1552 : vector<8x128xf32>
    %c392 = arith.constant 392 : index
    %c0_331 = arith.constant 0 : index
    %1554 = vector.load %arg2[%c392, %c0_331] : memref<768x128xf32, #tpu.memory_space<vmem>>, vector<8x128xf32>
    tpu.vector_store %arg2[%c392, %c0_331], %1553 {strides = array<i32>} : memref<768x128xf32, #tpu.memory_space<vmem>>, vector<8x128xf32>,
    %c520 = arith.constant 520 : index
    %c0_332 = arith.constant 0 : index
    %1555 = vector.load %arg2[%c520, %c0_332] : memref<768x128xf32, #tpu.memory_space<vmem>>, vector<8x128xf32>
    tpu.vector_store %arg2[%c520, %c0_332], %1550 {strides = array<i32>} : memref<768x128xf32, #tpu.memory_space<vmem>>, vector<8x128xf32>,
    %c648 = arith.constant 648 : index
    %c0_333 = arith.constant 0 : index
    %1556 = vector.load %arg2[%c648, %c0_333] : memref<768x128xf32, #tpu.memory_space<vmem>>, vector<8x128xf32>
    tpu.vector_store %arg2[%c648, %c0_333], %1551 {strides = array<i32>} : memref<768x128xf32, #tpu.memory_space<vmem>>, vector<8x128xf32>,
    %c16_334 = arith.constant 16 : index
    %c0_335 = arith.constant 0 : index
    %1557 = vector.load %arg2[%c16_334, %c0_335] : memref<768x128xf32, #tpu.memory_space<vmem>>, vector<8x128xf32>
    %c144_336 = arith.constant 144 : index
    %c0_337 = arith.constant 0 : index
    %1558 = vector.load %arg2[%c144_336, %c0_337] : memref<768x128xf32, #tpu.memory_space<vmem>>, vector<8x128xf32>
    %1559 = arith.addf %1557, %1558 : vector<8x128xf32>
    %1560 = arith.maximumf %1557, %1558 : vector<8x128xf32>
    %1561 = arith.minimumf %1557, %1558 : vector<8x128xf32>
    %c272_338 = arith.constant 272 : index
    %c0_339 = arith.constant 0 : index
    %1562 = vector.load %arg2[%c272_338, %c0_339] : memref<768x128xf32, #tpu.memory_space<vmem>>, vector<8x128xf32>
    %1563 = arith.addf %1559, %1562 : vector<8x128xf32>
    %1564 = arith.maximumf %1560, %1562 : vector<8x128xf32>
    %1565 = arith.minimumf %1561, %1562 : vector<8x128xf32>
    %cst_340 = arith.constant 0.333333343 : f32
    %1566 = vector.broadcast %cst_340 : f32 to vector<8x128xf32>
    %1567 = arith.mulf %1563, %1566 : vector<8x128xf32>
    %c400 = arith.constant 400 : index
    %c0_341 = arith.constant 0 : index
    %1568 = vector.load %arg2[%c400, %c0_341] : memref<768x128xf32, #tpu.memory_space<vmem>>, vector<8x128xf32>
    tpu.vector_store %arg2[%c400, %c0_341], %1567 {strides = array<i32>} : memref<768x128xf32, #tpu.memory_space<vmem>>, vector<8x128xf32>,
    %c528 = arith.constant 528 : index
    %c0_342 = arith.constant 0 : index
    %1569 = vector.load %arg2[%c528, %c0_342] : memref<768x128xf32, #tpu.memory_space<vmem>>, vector<8x128xf32>
    tpu.vector_store %arg2[%c528, %c0_342], %1564 {strides = array<i32>} : memref<768x128xf32, #tpu.memory_space<vmem>>, vector<8x128xf32>,
    %c656 = arith.constant 656 : index
    %c0_343 = arith.constant 0 : index
    %1570 = vector.load %arg2[%c656, %c0_343] : memref<768x128xf32, #tpu.memory_space<vmem>>, vector<8x128xf32>
    tpu.vector_store %arg2[%c656, %c0_343], %1565 {strides = array<i32>} : memref<768x128xf32, #tpu.memory_space<vmem>>, vector<8x128xf32>,
    %c24_344 = arith.constant 24 : index
    %c0_345 = arith.constant 0 : index
    %1571 = vector.load %arg2[%c24_344, %c0_345] : memref<768x128xf32, #tpu.memory_space<vmem>>, vector<8x128xf32>
    %c152_346 = arith.constant 152 : index
    %c0_347 = arith.constant 0 : index
    %1572 = vector.load %arg2[%c152_346, %c0_347] : memref<768x128xf32, #tpu.memory_space<vmem>>, vector<8x128xf32>
    %1573 = arith.addf %1571, %1572 : vector<8x128xf32>
    %1574 = arith.maximumf %1571, %1572 : vector<8x128xf32>
    %1575 = arith.minimumf %1571, %1572 : vector<8x128xf32>
    %c280_348 = arith.constant 280 : index
    %c0_349 = arith.constant 0 : index
    %1576 = vector.load %arg2[%c280_348, %c0_349] : memref<768x128xf32, #tpu.memory_space<vmem>>, vector<8x128xf32>
    %1577 = arith.addf %1573, %1576 : vector<8x128xf32>
    %1578 = arith.maximumf %1574, %1576 : vector<8x128xf32>
    %1579 = arith.minimumf %1575, %1576 : vector<8x128xf32>
    %cst_350 = arith.constant 0.333333343 : f32
    %1580 = vector.broadcast %cst_350 : f32 to vector<8x128xf32>
    %1581 = arith.mulf %1577, %1580 : vector<8x128xf32>
    %c408 = arith.constant 408 : index
    %c0_351 = arith.constant 0 : index
    %1582 = vector.load %arg2[%c408, %c0_351] : memref<768x128xf32, #tpu.memory_space<vmem>>, vector<8x128xf32>
    tpu.vector_store %arg2[%c408, %c0_351], %1581 {strides = array<i32>} : memref<768x128xf32, #tpu.memory_space<vmem>>, vector<8x128xf32>,
    %c536 = arith.constant 536 : index
    %c0_352 = arith.constant 0 : index
    %1583 = vector.load %arg2[%c536, %c0_352] : memref<768x128xf32, #tpu.memory_space<vmem>>, vector<8x128xf32>
    tpu.vector_store %arg2[%c536, %c0_352], %1578 {strides = array<i32>} : memref<768x128xf32, #tpu.memory_space<vmem>>, vector<8x128xf32>,
    %c664 = arith.constant 664 : index
    %c0_353 = arith.constant 0 : index
    %1584 = vector.load %arg2[%c664, %c0_353] : memref<768x128xf32, #tpu.memory_space<vmem>>, vector<8x128xf32>
    tpu.vector_store %arg2[%c664, %c0_353], %1579 {strides = array<i32>} : memref<768x128xf32, #tpu.memory_space<vmem>>, vector<8x128xf32>,
    %c32_354 = arith.constant 32 : index
    %c0_355 = arith.constant 0 : index
    %1585 = vector.load %arg2[%c32_354, %c0_355] : memref<768x128xf32, #tpu.memory_space<vmem>>, vector<8x128xf32>
    %c160_356 = arith.constant 160 : index
    %c0_357 = arith.constant 0 : index
    %1586 = vector.load %arg2[%c160_356, %c0_357] : memref<768x128xf32, #tpu.memory_space<vmem>>, vector<8x128xf32>
    %1587 = arith.addf %1585, %1586 : vector<8x128xf32>
    %1588 = arith.maximumf %1585, %1586 : vector<8x128xf32>
    %1589 = arith.minimumf %1585, %1586 : vector<8x128xf32>
    %c288_358 = arith.constant 288 : index
    %c0_359 = arith.constant 0 : index
    %1590 = vector.load %arg2[%c288_358, %c0_359] : memref<768x128xf32, #tpu.memory_space<vmem>>, vector<8x128xf32>
    %1591 = arith.addf %1587, %1590 : vector<8x128xf32>
    %1592 = arith.maximumf %1588, %1590 : vector<8x128xf32>
    %1593 = arith.minimumf %1589, %1590 : vector<8x128xf32>
    %cst_360 = arith.constant 0.333333343 : f32
    %1594 = vector.broadcast %cst_360 : f32 to vector<8x128xf32>
    %1595 = arith.mulf %1591, %1594 : vector<8x128xf32>
    %c416 = arith.constant 416 : index
    %c0_361 = arith.constant 0 : index
    %1596 = vector.load %arg2[%c416, %c0_361] : memref<768x128xf32, #tpu.memory_space<vmem>>, vector<8x128xf32>
    tpu.vector_store %arg2[%c416, %c0_361], %1595 {strides = array<i32>} : memref<768x128xf32, #tpu.memory_space<vmem>>, vector<8x128xf32>,
    %c544 = arith.constant 544 : index
    %c0_362 = arith.constant 0 : index
    %1597 = vector.load %arg2[%c544, %c0_362] : memref<768x128xf32, #tpu.memory_space<vmem>>, vector<8x128xf32>
    tpu.vector_store %arg2[%c544, %c0_362], %1592 {strides = array<i32>} : memref<768x128xf32, #tpu.memory_space<vmem>>, vector<8x128xf32>,
    %c672 = arith.constant 672 : index
    %c0_363 = arith.constant 0 : index
    %1598 = vector.load %arg2[%c672, %c0_363] : memref<768x128xf32, #tpu.memory_space<vmem>>, vector<8x128xf32>
    tpu.vector_store %arg2[%c672, %c0_363], %1593 {strides = array<i32>} : memref<768x128xf32, #tpu.memory_space<vmem>>, vector<8x128xf32>,
    %c40_364 = arith.constant 40 : index
    %c0_365 = arith.constant 0 : index
    %1599 = vector.load %arg2[%c40_364, %c0_365] : memref<768x128xf32, #tpu.memory_space<vmem>>, vector<8x128xf32>
    %c168_366 = arith.constant 168 : index
    %c0_367 = arith.constant 0 : index
    %1600 = vector.load %arg2[%c168_366, %c0_367] : memref<768x128xf32, #tpu.memory_space<vmem>>, vector<8x128xf32>
    %1601 = arith.addf %1599, %1600 : vector<8x128xf32>
    %1602 = arith.maximumf %1599, %1600 : vector<8x128xf32>
    %1603 = arith.minimumf %1599, %1600 : vector<8x128xf32>
    %c296_368 = arith.constant 296 : index
    %c0_369 = arith.constant 0 : index
    %1604 = vector.load %arg2[%c296_368, %c0_369] : memref<768x128xf32, #tpu.memory_space<vmem>>, vector<8x128xf32>
    %1605 = arith.addf %1601, %1604 : vector<8x128xf32>
    %1606 = arith.maximumf %1602, %1604 : vector<8x128xf32>
    %1607 = arith.minimumf %1603, %1604 : vector<8x128xf32>
    %cst_370 = arith.constant 0.333333343 : f32
    %1608 = vector.broadcast %cst_370 : f32 to vector<8x128xf32>
    %1609 = arith.mulf %1605, %1608 : vector<8x128xf32>
    %c424 = arith.constant 424 : index
    %c0_371 = arith.constant 0 : index
    %1610 = vector.load %arg2[%c424, %c0_371] : memref<768x128xf32, #tpu.memory_space<vmem>>, vector<8x128xf32>
    tpu.vector_store %arg2[%c424, %c0_371], %1609 {strides = array<i32>} : memref<768x128xf32, #tpu.memory_space<vmem>>, vector<8x128xf32>,
    %c552 = arith.constant 552 : index
    %c0_372 = arith.constant 0 : index
    %1611 = vector.load %arg2[%c552, %c0_372] : memref<768x128xf32, #tpu.memory_space<vmem>>, vector<8x128xf32>
    tpu.vector_store %arg2[%c552, %c0_372], %1606 {strides = array<i32>} : memref<768x128xf32, #tpu.memory_space<vmem>>, vector<8x128xf32>,
    %c680 = arith.constant 680 : index
    %c0_373 = arith.constant 0 : index
    %1612 = vector.load %arg2[%c680, %c0_373] : memref<768x128xf32, #tpu.memory_space<vmem>>, vector<8x128xf32>
    tpu.vector_store %arg2[%c680, %c0_373], %1607 {strides = array<i32>} : memref<768x128xf32, #tpu.memory_space<vmem>>, vector<8x128xf32>,
    %c48_374 = arith.constant 48 : index
    %c0_375 = arith.constant 0 : index
    %1613 = vector.load %arg2[%c48_374, %c0_375] : memref<768x128xf32, #tpu.memory_space<vmem>>, vector<8x128xf32>
    %c176_376 = arith.constant 176 : index
    %c0_377 = arith.constant 0 : index
    %1614 = vector.load %arg2[%c176_376, %c0_377] : memref<768x128xf32, #tpu.memory_space<vmem>>, vector<8x128xf32>
    %1615 = arith.addf %1613, %1614 : vector<8x128xf32>
    %1616 = arith.maximumf %1613, %1614 : vector<8x128xf32>
    %1617 = arith.minimumf %1613, %1614 : vector<8x128xf32>
    %c304_378 = arith.constant 304 : index
    %c0_379 = arith.constant 0 : index
    %1618 = vector.load %arg2[%c304_378, %c0_379] : memref<768x128xf32, #tpu.memory_space<vmem>>, vector<8x128xf32>
    %1619 = arith.addf %1615, %1618 : vector<8x128xf32>
    %1620 = arith.maximumf %1616, %1618 : vector<8x128xf32>
    %1621 = arith.minimumf %1617, %1618 : vector<8x128xf32>
    %cst_380 = arith.constant 0.333333343 : f32
    %1622 = vector.broadcast %cst_380 : f32 to vector<8x128xf32>
    %1623 = arith.mulf %1619, %1622 : vector<8x128xf32>
    %c432 = arith.constant 432 : index
    %c0_381 = arith.constant 0 : index
    %1624 = vector.load %arg2[%c432, %c0_381] : memref<768x128xf32, #tpu.memory_space<vmem>>, vector<8x128xf32>
    tpu.vector_store %arg2[%c432, %c0_381], %1623 {strides = array<i32>} : memref<768x128xf32, #tpu.memory_space<vmem>>, vector<8x128xf32>,
    %c560 = arith.constant 560 : index
    %c0_382 = arith.constant 0 : index
    %1625 = vector.load %arg2[%c560, %c0_382] : memref<768x128xf32, #tpu.memory_space<vmem>>, vector<8x128xf32>
    tpu.vector_store %arg2[%c560, %c0_382], %1620 {strides = array<i32>} : memref<768x128xf32, #tpu.memory_space<vmem>>, vector<8x128xf32>,
    %c688 = arith.constant 688 : index
    %c0_383 = arith.constant 0 : index
    %1626 = vector.load %arg2[%c688, %c0_383] : memref<768x128xf32, #tpu.memory_space<vmem>>, vector<8x128xf32>
    tpu.vector_store %arg2[%c688, %c0_383], %1621 {strides = array<i32>} : memref<768x128xf32, #tpu.memory_space<vmem>>, vector<8x128xf32>,
    %c56_384 = arith.constant 56 : index
    %c0_385 = arith.constant 0 : index
    %1627 = vector.load %arg2[%c56_384, %c0_385] : memref<768x128xf32, #tpu.memory_space<vmem>>, vector<8x128xf32>
    %c184_386 = arith.constant 184 : index
    %c0_387 = arith.constant 0 : index
    %1628 = vector.load %arg2[%c184_386, %c0_387] : memref<768x128xf32, #tpu.memory_space<vmem>>, vector<8x128xf32>
    %1629 = arith.addf %1627, %1628 : vector<8x128xf32>
    %1630 = arith.maximumf %1627, %1628 : vector<8x128xf32>
    %1631 = arith.minimumf %1627, %1628 : vector<8x128xf32>
    %c312_388 = arith.constant 312 : index
    %c0_389 = arith.constant 0 : index
    %1632 = vector.load %arg2[%c312_388, %c0_389] : memref<768x128xf32, #tpu.memory_space<vmem>>, vector<8x128xf32>
    %1633 = arith.addf %1629, %1632 : vector<8x128xf32>
    %1634 = arith.maximumf %1630, %1632 : vector<8x128xf32>
    %1635 = arith.minimumf %1631, %1632 : vector<8x128xf32>
    %cst_390 = arith.constant 0.333333343 : f32
    %1636 = vector.broadcast %cst_390 : f32 to vector<8x128xf32>
    %1637 = arith.mulf %1633, %1636 : vector<8x128xf32>
    %c440 = arith.constant 440 : index
    %c0_391 = arith.constant 0 : index
    %1638 = vector.load %arg2[%c440, %c0_391] : memref<768x128xf32, #tpu.memory_space<vmem>>, vector<8x128xf32>
    tpu.vector_store %arg2[%c440, %c0_391], %1637 {strides = array<i32>} : memref<768x128xf32, #tpu.memory_space<vmem>>, vector<8x128xf32>,
    %c568 = arith.constant 568 : index
    %c0_392 = arith.constant 0 : index
    %1639 = vector.load %arg2[%c568, %c0_392] : memref<768x128xf32, #tpu.memory_space<vmem>>, vector<8x128xf32>
    tpu.vector_store %arg2[%c568, %c0_392], %1634 {strides = array<i32>} : memref<768x128xf32, #tpu.memory_space<vmem>>, vector<8x128xf32>,
    %c696 = arith.constant 696 : index
    %c0_393 = arith.constant 0 : index
    %1640 = vector.load %arg2[%c696, %c0_393] : memref<768x128xf32, #tpu.memory_space<vmem>>, vector<8x128xf32>
    tpu.vector_store %arg2[%c696, %c0_393], %1635 {strides = array<i32>} : memref<768x128xf32, #tpu.memory_space<vmem>>, vector<8x128xf32>,
    %c64_394 = arith.constant 64 : index
    %c0_395 = arith.constant 0 : index
    %1641 = vector.load %arg2[%c64_394, %c0_395] : memref<768x128xf32, #tpu.memory_space<vmem>>, vector<8x128xf32>
    %c192_396 = arith.constant 192 : index
    %c0_397 = arith.constant 0 : index
    %1642 = vector.load %arg2[%c192_396, %c0_397] : memref<768x128xf32, #tpu.memory_space<vmem>>, vector<8x128xf32>
    %1643 = arith.addf %1641, %1642 : vector<8x128xf32>
    %1644 = arith.maximumf %1641, %1642 : vector<8x128xf32>
    %1645 = arith.minimumf %1641, %1642 : vector<8x128xf32>
    %c320_398 = arith.constant 320 : index
    %c0_399 = arith.constant 0 : index
    %1646 = vector.load %arg2[%c320_398, %c0_399] : memref<768x128xf32, #tpu.memory_space<vmem>>, vector<8x128xf32>
    %1647 = arith.addf %1643, %1646 : vector<8x128xf32>
    %1648 = arith.maximumf %1644, %1646 : vector<8x128xf32>
    %1649 = arith.minimumf %1645, %1646 : vector<8x128xf32>
    %cst_400 = arith.constant 0.333333343 : f32
    %1650 = vector.broadcast %cst_400 : f32 to vector<8x128xf32>
    %1651 = arith.mulf %1647, %1650 : vector<8x128xf32>
    %c448 = arith.constant 448 : index
    %c0_401 = arith.constant 0 : index
    %1652 = vector.load %arg2[%c448, %c0_401] : memref<768x128xf32, #tpu.memory_space<vmem>>, vector<8x128xf32>
    tpu.vector_store %arg2[%c448, %c0_401], %1651 {strides = array<i32>} : memref<768x128xf32, #tpu.memory_space<vmem>>, vector<8x128xf32>,
    %c576 = arith.constant 576 : index
    %c0_402 = arith.constant 0 : index
    %1653 = vector.load %arg2[%c576, %c0_402] : memref<768x128xf32, #tpu.memory_space<vmem>>, vector<8x128xf32>
    tpu.vector_store %arg2[%c576, %c0_402], %1648 {strides = array<i32>} : memref<768x128xf32, #tpu.memory_space<vmem>>, vector<8x128xf32>,
    %c704 = arith.constant 704 : index
    %c0_403 = arith.constant 0 : index
    %1654 = vector.load %arg2[%c704, %c0_403] : memref<768x128xf32, #tpu.memory_space<vmem>>, vector<8x128xf32>
    tpu.vector_store %arg2[%c704, %c0_403], %1649 {strides = array<i32>} : memref<768x128xf32, #tpu.memory_space<vmem>>, vector<8x128xf32>,
    %c72_404 = arith.constant 72 : index
    %c0_405 = arith.constant 0 : index
    %1655 = vector.load %arg2[%c72_404, %c0_405] : memref<768x128xf32, #tpu.memory_space<vmem>>, vector<8x128xf32>
    %c200_406 = arith.constant 200 : index
    %c0_407 = arith.constant 0 : index
    %1656 = vector.load %arg2[%c200_406, %c0_407] : memref<768x128xf32, #tpu.memory_space<vmem>>, vector<8x128xf32>
    %1657 = arith.addf %1655, %1656 : vector<8x128xf32>
    %1658 = arith.maximumf %1655, %1656 : vector<8x128xf32>
    %1659 = arith.minimumf %1655, %1656 : vector<8x128xf32>
    %c328_408 = arith.constant 328 : index
    %c0_409 = arith.constant 0 : index
    %1660 = vector.load %arg2[%c328_408, %c0_409] : memref<768x128xf32, #tpu.memory_space<vmem>>, vector<8x128xf32>
    %1661 = arith.addf %1657, %1660 : vector<8x128xf32>
    %1662 = arith.maximumf %1658, %1660 : vector<8x128xf32>
    %1663 = arith.minimumf %1659, %1660 : vector<8x128xf32>
    %cst_410 = arith.constant 0.333333343 : f32
    %1664 = vector.broadcast %cst_410 : f32 to vector<8x128xf32>
    %1665 = arith.mulf %1661, %1664 : vector<8x128xf32>
    %c456 = arith.constant 456 : index
    %c0_411 = arith.constant 0 : index
    %1666 = vector.load %arg2[%c456, %c0_411] : memref<768x128xf32, #tpu.memory_space<vmem>>, vector<8x128xf32>
    tpu.vector_store %arg2[%c456, %c0_411], %1665 {strides = array<i32>} : memref<768x128xf32, #tpu.memory_space<vmem>>, vector<8x128xf32>,
    %c584 = arith.constant 584 : index
    %c0_412 = arith.constant 0 : index
    %1667 = vector.load %arg2[%c584, %c0_412] : memref<768x128xf32, #tpu.memory_space<vmem>>, vector<8x128xf32>
    tpu.vector_store %arg2[%c584, %c0_412], %1662 {strides = array<i32>} : memref<768x128xf32, #tpu.memory_space<vmem>>, vector<8x128xf32>,
    %c712 = arith.constant 712 : index
    %c0_413 = arith.constant 0 : index
    %1668 = vector.load %arg2[%c712, %c0_413] : memref<768x128xf32, #tpu.memory_space<vmem>>, vector<8x128xf32>
    tpu.vector_store %arg2[%c712, %c0_413], %1663 {strides = array<i32>} : memref<768x128xf32, #tpu.memory_space<vmem>>, vector<8x128xf32>,
    %c80_414 = arith.constant 80 : index
    %c0_415 = arith.constant 0 : index
    %1669 = vector.load %arg2[%c80_414, %c0_415] : memref<768x128xf32, #tpu.memory_space<vmem>>, vector<8x128xf32>
    %c208_416 = arith.constant 208 : index
    %c0_417 = arith.constant 0 : index
    %1670 = vector.load %arg2[%c208_416, %c0_417] : memref<768x128xf32, #tpu.memory_space<vmem>>, vector<8x128xf32>
    %1671 = arith.addf %1669, %1670 : vector<8x128xf32>
    %1672 = arith.maximumf %1669, %1670 : vector<8x128xf32>
    %1673 = arith.minimumf %1669, %1670 : vector<8x128xf32>
    %c336_418 = arith.constant 336 : index
    %c0_419 = arith.constant 0 : index
    %1674 = vector.load %arg2[%c336_418, %c0_419] : memref<768x128xf32, #tpu.memory_space<vmem>>, vector<8x128xf32>
    %1675 = arith.addf %1671, %1674 : vector<8x128xf32>
    %1676 = arith.maximumf %1672, %1674 : vector<8x128xf32>
    %1677 = arith.minimumf %1673, %1674 : vector<8x128xf32>
    %cst_420 = arith.constant 0.333333343 : f32
    %1678 = vector.broadcast %cst_420 : f32 to vector<8x128xf32>
    %1679 = arith.mulf %1675, %1678 : vector<8x128xf32>
    %c464 = arith.constant 464 : index
    %c0_421 = arith.constant 0 : index
    %1680 = vector.load %arg2[%c464, %c0_421] : memref<768x128xf32, #tpu.memory_space<vmem>>, vector<8x128xf32>
    tpu.vector_store %arg2[%c464, %c0_421], %1679 {strides = array<i32>} : memref<768x128xf32, #tpu.memory_space<vmem>>, vector<8x128xf32>,
    %c592 = arith.constant 592 : index
    %c0_422 = arith.constant 0 : index
    %1681 = vector.load %arg2[%c592, %c0_422] : memref<768x128xf32, #tpu.memory_space<vmem>>, vector<8x128xf32>
    tpu.vector_store %arg2[%c592, %c0_422], %1676 {strides = array<i32>} : memref<768x128xf32, #tpu.memory_space<vmem>>, vector<8x128xf32>,
    %c720 = arith.constant 720 : index
    %c0_423 = arith.constant 0 : index
    %1682 = vector.load %arg2[%c720, %c0_423] : memref<768x128xf32, #tpu.memory_space<vmem>>, vector<8x128xf32>
    tpu.vector_store %arg2[%c720, %c0_423], %1677 {strides = array<i32>} : memref<768x128xf32, #tpu.memory_space<vmem>>, vector<8x128xf32>,
    %c88 = arith.constant 88 : index
    %c0_424 = arith.constant 0 : index
    %1683 = vector.load %arg2[%c88, %c0_424] : memref<768x128xf32, #tpu.memory_space<vmem>>, vector<8x128xf32>
    %c216 = arith.constant 216 : index
    %c0_425 = arith.constant 0 : index
    %1684 = vector.load %arg2[%c216, %c0_425] : memref<768x128xf32, #tpu.memory_space<vmem>>, vector<8x128xf32>
    %1685 = arith.addf %1683, %1684 : vector<8x128xf32>
    %1686 = arith.maximumf %1683, %1684 : vector<8x128xf32>
    %1687 = arith.minimumf %1683, %1684 : vector<8x128xf32>
    %c344 = arith.constant 344 : index
    %c0_426 = arith.constant 0 : index
    %1688 = vector.load %arg2[%c344, %c0_426] : memref<768x128xf32, #tpu.memory_space<vmem>>, vector<8x128xf32>
    %1689 = arith.addf %1685, %1688 : vector<8x128xf32>
    %1690 = arith.maximumf %1686, %1688 : vector<8x128xf32>
    %1691 = arith.minimumf %1687, %1688 : vector<8x128xf32>
    %cst_427 = arith.constant 0.333333343 : f32
    %1692 = vector.broadcast %cst_427 : f32 to vector<8x128xf32>
    %1693 = arith.mulf %1689, %1692 : vector<8x128xf32>
    %c472 = arith.constant 472 : index
    %c0_428 = arith.constant 0 : index
    %1694 = vector.load %arg2[%c472, %c0_428] : memref<768x128xf32, #tpu.memory_space<vmem>>, vector<8x128xf32>
    tpu.vector_store %arg2[%c472, %c0_428], %1693 {strides = array<i32>} : memref<768x128xf32, #tpu.memory_space<vmem>>, vector<8x128xf32>,
    %c600 = arith.constant 600 : index
    %c0_429 = arith.constant 0 : index
    %1695 = vector.load %arg2[%c600, %c0_429] : memref<768x128xf32, #tpu.memory_space<vmem>>, vector<8x128xf32>
    tpu.vector_store %arg2[%c600, %c0_429], %1690 {strides = array<i32>} : memref<768x128xf32, #tpu.memory_space<vmem>>, vector<8x128xf32>,
    %c728 = arith.constant 728 : index
    %c0_430 = arith.constant 0 : index
    %1696 = vector.load %arg2[%c728, %c0_430] : memref<768x128xf32, #tpu.memory_space<vmem>>, vector<8x128xf32>
    tpu.vector_store %arg2[%c728, %c0_430], %1691 {strides = array<i32>} : memref<768x128xf32, #tpu.memory_space<vmem>>, vector<8x128xf32>,
    %c96 = arith.constant 96 : index
    %c0_431 = arith.constant 0 : index
    %1697 = vector.load %arg2[%c96, %c0_431] : memref<768x128xf32, #tpu.memory_space<vmem>>, vector<8x128xf32>
    %c224 = arith.constant 224 : index
    %c0_432 = arith.constant 0 : index
    %1698 = vector.load %arg2[%c224, %c0_432] : memref<768x128xf32, #tpu.memory_space<vmem>>, vector<8x128xf32>
    %1699 = arith.addf %1697, %1698 : vector<8x128xf32>
    %1700 = arith.maximumf %1697, %1698 : vector<8x128xf32>
    %1701 = arith.minimumf %1697, %1698 : vector<8x128xf32>
    %c352 = arith.constant 352 : index
    %c0_433 = arith.constant 0 : index
    %1702 = vector.load %arg2[%c352, %c0_433] : memref<768x128xf32, #tpu.memory_space<vmem>>, vector<8x128xf32>
    %1703 = arith.addf %1699, %1702 : vector<8x128xf32>
    %1704 = arith.maximumf %1700, %1702 : vector<8x128xf32>
    %1705 = arith.minimumf %1701, %1702 : vector<8x128xf32>
    %cst_434 = arith.constant 0.333333343 : f32
    %1706 = vector.broadcast %cst_434 : f32 to vector<8x128xf32>
    %1707 = arith.mulf %1703, %1706 : vector<8x128xf32>
    %c480 = arith.constant 480 : index
    %c0_435 = arith.constant 0 : index
    %1708 = vector.load %arg2[%c480, %c0_435] : memref<768x128xf32, #tpu.memory_space<vmem>>, vector<8x128xf32>
    tpu.vector_store %arg2[%c480, %c0_435], %1707 {strides = array<i32>} : memref<768x128xf32, #tpu.memory_space<vmem>>, vector<8x128xf32>,
    %c608 = arith.constant 608 : index
    %c0_436 = arith.constant 0 : index
    %1709 = vector.load %arg2[%c608, %c0_436] : memref<768x128xf32, #tpu.memory_space<vmem>>, vector<8x128xf32>
    tpu.vector_store %arg2[%c608, %c0_436], %1704 {strides = array<i32>} : memref<768x128xf32, #tpu.memory_space<vmem>>, vector<8x128xf32>,
    %c736 = arith.constant 736 : index
    %c0_437 = arith.constant 0 : index
    %1710 = vector.load %arg2[%c736, %c0_437] : memref<768x128xf32, #tpu.memory_space<vmem>>, vector<8x128xf32>
    tpu.vector_store %arg2[%c736, %c0_437], %1705 {strides = array<i32>} : memref<768x128xf32, #tpu.memory_space<vmem>>, vector<8x128xf32>,
    %c104 = arith.constant 104 : index
    %c0_438 = arith.constant 0 : index
    %1711 = vector.load %arg2[%c104, %c0_438] : memref<768x128xf32, #tpu.memory_space<vmem>>, vector<8x128xf32>
    %c232 = arith.constant 232 : index
    %c0_439 = arith.constant 0 : index
    %1712 = vector.load %arg2[%c232, %c0_439] : memref<768x128xf32, #tpu.memory_space<vmem>>, vector<8x128xf32>
    %1713 = arith.addf %1711, %1712 : vector<8x128xf32>
    %1714 = arith.maximumf %1711, %1712 : vector<8x128xf32>
    %1715 = arith.minimumf %1711, %1712 : vector<8x128xf32>
    %c360 = arith.constant 360 : index
    %c0_440 = arith.constant 0 : index
    %1716 = vector.load %arg2[%c360, %c0_440] : memref<768x128xf32, #tpu.memory_space<vmem>>, vector<8x128xf32>
    %1717 = arith.addf %1713, %1716 : vector<8x128xf32>
    %1718 = arith.maximumf %1714, %1716 : vector<8x128xf32>
    %1719 = arith.minimumf %1715, %1716 : vector<8x128xf32>
    %cst_441 = arith.constant 0.333333343 : f32
    %1720 = vector.broadcast %cst_441 : f32 to vector<8x128xf32>
    %1721 = arith.mulf %1717, %1720 : vector<8x128xf32>
    %c488 = arith.constant 488 : index
    %c0_442 = arith.constant 0 : index
    %1722 = vector.load %arg2[%c488, %c0_442] : memref<768x128xf32, #tpu.memory_space<vmem>>, vector<8x128xf32>
    tpu.vector_store %arg2[%c488, %c0_442], %1721 {strides = array<i32>} : memref<768x128xf32, #tpu.memory_space<vmem>>, vector<8x128xf32>,
    %c616 = arith.constant 616 : index
    %c0_443 = arith.constant 0 : index
    %1723 = vector.load %arg2[%c616, %c0_443] : memref<768x128xf32, #tpu.memory_space<vmem>>, vector<8x128xf32>
    tpu.vector_store %arg2[%c616, %c0_443], %1718 {strides = array<i32>} : memref<768x128xf32, #tpu.memory_space<vmem>>, vector<8x128xf32>,
    %c744 = arith.constant 744 : index
    %c0_444 = arith.constant 0 : index
    %1724 = vector.load %arg2[%c744, %c0_444] : memref<768x128xf32, #tpu.memory_space<vmem>>, vector<8x128xf32>
    tpu.vector_store %arg2[%c744, %c0_444], %1719 {strides = array<i32>} : memref<768x128xf32, #tpu.memory_space<vmem>>, vector<8x128xf32>,
    %c112 = arith.constant 112 : index
    %c0_445 = arith.constant 0 : index
    %1725 = vector.load %arg2[%c112, %c0_445] : memref<768x128xf32, #tpu.memory_space<vmem>>, vector<8x128xf32>
    %c240 = arith.constant 240 : index
    %c0_446 = arith.constant 0 : index
    %1726 = vector.load %arg2[%c240, %c0_446] : memref<768x128xf32, #tpu.memory_space<vmem>>, vector<8x128xf32>
    %1727 = arith.addf %1725, %1726 : vector<8x128xf32>
    %1728 = arith.maximumf %1725, %1726 : vector<8x128xf32>
    %1729 = arith.minimumf %1725, %1726 : vector<8x128xf32>
    %c368 = arith.constant 368 : index
    %c0_447 = arith.constant 0 : index
    %1730 = vector.load %arg2[%c368, %c0_447] : memref<768x128xf32, #tpu.memory_space<vmem>>, vector<8x128xf32>
    %1731 = arith.addf %1727, %1730 : vector<8x128xf32>
    %1732 = arith.maximumf %1728, %1730 : vector<8x128xf32>
    %1733 = arith.minimumf %1729, %1730 : vector<8x128xf32>
    %cst_448 = arith.constant 0.333333343 : f32
    %1734 = vector.broadcast %cst_448 : f32 to vector<8x128xf32>
    %1735 = arith.mulf %1731, %1734 : vector<8x128xf32>
    %c496 = arith.constant 496 : index
    %c0_449 = arith.constant 0 : index
    %1736 = vector.load %arg2[%c496, %c0_449] : memref<768x128xf32, #tpu.memory_space<vmem>>, vector<8x128xf32>
    tpu.vector_store %arg2[%c496, %c0_449], %1735 {strides = array<i32>} : memref<768x128xf32, #tpu.memory_space<vmem>>, vector<8x128xf32>,
    %c624 = arith.constant 624 : index
    %c0_450 = arith.constant 0 : index
    %1737 = vector.load %arg2[%c624, %c0_450] : memref<768x128xf32, #tpu.memory_space<vmem>>, vector<8x128xf32>
    tpu.vector_store %arg2[%c624, %c0_450], %1732 {strides = array<i32>} : memref<768x128xf32, #tpu.memory_space<vmem>>, vector<8x128xf32>,
    %c752 = arith.constant 752 : index
    %c0_451 = arith.constant 0 : index
    %1738 = vector.load %arg2[%c752, %c0_451] : memref<768x128xf32, #tpu.memory_space<vmem>>, vector<8x128xf32>
    tpu.vector_store %arg2[%c752, %c0_451], %1733 {strides = array<i32>} : memref<768x128xf32, #tpu.memory_space<vmem>>, vector<8x128xf32>,
    %c120 = arith.constant 120 : index
    %c0_452 = arith.constant 0 : index
    %1739 = vector.load %arg2[%c120, %c0_452] : memref<768x128xf32, #tpu.memory_space<vmem>>, vector<8x128xf32>
    %c248 = arith.constant 248 : index
    %c0_453 = arith.constant 0 : index
    %1740 = vector.load %arg2[%c248, %c0_453] : memref<768x128xf32, #tpu.memory_space<vmem>>, vector<8x128xf32>
    %1741 = arith.addf %1739, %1740 : vector<8x128xf32>
    %1742 = arith.maximumf %1739, %1740 : vector<8x128xf32>
    %1743 = arith.minimumf %1739, %1740 : vector<8x128xf32>
    %c376 = arith.constant 376 : index
    %c0_454 = arith.constant 0 : index
    %1744 = vector.load %arg2[%c376, %c0_454] : memref<768x128xf32, #tpu.memory_space<vmem>>, vector<8x128xf32>
    %1745 = arith.addf %1741, %1744 : vector<8x128xf32>
    %1746 = arith.maximumf %1742, %1744 : vector<8x128xf32>
    %1747 = arith.minimumf %1743, %1744 : vector<8x128xf32>
    %cst_455 = arith.constant 0.333333343 : f32
    %1748 = vector.broadcast %cst_455 : f32 to vector<8x128xf32>
    %1749 = arith.mulf %1745, %1748 : vector<8x128xf32>
    %c504 = arith.constant 504 : index
    %c0_456 = arith.constant 0 : index
    %1750 = vector.load %arg2[%c504, %c0_456] : memref<768x128xf32, #tpu.memory_space<vmem>>, vector<8x128xf32>
    tpu.vector_store %arg2[%c504, %c0_456], %1749 {strides = array<i32>} : memref<768x128xf32, #tpu.memory_space<vmem>>, vector<8x128xf32>,
    %c632 = arith.constant 632 : index
    %c0_457 = arith.constant 0 : index
    %1751 = vector.load %arg2[%c632, %c0_457] : memref<768x128xf32, #tpu.memory_space<vmem>>, vector<8x128xf32>
    tpu.vector_store %arg2[%c632, %c0_457], %1746 {strides = array<i32>} : memref<768x128xf32, #tpu.memory_space<vmem>>, vector<8x128xf32>,
    %c760 = arith.constant 760 : index
    %c0_458 = arith.constant 0 : index
    %1752 = vector.load %arg2[%c760, %c0_458] : memref<768x128xf32, #tpu.memory_space<vmem>>, vector<8x128xf32>
    tpu.vector_store %arg2[%c760, %c0_458], %1747 {strides = array<i32>} : memref<768x128xf32, #tpu.memory_space<vmem>>, vector<8x128xf32>,
    return
  }
  func.func @transform_0(%arg0: i32) -> (i32, i32, i32) {
    %c0_i32 = arith.constant 0 : i32
    %c0_i32_0 = arith.constant 0 : i32
    %c0_i32_1 = arith.constant 0 : i32
    return %c0_i32, %c0_i32_0, %arg0 : i32, i32, i32
  }
  func.func @transform_1(%arg0: i32) -> (i32, i32) {
    %c0_i32 = arith.constant 0 : i32
    %c0_i32_0 = arith.constant 0 : i32
    return %c0_i32, %arg0 : i32, i32
  }
}

module attributes {stable_mosaic.version = 11 : i64} {
  func.func @_head_kernel(%arg0: i32, %arg1: memref<768x128xf32, #tpu.memory_space<vmem>>, %arg2: memref<30x768xf32, #tpu.memory_space<vmem>>, %arg3: memref<30x1xf32, #tpu.memory_space<vmem>>, %arg4: memref<1x30xf32, #tpu.memory_space<vmem>>, %arg5: memref<1x1xf32, #tpu.memory_space<vmem>>, %arg6: memref<1x128xf32, #tpu.memory_space<vmem>>) attributes {dimension_semantics = [#tpu.dimension_semantics<parallel>], iteration_bounds = array<i64: 1>, scalar_prefetch = 0 : i64, scratch_operands = 0 : i64, tpu.core_type = #tpu.core_type<tc>, window_params = [{transform_indices = @transform_0, window_bounds = array<i64: 768, 128>}, {pipeline_mode = #tpu.pipeline_mode<synchronous>, transform_indices = @transform_1, window_bounds = array<i64: 30, 768>}, {pipeline_mode = #tpu.pipeline_mode<synchronous>, transform_indices = @transform_2, window_bounds = array<i64: 30, 1>}, {pipeline_mode = #tpu.pipeline_mode<synchronous>, transform_indices = @transform_3, window_bounds = array<i64: 1, 30>}, {pipeline_mode = #tpu.pipeline_mode<synchronous>, transform_indices = @transform_4, window_bounds = array<i64: 1, 1>}, {transform_indices = @transform_5, window_bounds = array<i64: 1, 128>}]} {
    %c0 = arith.constant 0 : index
    %c0_0 = arith.constant 0 : index
    %0 = vector.load %arg2[%c0, %c0_0] : memref<30x768xf32, #tpu.memory_space<vmem>>, vector<30x768xf32>
    %c0_1 = arith.constant 0 : index
    %c0_2 = arith.constant 0 : index
    %1 = vector.load %arg1[%c0_1, %c0_2] : memref<768x128xf32, #tpu.memory_space<vmem>>, vector<768x128xf32>
    %cst = arith.constant dense<0.000000e+00> : vector<30x128xf32>
    %2 = tpu.matmul %0, %1, %cst {dimension_numbers = #tpu.dot_dimension_numbers<[1], [0], [0], [1], [0, 0, 1, 1], [], []>} : vector<30x768xf32>, vector<768x128xf32>, vector<30x128xf32> -> vector<30x128xf32>
    %c0_3 = arith.constant 0 : index
    %c0_4 = arith.constant 0 : index
    %3 = vector.load %arg3[%c0_3, %c0_4] : memref<30x1xf32, #tpu.memory_space<vmem>>, vector<30x1xf32>
    %4 = vector.broadcast %3 : vector<30x1xf32> to vector<30x128xf32>
    %5 = arith.addf %2, %4 : vector<30x128xf32>
    %cst_5 = arith.constant 0.000000e+00 : f32
    %6 = vector.broadcast %cst_5 : f32 to vector<30x128xf32>
    %7 = arith.maximumf %5, %6 : vector<30x128xf32>
    %c0_6 = arith.constant 0 : index
    %c0_7 = arith.constant 0 : index
    %8 = vector.load %arg4[%c0_6, %c0_7] : memref<1x30xf32, #tpu.memory_space<vmem>>, vector<1x30xf32>
    %cst_8 = arith.constant dense<0.000000e+00> : vector<1x128xf32>
    %9 = tpu.matmul %8, %7, %cst_8 {dimension_numbers = #tpu.dot_dimension_numbers<[1], [0], [0], [1], [0, 0, 1, 1], [], []>} : vector<1x30xf32>, vector<30x128xf32>, vector<1x128xf32> -> vector<1x128xf32>
    %c0_9 = arith.constant 0 : index
    %c0_10 = arith.constant 0 : index
    %10 = vector.load %arg5[%c0_9, %c0_10] : memref<1x1xf32, #tpu.memory_space<vmem>>, vector<1x1xf32>
    %11 = vector.broadcast %10 : vector<1x1xf32> to vector<1x128xf32>
    %12 = arith.addf %9, %11 : vector<1x128xf32>
    %c0_11 = arith.constant 0 : index
    %c0_12 = arith.constant 0 : index
    %13 = vector.load %arg6[%c0_11, %c0_12] : memref<1x128xf32, #tpu.memory_space<vmem>>, vector<1x128xf32>
    tpu.vector_store %arg6[%c0_11, %c0_12], %12 {strides = array<i32>} : memref<1x128xf32, #tpu.memory_space<vmem>>, vector<1x128xf32>,
    return
  }
  func.func @transform_0(%arg0: i32) -> (i32, i32) {
    %c0_i32 = arith.constant 0 : i32
    %c0_i32_0 = arith.constant 0 : i32
    return %c0_i32, %arg0 : i32, i32
  }
  func.func @transform_1(%arg0: i32) -> (i32, i32) {
    %c0_i32 = arith.constant 0 : i32
    %c0_i32_0 = arith.constant 0 : i32
    %c0_i32_1 = arith.constant 0 : i32
    return %c0_i32, %c0_i32_0 : i32, i32
  }
  func.func @transform_2(%arg0: i32) -> (i32, i32) {
    %c0_i32 = arith.constant 0 : i32
    %c0_i32_0 = arith.constant 0 : i32
    %c0_i32_1 = arith.constant 0 : i32
    return %c0_i32, %c0_i32_0 : i32, i32
  }
  func.func @transform_3(%arg0: i32) -> (i32, i32) {
    %c0_i32 = arith.constant 0 : i32
    %c0_i32_0 = arith.constant 0 : i32
    %c0_i32_1 = arith.constant 0 : i32
    return %c0_i32, %c0_i32_0 : i32, i32
  }
  func.func @transform_4(%arg0: i32) -> (i32, i32) {
    %c0_i32 = arith.constant 0 : i32
    %c0_i32_0 = arith.constant 0 : i32
    %c0_i32_1 = arith.constant 0 : i32
    return %c0_i32, %c0_i32_0 : i32, i32
  }
  func.func @transform_5(%arg0: i32) -> (i32, i32) {
    %c0_i32 = arith.constant 0 : i32
    %c0_i32_0 = arith.constant 0 : i32
    return %c0_i32, %arg0 : i32, i32
  }
}

</mosaic_0001>

<llo_original>
// kernel: custom-call
$region0: #{custom-call}
  %s0 = inlined_call_operand.vmem [shape: f32[768], index: 0, kind: output, shape index: {}]

// kernel: alphanet_forward.3
$region0: #{alphanet_forward.3}
  #allocation0 [shape = 'u32[]', space=smem, size = 0x4, offset = 0x4, fixed_abs, tag = 'smem constant byte address 0x4 - core index']
  #allocation1 [shape = 'u32[72,128]{1,0:T(1,128)}', space=vmem, size = 0x9000, scoped, tag = 'internal scratch']
  #allocation2 [shape = 'f32[1,1]{1,0:T(1,128)S(1)}', space=vmem, size = 0x200, scoped, tag = 'scoped memory for alphanet_forward.3']
  %s0 = inlined_call_operand.vmem [shape: f32[768,128], index: 0, kind: input, shape index: {}]
  %s1 = inlined_call_operand.vmem [shape: f32[30,768], index: 1, kind: input, shape index: {}]
  %s2 = inlined_call_operand.vmem [shape: f32[30,1], index: 2, kind: input, shape index: {}]
  %s3 = inlined_call_operand.vmem [shape: f32[1,30], index: 3, kind: input, shape index: {}]
  %s4 = inlined_call_operand.<no memory space> [shape: f32[1,1], index: 4, kind: input, shape index: {}]
  %s5 = inlined_call_operand.vmem [shape: f32[1,128], index: 5, kind: output, shape index: {}]
  %s6 = sld [smem:[#allocation0]]
  $region30: #{alphanet_forward.3} parent=0
    _
  %s8 = ssub.s32 1, %s6
  %s9 = scalar_select 0, %s8, %s6
  %v10 = vstv %s4
  %11 = vst [vmem:[#allocation2] sm:$0x1] %v10
  // Predicated region
  $region2: #{alphanet_forward.3} parent=0 // pred_check
    _
  $region3: #{alphanet_forward.3} parent=0 // pred_check_branch
    %13 = sbr.rel (0) target = $region5
  $region4: #{alphanet_forward.3} parent=0 // pred_region
    _
  $region5: #{alphanet_forward.3} parent=0 // pred_fallthru
    _
  // Predicated region
  $region6: #{alphanet_forward.3} parent=0 // pred_check
    _
  $region7: #{alphanet_forward.3} parent=0 // pred_check_branch
    %15 = sbr.rel (0) target = $region9
  $region8: #{alphanet_forward.3} parent=0 // pred_region
    _
  $region9: #{alphanet_forward.3} parent=0 // pred_fallthru
    _
  // Predicated region
  $region10: #{alphanet_forward.3} parent=0 // pred_check
    _
  $region11: #{alphanet_forward.3} parent=0 // pred_check_branch
    %17 = sbr.rel (0) target = $region13
  $region12: #{alphanet_forward.3} parent=0 // pred_region
    _
  $region13: #{alphanet_forward.3} parent=0 // pred_fallthru
    _
  // Predicated region
  $region14: #{alphanet_forward.3} parent=0 // pred_check
    _
  $region15: #{alphanet_forward.3} parent=0 // pred_check_branch
    %19 = sbr.rel (0) target = $region17
  $region16: #{alphanet_forward.3} parent=0 // pred_region
    _
  $region17: #{alphanet_forward.3} parent=0 // pred_fallthru
    _
  // Predicated region
  $region18: #{alphanet_forward.3} parent=0 // pred_check
    _
  $region19: #{alphanet_forward.3} parent=0 // pred_check_branch
    %21 = sbr.rel (0) target = $region21
  $region20: #{alphanet_forward.3} parent=0 // pred_region
    _
  $region21: #{alphanet_forward.3} parent=0 // pred_fallthru
    _
  %v22 = vld [vmem:[%s1] sm:$0xff]
  %v23 = vld [vmem:[%s1 + $0x8] sm:$0xff]
  %v24 = vld [vmem:[%s1 + $0x10] sm:$0xff]
  %v25 = vld [vmem:[%s1 + $0x18] sm:$0xff]
  %v26 = vld [vmem:[%s1 + $0x20] sm:$0xff]
  %v27 = vld [vmem:[%s1 + $0x28] sm:$0xff]
  %v28 = vld [vmem:[%s1 + $0x30] sm:$0xff]
  %v29 = vld [vmem:[%s1 + $0x38] sm:$0xff]
  %v30 = vld [vmem:[%s1 + $0x40] sm:$0xff]
  %v31 = vld [vmem:[%s1 + $0x48] sm:$0xff]
  %v32 = vld [vmem:[%s1 + $0x50] sm:$0xff]
  %v33 = vld [vmem:[%s1 + $0x58] sm:$0xff]
  %v34 = vld [vmem:[%s1 + $0x60] sm:$0xff]
  %v35 = vld [vmem:[%s1 + $0x68] sm:$0xff]
  %v36 = vld [vmem:[%s1 + $0x70] sm:$0xff]
  %v37 = vld [vmem:[%s1 + $0x78] sm:$0xff]
  %v38 = vld [vmem:[%s1 + $0x80] sm:$0xff]
  %v39 = vld [vmem:[%s1 + $0x88] sm:$0xff]
  %v40 = vld [vmem:[%s1 + $0x90] sm:$0x3f]
  %v41 = vld [vmem:[%s1 + $0x98] sm:$0x3f]
  %v42 = vld [vmem:[%s1 + $0xa0] sm:$0x3f]
  %v43 = vld [vmem:[%s1 + $0xa8] sm:$0x3f]
  %v44 = vld [vmem:[%s1 + $0xb0] sm:$0x3f]
  %v45 = vld [vmem:[%s1 + $0xb8] sm:$0x3f]
  %v46 = vld [vmem:[%s0] sm:$0xff]
  %v47 = vld [vmem:[%s0 + $0x8] sm:$0xff]
  %v48 = vld [vmem:[%s0 + $0x10] sm:$0xff]
  %v49 = vld [vmem:[%s0 + $0x18] sm:$0xff]
  %v50 = vld [vmem:[%s0 + $0x20] sm:$0xff]
  %v51 = vld [vmem:[%s0 + $0x28] sm:$0xff]
  %v52 = vld [vmem:[%s0 + $0x30] sm:$0xff]
  %v53 = vld [vmem:[%s0 + $0x38] sm:$0xff]
  %v54 = vld [vmem:[%s0 + $0x40] sm:$0xff]
  %v55 = vld [vmem:[%s0 + $0x48] sm:$0xff]
  %v56 = vld [vmem:[%s0 + $0x50] sm:$0xff]
  %v57 = vld [vmem:[%s0 + $0x58] sm:$0xff]
  %v58 = vld [vmem:[%s0 + $0x60] sm:$0xff]
  %v59 = vld [vmem:[%s0 + $0x68] sm:$0xff]
  %v60 = vld [vmem:[%s0 + $0x70] sm:$0xff]
  %v61 = vld [vmem:[%s0 + $0x78] sm:$0xff]
  %v62 = vld [vmem:[%s0 + $0x80] sm:$0xff]
  %v63 = vld [vmem:[%s0 + $0x88] sm:$0xff]
  %v64 = vld [vmem:[%s0 + $0x90] sm:$0xff]
  %v65 = vld [vmem:[%s0 + $0x98] sm:$0xff]
  %v66 = vld [vmem:[%s0 + $0xa0] sm:$0xff]
  %v67 = vld [vmem:[%s0 + $0xa8] sm:$0xff]
  %v68 = vld [vmem:[%s0 + $0xb0] sm:$0xff]
  %v69 = vld [vmem:[%s0 + $0xb8] sm:$0xff]
  %v70 = vld [vmem:[%s0 + $0xc0] sm:$0xff]
  %v71 = vld [vmem:[%s0 + $0xc8] sm:$0xff]
  %v72 = vld [vmem:[%s0 + $0xd0] sm:$0xff]
  %v73 = vld [vmem:[%s0 + $0xd8] sm:$0xff]
  %v74 = vld [vmem:[%s0 + $0xe0] sm:$0xff]
  %v75 = vld [vmem:[%s0 + $0xe8] sm:$0xff]
  %v76 = vld [vmem:[%s0 + $0xf0] sm:$0xff]
  %v77 = vld [vmem:[%s0 + $0xf8] sm:$0xff]
  %v78 = vld [vmem:[%s0 + $0x100] sm:$0xff]
  %v79 = vld [vmem:[%s0 + $0x108] sm:$0xff]
  %v80 = vld [vmem:[%s0 + $0x110] sm:$0xff]
  %v81 = vld [vmem:[%s0 + $0x118] sm:$0xff]
  %v82 = vld [vmem:[%s0 + $0x120] sm:$0xff]
  %v83 = vld [vmem:[%s0 + $0x128] sm:$0xff]
  %v84 = vld [vmem:[%s0 + $0x130] sm:$0xff]
  %v85 = vld [vmem:[%s0 + $0x138] sm:$0xff]
  %v86 = vld [vmem:[%s0 + $0x140] sm:$0xff]
  %v87 = vld [vmem:[%s0 + $0x148] sm:$0xff]
  %v88 = vld [vmem:[%s0 + $0x150] sm:$0xff]
  %v89 = vld [vmem:[%s0 + $0x158] sm:$0xff]
  %v90 = vld [vmem:[%s0 + $0x160] sm:$0xff]
  %v91 = vld [vmem:[%s0 + $0x168] sm:$0xff]
  %v92 = vld [vmem:[%s0 + $0x170] sm:$0xff]
  %v93 = vld [vmem:[%s0 + $0x178] sm:$0xff]
  %v94 = vld [vmem:[%s0 + $0x180] sm:$0xff]
  %v95 = vld [vmem:[%s0 + $0x188] sm:$0xff]
  %v96 = vld [vmem:[%s0 + $0x190] sm:$0xff]
  %v97 = vld [vmem:[%s0 + $0x198] sm:$0xff]
  %v98 = vld [vmem:[%s0 + $0x1a0] sm:$0xff]
  %v99 = vld [vmem:[%s0 + $0x1a8] sm:$0xff]
  %v100 = vld [vmem:[%s0 + $0x1b0] sm:$0xff]
  %v101 = vld [vmem:[%s0 + $0x1b8] sm:$0xff]
  %v102 = vld [vmem:[%s0 + $0x1c0] sm:$0xff]
  %v103 = vld [vmem:[%s0 + $0x1c8] sm:$0xff]
  %v104 = vld [vmem:[%s0 + $0x1d0] sm:$0xff]
  %v105 = vld [vmem:[%s0 + $0x1d8] sm:$0xff]
  %v106 = vld [vmem:[%s0 + $0x1e0] sm:$0xff]
  %v107 = vld [vmem:[%s0 + $0x1e8] sm:$0xff]
  %v108 = vld [vmem:[%s0 + $0x1f0] sm:$0xff]
  %v109 = vld [vmem:[%s0 + $0x1f8] sm:$0xff]
  %v110 = vld [vmem:[%s0 + $0x200] sm:$0xff]
  %v111 = vld [vmem:[%s0 + $0x208] sm:$0xff]
  %v112 = vld [vmem:[%s0 + $0x210] sm:$0xff]
  %v113 = vld [vmem:[%s0 + $0x218] sm:$0xff]
  %v114 = vld [vmem:[%s0 + $0x220] sm:$0xff]
  %v115 = vld [vmem:[%s0 + $0x228] sm:$0xff]
  %v116 = vld [vmem:[%s0 + $0x230] sm:$0xff]
  %v117 = vld [vmem:[%s0 + $0x238] sm:$0xff]
  %v118 = vld [vmem:[%s0 + $0x240] sm:$0xff]
  %v119 = vld [vmem:[%s0 + $0x248] sm:$0xff]
  %v120 = vld [vmem:[%s0 + $0x250] sm:$0xff]
  %v121 = vld [vmem:[%s0 + $0x258] sm:$0xff]
  %v122 = vld [vmem:[%s0 + $0x260] sm:$0xff]
  %v123 = vld [vmem:[%s0 + $0x268] sm:$0xff]
  %v124 = vld [vmem:[%s0 + $0x270] sm:$0xff]
  %v125 = vld [vmem:[%s0 + $0x278] sm:$0xff]
  %v126 = vld [vmem:[%s0 + $0x280] sm:$0xff]
  %v127 = vld [vmem:[%s0 + $0x288] sm:$0xff]
  %v128 = vld [vmem:[%s0 + $0x290] sm:$0xff]
  %v129 = vld [vmem:[%s0 + $0x298] sm:$0xff]
  %v130 = vld [vmem:[%s0 + $0x2a0] sm:$0xff]
  %v131 = vld [vmem:[%s0 + $0x2a8] sm:$0xff]
  %v132 = vld [vmem:[%s0 + $0x2b0] sm:$0xff]
  %v133 = vld [vmem:[%s0 + $0x2b8] sm:$0xff]
  %v134 = vld [vmem:[%s0 + $0x2c0] sm:$0xff]
  %v135 = vld [vmem:[%s0 + $0x2c8] sm:$0xff]
  %v136 = vld [vmem:[%s0 + $0x2d0] sm:$0xff]
  %v137 = vld [vmem:[%s0 + $0x2d8] sm:$0xff]
  %v138 = vld [vmem:[%s0 + $0x2e0] sm:$0xff]
  %v139 = vld [vmem:[%s0 + $0x2e8] sm:$0xff]
  %v140 = vld [vmem:[%s0 + $0x2f0] sm:$0xff]
  %v141 = vld [vmem:[%s0 + $0x2f8] sm:$0xff]
  %v142 = vld [vmem:[%s2] sm:$0xff]
  %v143 = vld [vmem:[%s2 + $0x8] sm:$0xff]
  %v144 = vld [vmem:[%s2 + $0x10] sm:$0xff]
  %v145 = vld [vmem:[%s2 + $0x18] sm:$0x3f]
  %147 = vset.pattern.permute.xlu0 0
  %148 = vperm.xlu0 %147, %v142
  %v149 = vpop.permute.xlu0 %148
  %152 = vset.pattern.permute.xlu0 0
  %153 = vperm.xlu0 %152, %v143
  %v154 = vpop.permute.xlu0 %153
  %157 = vset.pattern.permute.xlu0 0
  %158 = vperm.xlu0 %157, %v144
  %v159 = vpop.permute.xlu0 %158
  %162 = vset.pattern.permute.xlu0 0
  %163 = vperm.xlu0 %162, %v145
  %v164 = vpop.permute.xlu0 %163
  %166 = vmatpush.msra.mxu0 %v61
  %167 = vmatpush.msra.mxu0 %v60
  %168 = vmatpush.msra.mxu0 %v59
  %169 = vmatpush.msra.mxu0 %v58
  %170 = vmatpush.msra.mxu0 %v57
  %171 = vmatpush.msra.mxu0 %v56
  %172 = vmatpush.msra.mxu0 %v55
  %173 = vmatpush.msra.mxu0 %v54
  %174 = vmatpush.msra.mxu0 %v53
  %175 = vmatpush.msra.mxu0 %v52
  %176 = vmatpush.msra.mxu0 %v51
  %177 = vmatpush.msra.mxu0 %v50
  %178 = vmatpush.msra.mxu0 %v49
  %179 = vmatpush.msra.mxu0 %v48
  %180 = vmatpush.msra.mxu0 %v47
  %181 = vmatpush.msra.mxu0 %v46
  %182 = vmatmul.f32.gmra.mxu0 %v22
  %v183 = vpop.f32.mrf.mxu0
  %v184 = vadd.f32 %v149, %v183
  %185 = vmatmul.f32.gmra.mxu0 %v28
  %v186 = vpop.f32.mrf.mxu0
  %v187 = vadd.f32 %v154, %v186
  %188 = vmatmul.f32.gmra.mxu0 %v34
  %v189 = vpop.f32.mrf.mxu0
  %v190 = vadd.f32 %v159, %v189
  %191 = vmatmul.f32.gmra.mxu0 %v40
  %v192 = vpop.f32.mrf.mxu0
  %v193 = vadd.f32 %v164, %v192
  %194 = vdwg.mxu0
  %195 = vmatpush.msra.mxu0 %v77
  %196 = vmatpush.msra.mxu0 %v76
  %197 = vmatpush.msra.mxu0 %v75
  %198 = vmatpush.msra.mxu0 %v74
  %199 = vmatpush.msra.mxu0 %v73
  %200 = vmatpush.msra.mxu0 %v72
  %201 = vmatpush.msra.mxu0 %v71
  %202 = vmatpush.msra.mxu0 %v70
  %203 = vmatpush.msra.mxu0 %v69
  %204 = vmatpush.msra.mxu0 %v68
  %205 = vmatpush.msra.mxu0 %v67
  %206 = vmatpush.msra.mxu0 %v66
  %207 = vmatpush.msra.mxu0 %v65
  %208 = vmatpush.msra.mxu0 %v64
  %209 = vmatpush.msra.mxu0 %v63
  %210 = vmatpush.msra.mxu0 %v62
  %211 = vmatmul.f32.gmra.mxu0 %v23
  %v212 = vpop.f32.mrf.mxu0
  %v213 = vadd.f32 %v184, %v212
  %214 = vmatmul.f32.gmra.mxu0 %v29
  %v215 = vpop.f32.mrf.mxu0
  %v216 = vadd.f32 %v187, %v215
  %217 = vmatmul.f32.gmra.mxu0 %v35
  %v218 = vpop.f32.mrf.mxu0
  %v219 = vadd.f32 %v190, %v218
  %220 = vmatmul.f32.gmra.mxu0 %v41
  %v221 = vpop.f32.mrf.mxu0
  %v222 = vadd.f32 %v193, %v221
  %223 = vdwg.mxu0
  %224 = vmatpush.msra.mxu0 %v93
  %225 = vmatpush.msra.mxu0 %v92
  %226 = vmatpush.msra.mxu0 %v91
  %227 = vmatpush.msra.mxu0 %v90
  %228 = vmatpush.msra.mxu0 %v89
  %229 = vmatpush.msra.mxu0 %v88
  %230 = vmatpush.msra.mxu0 %v87
  %231 = vmatpush.msra.mxu0 %v86
  %232 = vmatpush.msra.mxu0 %v85
  %233 = vmatpush.msra.mxu0 %v84
  %234 = vmatpush.msra.mxu0 %v83
  %235 = vmatpush.msra.mxu0 %v82
  %236 = vmatpush.msra.mxu0 %v81
  %237 = vmatpush.msra.mxu0 %v80
  %238 = vmatpush.msra.mxu0 %v79
  %239 = vmatpush.msra.mxu0 %v78
  %240 = vmatmul.f32.gmra.mxu0 %v24
  %v241 = vpop.f32.mrf.mxu0
  %v242 = vadd.f32 %v213, %v241
  %243 = vmatmul.f32.gmra.mxu0 %v30
  %v244 = vpop.f32.mrf.mxu0
  %v245 = vadd.f32 %v216, %v244
  %246 = vmatmul.f32.gmra.mxu0 %v36
  %v247 = vpop.f32.mrf.mxu0
  %v248 = vadd.f32 %v219, %v247
  %249 = vmatmul.f32.gmra.mxu0 %v42
  %v250 = vpop.f32.mrf.mxu0
  %v251 = vadd.f32 %v222, %v250
  %252 = vdwg.mxu0
  %253 = vmatpush.msra.mxu0 %v109
  %254 = vmatpush.msra.mxu0 %v108
  %255 = vmatpush.msra.mxu0 %v107
  %256 = vmatpush.msra.mxu0 %v106
  %257 = vmatpush.msra.mxu0 %v105
  %258 = vmatpush.msra.mxu0 %v104
  %259 = vmatpush.msra.mxu0 %v103
  %260 = vmatpush.msra.mxu0 %v102
  %261 = vmatpush.msra.mxu0 %v101
  %262 = vmatpush.msra.mxu0 %v100
  %263 = vmatpush.msra.mxu0 %v99
  %264 = vmatpush.msra.mxu0 %v98
  %265 = vmatpush.msra.mxu0 %v97
  %266 = vmatpush.msra.mxu0 %v96
  %267 = vmatpush.msra.mxu0 %v95
  %268 = vmatpush.msra.mxu0 %v94
  %269 = vmatmul.f32.gmra.mxu0 %v25
  %v270 = vpop.f32.mrf.mxu0
  %v271 = vadd.f32 %v242, %v270
  %272 = vmatmul.f32.gmra.mxu0 %v31
  %v273 = vpop.f32.mrf.mxu0
  %v274 = vadd.f32 %v245, %v273
  %275 = vmatmul.f32.gmra.mxu0 %v37
  %v276 = vpop.f32.mrf.mxu0
  %v277 = vadd.f32 %v248, %v276
  %278 = vmatmul.f32.gmra.mxu0 %v43
  %v279 = vpop.f32.mrf.mxu0
  %v280 = vadd.f32 %v251, %v279
  %281 = vdwg.mxu0
  %282 = vmatpush.msra.mxu0 %v125
  %283 = vmatpush.msra.mxu0 %v124
  %284 = vmatpush.msra.mxu0 %v123
  %285 = vmatpush.msra.mxu0 %v122
  %286 = vmatpush.msra.mxu0 %v121
  %287 = vmatpush.msra.mxu0 %v120
  %288 = vmatpush.msra.mxu0 %v119
  %289 = vmatpush.msra.mxu0 %v118
  %290 = vmatpush.msra.mxu0 %v117
  %291 = vmatpush.msra.mxu0 %v116
  %292 = vmatpush.msra.mxu0 %v115
  %293 = vmatpush.msra.mxu0 %v114
  %294 = vmatpush.msra.mxu0 %v113
  %295 = vmatpush.msra.mxu0 %v112
  %296 = vmatpush.msra.mxu0 %v111
  %297 = vmatpush.msra.mxu0 %v110
  %298 = vmatmul.f32.gmra.mxu0 %v26
  %v299 = vpop.f32.mrf.mxu0
  %v300 = vadd.f32 %v271, %v299
  %301 = vmatmul.f32.gmra.mxu0 %v32
  %v302 = vpop.f32.mrf.mxu0
  %v303 = vadd.f32 %v274, %v302
  %304 = vmatmul.f32.gmra.mxu0 %v38
  %v305 = vpop.f32.mrf.mxu0
  %v306 = vadd.f32 %v277, %v305
  %307 = vmatmul.f32.gmra.mxu0 %v44
  %v308 = vpop.f32.mrf.mxu0
  %v309 = vadd.f32 %v280, %v308
  %310 = vdwg.mxu0
  %311 = vmatpush.msra.mxu0 %v141
  %312 = vmatpush.msra.mxu0 %v140
  %313 = vmatpush.msra.mxu0 %v139
  %314 = vmatpush.msra.mxu0 %v138
  %315 = vmatpush.msra.mxu0 %v137
  %316 = vmatpush.msra.mxu0 %v136
  %317 = vmatpush.msra.mxu0 %v135
  %318 = vmatpush.msra.mxu0 %v134
  %319 = vmatpush.msra.mxu0 %v133
  %320 = vmatpush.msra.mxu0 %v132
  %321 = vmatpush.msra.mxu0 %v131
  %322 = vmatpush.msra.mxu0 %v130
  %323 = vmatpush.msra.mxu0 %v129
  %324 = vmatpush.msra.mxu0 %v128
  %325 = vmatpush.msra.mxu0 %v127
  %326 = vmatpush.msra.mxu0 %v126
  %327 = vmatmul.f32.gmra.mxu0 %v27
  %v328 = vpop.f32.mrf.mxu0
  %v329 = vadd.f32 %v300, %v328
  %330 = vmatmul.f32.gmra.mxu0 %v33
  %v331 = vpop.f32.mrf.mxu0
  %v332 = vadd.f32 %v303, %v331
  %333 = vmatmul.f32.gmra.mxu0 %v39
  %v334 = vpop.f32.mrf.mxu0
  %v335 = vadd.f32 %v306, %v334
  %336 = vmatmul.f32.gmra.mxu0 %v45
  %v337 = vpop.f32.mrf.mxu0
  %v338 = vadd.f32 %v309, %v337
  %339 = vdwg.mxu0
  %v340 = vmax.f32 %v329, 0.0
  %v341 = vmax.f32 %v332, 0.0
  %v342 = vmax.f32 %v335, 0.0
  %v343 = vmax.f32 %v338, 0.0
  %v344 = vld [vmem:[%s3] sm:$0x1]
  %v345 = vld [vmem:[#allocation2] sm:$0x1]
  %347 = vset.pattern.permute.xlu0 0
  %348 = vperm.xlu0 %347, %v345
  %v349 = vpop.permute.xlu0 %348
  %v351 = vperm.slane %v349, 0
  %vm352 = vcmask 244736
  %v354 = vsel %vm352, %v344, 0
  %vm356 = vcmask 1045504
  %v358 = vsel %vm356, %v343, 0
  %360 = vmatpush.msra.mxu0 0.0
  %361 = vmatpush.msra.mxu0 0.0
  %362 = vmatpush.msra.mxu0 0.0
  %363 = vmatpush.msra.mxu0 0.0
  %364 = vmatpush.msra.mxu0 0.0
  %365 = vmatpush.msra.mxu0 0.0
  %366 = vmatpush.msra.mxu0 0.0
  %367 = vmatpush.msra.mxu0 0.0
  %368 = vmatpush.msra.mxu0 0.0
  %369 = vmatpush.msra.mxu0 0.0
  %370 = vmatpush.msra.mxu0 0.0
  %371 = vmatpush.msra.mxu0 0.0
  %372 = vmatpush.msra.mxu0 %v358
  %373 = vmatpush.msra.mxu0 %v342
  %374 = vmatpush.msra.mxu0 %v341
  %375 = vmatpush.msra.mxu0 %v340
  %376 = vmatmul.f32.gmra.mxu0 %v354
  %v377 = vpop.f32.mrf.mxu0
  %v378 = vadd.f32 %v351, %v377
  %379 = vdwg.mxu0
  %380 = vst [vmem:[%s5] sm:$0x1] %v378
  // Predicated region
  $region22: #{alphanet_forward.3} parent=0 // pred_check
    _
  $region23: #{alphanet_forward.3} parent=0 // pred_check_branch
    %382 = sbr.rel (0) target = $region25
  $region24: #{alphanet_forward.3} parent=0 // pred_region
    _
  $region25: #{alphanet_forward.3} parent=0 // pred_fallthru
    _
  // Predicated region
  $region26: #{alphanet_forward.3} parent=0 // pred_check
    _
  $region27: #{alphanet_forward.3} parent=0 // pred_check_branch
    %384 = sbr.rel (0) target = $region29
  $region28: #{alphanet_forward.3} parent=0 // pred_region
    _
  $region29: #{alphanet_forward.3} parent=0 // pred_fallthru
    _

// kernel: alphanet_forward.2
$region0: #{alphanet_forward.2}
  #allocation0 [shape = 'u32[]', space=smem, size = 0x4, offset = 0x4, fixed_abs, tag = 'smem constant byte address 0x4 - core index']
  #allocation1 [shape = 'u32[72,128]{1,0:T(1,128)}', space=vmem, size = 0x9000, scoped, tag = 'internal scratch']
  %s0 = inlined_call_operand.vmem [shape: f32[30,9,128], index: 0, kind: input, shape index: {}]
  %s1 = inlined_call_operand.vmem [shape: f32[768,128], index: 1, kind: output, shape index: {}]
  %s2 = sld [smem:[#allocation0]]
  $region14: #{alphanet_forward.2} parent=0
    _
  %s4 = ssub.s32 1, %s2
  %s5 = scalar_select 0, %s4, %s2
  // Predicated region
  $region2: #{alphanet_forward.2} parent=0 // pred_check
    _
  $region3: #{alphanet_forward.2} parent=0 // pred_check_branch
    %7 = sbr.rel (0) target = $region5
  $region4: #{alphanet_forward.2} parent=0 // pred_region
    _
  $region5: #{alphanet_forward.2} parent=0 // pred_fallthru
    _
  %v8 = vld [vmem:[%s0] sm:$0xff]
  %v9 = vld [vmem:[%s0 + $0x8] sm:$0x1]
  %s10 = scalar_lea.vmem %s0, 16
  %v11 = vld [vmem:[%s10] sm:$0xff]
  %v12 = vld [vmem:[%s10 + $0x8] sm:$0x1]
  %v13 = vadd.f32 %v8, %v11
  %v14 = vadd.f32 %v9, %v12
  %s15 = scalar_lea.vmem %s0, 32
  %v16 = vld [vmem:[%s15] sm:$0xff]
  %v17 = vld [vmem:[%s15 + $0x8] sm:$0x1]
  %v18 = vadd.f32 %v13, %v16
  %v19 = vadd.f32 %v14, %v17
  %s20 = scalar_lea.vmem %s0, 48
  %v21 = vld [vmem:[%s20] sm:$0xff]
  %v22 = vld [vmem:[%s20 + $0x8] sm:$0x1]
  %v23 = vadd.f32 %v18, %v21
  %v24 = vadd.f32 %v19, %v22
  %s25 = scalar_lea.vmem %s0, 64
  %v26 = vld [vmem:[%s25] sm:$0xff]
  %v27 = vld [vmem:[%s25 + $0x8] sm:$0x1]
  %v28 = vadd.f32 %v23, %v26
  %v29 = vadd.f32 %v24, %v27
  %s30 = scalar_lea.vmem %s0, 80
  %v31 = vld [vmem:[%s30] sm:$0xff]
  %v32 = vld [vmem:[%s30 + $0x8] sm:$0x1]
  %v33 = vadd.f32 %v28, %v31
  %v34 = vadd.f32 %v29, %v32
  %s35 = scalar_lea.vmem %s0, 96
  %v36 = vld [vmem:[%s35] sm:$0xff]
  %v37 = vld [vmem:[%s35 + $0x8] sm:$0x1]
  %v38 = vadd.f32 %v33, %v36
  %v39 = vadd.f32 %v34, %v37
  %s40 = scalar_lea.vmem %s0, 112
  %v41 = vld [vmem:[%s40] sm:$0xff]
  %v42 = vld [vmem:[%s40 + $0x8] sm:$0x1]
  %v43 = vadd.f32 %v38, %v41
  %v44 = vadd.f32 %v39, %v42
  %s45 = scalar_lea.vmem %s0, 128
  %v46 = vld [vmem:[%s45] sm:$0xff]
  %v47 = vld [vmem:[%s45 + $0x8] sm:$0x1]
  %v48 = vadd.f32 %v43, %v46
  %v49 = vadd.f32 %v44, %v47
  %s50 = scalar_lea.vmem %s0, 144
  %v51 = vld [vmem:[%s50] sm:$0xff]
  %v52 = vld [vmem:[%s50 + $0x8] sm:$0x1]
  %v53 = vadd.f32 %v48, %v51
  %v54 = vadd.f32 %v49, %v52
  %v55 = vmul.f32 %v53, 0.1
  %v56 = vmul.f32 %v54, 0.1
  %v57 = vsub.f32 %v8, %v55
  %v58 = vsub.f32 %v9, %v56
  %v59 = vmul.f32 %v57, %v57
  %v60 = vmul.f32 %v58, %v58
  %v61 = vmul.f32 %v8, 0.018181818
  %v62 = vmul.f32 %v9, 0.018181818
  %vm65 = vcmask 1046528
  %v66 = vrot.slane %v57, 1
  %v67 = vrot.slane %v58, 1
  %v68 = vsel %vm65, %v66, %v67
  %v70 = vmul.f32 %v57, %v68
  %vm71 = vcmask 1045504
  %v72 = vrot.slane %v57, 2
  %v73 = vrot.slane %v58, 2
  %v74 = vsel %vm71, %v72, %v73
  %v76 = vmul.f32 %v57, %v74
  %vm77 = vcmask 1044480
  %v78 = vrot.slane %v57, 3
  %v79 = vrot.slane %v58, 3
  %v80 = vsel %vm77, %v78, %v79
  %v82 = vmul.f32 %v57, %v80
  %vm83 = vcmask 1043456
  %v84 = vrot.slane %v57, 4
  %v85 = vrot.slane %v58, 4
  %v86 = vsel %vm83, %v84, %v85
  %v88 = vmul.f32 %v57, %v86
  %vm89 = vcmask 1042432
  %v90 = vrot.slane %v57, 5
  %v91 = vrot.slane %v58, 5
  %v92 = vsel %vm89, %v90, %v91
  %v94 = vmul.f32 %v57, %v92
  %vm95 = vcmask 1041408
  %v96 = vrot.slane %v57, 6
  %v97 = vrot.slane %v58, 6
  %v98 = vsel %vm95, %v96, %v97
  %v100 = vmul.f32 %v57, %v98
  %vm101 = vcmask 1040384
  %v102 = vrot.slane %v57, 7
  %v103 = vrot.slane %v58, 7
  %v104 = vsel %vm101, %v102, %v103
  %v106 = vmul.f32 %v57, %v104
  %v107 = vmul.f32 %v57, %v58
  %v108 = vsub.f32 %v11, %v55
  %v109 = vsub.f32 %v12, %v56
  %v110 = vmul.f32 %v108, %v108
  %v111 = vmul.f32 %v109, %v109
  %v112 = vadd.f32 %v59, %v110
  %v113 = vadd.f32 %v60, %v111
  %v114 = vmul.f32 %v11, 0.036363635
  %v115 = vmul.f32 %v12, 0.036363635
  %v116 = vadd.f32 %v61, %v114
  %v117 = vadd.f32 %v62, %v115
  %v120 = vrot.slane %v108, 1
  %v121 = vrot.slane %v109, 1
  %v122 = vsel %vm65, %v120, %v121
  %v124 = vmul.f32 %v108, %v122
  %v125 = vadd.f32 %v70, %v124
  %v126 = vrot.slane %v108, 2
  %v127 = vrot.slane %v109, 2
  %v128 = vsel %vm71, %v126, %v127
  %v130 = vmul.f32 %v108, %v128
  %v131 = vadd.f32 %v76, %v130
  %v132 = vrot.slane %v108, 3
  %v133 = vrot.slane %v109, 3
  %v134 = vsel %vm77, %v132, %v133
  %v136 = vmul.f32 %v108, %v134
  %v137 = vadd.f32 %v82, %v136
  %v138 = vrot.slane %v108, 4
  %v139 = vrot.slane %v109, 4
  %v140 = vsel %vm83, %v138, %v139
  %v142 = vmul.f32 %v108, %v140
  %v143 = vadd.f32 %v88, %v142
  %v144 = vrot.slane %v108, 5
  %v145 = vrot.slane %v109, 5
  %v146 = vsel %vm89, %v144, %v145
  %v148 = vmul.f32 %v108, %v146
  %v149 = vadd.f32 %v94, %v148
  %v150 = vrot.slane %v108, 6
  %v151 = vrot.slane %v109, 6
  %v152 = vsel %vm95, %v150, %v151
  %v154 = vmul.f32 %v108, %v152
  %v155 = vadd.f32 %v100, %v154
  %v156 = vrot.slane %v108, 7
  %v157 = vrot.slane %v109, 7
  %v158 = vsel %vm101, %v156, %v157
  %v160 = vmul.f32 %v108, %v158
  %v161 = vadd.f32 %v106, %v160
  %v162 = vmul.f32 %v108, %v109
  %v163 = vadd.f32 %v107, %v162
  %v164 = vsub.f32 %v16, %v55
  %v165 = vsub.f32 %v17, %v56
  %v166 = vmul.f32 %v164, %v164
  %v167 = vmul.f32 %v165, %v165
  %v168 = vadd.f32 %v112, %v166
  %v169 = vadd.f32 %v113, %v167
  %v170 = vmul.f32 %v16, 0.054545455
  %v171 = vmul.f32 %v17, 0.054545455
  %v172 = vadd.f32 %v116, %v170
  %v173 = vadd.f32 %v117, %v171
  %v176 = vrot.slane %v164, 1
  %v177 = vrot.slane %v165, 1
  %v178 = vsel %vm65, %v176, %v177
  %v180 = vmul.f32 %v164, %v178
  %v181 = vadd.f32 %v125, %v180
  %v182 = vrot.slane %v164, 2
  %v183 = vrot.slane %v165, 2
  %v184 = vsel %vm71, %v182, %v183
  %v186 = vmul.f32 %v164, %v184
  %v187 = vadd.f32 %v131, %v186
  %v188 = vrot.slane %v164, 3
  %v189 = vrot.slane %v165, 3
  %v190 = vsel %vm77, %v188, %v189
  %v192 = vmul.f32 %v164, %v190
  %v193 = vadd.f32 %v137, %v192
  %v194 = vrot.slane %v164, 4
  %v195 = vrot.slane %v165, 4
  %v196 = vsel %vm83, %v194, %v195
  %v198 = vmul.f32 %v164, %v196
  %v199 = vadd.f32 %v143, %v198
  %v200 = vrot.slane %v164, 5
  %v201 = vrot.slane %v165, 5
  %v202 = vsel %vm89, %v200, %v201
  %v204 = vmul.f32 %v164, %v202
  %v205 = vadd.f32 %v149, %v204
  %v206 = vrot.slane %v164, 6
  %v207 = vrot.slane %v165, 6
  %v208 = vsel %vm95, %v206, %v207
  %v210 = vmul.f32 %v164, %v208
  %v211 = vadd.f32 %v155, %v210
  %v212 = vrot.slane %v164, 7
  %v213 = vrot.slane %v165, 7
  %v214 = vsel %vm101, %v212, %v213
  %v216 = vmul.f32 %v164, %v214
  %v217 = vadd.f32 %v161, %v216
  %v218 = vmul.f32 %v164, %v165
  %v219 = vadd.f32 %v163, %v218
  %v220 = vsub.f32 %v21, %v55
  %v221 = vsub.f32 %v22, %v56
  %v222 = vmul.f32 %v220, %v220
  %v223 = vmul.f32 %v221, %v221
  %v224 = vadd.f32 %v168, %v222
  %v225 = vadd.f32 %v169, %v223
  %v226 = vmul.f32 %v21, 0.07272727
  %v227 = vmul.f32 %v22, 0.07272727
  %v228 = vadd.f32 %v172, %v226
  %v229 = vadd.f32 %v173, %v227
  %v232 = vrot.slane %v220, 1
  %v233 = vrot.slane %v221, 1
  %v234 = vsel %vm65, %v232, %v233
  %v236 = vmul.f32 %v220, %v234
  %v237 = vadd.f32 %v181, %v236
  %v238 = vrot.slane %v220, 2
  %v239 = vrot.slane %v221, 2
  %v240 = vsel %vm71, %v238, %v239
  %v242 = vmul.f32 %v220, %v240
  %v243 = vadd.f32 %v187, %v242
  %v244 = vrot.slane %v220, 3
  %v245 = vrot.slane %v221, 3
  %v246 = vsel %vm77, %v244, %v245
  %v248 = vmul.f32 %v220, %v246
  %v249 = vadd.f32 %v193, %v248
  %v250 = vrot.slane %v220, 4
  %v251 = vrot.slane %v221, 4
  %v252 = vsel %vm83, %v250, %v251
  %v254 = vmul.f32 %v220, %v252
  %v255 = vadd.f32 %v199, %v254
  %v256 = vrot.slane %v220, 5
  %v257 = vrot.slane %v221, 5
  %v258 = vsel %vm89, %v256, %v257
  %v260 = vmul.f32 %v220, %v258
  %v261 = vadd.f32 %v205, %v260
  %v262 = vrot.slane %v220, 6
  %v263 = vrot.slane %v221, 6
  %v264 = vsel %vm95, %v262, %v263
  %v266 = vmul.f32 %v220, %v264
  %v267 = vadd.f32 %v211, %v266
  %v268 = vrot.slane %v220, 7
  %v269 = vrot.slane %v221, 7
  %v270 = vsel %vm101, %v268, %v269
  %v272 = vmul.f32 %v220, %v270
  %v273 = vadd.f32 %v217, %v272
  %v274 = vmul.f32 %v220, %v221
  %v275 = vadd.f32 %v219, %v274
  %v276 = vsub.f32 %v26, %v55
  %v277 = vsub.f32 %v27, %v56
  %v278 = vmul.f32 %v276, %v276
  %v279 = vmul.f32 %v277, %v277
  %v280 = vadd.f32 %v224, %v278
  %v281 = vadd.f32 %v225, %v279
  %v282 = vmul.f32 %v26, 0.09090909
  %v283 = vmul.f32 %v27, 0.09090909
  %v284 = vadd.f32 %v228, %v282
  %v285 = vadd.f32 %v229, %v283
  %v288 = vrot.slane %v276, 1
  %v289 = vrot.slane %v277, 1
  %v290 = vsel %vm65, %v288, %v289
  %v292 = vmul.f32 %v276, %v290
  %v293 = vadd.f32 %v237, %v292
  %v294 = vrot.slane %v276, 2
  %v295 = vrot.slane %v277, 2
  %v296 = vsel %vm71, %v294, %v295
  %v298 = vmul.f32 %v276, %v296
  %v299 = vadd.f32 %v243, %v298
  %v300 = vrot.slane %v276, 3
  %v301 = vrot.slane %v277, 3
  %v302 = vsel %vm77, %v300, %v301
  %v304 = vmul.f32 %v276, %v302
  %v305 = vadd.f32 %v249, %v304
  %v306 = vrot.slane %v276, 4
  %v307 = vrot.slane %v277, 4
  %v308 = vsel %vm83, %v306, %v307
  %v310 = vmul.f32 %v276, %v308
  %v311 = vadd.f32 %v255, %v310
  %v312 = vrot.slane %v276, 5
  %v313 = vrot.slane %v277, 5
  %v314 = vsel %vm89, %v312, %v313
  %v316 = vmul.f32 %v276, %v314
  %v317 = vadd.f32 %v261, %v316
  %v318 = vrot.slane %v276, 6
  %v319 = vrot.slane %v277, 6
  %v320 = vsel %vm95, %v318, %v319
  %v322 = vmul.f32 %v276, %v320
  %v323 = vadd.f32 %v267, %v322
  %v324 = vrot.slane %v276, 7
  %v325 = vrot.slane %v277, 7
  %v326 = vsel %vm101, %v324, %v325
  %v328 = vmul.f32 %v276, %v326
  %v329 = vadd.f32 %v273, %v328
  %v330 = vmul.f32 %v276, %v277
  %v331 = vadd.f32 %v275, %v330
  %v332 = vsub.f32 %v31, %v55
  %v333 = vsub.f32 %v32, %v56
  %v334 = vmul.f32 %v332, %v332
  %v335 = vmul.f32 %v333, %v333
  %v336 = vadd.f32 %v280, %v334
  %v337 = vadd.f32 %v281, %v335
  %v338 = vmul.f32 %v31, 0.10909091
  %v339 = vmul.f32 %v32, 0.10909091
  %v340 = vadd.f32 %v284, %v338
  %v341 = vadd.f32 %v285, %v339
  %v344 = vrot.slane %v332, 1
  %v345 = vrot.slane %v333, 1
  %v346 = vsel %vm65, %v344, %v345
  %v348 = vmul.f32 %v332, %v346
  %v349 = vadd.f32 %v293, %v348
  %v350 = vrot.slane %v332, 2
  %v351 = vrot.slane %v333, 2
  %v352 = vsel %vm71, %v350, %v351
  %v354 = vmul.f32 %v332, %v352
  %v355 = vadd.f32 %v299, %v354
  %v356 = vrot.slane %v332, 3
  %v357 = vrot.slane %v333, 3
  %v358 = vsel %vm77, %v356, %v357
  %v360 = vmul.f32 %v332, %v358
  %v361 = vadd.f32 %v305, %v360
  %v362 = vrot.slane %v332, 4
  %v363 = vrot.slane %v333, 4
  %v364 = vsel %vm83, %v362, %v363
  %v366 = vmul.f32 %v332, %v364
  %v367 = vadd.f32 %v311, %v366
  %v368 = vrot.slane %v332, 5
  %v369 = vrot.slane %v333, 5
  %v370 = vsel %vm89, %v368, %v369
  %v372 = vmul.f32 %v332, %v370
  %v373 = vadd.f32 %v317, %v372
  %v374 = vrot.slane %v332, 6
  %v375 = vrot.slane %v333, 6
  %v376 = vsel %vm95, %v374, %v375
  %v378 = vmul.f32 %v332, %v376
  %v379 = vadd.f32 %v323, %v378
  %v380 = vrot.slane %v332, 7
  %v381 = vrot.slane %v333, 7
  %v382 = vsel %vm101, %v380, %v381
  %v384 = vmul.f32 %v332, %v382
  %v385 = vadd.f32 %v329, %v384
  %v386 = vmul.f32 %v332, %v333
  %v387 = vadd.f32 %v331, %v386
  %v388 = vsub.f32 %v36, %v55
  %v389 = vsub.f32 %v37, %v56
  %v390 = vmul.f32 %v388, %v388
  %v391 = vmul.f32 %v389, %v389
  %v392 = vadd.f32 %v336, %v390
  %v393 = vadd.f32 %v337, %v391
  %v394 = vmul.f32 %v36, 0.12727273
  %v395 = vmul.f32 %v37, 0.12727273
  %v396 = vadd.f32 %v340, %v394
  %v397 = vadd.f32 %v341, %v395
  %v400 = vrot.slane %v388, 1
  %v401 = vrot.slane %v389, 1
  %v402 = vsel %vm65, %v400, %v401
  %v404 = vmul.f32 %v388, %v402
  %v405 = vadd.f32 %v349, %v404
  %v406 = vrot.slane %v388, 2
  %v407 = vrot.slane %v389, 2
  %v408 = vsel %vm71, %v406, %v407
  %v410 = vmul.f32 %v388, %v408
  %v411 = vadd.f32 %v355, %v410
  %v412 = vrot.slane %v388, 3
  %v413 = vrot.slane %v389, 3
  %v414 = vsel %vm77, %v412, %v413
  %v416 = vmul.f32 %v388, %v414
  %v417 = vadd.f32 %v361, %v416
  %v418 = vrot.slane %v388, 4
  %v419 = vrot.slane %v389, 4
  %v420 = vsel %vm83, %v418, %v419
  %v422 = vmul.f32 %v388, %v420
  %v423 = vadd.f32 %v367, %v422
  %v424 = vrot.slane %v388, 5
  %v425 = vrot.slane %v389, 5
  %v426 = vsel %vm89, %v424, %v425
  %v428 = vmul.f32 %v388, %v426
  %v429 = vadd.f32 %v373, %v428
  %v430 = vrot.slane %v388, 6
  %v431 = vrot.slane %v389, 6
  %v432 = vsel %vm95, %v430, %v431
  %v434 = vmul.f32 %v388, %v432
  %v435 = vadd.f32 %v379, %v434
  %v436 = vrot.slane %v388, 7
  %v437 = vrot.slane %v389, 7
  %v438 = vsel %vm101, %v436, %v437
  %v440 = vmul.f32 %v388, %v438
  %v441 = vadd.f32 %v385, %v440
  %v442 = vmul.f32 %v388, %v389
  %v443 = vadd.f32 %v387, %v442
  %v444 = vsub.f32 %v41, %v55
  %v445 = vsub.f32 %v42, %v56
  %v446 = vmul.f32 %v444, %v444
  %v447 = vmul.f32 %v445, %v445
  %v448 = vadd.f32 %v392, %v446
  %v449 = vadd.f32 %v393, %v447
  %v450 = vmul.f32 %v41, 0.14545454
  %v451 = vmul.f32 %v42, 0.14545454
  %v452 = vadd.f32 %v396, %v450
  %v453 = vadd.f32 %v397, %v451
  %v456 = vrot.slane %v444, 1
  %v457 = vrot.slane %v445, 1
  %v458 = vsel %vm65, %v456, %v457
  %v460 = vmul.f32 %v444, %v458
  %v461 = vadd.f32 %v405, %v460
  %v462 = vrot.slane %v444, 2
  %v463 = vrot.slane %v445, 2
  %v464 = vsel %vm71, %v462, %v463
  %v466 = vmul.f32 %v444, %v464
  %v467 = vadd.f32 %v411, %v466
  %v468 = vrot.slane %v444, 3
  %v469 = vrot.slane %v445, 3
  %v470 = vsel %vm77, %v468, %v469
  %v472 = vmul.f32 %v444, %v470
  %v473 = vadd.f32 %v417, %v472
  %v474 = vrot.slane %v444, 4
  %v475 = vrot.slane %v445, 4
  %v476 = vsel %vm83, %v474, %v475
  %v478 = vmul.f32 %v444, %v476
  %v479 = vadd.f32 %v423, %v478
  %v480 = vrot.slane %v444, 5
  %v481 = vrot.slane %v445, 5
  %v482 = vsel %vm89, %v480, %v481
  %v484 = vmul.f32 %v444, %v482
  %v485 = vadd.f32 %v429, %v484
  %v486 = vrot.slane %v444, 6
  %v487 = vrot.slane %v445, 6
  %v488 = vsel %vm95, %v486, %v487
  %v490 = vmul.f32 %v444, %v488
  %v491 = vadd.f32 %v435, %v490
  %v492 = vrot.slane %v444, 7
  %v493 = vrot.slane %v445, 7
  %v494 = vsel %vm101, %v492, %v493
  %v496 = vmul.f32 %v444, %v494
  %v497 = vadd.f32 %v441, %v496
  %v498 = vmul.f32 %v444, %v445
  %v499 = vadd.f32 %v443, %v498
  %v500 = vsub.f32 %v46, %v55
  %v501 = vsub.f32 %v47, %v56
  %v502 = vmul.f32 %v500, %v500
  %v503 = vmul.f32 %v501, %v501
  %v504 = vadd.f32 %v448, %v502
  %v505 = vadd.f32 %v449, %v503
  %v506 = vmul.f32 %v46, 0.16363636
  %v507 = vmul.f32 %v47, 0.16363636
  %v508 = vadd.f32 %v452, %v506
  %v509 = vadd.f32 %v453, %v507
  %v512 = vrot.slane %v500, 1
  %v513 = vrot.slane %v501, 1
  %v514 = vsel %vm65, %v512, %v513
  %v516 = vmul.f32 %v500, %v514
  %v517 = vadd.f32 %v461, %v516
  %v518 = vrot.slane %v500, 2
  %v519 = vrot.slane %v501, 2
  %v520 = vsel %vm71, %v518, %v519
  %v522 = vmul.f32 %v500, %v520
  %v523 = vadd.f32 %v467, %v522
  %v524 = vrot.slane %v500, 3
  %v525 = vrot.slane %v501, 3
  %v526 = vsel %vm77, %v524, %v525
  %v528 = vmul.f32 %v500, %v526
  %v529 = vadd.f32 %v473, %v528
  %v530 = vrot.slane %v500, 4
  %v531 = vrot.slane %v501, 4
  %v532 = vsel %vm83, %v530, %v531
  %v534 = vmul.f32 %v500, %v532
  %v535 = vadd.f32 %v479, %v534
  %v536 = vrot.slane %v500, 5
  %v537 = vrot.slane %v501, 5
  %v538 = vsel %vm89, %v536, %v537
  %v540 = vmul.f32 %v500, %v538
  %v541 = vadd.f32 %v485, %v540
  %v542 = vrot.slane %v500, 6
  %v543 = vrot.slane %v501, 6
  %v544 = vsel %vm95, %v542, %v543
  %v546 = vmul.f32 %v500, %v544
  %v547 = vadd.f32 %v491, %v546
  %v548 = vrot.slane %v500, 7
  %v549 = vrot.slane %v501, 7
  %v550 = vsel %vm101, %v548, %v549
  %v552 = vmul.f32 %v500, %v550
  %v553 = vadd.f32 %v497, %v552
  %v554 = vmul.f32 %v500, %v501
  %v555 = vadd.f32 %v499, %v554
  %v556 = vsub.f32 %v51, %v55
  %v557 = vsub.f32 %v52, %v56
  %v558 = vmul.f32 %v556, %v556
  %v559 = vmul.f32 %v557, %v557
  %v560 = vadd.f32 %v504, %v558
  %v561 = vadd.f32 %v505, %v559
  %v562 = vmul.f32 %v51, 0.18181819
  %v563 = vmul.f32 %v52, 0.18181819
  %v564 = vadd.f32 %v508, %v562
  %v565 = vadd.f32 %v509, %v563
  %v568 = vrot.slane %v556, 1
  %v569 = vrot.slane %v557, 1
  %v570 = vsel %vm65, %v568, %v569
  %v572 = vmul.f32 %v556, %v570
  %v573 = vadd.f32 %v517, %v572
  %v574 = vrot.slane %v556, 2
  %v575 = vrot.slane %v557, 2
  %v576 = vsel %vm71, %v574, %v575
  %v578 = vmul.f32 %v556, %v576
  %v579 = vadd.f32 %v523, %v578
  %v580 = vrot.slane %v556, 3
  %v581 = vrot.slane %v557, 3
  %v582 = vsel %vm77, %v580, %v581
  %v584 = vmul.f32 %v556, %v582
  %v585 = vadd.f32 %v529, %v584
  %v586 = vrot.slane %v556, 4
  %v587 = vrot.slane %v557, 4
  %v588 = vsel %vm83, %v586, %v587
  %v590 = vmul.f32 %v556, %v588
  %v591 = vadd.f32 %v535, %v590
  %v592 = vrot.slane %v556, 5
  %v593 = vrot.slane %v557, 5
  %v594 = vsel %vm89, %v592, %v593
  %v596 = vmul.f32 %v556, %v594
  %v597 = vadd.f32 %v541, %v596
  %v598 = vrot.slane %v556, 6
  %v599 = vrot.slane %v557, 6
  %v600 = vsel %vm95, %v598, %v599
  %v602 = vmul.f32 %v556, %v600
  %v603 = vadd.f32 %v547, %v602
  %v604 = vrot.slane %v556, 7
  %v605 = vrot.slane %v557, 7
  %v606 = vsel %vm101, %v604, %v605
  %v608 = vmul.f32 %v556, %v606
  %v609 = vadd.f32 %v553, %v608
  %v610 = vmul.f32 %v556, %v557
  %v611 = vadd.f32 %v555, %v610
  %v612 = vmul.f32 %v560, 0.1
  %v613 = vmul.f32 %v561, 0.1
  %v614 = vrsqrt.pop %v612
  %v615 = vmul.f32 %v614, %v612
  %v616 = vmul.f32 %v615, %v614
  %v617 = vmul.f32 0.5, %v616
  %v618 = vsub.f32 1.5, %v617
  %v619 = vmul.f32 %v614, %v618
  %vm620 = vweird.f32 %v612
  %vm621 = vweird.f32 %v614
  %vm622 = vmor %vm620, %vm621
  %v623 = vsel %vm622, %v614, %v619
  %v624 = vrsqrt.pop %v613
  %v625 = vmul.f32 %v624, %v613
  %v626 = vmul.f32 %v625, %v624
  %v627 = vmul.f32 0.5, %v626
  %v628 = vsub.f32 1.5, %v627
  %v629 = vmul.f32 %v624, %v628
  %vm630 = vweird.f32 %v613
  %vm631 = vweird.f32 %v624
  %vm632 = vmor %vm630, %vm631
  %v633 = vsel %vm632, %v624, %v629
  %v634 = vmul.f32 %v560, 0.11111111
  %v635 = vmul.f32 %v561, 0.11111111
  %v636 = vrsqrt.pop %v634
  %v637 = vmul.f32 %v636, %v634
  %v638 = vmul.f32 %v637, %v636
  %v639 = vmul.f32 0.5, %v638
  %v640 = vsub.f32 1.5, %v639
  %v641 = vmul.f32 %v636, %v640
  %vm642 = vweird.f32 %v634
  %vm643 = vweird.f32 %v636
  %vm644 = vmor %vm642, %vm643
  %v645 = vsel %vm644, %v636, %v641
  %v646 = vrsqrt.pop %v635
  %v647 = vmul.f32 %v646, %v635
  %v648 = vmul.f32 %v647, %v646
  %v649 = vmul.f32 0.5, %v648
  %v650 = vsub.f32 1.5, %v649
  %v651 = vmul.f32 %v646, %v650
  %vm652 = vweird.f32 %v635
  %vm653 = vweird.f32 %v646
  %vm654 = vmor %vm652, %vm653
  %v655 = vsel %vm654, %v646, %v651
  %v656 = vrsqrt.pop %v634
  %v657 = vmul.f32 %v656, %v634
  %v658 = vmul.f32 %v657, %v656
  %v659 = vmul.f32 0.5, %v658
  %v660 = vsub.f32 1.5, %v659
  %v661 = vmul.f32 %v656, %v660
  %v662 = vmul.f32 %v634, %v661
  %vm663 = vcmp.eq.f32.partialorder %v634, inf
  %v664 = vsel %vm663, %v634, %v662
  %vm665 = vcmp.eq.f32.partialorder %v634, 0.0
  %v666 = vand.u32 %v634, 2147483648
  %v667 = vsel %vm665, %v666, %v664
  %v668 = vrsqrt.pop %v635
  %v669 = vmul.f32 %v668, %v635
  %v670 = vmul.f32 %v669, %v668
  %v671 = vmul.f32 0.5, %v670
  %v672 = vsub.f32 1.5, %v671
  %v673 = vmul.f32 %v668, %v672
  %v674 = vmul.f32 %v635, %v673
  %vm675 = vcmp.eq.f32.partialorder %v635, inf
  %v676 = vsel %vm675, %v635, %v674
  %vm677 = vcmp.eq.f32.partialorder %v635, 0.0
  %v678 = vand.u32 %v635, 2147483648
  %v679 = vsel %vm677, %v678, %v676
  %v680 = vmul.f32 %v55, %v645
  %v681 = vmul.f32 %v56, %v655
  %v682 = vsub.f32 %v51, %v8
  %v683 = vsub.f32 %v52, %v9
  %v684 = vrcp.pop %v8
  %v685 = vmul.f32 %v8, %v684
  %v686 = vsub.f32 1.0, %v685
  %v687 = vmul.f32 %v684, %v686
  %v688 = vadd.f32 %v684, %v687
  %vm689 = vweird.f32 %v8
  %vm690 = vweird.f32 %v684
  %vm691 = vmor %vm689, %vm690
  %v692 = vsel %vm691, %v684, %v688
  %v693 = vand.u32 2147483647, %v8
  %vm694 = vcmp.eq.f32.partialorder %v693, 8.507059e+37
  %v695 = vand.u32 %v8, 2147483648
  %v696 = vor.u32 1.1754944e-38, %v695
  %v697 = vsel %vm694, %v696, %v692
  %v698 = vmul.f32 %v682, %v697
  %v699 = vrcp.pop %v9
  %v700 = vmul.f32 %v9, %v699
  %v701 = vsub.f32 1.0, %v700
  %v702 = vmul.f32 %v699, %v701
  %v703 = vadd.f32 %v699, %v702
  %vm704 = vweird.f32 %v9
  %vm705 = vweird.f32 %v699
  %vm706 = vmor %vm704, %vm705
  %v707 = vsel %vm706, %v699, %v703
  %v708 = vand.u32 2147483647, %v9
  %vm709 = vcmp.eq.f32.partialorder %v708, 8.507059e+37
  %v710 = vand.u32 %v9, 2147483648
  %v711 = vor.u32 1.1754944e-38, %v710
  %v712 = vsel %vm709, %v711, %v707
  %v713 = vmul.f32 %v683, %v712
  %v714 = vsub.f32 %v698, 1.0
  %v715 = vsub.f32 %v713, 1.0
  %v716 = vmul.f32 %v573, 0.1
  %v719 = vrot.slane %v623, 1
  %v720 = vrot.slane %v633, 1
  %v721 = vsel %vm65, %v719, %v720
  %v723 = vmul.f32 %v623, %v721
  %v724 = vmul.f32 %v716, %v723
  %725 = vst [vmem:[%s1] sm:$0xff] %v716
  %726 = vst [vmem:[%s1 + $0x28] sm:$0xff] %v724
  %v727 = vmul.f32 %v579, 0.1
  %v728 = vrot.slane %v623, 2
  %v729 = vrot.slane %v633, 2
  %v730 = vsel %vm71, %v728, %v729
  %v732 = vmul.f32 %v623, %v730
  %v733 = vmul.f32 %v727, %v732
  %734 = vst [vmem:[%s1 + $0x8] sm:$0x7f] %v727
  %735 = vst [vmem:[%s1 + $0x30] sm:$0x7f] %v733
  %v736 = vmul.f32 %v585, 0.1
  %v737 = vrot.slane %v623, 3
  %v738 = vrot.slane %v633, 3
  %v739 = vsel %vm77, %v737, %v738
  %v741 = vmul.f32 %v623, %v739
  %v742 = vmul.f32 %v736, %v741
  %743 = vst [vmem:[%s1 + $0x10] sm:$0x3f] %v736
  %744 = vst [vmem:[%s1 + $0x38] sm:$0x3f] %v742
  %v745 = vmul.f32 %v591, 0.1
  %v746 = vrot.slane %v623, 4
  %v747 = vrot.slane %v633, 4
  %v748 = vsel %vm83, %v746, %v747
  %v750 = vmul.f32 %v623, %v748
  %v751 = vmul.f32 %v745, %v750
  %752 = vst [vmem:[%s1 + $0x18] sm:$0x1f] %v745
  %753 = vst [vmem:[%s1 + $0x40] sm:$0x1f] %v751
  %v754 = vmul.f32 %v597, 0.1
  %v755 = vrot.slane %v623, 5
  %v756 = vrot.slane %v633, 5
  %v757 = vsel %vm89, %v755, %v756
  %v759 = vmul.f32 %v623, %v757
  %v760 = vmul.f32 %v754, %v759
  %761 = vst [vmem:[%s1 + $0x20] sm:$0xf] %v754
  %762 = vst [vmem:[%s1 + $0x48] sm:$0xf] %v760
  %v763 = vmul.f32 %v603, 0.1
  %v764 = vrot.slane %v623, 6
  %v765 = vrot.slane %v633, 6
  %v766 = vsel %vm95, %v764, %v765
  %v768 = vmul.f32 %v623, %v766
  %v769 = vmul.f32 %v763, %v768
  %770 = vst [vmem:[%s1 + $0x1d] sm:$0x7] %v763
  %771 = vst [vmem:[%s1 + $0x45] sm:$0x7] %v769
  %v772 = vmul.f32 %v609, 0.1
  %v773 = vrot.slane %v623, 7
  %v774 = vrot.slane %v633, 7
  %v775 = vsel %vm101, %v773, %v774
  %v777 = vmul.f32 %v623, %v775
  %v778 = vmul.f32 %v772, %v777
  %779 = vst [vmem:[%s1 + $0x16] sm:$0x3] %v772
  %780 = vst [vmem:[%s1 + $0x3e] sm:$0x3] %v778
  %v781 = vmul.f32 %v611, 0.1
  %v782 = vmul.f32 %v623, %v633
  %v783 = vmul.f32 %v781, %v782
  %784 = vst [vmem:[%s1 + $0xf] sm:$0x1] %v781
  %785 = vst [vmem:[%s1 + $0x37] sm:$0x1] %v783
  %786 = vst [vmem:[%s1 + $0x24] sm:$0xf] 0.0
  %787 = vst [vmem:[%s1 + $0x4c] sm:$0xf] 0.0
  %788 = vst [vmem:[%s1 + $0x50] sm:$0xff] %v667
  %789 = vst [vmem:[%s1 + $0x58] sm:$0x1] %v679
  %790 = vst [vmem:[%s1 + $0x59] sm:$0xff] %v680
  %791 = vst [vmem:[%s1 + $0x61] sm:$0x1] %v681
  %792 = vst [vmem:[%s1 + $0x62] sm:$0xff] %v714
  %793 = vst [vmem:[%s1 + $0x6a] sm:$0x1] %v715
  %794 = vst [vmem:[%s1 + $0x6b] sm:$0xff] %v564
  %795 = vst [vmem:[%s1 + $0x73] sm:$0x1] %v565
  %796 = vst [vmem:[%s1 + $0x74] sm:$0xff] %v55
  %797 = vst [vmem:[%s1 + $0x7c] sm:$0x1] %v56
  %798 = vst [vmem:[%s1 + $0x7d] sm:$0x7] 0.0
  %s799 = scalar_lea.vmem %s0, 160
  %v800 = vld [vmem:[%s799] sm:$0xff]
  %v801 = vld [vmem:[%s799 + $0x8] sm:$0x1]
  %s802 = scalar_lea.vmem %s0, 176
  %v803 = vld [vmem:[%s802] sm:$0xff]
  %v804 = vld [vmem:[%s802 + $0x8] sm:$0x1]
  %v805 = vadd.f32 %v800, %v803
  %v806 = vadd.f32 %v801, %v804
  %s807 = scalar_lea.vmem %s0, 192
  %v808 = vld [vmem:[%s807] sm:$0xff]
  %v809 = vld [vmem:[%s807 + $0x8] sm:$0x1]
  %v810 = vadd.f32 %v805, %v808
  %v811 = vadd.f32 %v806, %v809
  %s812 = scalar_lea.vmem %s0, 208
  %v813 = vld [vmem:[%s812] sm:$0xff]
  %v814 = vld [vmem:[%s812 + $0x8] sm:$0x1]
  %v815 = vadd.f32 %v810, %v813
  %v816 = vadd.f32 %v811, %v814
  %s817 = scalar_lea.vmem %s0, 224
  %v818 = vld [vmem:[%s817] sm:$0xff]
  %v819 = vld [vmem:[%s817 + $0x8] sm:$0x1]
  %v820 = vadd.f32 %v815, %v818
  %v821 = vadd.f32 %v816, %v819
  %s822 = scalar_lea.vmem %s0, 240
  %v823 = vld [vmem:[%s822] sm:$0xff]
  %v824 = vld [vmem:[%s822 + $0x8] sm:$0x1]
  %v825 = vadd.f32 %v820, %v823
  %v826 = vadd.f32 %v821, %v824
  %s827 = scalar_lea.vmem %s0, 256
  %v828 = vld [vmem:[%s827] sm:$0xff]
  %v829 = vld [vmem:[%s827 + $0x8] sm:$0x1]
  %v830 = vadd.f32 %v825, %v828
  %v831 = vadd.f32 %v826, %v829
  %s832 = scalar_lea.vmem %s0, 272
  %v833 = vld [vmem:[%s832] sm:$0xff]
  %v834 = vld [vmem:[%s832 + $0x8] sm:$0x1]
  %v835 = vadd.f32 %v830, %v833
  %v836 = vadd.f32 %v831, %v834
  %s837 = scalar_lea.vmem %s0, 288
  %v838 = vld [vmem:[%s837] sm:$0xff]
  %v839 = vld [vmem:[%s837 + $0x8] sm:$0x1]
  %v840 = vadd.f32 %v835, %v838
  %v841 = vadd.f32 %v836, %v839
  %s842 = scalar_lea.vmem %s0, 304
  %v843 = vld [vmem:[%s842] sm:$0xff]
  %v844 = vld [vmem:[%s842 + $0x8] sm:$0x1]
  %v845 = vadd.f32 %v840, %v843
  %v846 = vadd.f32 %v841, %v844
  %v847 = vmul.f32 %v845, 0.1
  %v848 = vmul.f32 %v846, 0.1
  %v849 = vsub.f32 %v800, %v847
  %v850 = vsub.f32 %v801, %v848
  %v851 = vmul.f32 %v849, %v849
  %v852 = vmul.f32 %v850, %v850
  %v853 = vmul.f32 %v800, 0.018181818
  %v854 = vmul.f32 %v801, 0.018181818
  %v857 = vrot.slane %v849, 1
  %v858 = vrot.slane %v850, 1
  %v859 = vsel %vm65, %v857, %v858
  %v861 = vmul.f32 %v849, %v859
  %v862 = vrot.slane %v849, 2
  %v863 = vrot.slane %v850, 2
  %v864 = vsel %vm71, %v862, %v863
  %v866 = vmul.f32 %v849, %v864
  %v867 = vrot.slane %v849, 3
  %v868 = vrot.slane %v850, 3
  %v869 = vsel %vm77, %v867, %v868
  %v871 = vmul.f32 %v849, %v869
  %v872 = vrot.slane %v849, 4
  %v873 = vrot.slane %v850, 4
  %v874 = vsel %vm83, %v872, %v873
  %v876 = vmul.f32 %v849, %v874
  %v877 = vrot.slane %v849, 5
  %v878 = vrot.slane %v850, 5
  %v879 = vsel %vm89, %v877, %v878
  %v881 = vmul.f32 %v849, %v879
  %v882 = vrot.slane %v849, 6
  %v883 = vrot.slane %v850, 6
  %v884 = vsel %vm95, %v882, %v883
  %v886 = vmul.f32 %v849, %v884
  %v887 = vrot.slane %v849, 7
  %v888 = vrot.slane %v850, 7
  %v889 = vsel %vm101, %v887, %v888
  %v891 = vmul.f32 %v849, %v889
  %v892 = vmul.f32 %v849, %v850
  %v893 = vsub.f32 %v803, %v847
  %v894 = vsub.f32 %v804, %v848
  %v895 = vmul.f32 %v893, %v893
  %v896 = vmul.f32 %v894, %v894
  %v897 = vadd.f32 %v851, %v895
  %v898 = vadd.f32 %v852, %v896
  %v899 = vmul.f32 %v803, 0.036363635
  %v900 = vmul.f32 %v804, 0.036363635
  %v901 = vadd.f32 %v853, %v899
  %v902 = vadd.f32 %v854, %v900
  %v905 = vrot.slane %v893, 1
  %v906 = vrot.slane %v894, 1
  %v907 = vsel %vm65, %v905, %v906
  %v909 = vmul.f32 %v893, %v907
  %v910 = vadd.f32 %v861, %v909
  %v911 = vrot.slane %v893, 2
  %v912 = vrot.slane %v894, 2
  %v913 = vsel %vm71, %v911, %v912
  %v915 = vmul.f32 %v893, %v913
  %v916 = vadd.f32 %v866, %v915
  %v917 = vrot.slane %v893, 3
  %v918 = vrot.slane %v894, 3
  %v919 = vsel %vm77, %v917, %v918
  %v921 = vmul.f32 %v893, %v919
  %v922 = vadd.f32 %v871, %v921
  %v923 = vrot.slane %v893, 4
  %v924 = vrot.slane %v894, 4
  %v925 = vsel %vm83, %v923, %v924
  %v927 = vmul.f32 %v893, %v925
  %v928 = vadd.f32 %v876, %v927
  %v929 = vrot.slane %v893, 5
  %v930 = vrot.slane %v894, 5
  %v931 = vsel %vm89, %v929, %v930
  %v933 = vmul.f32 %v893, %v931
  %v934 = vadd.f32 %v881, %v933
  %v935 = vrot.slane %v893, 6
  %v936 = vrot.slane %v894, 6
  %v937 = vsel %vm95, %v935, %v936
  %v939 = vmul.f32 %v893, %v937
  %v940 = vadd.f32 %v886, %v939
  %v941 = vrot.slane %v893, 7
  %v942 = vrot.slane %v894, 7
  %v943 = vsel %vm101, %v941, %v942
  %v945 = vmul.f32 %v893, %v943
  %v946 = vadd.f32 %v891, %v945
  %v947 = vmul.f32 %v893, %v894
  %v948 = vadd.f32 %v892, %v947
  %v949 = vsub.f32 %v808, %v847
  %v950 = vsub.f32 %v809, %v848
  %v951 = vmul.f32 %v949, %v949
  %v952 = vmul.f32 %v950, %v950
  %v953 = vadd.f32 %v897, %v951
  %v954 = vadd.f32 %v898, %v952
  %v955 = vmul.f32 %v808, 0.054545455
  %v956 = vmul.f32 %v809, 0.054545455
  %v957 = vadd.f32 %v901, %v955
  %v958 = vadd.f32 %v902, %v956
  %v961 = vrot.slane %v949, 1
  %v962 = vrot.slane %v950, 1
  %v963 = vsel %vm65, %v961, %v962
  %v965 = vmul.f32 %v949, %v963
  %v966 = vadd.f32 %v910, %v965
  %v967 = vrot.slane %v949, 2
  %v968 = vrot.slane %v950, 2
  %v969 = vsel %vm71, %v967, %v968
  %v971 = vmul.f32 %v949, %v969
  %v972 = vadd.f32 %v916, %v971
  %v973 = vrot.slane %v949, 3
  %v974 = vrot.slane %v950, 3
  %v975 = vsel %vm77, %v973, %v974
  %v977 = vmul.f32 %v949, %v975
  %v978 = vadd.f32 %v922, %v977
  %v979 = vrot.slane %v949, 4
  %v980 = vrot.slane %v950, 4
  %v981 = vsel %vm83, %v979, %v980
  %v983 = vmul.f32 %v949, %v981
  %v984 = vadd.f32 %v928, %v983
  %v985 = vrot.slane %v949, 5
  %v986 = vrot.slane %v950, 5
  %v987 = vsel %vm89, %v985, %v986
  %v989 = vmul.f32 %v949, %v987
  %v990 = vadd.f32 %v934, %v989
  %v991 = vrot.slane %v949, 6
  %v992 = vrot.slane %v950, 6
  %v993 = vsel %vm95, %v991, %v992
  %v995 = vmul.f32 %v949, %v993
  %v996 = vadd.f32 %v940, %v995
  %v997 = vrot.slane %v949, 7
  %v998 = vrot.slane %v950, 7
  %v999 = vsel %vm101, %v997, %v998
  %v1001 = vmul.f32 %v949, %v999
  %v1002 = vadd.f32 %v946, %v1001
  %v1003 = vmul.f32 %v949, %v950
  %v1004 = vadd.f32 %v948, %v1003
  %v1005 = vsub.f32 %v813, %v847
  %v1006 = vsub.f32 %v814, %v848
  %v1007 = vmul.f32 %v1005, %v1005
  %v1008 = vmul.f32 %v1006, %v1006
  %v1009 = vadd.f32 %v953, %v1007
  %v1010 = vadd.f32 %v954, %v1008
  %v1011 = vmul.f32 %v813, 0.07272727
  %v1012 = vmul.f32 %v814, 0.07272727
  %v1013 = vadd.f32 %v957, %v1011
  %v1014 = vadd.f32 %v958, %v1012
  %v1017 = vrot.slane %v1005, 1
  %v1018 = vrot.slane %v1006, 1
  %v1019 = vsel %vm65, %v1017, %v1018
  %v1021 = vmul.f32 %v1005, %v1019
  %v1022 = vadd.f32 %v966, %v1021
  %v1023 = vrot.slane %v1005, 2
  %v1024 = vrot.slane %v1006, 2
  %v1025 = vsel %vm71, %v1023, %v1024
  %v1027 = vmul.f32 %v1005, %v1025
  %v1028 = vadd.f32 %v972, %v1027
  %v1029 = vrot.slane %v1005, 3
  %v1030 = vrot.slane %v1006, 3
  %v1031 = vsel %vm77, %v1029, %v1030
  %v1033 = vmul.f32 %v1005, %v1031
  %v1034 = vadd.f32 %v978, %v1033
  %v1035 = vrot.slane %v1005, 4
  %v1036 = vrot.slane %v1006, 4
  %v1037 = vsel %vm83, %v1035, %v1036
  %v1039 = vmul.f32 %v1005, %v1037
  %v1040 = vadd.f32 %v984, %v1039
  %v1041 = vrot.slane %v1005, 5
  %v1042 = vrot.slane %v1006, 5
  %v1043 = vsel %vm89, %v1041, %v1042
  %v1045 = vmul.f32 %v1005, %v1043
  %v1046 = vadd.f32 %v990, %v1045
  %v1047 = vrot.slane %v1005, 6
  %v1048 = vrot.slane %v1006, 6
  %v1049 = vsel %vm95, %v1047, %v1048
  %v1051 = vmul.f32 %v1005, %v1049
  %v1052 = vadd.f32 %v996, %v1051
  %v1053 = vrot.slane %v1005, 7
  %v1054 = vrot.slane %v1006, 7
  %v1055 = vsel %vm101, %v1053, %v1054
  %v1057 = vmul.f32 %v1005, %v1055
  %v1058 = vadd.f32 %v1002, %v1057
  %v1059 = vmul.f32 %v1005, %v1006
  %v1060 = vadd.f32 %v1004, %v1059
  %v1061 = vsub.f32 %v818, %v847
  %v1062 = vsub.f32 %v819, %v848
  %v1063 = vmul.f32 %v1061, %v1061
  %v1064 = vmul.f32 %v1062, %v1062
  %v1065 = vadd.f32 %v1009, %v1063
  %v1066 = vadd.f32 %v1010, %v1064
  %v1067 = vmul.f32 %v818, 0.09090909
  %v1068 = vmul.f32 %v819, 0.09090909
  %v1069 = vadd.f32 %v1013, %v1067
  %v1070 = vadd.f32 %v1014, %v1068
  %v1073 = vrot.slane %v1061, 1
  %v1074 = vrot.slane %v1062, 1
  %v1075 = vsel %vm65, %v1073, %v1074
  %v1077 = vmul.f32 %v1061, %v1075
  %v1078 = vadd.f32 %v1022, %v1077
  %v1079 = vrot.slane %v1061, 2
  %v1080 = vrot.slane %v1062, 2
  %v1081 = vsel %vm71, %v1079, %v1080
  %v1083 = vmul.f32 %v1061, %v1081
  %v1084 = vadd.f32 %v1028, %v1083
  %v1085 = vrot.slane %v1061, 3
  %v1086 = vrot.slane %v1062, 3
  %v1087 = vsel %vm77, %v1085, %v1086
  %v1089 = vmul.f32 %v1061, %v1087
  %v1090 = vadd.f32 %v1034, %v1089
  %v1091 = vrot.slane %v1061, 4
  %v1092 = vrot.slane %v1062, 4
  %v1093 = vsel %vm83, %v1091, %v1092
  %v1095 = vmul.f32 %v1061, %v1093
  %v1096 = vadd.f32 %v1040, %v1095
  %v1097 = vrot.slane %v1061, 5
  %v1098 = vrot.slane %v1062, 5
  %v1099 = vsel %vm89, %v1097, %v1098
  %v1101 = vmul.f32 %v1061, %v1099
  %v1102 = vadd.f32 %v1046, %v1101
  %v1103 = vrot.slane %v1061, 6
  %v1104 = vrot.slane %v1062, 6
  %v1105 = vsel %vm95, %v1103, %v1104
  %v1107 = vmul.f32 %v1061, %v1105
  %v1108 = vadd.f32 %v1052, %v1107
  %v1109 = vrot.slane %v1061, 7
  %v1110 = vrot.slane %v1062, 7
  %v1111 = vsel %vm101, %v1109, %v1110
  %v1113 = vmul.f32 %v1061, %v1111
  %v1114 = vadd.f32 %v1058, %v1113
  %v1115 = vmul.f32 %v1061, %v1062
  %v1116 = vadd.f32 %v1060, %v1115
  %v1117 = vsub.f32 %v823, %v847
  %v1118 = vsub.f32 %v824, %v848
  %v1119 = vmul.f32 %v1117, %v1117
  %v1120 = vmul.f32 %v1118, %v1118
  %v1121 = vadd.f32 %v1065, %v1119
  %v1122 = vadd.f32 %v1066, %v1120
  %v1123 = vmul.f32 %v823, 0.10909091
  %v1124 = vmul.f32 %v824, 0.10909091
  %v1125 = vadd.f32 %v1069, %v1123
  %v1126 = vadd.f32 %v1070, %v1124
  %v1129 = vrot.slane %v1117, 1
  %v1130 = vrot.slane %v1118, 1
  %v1131 = vsel %vm65, %v1129, %v1130
  %v1133 = vmul.f32 %v1117, %v1131
  %v1134 = vadd.f32 %v1078, %v1133
  %v1135 = vrot.slane %v1117, 2
  %v1136 = vrot.slane %v1118, 2
  %v1137 = vsel %vm71, %v1135, %v1136
  %v1139 = vmul.f32 %v1117, %v1137
  %v1140 = vadd.f32 %v1084, %v1139
  %v1141 = vrot.slane %v1117, 3
  %v1142 = vrot.slane %v1118, 3
  %v1143 = vsel %vm77, %v1141, %v1142
  %v1145 = vmul.f32 %v1117, %v1143
  %v1146 = vadd.f32 %v1090, %v1145
  %v1147 = vrot.slane %v1117, 4
  %v1148 = vrot.slane %v1118, 4
  %v1149 = vsel %vm83, %v1147, %v1148
  %v1151 = vmul.f32 %v1117, %v1149
  %v1152 = vadd.f32 %v1096, %v1151
  %v1153 = vrot.slane %v1117, 5
  %v1154 = vrot.slane %v1118, 5
  %v1155 = vsel %vm89, %v1153, %v1154
  %v1157 = vmul.f32 %v1117, %v1155
  %v1158 = vadd.f32 %v1102, %v1157
  %v1159 = vrot.slane %v1117, 6
  %v1160 = vrot.slane %v1118, 6
  %v1161 = vsel %vm95, %v1159, %v1160
  %v1163 = vmul.f32 %v1117, %v1161
  %v1164 = vadd.f32 %v1108, %v1163
  %v1165 = vrot.slane %v1117, 7
  %v1166 = vrot.slane %v1118, 7
  %v1167 = vsel %vm101, %v1165, %v1166
  %v1169 = vmul.f32 %v1117, %v1167
  %v1170 = vadd.f32 %v1114, %v1169
  %v1171 = vmul.f32 %v1117, %v1118
  %v1172 = vadd.f32 %v1116, %v1171
  %v1173 = vsub.f32 %v828, %v847
  %v1174 = vsub.f32 %v829, %v848
  %v1175 = vmul.f32 %v1173, %v1173
  %v1176 = vmul.f32 %v1174, %v1174
  %v1177 = vadd.f32 %v1121, %v1175
  %v1178 = vadd.f32 %v1122, %v1176
  %v1179 = vmul.f32 %v828, 0.12727273
  %v1180 = vmul.f32 %v829, 0.12727273
  %v1181 = vadd.f32 %v1125, %v1179
  %v1182 = vadd.f32 %v1126, %v1180
  %v1185 = vrot.slane %v1173, 1
  %v1186 = vrot.slane %v1174, 1
  %v1187 = vsel %vm65, %v1185, %v1186
  %v1189 = vmul.f32 %v1173, %v1187
  %v1190 = vadd.f32 %v1134, %v1189
  %v1191 = vrot.slane %v1173, 2
  %v1192 = vrot.slane %v1174, 2
  %v1193 = vsel %vm71, %v1191, %v1192
  %v1195 = vmul.f32 %v1173, %v1193
  %v1196 = vadd.f32 %v1140, %v1195
  %v1197 = vrot.slane %v1173, 3
  %v1198 = vrot.slane %v1174, 3
  %v1199 = vsel %vm77, %v1197, %v1198
  %v1201 = vmul.f32 %v1173, %v1199
  %v1202 = vadd.f32 %v1146, %v1201
  %v1203 = vrot.slane %v1173, 4
  %v1204 = vrot.slane %v1174, 4
  %v1205 = vsel %vm83, %v1203, %v1204
  %v1207 = vmul.f32 %v1173, %v1205
  %v1208 = vadd.f32 %v1152, %v1207
  %v1209 = vrot.slane %v1173, 5
  %v1210 = vrot.slane %v1174, 5
  %v1211 = vsel %vm89, %v1209, %v1210
  %v1213 = vmul.f32 %v1173, %v1211
  %v1214 = vadd.f32 %v1158, %v1213
  %v1215 = vrot.slane %v1173, 6
  %v1216 = vrot.slane %v1174, 6
  %v1217 = vsel %vm95, %v1215, %v1216
  %v1219 = vmul.f32 %v1173, %v1217
  %v1220 = vadd.f32 %v1164, %v1219
  %v1221 = vrot.slane %v1173, 7
  %v1222 = vrot.slane %v1174, 7
  %v1223 = vsel %vm101, %v1221, %v1222
  %v1225 = vmul.f32 %v1173, %v1223
  %v1226 = vadd.f32 %v1170, %v1225
  %v1227 = vmul.f32 %v1173, %v1174
  %v1228 = vadd.f32 %v1172, %v1227
  %v1229 = vsub.f32 %v833, %v847
  %v1230 = vsub.f32 %v834, %v848
  %v1231 = vmul.f32 %v1229, %v1229
  %v1232 = vmul.f32 %v1230, %v1230
  %v1233 = vadd.f32 %v1177, %v1231
  %v1234 = vadd.f32 %v1178, %v1232
  %v1235 = vmul.f32 %v833, 0.14545454
  %v1236 = vmul.f32 %v834, 0.14545454
  %v1237 = vadd.f32 %v1181, %v1235
  %v1238 = vadd.f32 %v1182, %v1236
  %v1241 = vrot.slane %v1229, 1
  %v1242 = vrot.slane %v1230, 1
  %v1243 = vsel %vm65, %v1241, %v1242
  %v1245 = vmul.f32 %v1229, %v1243
  %v1246 = vadd.f32 %v1190, %v1245
  %v1247 = vrot.slane %v1229, 2
  %v1248 = vrot.slane %v1230, 2
  %v1249 = vsel %vm71, %v1247, %v1248
  %v1251 = vmul.f32 %v1229, %v1249
  %v1252 = vadd.f32 %v1196, %v1251
  %v1253 = vrot.slane %v1229, 3
  %v1254 = vrot.slane %v1230, 3
  %v1255 = vsel %vm77, %v1253, %v1254
  %v1257 = vmul.f32 %v1229, %v1255
  %v1258 = vadd.f32 %v1202, %v1257
  %v1259 = vrot.slane %v1229, 4
  %v1260 = vrot.slane %v1230, 4
  %v1261 = vsel %vm83, %v1259, %v1260
  %v1263 = vmul.f32 %v1229, %v1261
  %v1264 = vadd.f32 %v1208, %v1263
  %v1265 = vrot.slane %v1229, 5
  %v1266 = vrot.slane %v1230, 5
  %v1267 = vsel %vm89, %v1265, %v1266
  %v1269 = vmul.f32 %v1229, %v1267
  %v1270 = vadd.f32 %v1214, %v1269
  %v1271 = vrot.slane %v1229, 6
  %v1272 = vrot.slane %v1230, 6
  %v1273 = vsel %vm95, %v1271, %v1272
  %v1275 = vmul.f32 %v1229, %v1273
  %v1276 = vadd.f32 %v1220, %v1275
  %v1277 = vrot.slane %v1229, 7
  %v1278 = vrot.slane %v1230, 7
  %v1279 = vsel %vm101, %v1277, %v1278
  %v1281 = vmul.f32 %v1229, %v1279
  %v1282 = vadd.f32 %v1226, %v1281
  %v1283 = vmul.f32 %v1229, %v1230
  %v1284 = vadd.f32 %v1228, %v1283
  %v1285 = vsub.f32 %v838, %v847
  %v1286 = vsub.f32 %v839, %v848
  %v1287 = vmul.f32 %v1285, %v1285
  %v1288 = vmul.f32 %v1286, %v1286
  %v1289 = vadd.f32 %v1233, %v1287
  %v1290 = vadd.f32 %v1234, %v1288
  %v1291 = vmul.f32 %v838, 0.16363636
  %v1292 = vmul.f32 %v839, 0.16363636
  %v1293 = vadd.f32 %v1237, %v1291
  %v1294 = vadd.f32 %v1238, %v1292
  %v1297 = vrot.slane %v1285, 1
  %v1298 = vrot.slane %v1286, 1
  %v1299 = vsel %vm65, %v1297, %v1298
  %v1301 = vmul.f32 %v1285, %v1299
  %v1302 = vadd.f32 %v1246, %v1301
  %v1303 = vrot.slane %v1285, 2
  %v1304 = vrot.slane %v1286, 2
  %v1305 = vsel %vm71, %v1303, %v1304
  %v1307 = vmul.f32 %v1285, %v1305
  %v1308 = vadd.f32 %v1252, %v1307
  %v1309 = vrot.slane %v1285, 3
  %v1310 = vrot.slane %v1286, 3
  %v1311 = vsel %vm77, %v1309, %v1310
  %v1313 = vmul.f32 %v1285, %v1311
  %v1314 = vadd.f32 %v1258, %v1313
  %v1315 = vrot.slane %v1285, 4
  %v1316 = vrot.slane %v1286, 4
  %v1317 = vsel %vm83, %v1315, %v1316
  %v1319 = vmul.f32 %v1285, %v1317
  %v1320 = vadd.f32 %v1264, %v1319
  %v1321 = vrot.slane %v1285, 5
  %v1322 = vrot.slane %v1286, 5
  %v1323 = vsel %vm89, %v1321, %v1322
  %v1325 = vmul.f32 %v1285, %v1323
  %v1326 = vadd.f32 %v1270, %v1325
  %v1327 = vrot.slane %v1285, 6
  %v1328 = vrot.slane %v1286, 6
  %v1329 = vsel %vm95, %v1327, %v1328
  %v1331 = vmul.f32 %v1285, %v1329
  %v1332 = vadd.f32 %v1276, %v1331
  %v1333 = vrot.slane %v1285, 7
  %v1334 = vrot.slane %v1286, 7
  %v1335 = vsel %vm101, %v1333, %v1334
  %v1337 = vmul.f32 %v1285, %v1335
  %v1338 = vadd.f32 %v1282, %v1337
  %v1339 = vmul.f32 %v1285, %v1286
  %v1340 = vadd.f32 %v1284, %v1339
  %v1341 = vsub.f32 %v843, %v847
  %v1342 = vsub.f32 %v844, %v848
  %v1343 = vmul.f32 %v1341, %v1341
  %v1344 = vmul.f32 %v1342, %v1342
  %v1345 = vadd.f32 %v1289, %v1343
  %v1346 = vadd.f32 %v1290, %v1344
  %v1347 = vmul.f32 %v843, 0.18181819
  %v1348 = vmul.f32 %v844, 0.18181819
  %v1349 = vadd.f32 %v1293, %v1347
  %v1350 = vadd.f32 %v1294, %v1348
  %v1353 = vrot.slane %v1341, 1
  %v1354 = vrot.slane %v1342, 1
  %v1355 = vsel %vm65, %v1353, %v1354
  %v1357 = vmul.f32 %v1341, %v1355
  %v1358 = vadd.f32 %v1302, %v1357
  %v1359 = vrot.slane %v1341, 2
  %v1360 = vrot.slane %v1342, 2
  %v1361 = vsel %vm71, %v1359, %v1360
  %v1363 = vmul.f32 %v1341, %v1361
  %v1364 = vadd.f32 %v1308, %v1363
  %v1365 = vrot.slane %v1341, 3
  %v1366 = vrot.slane %v1342, 3
  %v1367 = vsel %vm77, %v1365, %v1366
  %v1369 = vmul.f32 %v1341, %v1367
  %v1370 = vadd.f32 %v1314, %v1369
  %v1371 = vrot.slane %v1341, 4
  %v1372 = vrot.slane %v1342, 4
  %v1373 = vsel %vm83, %v1371, %v1372
  %v1375 = vmul.f32 %v1341, %v1373
  %v1376 = vadd.f32 %v1320, %v1375
  %v1377 = vrot.slane %v1341, 5
  %v1378 = vrot.slane %v1342, 5
  %v1379 = vsel %vm89, %v1377, %v1378
  %v1381 = vmul.f32 %v1341, %v1379
  %v1382 = vadd.f32 %v1326, %v1381
  %v1383 = vrot.slane %v1341, 6
  %v1384 = vrot.slane %v1342, 6
  %v1385 = vsel %vm95, %v1383, %v1384
  %v1387 = vmul.f32 %v1341, %v1385
  %v1388 = vadd.f32 %v1332, %v1387
  %v1389 = vrot.slane %v1341, 7
  %v1390 = vrot.slane %v1342, 7
  %v1391 = vsel %vm101, %v1389, %v1390
  %v1393 = vmul.f32 %v1341, %v1391
  %v1394 = vadd.f32 %v1338, %v1393
  %v1395 = vmul.f32 %v1341, %v1342
  %v1396 = vadd.f32 %v1340, %v1395
  %v1397 = vmul.f32 %v1345, 0.1
  %v1398 = vmul.f32 %v1346, 0.1
  %v1399 = vrsqrt.pop %v1397
  %v1400 = vmul.f32 %v1399, %v1397
  %v1401 = vmul.f32 %v1400, %v1399
  %v1402 = vmul.f32 0.5, %v1401
  %v1403 = vsub.f32 1.5, %v1402
  %v1404 = vmul.f32 %v1399, %v1403
  %vm1405 = vweird.f32 %v1397
  %vm1406 = vweird.f32 %v1399
  %vm1407 = vmor %vm1405, %vm1406
  %v1408 = vsel %vm1407, %v1399, %v1404
  %v1409 = vrsqrt.pop %v1398
  %v1410 = vmul.f32 %v1409, %v1398
  %v1411 = vmul.f32 %v1410, %v1409
  %v1412 = vmul.f32 0.5, %v1411
  %v1413 = vsub.f32 1.5, %v1412
  %v1414 = vmul.f32 %v1409, %v1413
  %vm1415 = vweird.f32 %v1398
  %vm1416 = vweird.f32 %v1409
  %vm1417 = vmor %vm1415, %vm1416
  %v1418 = vsel %vm1417, %v1409, %v1414
  %v1419 = vmul.f32 %v1345, 0.11111111
  %v1420 = vmul.f32 %v1346, 0.11111111
  %v1421 = vrsqrt.pop %v1419
  %v1422 = vmul.f32 %v1421, %v1419
  %v1423 = vmul.f32 %v1422, %v1421
  %v1424 = vmul.f32 0.5, %v1423
  %v1425 = vsub.f32 1.5, %v1424
  %v1426 = vmul.f32 %v1421, %v1425
  %vm1427 = vweird.f32 %v1419
  %vm1428 = vweird.f32 %v1421
  %vm1429 = vmor %vm1427, %vm1428
  %v1430 = vsel %vm1429, %v1421, %v1426
  %v1431 = vrsqrt.pop %v1420
  %v1432 = vmul.f32 %v1431, %v1420
  %v1433 = vmul.f32 %v1432, %v1431
  %v1434 = vmul.f32 0.5, %v1433
  %v1435 = vsub.f32 1.5, %v1434
  %v1436 = vmul.f32 %v1431, %v1435
  %vm1437 = vweird.f32 %v1420
  %vm1438 = vweird.f32 %v1431
  %vm1439 = vmor %vm1437, %vm1438
  %v1440 = vsel %vm1439, %v1431, %v1436
  %v1441 = vrsqrt.pop %v1419
  %v1442 = vmul.f32 %v1441, %v1419
  %v1443 = vmul.f32 %v1442, %v1441
  %v1444 = vmul.f32 0.5, %v1443
  %v1445 = vsub.f32 1.5, %v1444
  %v1446 = vmul.f32 %v1441, %v1445
  %v1447 = vmul.f32 %v1419, %v1446
  %vm1448 = vcmp.eq.f32.partialorder %v1419, inf
  %v1449 = vsel %vm1448, %v1419, %v1447
  %vm1450 = vcmp.eq.f32.partialorder %v1419, 0.0
  %v1451 = vand.u32 %v1419, 2147483648
  %v1452 = vsel %vm1450, %v1451, %v1449
  %v1453 = vrsqrt.pop %v1420
  %v1454 = vmul.f32 %v1453, %v1420
  %v1455 = vmul.f32 %v1454, %v1453
  %v1456 = vmul.f32 0.5, %v1455
  %v1457 = vsub.f32 1.5, %v1456
  %v1458 = vmul.f32 %v1453, %v1457
  %v1459 = vmul.f32 %v1420, %v1458
  %vm1460 = vcmp.eq.f32.partialorder %v1420, inf
  %v1461 = vsel %vm1460, %v1420, %v1459
  %vm1462 = vcmp.eq.f32.partialorder %v1420, 0.0
  %v1463 = vand.u32 %v1420, 2147483648
  %v1464 = vsel %vm1462, %v1463, %v1461
  %v1465 = vmul.f32 %v847, %v1430
  %v1466 = vmul.f32 %v848, %v1440
  %v1467 = vsub.f32 %v843, %v800
  %v1468 = vsub.f32 %v844, %v801
  %v1469 = vrcp.pop %v800
  %v1470 = vmul.f32 %v800, %v1469
  %v1471 = vsub.f32 1.0, %v1470
  %v1472 = vmul.f32 %v1469, %v1471
  %v1473 = vadd.f32 %v1469, %v1472
  %vm1474 = vweird.f32 %v800
  %vm1475 = vweird.f32 %v1469
  %vm1476 = vmor %vm1474, %vm1475
  %v1477 = vsel %vm1476, %v1469, %v1473
  %v1478 = vand.u32 2147483647, %v800
  %vm1479 = vcmp.eq.f32.partialorder %v1478, 8.507059e+37
  %v1480 = vand.u32 %v800, 2147483648
  %v1481 = vor.u32 1.1754944e-38, %v1480
  %v1482 = vsel %vm1479, %v1481, %v1477
  %v1483 = vmul.f32 %v1467, %v1482
  %v1484 = vrcp.pop %v801
  %v1485 = vmul.f32 %v801, %v1484
  %v1486 = vsub.f32 1.0, %v1485
  %v1487 = vmul.f32 %v1484, %v1486
  %v1488 = vadd.f32 %v1484, %v1487
  %vm1489 = vweird.f32 %v801
  %vm1490 = vweird.f32 %v1484
  %vm1491 = vmor %vm1489, %vm1490
  %v1492 = vsel %vm1491, %v1484, %v1488
  %v1493 = vand.u32 2147483647, %v801
  %vm1494 = vcmp.eq.f32.partialorder %v1493, 8.507059e+37
  %v1495 = vand.u32 %v801, 2147483648
  %v1496 = vor.u32 1.1754944e-38, %v1495
  %v1497 = vsel %vm1494, %v1496, %v1492
  %v1498 = vmul.f32 %v1468, %v1497
  %v1499 = vsub.f32 %v1483, 1.0
  %v1500 = vsub.f32 %v1498, 1.0
  %v1501 = vmul.f32 %v1358, 0.1
  %v1504 = vrot.slane %v1408, 1
  %v1505 = vrot.slane %v1418, 1
  %v1506 = vsel %vm65, %v1504, %v1505
  %v1508 = vmul.f32 %v1408, %v1506
  %v1509 = vmul.f32 %v1501, %v1508
  %1510 = vst [vmem:[%s1 + $0x80] sm:$0xff] %v1501
  %1511 = vst [vmem:[%s1 + $0xa8] sm:$0xff] %v1509
  %v1512 = vmul.f32 %v1364, 0.1
  %v1513 = vrot.slane %v1408, 2
  %v1514 = vrot.slane %v1418, 2
  %v1515 = vsel %vm71, %v1513, %v1514
  %v1517 = vmul.f32 %v1408, %v1515
  %v1518 = vmul.f32 %v1512, %v1517
  %1519 = vst [vmem:[%s1 + $0x88] sm:$0x7f] %v1512
  %1520 = vst [vmem:[%s1 + $0xb0] sm:$0x7f] %v1518
  %v1521 = vmul.f32 %v1370, 0.1
  %v1522 = vrot.slane %v1408, 3
  %v1523 = vrot.slane %v1418, 3
  %v1524 = vsel %vm77, %v1522, %v1523
  %v1526 = vmul.f32 %v1408, %v1524
  %v1527 = vmul.f32 %v1521, %v1526
  %1528 = vst [vmem:[%s1 + $0x90] sm:$0x3f] %v1521
  %1529 = vst [vmem:[%s1 + $0xb8] sm:$0x3f] %v1527
  %v1530 = vmul.f32 %v1376, 0.1
  %v1531 = vrot.slane %v1408, 4
  %v1532 = vrot.slane %v1418, 4
  %v1533 = vsel %vm83, %v1531, %v1532
  %v1535 = vmul.f32 %v1408, %v1533
  %v1536 = vmul.f32 %v1530, %v1535
  %1537 = vst [vmem:[%s1 + $0x98] sm:$0x1f] %v1530
  %1538 = vst [vmem:[%s1 + $0xc0] sm:$0x1f] %v1536
  %v1539 = vmul.f32 %v1382, 0.1
  %v1540 = vrot.slane %v1408, 5
  %v1541 = vrot.slane %v1418, 5
  %v1542 = vsel %vm89, %v1540, %v1541
  %v1544 = vmul.f32 %v1408, %v1542
  %v1545 = vmul.f32 %v1539, %v1544
  %1546 = vst [vmem:[%s1 + $0xa0] sm:$0xf] %v1539
  %1547 = vst [vmem:[%s1 + $0xc8] sm:$0xf] %v1545
  %v1548 = vmul.f32 %v1388, 0.1
  %v1549 = vrot.slane %v1408, 6
  %v1550 = vrot.slane %v1418, 6
  %v1551 = vsel %vm95, %v1549, %v1550
  %v1553 = vmul.f32 %v1408, %v1551
  %v1554 = vmul.f32 %v1548, %v1553
  %1555 = vst [vmem:[%s1 + $0x9d] sm:$0x7] %v1548
  %1556 = vst [vmem:[%s1 + $0xc5] sm:$0x7] %v1554
  %v1557 = vmul.f32 %v1394, 0.1
  %v1558 = vrot.slane %v1408, 7
  %v1559 = vrot.slane %v1418, 7
  %v1560 = vsel %vm101, %v1558, %v1559
  %v1562 = vmul.f32 %v1408, %v1560
  %v1563 = vmul.f32 %v1557, %v1562
  %1564 = vst [vmem:[%s1 + $0x96] sm:$0x3] %v1557
  %1565 = vst [vmem:[%s1 + $0xbe] sm:$0x3] %v1563
  %v1566 = vmul.f32 %v1396, 0.1
  %v1567 = vmul.f32 %v1408, %v1418
  %v1568 = vmul.f32 %v1566, %v1567
  %1569 = vst [vmem:[%s1 + $0x8f] sm:$0x1] %v1566
  %1570 = vst [vmem:[%s1 + $0xb7] sm:$0x1] %v1568
  %1571 = vst [vmem:[%s1 + $0xa4] sm:$0xf] 0.0
  %1572 = vst [vmem:[%s1 + $0xcc] sm:$0xf] 0.0
  %1573 = vst [vmem:[%s1 + $0xd0] sm:$0xff] %v1452
  %1574 = vst [vmem:[%s1 + $0xd8] sm:$0x1] %v1464
  %1575 = vst [vmem:[%s1 + $0xd9] sm:$0xff] %v1465
  %1576 = vst [vmem:[%s1 + $0xe1] sm:$0x1] %v1466
  %1577 = vst [vmem:[%s1 + $0xe2] sm:$0xff] %v1499
  %1578 = vst [vmem:[%s1 + $0xea] sm:$0x1] %v1500
  %1579 = vst [vmem:[%s1 + $0xeb] sm:$0xff] %v1349
  %1580 = vst [vmem:[%s1 + $0xf3] sm:$0x1] %v1350
  %1581 = vst [vmem:[%s1 + $0xf4] sm:$0xff] %v847
  %1582 = vst [vmem:[%s1 + $0xfc] sm:$0x1] %v848
  %1583 = vst [vmem:[%s1 + $0xfd] sm:$0x7] 0.0
  %s1584 = scalar_lea.vmem %s0, 320
  %v1585 = vld [vmem:[%s1584] sm:$0xff]
  %v1586 = vld [vmem:[%s1584 + $0x8] sm:$0x1]
  %s1587 = scalar_lea.vmem %s0, 336
  %v1588 = vld [vmem:[%s1587] sm:$0xff]
  %v1589 = vld [vmem:[%s1587 + $0x8] sm:$0x1]
  %v1590 = vadd.f32 %v1585, %v1588
  %v1591 = vadd.f32 %v1586, %v1589
  %s1592 = scalar_lea.vmem %s0, 352
  %v1593 = vld [vmem:[%s1592] sm:$0xff]
  %v1594 = vld [vmem:[%s1592 + $0x8] sm:$0x1]
  %v1595 = vadd.f32 %v1590, %v1593
  %v1596 = vadd.f32 %v1591, %v1594
  %s1597 = scalar_lea.vmem %s0, 368
  %v1598 = vld [vmem:[%s1597] sm:$0xff]
  %v1599 = vld [vmem:[%s1597 + $0x8] sm:$0x1]
  %v1600 = vadd.f32 %v1595, %v1598
  %v1601 = vadd.f32 %v1596, %v1599
  %s1602 = scalar_lea.vmem %s0, 384
  %v1603 = vld [vmem:[%s1602] sm:$0xff]
  %v1604 = vld [vmem:[%s1602 + $0x8] sm:$0x1]
  %v1605 = vadd.f32 %v1600, %v1603
  %v1606 = vadd.f32 %v1601, %v1604
  %s1607 = scalar_lea.vmem %s0, 400
  %v1608 = vld [vmem:[%s1607] sm:$0xff]
  %v1609 = vld [vmem:[%s1607 + $0x8] sm:$0x1]
  %v1610 = vadd.f32 %v1605, %v1608
  %v1611 = vadd.f32 %v1606, %v1609
  %s1612 = scalar_lea.vmem %s0, 416
  %v1613 = vld [vmem:[%s1612] sm:$0xff]
  %v1614 = vld [vmem:[%s1612 + $0x8] sm:$0x1]
  %v1615 = vadd.f32 %v1610, %v1613
  %v1616 = vadd.f32 %v1611, %v1614
  %s1617 = scalar_lea.vmem %s0, 432
  %v1618 = vld [vmem:[%s1617] sm:$0xff]
  %v1619 = vld [vmem:[%s1617 + $0x8] sm:$0x1]
  %v1620 = vadd.f32 %v1615, %v1618
  %v1621 = vadd.f32 %v1616, %v1619
  %s1622 = scalar_lea.vmem %s0, 448
  %v1623 = vld [vmem:[%s1622] sm:$0xff]
  %v1624 = vld [vmem:[%s1622 + $0x8] sm:$0x1]
  %v1625 = vadd.f32 %v1620, %v1623
  %v1626 = vadd.f32 %v1621, %v1624
  %s1627 = scalar_lea.vmem %s0, 464
  %v1628 = vld [vmem:[%s1627] sm:$0xff]
  %v1629 = vld [vmem:[%s1627 + $0x8] sm:$0x1]
  %v1630 = vadd.f32 %v1625, %v1628
  %v1631 = vadd.f32 %v1626, %v1629
  %v1632 = vmul.f32 %v1630, 0.1
  %v1633 = vmul.f32 %v1631, 0.1
  %v1634 = vsub.f32 %v1585, %v1632
  %v1635 = vsub.f32 %v1586, %v1633
  %v1636 = vmul.f32 %v1634, %v1634
  %v1637 = vmul.f32 %v1635, %v1635
  %v1638 = vmul.f32 %v1585, 0.018181818
  %v1639 = vmul.f32 %v1586, 0.018181818
  %v1642 = vrot.slane %v1634, 1
  %v1643 = vrot.slane %v1635, 1
  %v1644 = vsel %vm65, %v1642, %v1643
  %v1646 = vmul.f32 %v1634, %v1644
  %v1647 = vrot.slane %v1634, 2
  %v1648 = vrot.slane %v1635, 2
  %v1649 = vsel %vm71, %v1647, %v1648
  %v1651 = vmul.f32 %v1634, %v1649
  %v1652 = vrot.slane %v1634, 3
  %v1653 = vrot.slane %v1635, 3
  %v1654 = vsel %vm77, %v1652, %v1653
  %v1656 = vmul.f32 %v1634, %v1654
  %v1657 = vrot.slane %v1634, 4
  %v1658 = vrot.slane %v1635, 4
  %v1659 = vsel %vm83, %v1657, %v1658
  %v1661 = vmul.f32 %v1634, %v1659
  %v1662 = vrot.slane %v1634, 5
  %v1663 = vrot.slane %v1635, 5
  %v1664 = vsel %vm89, %v1662, %v1663
  %v1666 = vmul.f32 %v1634, %v1664
  %v1667 = vrot.slane %v1634, 6
  %v1668 = vrot.slane %v1635, 6
  %v1669 = vsel %vm95, %v1667, %v1668
  %v1671 = vmul.f32 %v1634, %v1669
  %v1672 = vrot.slane %v1634, 7
  %v1673 = vrot.slane %v1635, 7
  %v1674 = vsel %vm101, %v1672, %v1673
  %v1676 = vmul.f32 %v1634, %v1674
  %v1677 = vmul.f32 %v1634, %v1635
  %v1678 = vsub.f32 %v1588, %v1632
  %v1679 = vsub.f32 %v1589, %v1633
  %v1680 = vmul.f32 %v1678, %v1678
  %v1681 = vmul.f32 %v1679, %v1679
  %v1682 = vadd.f32 %v1636, %v1680
  %v1683 = vadd.f32 %v1637, %v1681
  %v1684 = vmul.f32 %v1588, 0.036363635
  %v1685 = vmul.f32 %v1589, 0.036363635
  %v1686 = vadd.f32 %v1638, %v1684
  %v1687 = vadd.f32 %v1639, %v1685
  %v1690 = vrot.slane %v1678, 1
  %v1691 = vrot.slane %v1679, 1
  %v1692 = vsel %vm65, %v1690, %v1691
  %v1694 = vmul.f32 %v1678, %v1692
  %v1695 = vadd.f32 %v1646, %v1694
  %v1696 = vrot.slane %v1678, 2
  %v1697 = vrot.slane %v1679, 2
  %v1698 = vsel %vm71, %v1696, %v1697
  %v1700 = vmul.f32 %v1678, %v1698
  %v1701 = vadd.f32 %v1651, %v1700
  %v1702 = vrot.slane %v1678, 3
  %v1703 = vrot.slane %v1679, 3
  %v1704 = vsel %vm77, %v1702, %v1703
  %v1706 = vmul.f32 %v1678, %v1704
  %v1707 = vadd.f32 %v1656, %v1706
  %v1708 = vrot.slane %v1678, 4
  %v1709 = vrot.slane %v1679, 4
  %v1710 = vsel %vm83, %v1708, %v1709
  %v1712 = vmul.f32 %v1678, %v1710
  %v1713 = vadd.f32 %v1661, %v1712
  %v1714 = vrot.slane %v1678, 5
  %v1715 = vrot.slane %v1679, 5
  %v1716 = vsel %vm89, %v1714, %v1715
  %v1718 = vmul.f32 %v1678, %v1716
  %v1719 = vadd.f32 %v1666, %v1718
  %v1720 = vrot.slane %v1678, 6
  %v1721 = vrot.slane %v1679, 6
  %v1722 = vsel %vm95, %v1720, %v1721
  %v1724 = vmul.f32 %v1678, %v1722
  %v1725 = vadd.f32 %v1671, %v1724
  %v1726 = vrot.slane %v1678, 7
  %v1727 = vrot.slane %v1679, 7
  %v1728 = vsel %vm101, %v1726, %v1727
  %v1730 = vmul.f32 %v1678, %v1728
  %v1731 = vadd.f32 %v1676, %v1730
  %v1732 = vmul.f32 %v1678, %v1679
  %v1733 = vadd.f32 %v1677, %v1732
  %v1734 = vsub.f32 %v1593, %v1632
  %v1735 = vsub.f32 %v1594, %v1633
  %v1736 = vmul.f32 %v1734, %v1734
  %v1737 = vmul.f32 %v1735, %v1735
  %v1738 = vadd.f32 %v1682, %v1736
  %v1739 = vadd.f32 %v1683, %v1737
  %v1740 = vmul.f32 %v1593, 0.054545455
  %v1741 = vmul.f32 %v1594, 0.054545455
  %v1742 = vadd.f32 %v1686, %v1740
  %v1743 = vadd.f32 %v1687, %v1741
  %v1746 = vrot.slane %v1734, 1
  %v1747 = vrot.slane %v1735, 1
  %v1748 = vsel %vm65, %v1746, %v1747
  %v1750 = vmul.f32 %v1734, %v1748
  %v1751 = vadd.f32 %v1695, %v1750
  %v1752 = vrot.slane %v1734, 2
  %v1753 = vrot.slane %v1735, 2
  %v1754 = vsel %vm71, %v1752, %v1753
  %v1756 = vmul.f32 %v1734, %v1754
  %v1757 = vadd.f32 %v1701, %v1756
  %v1758 = vrot.slane %v1734, 3
  %v1759 = vrot.slane %v1735, 3
  %v1760 = vsel %vm77, %v1758, %v1759
  %v1762 = vmul.f32 %v1734, %v1760
  %v1763 = vadd.f32 %v1707, %v1762
  %v1764 = vrot.slane %v1734, 4
  %v1765 = vrot.slane %v1735, 4
  %v1766 = vsel %vm83, %v1764, %v1765
  %v1768 = vmul.f32 %v1734, %v1766
  %v1769 = vadd.f32 %v1713, %v1768
  %v1770 = vrot.slane %v1734, 5
  %v1771 = vrot.slane %v1735, 5
  %v1772 = vsel %vm89, %v1770, %v1771
  %v1774 = vmul.f32 %v1734, %v1772
  %v1775 = vadd.f32 %v1719, %v1774
  %v1776 = vrot.slane %v1734, 6
  %v1777 = vrot.slane %v1735, 6
  %v1778 = vsel %vm95, %v1776, %v1777
  %v1780 = vmul.f32 %v1734, %v1778
  %v1781 = vadd.f32 %v1725, %v1780
  %v1782 = vrot.slane %v1734, 7
  %v1783 = vrot.slane %v1735, 7
  %v1784 = vsel %vm101, %v1782, %v1783
  %v1786 = vmul.f32 %v1734, %v1784
  %v1787 = vadd.f32 %v1731, %v1786
  %v1788 = vmul.f32 %v1734, %v1735
  %v1789 = vadd.f32 %v1733, %v1788
  %v1790 = vsub.f32 %v1598, %v1632
  %v1791 = vsub.f32 %v1599, %v1633
  %v1792 = vmul.f32 %v1790, %v1790
  %v1793 = vmul.f32 %v1791, %v1791
  %v1794 = vadd.f32 %v1738, %v1792
  %v1795 = vadd.f32 %v1739, %v1793
  %v1796 = vmul.f32 %v1598, 0.07272727
  %v1797 = vmul.f32 %v1599, 0.07272727
  %v1798 = vadd.f32 %v1742, %v1796
  %v1799 = vadd.f32 %v1743, %v1797
  %v1802 = vrot.slane %v1790, 1
  %v1803 = vrot.slane %v1791, 1
  %v1804 = vsel %vm65, %v1802, %v1803
  %v1806 = vmul.f32 %v1790, %v1804
  %v1807 = vadd.f32 %v1751, %v1806
  %v1808 = vrot.slane %v1790, 2
  %v1809 = vrot.slane %v1791, 2
  %v1810 = vsel %vm71, %v1808, %v1809
  %v1812 = vmul.f32 %v1790, %v1810
  %v1813 = vadd.f32 %v1757, %v1812
  %v1814 = vrot.slane %v1790, 3
  %v1815 = vrot.slane %v1791, 3
  %v1816 = vsel %vm77, %v1814, %v1815
  %v1818 = vmul.f32 %v1790, %v1816
  %v1819 = vadd.f32 %v1763, %v1818
  %v1820 = vrot.slane %v1790, 4
  %v1821 = vrot.slane %v1791, 4
  %v1822 = vsel %vm83, %v1820, %v1821
  %v1824 = vmul.f32 %v1790, %v1822
  %v1825 = vadd.f32 %v1769, %v1824
  %v1826 = vrot.slane %v1790, 5
  %v1827 = vrot.slane %v1791, 5
  %v1828 = vsel %vm89, %v1826, %v1827
  %v1830 = vmul.f32 %v1790, %v1828
  %v1831 = vadd.f32 %v1775, %v1830
  %v1832 = vrot.slane %v1790, 6
  %v1833 = vrot.slane %v1791, 6
  %v1834 = vsel %vm95, %v1832, %v1833
  %v1836 = vmul.f32 %v1790, %v1834
  %v1837 = vadd.f32 %v1781, %v1836
  %v1838 = vrot.slane %v1790, 7
  %v1839 = vrot.slane %v1791, 7
  %v1840 = vsel %vm101, %v1838, %v1839
  %v1842 = vmul.f32 %v1790, %v1840
  %v1843 = vadd.f32 %v1787, %v1842
  %v1844 = vmul.f32 %v1790, %v1791
  %v1845 = vadd.f32 %v1789, %v1844
  %v1846 = vsub.f32 %v1603, %v1632
  %v1847 = vsub.f32 %v1604, %v1633
  %v1848 = vmul.f32 %v1846, %v1846
  %v1849 = vmul.f32 %v1847, %v1847
  %v1850 = vadd.f32 %v1794, %v1848
  %v1851 = vadd.f32 %v1795, %v1849
  %v1852 = vmul.f32 %v1603, 0.09090909
  %v1853 = vmul.f32 %v1604, 0.09090909
  %v1854 = vadd.f32 %v1798, %v1852
  %v1855 = vadd.f32 %v1799, %v1853
  %v1858 = vrot.slane %v1846, 1
  %v1859 = vrot.slane %v1847, 1
  %v1860 = vsel %vm65, %v1858, %v1859
  %v1862 = vmul.f32 %v1846, %v1860
  %v1863 = vadd.f32 %v1807, %v1862
  %v1864 = vrot.slane %v1846, 2
  %v1865 = vrot.slane %v1847, 2
  %v1866 = vsel %vm71, %v1864, %v1865
  %v1868 = vmul.f32 %v1846, %v1866
  %v1869 = vadd.f32 %v1813, %v1868
  %v1870 = vrot.slane %v1846, 3
  %v1871 = vrot.slane %v1847, 3
  %v1872 = vsel %vm77, %v1870, %v1871
  %v1874 = vmul.f32 %v1846, %v1872
  %v1875 = vadd.f32 %v1819, %v1874
  %v1876 = vrot.slane %v1846, 4
  %v1877 = vrot.slane %v1847, 4
  %v1878 = vsel %vm83, %v1876, %v1877
  %v1880 = vmul.f32 %v1846, %v1878
  %v1881 = vadd.f32 %v1825, %v1880
  %v1882 = vrot.slane %v1846, 5
  %v1883 = vrot.slane %v1847, 5
  %v1884 = vsel %vm89, %v1882, %v1883
  %v1886 = vmul.f32 %v1846, %v1884
  %v1887 = vadd.f32 %v1831, %v1886
  %v1888 = vrot.slane %v1846, 6
  %v1889 = vrot.slane %v1847, 6
  %v1890 = vsel %vm95, %v1888, %v1889
  %v1892 = vmul.f32 %v1846, %v1890
  %v1893 = vadd.f32 %v1837, %v1892
  %v1894 = vrot.slane %v1846, 7
  %v1895 = vrot.slane %v1847, 7
  %v1896 = vsel %vm101, %v1894, %v1895
  %v1898 = vmul.f32 %v1846, %v1896
  %v1899 = vadd.f32 %v1843, %v1898
  %v1900 = vmul.f32 %v1846, %v1847
  %v1901 = vadd.f32 %v1845, %v1900
  %v1902 = vsub.f32 %v1608, %v1632
  %v1903 = vsub.f32 %v1609, %v1633
  %v1904 = vmul.f32 %v1902, %v1902
  %v1905 = vmul.f32 %v1903, %v1903
  %v1906 = vadd.f32 %v1850, %v1904
  %v1907 = vadd.f32 %v1851, %v1905
  %v1908 = vmul.f32 %v1608, 0.10909091
  %v1909 = vmul.f32 %v1609, 0.10909091
  %v1910 = vadd.f32 %v1854, %v1908
  %v1911 = vadd.f32 %v1855, %v1909
  %v1914 = vrot.slane %v1902, 1
  %v1915 = vrot.slane %v1903, 1
  %v1916 = vsel %vm65, %v1914, %v1915
  %v1918 = vmul.f32 %v1902, %v1916
  %v1919 = vadd.f32 %v1863, %v1918
  %v1920 = vrot.slane %v1902, 2
  %v1921 = vrot.slane %v1903, 2
  %v1922 = vsel %vm71, %v1920, %v1921
  %v1924 = vmul.f32 %v1902, %v1922
  %v1925 = vadd.f32 %v1869, %v1924
  %v1926 = vrot.slane %v1902, 3
  %v1927 = vrot.slane %v1903, 3
  %v1928 = vsel %vm77, %v1926, %v1927
  %v1930 = vmul.f32 %v1902, %v1928
  %v1931 = vadd.f32 %v1875, %v1930
  %v1932 = vrot.slane %v1902, 4
  %v1933 = vrot.slane %v1903, 4
  %v1934 = vsel %vm83, %v1932, %v1933
  %v1936 = vmul.f32 %v1902, %v1934
  %v1937 = vadd.f32 %v1881, %v1936
  %v1938 = vrot.slane %v1902, 5
  %v1939 = vrot.slane %v1903, 5
  %v1940 = vsel %vm89, %v1938, %v1939
  %v1942 = vmul.f32 %v1902, %v1940
  %v1943 = vadd.f32 %v1887, %v1942
  %v1944 = vrot.slane %v1902, 6
  %v1945 = vrot.slane %v1903, 6
  %v1946 = vsel %vm95, %v1944, %v1945
  %v1948 = vmul.f32 %v1902, %v1946
  %v1949 = vadd.f32 %v1893, %v1948
  %v1950 = vrot.slane %v1902, 7
  %v1951 = vrot.slane %v1903, 7
  %v1952 = vsel %vm101, %v1950, %v1951
  %v1954 = vmul.f32 %v1902, %v1952
  %v1955 = vadd.f32 %v1899, %v1954
  %v1956 = vmul.f32 %v1902, %v1903
  %v1957 = vadd.f32 %v1901, %v1956
  %v1958 = vsub.f32 %v1613, %v1632
  %v1959 = vsub.f32 %v1614, %v1633
  %v1960 = vmul.f32 %v1958, %v1958
  %v1961 = vmul.f32 %v1959, %v1959
  %v1962 = vadd.f32 %v1906, %v1960
  %v1963 = vadd.f32 %v1907, %v1961
  %v1964 = vmul.f32 %v1613, 0.12727273
  %v1965 = vmul.f32 %v1614, 0.12727273
  %v1966 = vadd.f32 %v1910, %v1964
  %v1967 = vadd.f32 %v1911, %v1965
  %v1970 = vrot.slane %v1958, 1
  %v1971 = vrot.slane %v1959, 1
  %v1972 = vsel %vm65, %v1970, %v1971
  %v1974 = vmul.f32 %v1958, %v1972
  %v1975 = vadd.f32 %v1919, %v1974
  %v1976 = vrot.slane %v1958, 2
  %v1977 = vrot.slane %v1959, 2
  %v1978 = vsel %vm71, %v1976, %v1977
  %v1980 = vmul.f32 %v1958, %v1978
  %v1981 = vadd.f32 %v1925, %v1980
  %v1982 = vrot.slane %v1958, 3
  %v1983 = vrot.slane %v1959, 3
  %v1984 = vsel %vm77, %v1982, %v1983
  %v1986 = vmul.f32 %v1958, %v1984
  %v1987 = vadd.f32 %v1931, %v1986
  %v1988 = vrot.slane %v1958, 4
  %v1989 = vrot.slane %v1959, 4
  %v1990 = vsel %vm83, %v1988, %v1989
  %v1992 = vmul.f32 %v1958, %v1990
  %v1993 = vadd.f32 %v1937, %v1992
  %v1994 = vrot.slane %v1958, 5
  %v1995 = vrot.slane %v1959, 5
  %v1996 = vsel %vm89, %v1994, %v1995
  %v1998 = vmul.f32 %v1958, %v1996
  %v1999 = vadd.f32 %v1943, %v1998
  %v2000 = vrot.slane %v1958, 6
  %v2001 = vrot.slane %v1959, 6
  %v2002 = vsel %vm95, %v2000, %v2001
  %v2004 = vmul.f32 %v1958, %v2002
  %v2005 = vadd.f32 %v1949, %v2004
  %v2006 = vrot.slane %v1958, 7
  %v2007 = vrot.slane %v1959, 7
  %v2008 = vsel %vm101, %v2006, %v2007
  %v2010 = vmul.f32 %v1958, %v2008
  %v2011 = vadd.f32 %v1955, %v2010
  %v2012 = vmul.f32 %v1958, %v1959
  %v2013 = vadd.f32 %v1957, %v2012
  %v2014 = vsub.f32 %v1618, %v1632
  %v2015 = vsub.f32 %v1619, %v1633
  %v2016 = vmul.f32 %v2014, %v2014
  %v2017 = vmul.f32 %v2015, %v2015
  %v2018 = vadd.f32 %v1962, %v2016
  %v2019 = vadd.f32 %v1963, %v2017
  %v2020 = vmul.f32 %v1618, 0.14545454
  %v2021 = vmul.f32 %v1619, 0.14545454
  %v2022 = vadd.f32 %v1966, %v2020
  %v2023 = vadd.f32 %v1967, %v2021
  %v2026 = vrot.slane %v2014, 1
  %v2027 = vrot.slane %v2015, 1
  %v2028 = vsel %vm65, %v2026, %v2027
  %v2030 = vmul.f32 %v2014, %v2028
  %v2031 = vadd.f32 %v1975, %v2030
  %v2032 = vrot.slane %v2014, 2
  %v2033 = vrot.slane %v2015, 2
  %v2034 = vsel %vm71, %v2032, %v2033
  %v2036 = vmul.f32 %v2014, %v2034
  %v2037 = vadd.f32 %v1981, %v2036
  %v2038 = vrot.slane %v2014, 3
  %v2039 = vrot.slane %v2015, 3
  %v2040 = vsel %vm77, %v2038, %v2039
  %v2042 = vmul.f32 %v2014, %v2040
  %v2043 = vadd.f32 %v1987, %v2042
  %v2044 = vrot.slane %v2014, 4
  %v2045 = vrot.slane %v2015, 4
  %v2046 = vsel %vm83, %v2044, %v2045
  %v2048 = vmul.f32 %v2014, %v2046
  %v2049 = vadd.f32 %v1993, %v2048
  %v2050 = vrot.slane %v2014, 5
  %v2051 = vrot.slane %v2015, 5
  %v2052 = vsel %vm89, %v2050, %v2051
  %v2054 = vmul.f32 %v2014, %v2052
  %v2055 = vadd.f32 %v1999, %v2054
  %v2056 = vrot.slane %v2014, 6
  %v2057 = vrot.slane %v2015, 6
  %v2058 = vsel %vm95, %v2056, %v2057
  %v2060 = vmul.f32 %v2014, %v2058
  %v2061 = vadd.f32 %v2005, %v2060
  %v2062 = vrot.slane %v2014, 7
  %v2063 = vrot.slane %v2015, 7
  %v2064 = vsel %vm101, %v2062, %v2063
  %v2066 = vmul.f32 %v2014, %v2064
  %v2067 = vadd.f32 %v2011, %v2066
  %v2068 = vmul.f32 %v2014, %v2015
  %v2069 = vadd.f32 %v2013, %v2068
  %v2070 = vsub.f32 %v1623, %v1632
  %v2071 = vsub.f32 %v1624, %v1633
  %v2072 = vmul.f32 %v2070, %v2070
  %v2073 = vmul.f32 %v2071, %v2071
  %v2074 = vadd.f32 %v2018, %v2072
  %v2075 = vadd.f32 %v2019, %v2073
  %v2076 = vmul.f32 %v1623, 0.16363636
  %v2077 = vmul.f32 %v1624, 0.16363636
  %v2078 = vadd.f32 %v2022, %v2076
  %v2079 = vadd.f32 %v2023, %v2077
  %v2082 = vrot.slane %v2070, 1
  %v2083 = vrot.slane %v2071, 1
  %v2084 = vsel %vm65, %v2082, %v2083
  %v2086 = vmul.f32 %v2070, %v2084
  %v2087 = vadd.f32 %v2031, %v2086
  %v2088 = vrot.slane %v2070, 2
  %v2089 = vrot.slane %v2071, 2
  %v2090 = vsel %vm71, %v2088, %v2089
  %v2092 = vmul.f32 %v2070, %v2090
  %v2093 = vadd.f32 %v2037, %v2092
  %v2094 = vrot.slane %v2070, 3
  %v2095 = vrot.slane %v2071, 3
  %v2096 = vsel %vm77, %v2094, %v2095
  %v2098 = vmul.f32 %v2070, %v2096
  %v2099 = vadd.f32 %v2043, %v2098
  %v2100 = vrot.slane %v2070, 4
  %v2101 = vrot.slane %v2071, 4
  %v2102 = vsel %vm83, %v2100, %v2101
  %v2104 = vmul.f32 %v2070, %v2102
  %v2105 = vadd.f32 %v2049, %v2104
  %v2106 = vrot.slane %v2070, 5
  %v2107 = vrot.slane %v2071, 5
  %v2108 = vsel %vm89, %v2106, %v2107
  %v2110 = vmul.f32 %v2070, %v2108
  %v2111 = vadd.f32 %v2055, %v2110
  %v2112 = vrot.slane %v2070, 6
  %v2113 = vrot.slane %v2071, 6
  %v2114 = vsel %vm95, %v2112, %v2113
  %v2116 = vmul.f32 %v2070, %v2114
  %v2117 = vadd.f32 %v2061, %v2116
  %v2118 = vrot.slane %v2070, 7
  %v2119 = vrot.slane %v2071, 7
  %v2120 = vsel %vm101, %v2118, %v2119
  %v2122 = vmul.f32 %v2070, %v2120
  %v2123 = vadd.f32 %v2067, %v2122
  %v2124 = vmul.f32 %v2070, %v2071
  %v2125 = vadd.f32 %v2069, %v2124
  %v2126 = vsub.f32 %v1628, %v1632
  %v2127 = vsub.f32 %v1629, %v1633
  %v2128 = vmul.f32 %v2126, %v2126
  %v2129 = vmul.f32 %v2127, %v2127
  %v2130 = vadd.f32 %v2074, %v2128
  %v2131 = vadd.f32 %v2075, %v2129
  %v2132 = vmul.f32 %v1628, 0.18181819
  %v2133 = vmul.f32 %v1629, 0.18181819
  %v2134 = vadd.f32 %v2078, %v2132
  %v2135 = vadd.f32 %v2079, %v2133
  %v2138 = vrot.slane %v2126, 1
  %v2139 = vrot.slane %v2127, 1
  %v2140 = vsel %vm65, %v2138, %v2139
  %v2142 = vmul.f32 %v2126, %v2140
  %v2143 = vadd.f32 %v2087, %v2142
  %v2144 = vrot.slane %v2126, 2
  %v2145 = vrot.slane %v2127, 2
  %v2146 = vsel %vm71, %v2144, %v2145
  %v2148 = vmul.f32 %v2126, %v2146
  %v2149 = vadd.f32 %v2093, %v2148
  %v2150 = vrot.slane %v2126, 3
  %v2151 = vrot.slane %v2127, 3
  %v2152 = vsel %vm77, %v2150, %v2151
  %v2154 = vmul.f32 %v2126, %v2152
  %v2155 = vadd.f32 %v2099, %v2154
  %v2156 = vrot.slane %v2126, 4
  %v2157 = vrot.slane %v2127, 4
  %v2158 = vsel %vm83, %v2156, %v2157
  %v2160 = vmul.f32 %v2126, %v2158
  %v2161 = vadd.f32 %v2105, %v2160
  %v2162 = vrot.slane %v2126, 5
  %v2163 = vrot.slane %v2127, 5
  %v2164 = vsel %vm89, %v2162, %v2163
  %v2166 = vmul.f32 %v2126, %v2164
  %v2167 = vadd.f32 %v2111, %v2166
  %v2168 = vrot.slane %v2126, 6
  %v2169 = vrot.slane %v2127, 6
  %v2170 = vsel %vm95, %v2168, %v2169
  %v2172 = vmul.f32 %v2126, %v2170
  %v2173 = vadd.f32 %v2117, %v2172
  %v2174 = vrot.slane %v2126, 7
  %v2175 = vrot.slane %v2127, 7
  %v2176 = vsel %vm101, %v2174, %v2175
  %v2178 = vmul.f32 %v2126, %v2176
  %v2179 = vadd.f32 %v2123, %v2178
  %v2180 = vmul.f32 %v2126, %v2127
  %v2181 = vadd.f32 %v2125, %v2180
  %v2182 = vmul.f32 %v2130, 0.1
  %v2183 = vmul.f32 %v2131, 0.1
  %v2184 = vrsqrt.pop %v2182
  %v2185 = vmul.f32 %v2184, %v2182
  %v2186 = vmul.f32 %v2185, %v2184
  %v2187 = vmul.f32 0.5, %v2186
  %v2188 = vsub.f32 1.5, %v2187
  %v2189 = vmul.f32 %v2184, %v2188
  %vm2190 = vweird.f32 %v2182
  %vm2191 = vweird.f32 %v2184
  %vm2192 = vmor %vm2190, %vm2191
  %v2193 = vsel %vm2192, %v2184, %v2189
  %v2194 = vrsqrt.pop %v2183
  %v2195 = vmul.f32 %v2194, %v2183
  %v2196 = vmul.f32 %v2195, %v2194
  %v2197 = vmul.f32 0.5, %v2196
  %v2198 = vsub.f32 1.5, %v2197
  %v2199 = vmul.f32 %v2194, %v2198
  %vm2200 = vweird.f32 %v2183
  %vm2201 = vweird.f32 %v2194
  %vm2202 = vmor %vm2200, %vm2201
  %v2203 = vsel %vm2202, %v2194, %v2199
  %v2204 = vmul.f32 %v2130, 0.11111111
  %v2205 = vmul.f32 %v2131, 0.11111111
  %v2206 = vrsqrt.pop %v2204
  %v2207 = vmul.f32 %v2206, %v2204
  %v2208 = vmul.f32 %v2207, %v2206
  %v2209 = vmul.f32 0.5, %v2208
  %v2210 = vsub.f32 1.5, %v2209
  %v2211 = vmul.f32 %v2206, %v2210
  %vm2212 = vweird.f32 %v2204
  %vm2213 = vweird.f32 %v2206
  %vm2214 = vmor %vm2212, %vm2213
  %v2215 = vsel %vm2214, %v2206, %v2211
  %v2216 = vrsqrt.pop %v2205
  %v2217 = vmul.f32 %v2216, %v2205
  %v2218 = vmul.f32 %v2217, %v2216
  %v2219 = vmul.f32 0.5, %v2218
  %v2220 = vsub.f32 1.5, %v2219
  %v2221 = vmul.f32 %v2216, %v2220
  %vm2222 = vweird.f32 %v2205
  %vm2223 = vweird.f32 %v2216
  %vm2224 = vmor %vm2222, %vm2223
  %v2225 = vsel %vm2224, %v2216, %v2221
  %v2226 = vrsqrt.pop %v2204
  %v2227 = vmul.f32 %v2226, %v2204
  %v2228 = vmul.f32 %v2227, %v2226
  %v2229 = vmul.f32 0.5, %v2228
  %v2230 = vsub.f32 1.5, %v2229
  %v2231 = vmul.f32 %v2226, %v2230
  %v2232 = vmul.f32 %v2204, %v2231
  %vm2233 = vcmp.eq.f32.partialorder %v2204, inf
  %v2234 = vsel %vm2233, %v2204, %v2232
  %vm2235 = vcmp.eq.f32.partialorder %v2204, 0.0
  %v2236 = vand.u32 %v2204, 2147483648
  %v2237 = vsel %vm2235, %v2236, %v2234
  %v2238 = vrsqrt.pop %v2205
  %v2239 = vmul.f32 %v2238, %v2205
  %v2240 = vmul.f32 %v2239, %v2238
  %v2241 = vmul.f32 0.5, %v2240
  %v2242 = vsub.f32 1.5, %v2241
  %v2243 = vmul.f32 %v2238, %v2242
  %v2244 = vmul.f32 %v2205, %v2243
  %vm2245 = vcmp.eq.f32.partialorder %v2205, inf
  %v2246 = vsel %vm2245, %v2205, %v2244
  %vm2247 = vcmp.eq.f32.partialorder %v2205, 0.0
  %v2248 = vand.u32 %v2205, 2147483648
  %v2249 = vsel %vm2247, %v2248, %v2246
  %v2250 = vmul.f32 %v1632, %v2215
  %v2251 = vmul.f32 %v1633, %v2225
  %v2252 = vsub.f32 %v1628, %v1585
  %v2253 = vsub.f32 %v1629, %v1586
  %v2254 = vrcp.pop %v1585
  %v2255 = vmul.f32 %v1585, %v2254
  %v2256 = vsub.f32 1.0, %v2255
  %v2257 = vmul.f32 %v2254, %v2256
  %v2258 = vadd.f32 %v2254, %v2257
  %vm2259 = vweird.f32 %v1585
  %vm2260 = vweird.f32 %v2254
  %vm2261 = vmor %vm2259, %vm2260
  %v2262 = vsel %vm2261, %v2254, %v2258
  %v2263 = vand.u32 2147483647, %v1585
  %vm2264 = vcmp.eq.f32.partialorder %v2263, 8.507059e+37
  %v2265 = vand.u32 %v1585, 2147483648
  %v2266 = vor.u32 1.1754944e-38, %v2265
  %v2267 = vsel %vm2264, %v2266, %v2262
  %v2268 = vmul.f32 %v2252, %v2267
  %v2269 = vrcp.pop %v1586
  %v2270 = vmul.f32 %v1586, %v2269
  %v2271 = vsub.f32 1.0, %v2270
  %v2272 = vmul.f32 %v2269, %v2271
  %v2273 = vadd.f32 %v2269, %v2272
  %vm2274 = vweird.f32 %v1586
  %vm2275 = vweird.f32 %v2269
  %vm2276 = vmor %vm2274, %vm2275
  %v2277 = vsel %vm2276, %v2269, %v2273
  %v2278 = vand.u32 2147483647, %v1586
  %vm2279 = vcmp.eq.f32.partialorder %v2278, 8.507059e+37
  %v2280 = vand.u32 %v1586, 2147483648
  %v2281 = vor.u32 1.1754944e-38, %v2280
  %v2282 = vsel %vm2279, %v2281, %v2277
  %v2283 = vmul.f32 %v2253, %v2282
  %v2284 = vsub.f32 %v2268, 1.0
  %v2285 = vsub.f32 %v2283, 1.0
  %v2286 = vmul.f32 %v2143, 0.1
  %v2289 = vrot.slane %v2193, 1
  %v2290 = vrot.slane %v2203, 1
  %v2291 = vsel %vm65, %v2289, %v2290
  %v2293 = vmul.f32 %v2193, %v2291
  %v2294 = vmul.f32 %v2286, %v2293
  %2295 = vst [vmem:[%s1 + $0x100] sm:$0xff] %v2286
  %2296 = vst [vmem:[%s1 + $0x128] sm:$0xff] %v2294
  %v2297 = vmul.f32 %v2149, 0.1
  %v2298 = vrot.slane %v2193, 2
  %v2299 = vrot.slane %v2203, 2
  %v2300 = vsel %vm71, %v2298, %v2299
  %v2302 = vmul.f32 %v2193, %v2300
  %v2303 = vmul.f32 %v2297, %v2302
  %2304 = vst [vmem:[%s1 + $0x108] sm:$0x7f] %v2297
  %2305 = vst [vmem:[%s1 + $0x130] sm:$0x7f] %v2303
  %v2306 = vmul.f32 %v2155, 0.1
  %v2307 = vrot.slane %v2193, 3
  %v2308 = vrot.slane %v2203, 3
  %v2309 = vsel %vm77, %v2307, %v2308
  %v2311 = vmul.f32 %v2193, %v2309
  %v2312 = vmul.f32 %v2306, %v2311
  %2313 = vst [vmem:[%s1 + $0x110] sm:$0x3f] %v2306
  %2314 = vst [vmem:[%s1 + $0x138] sm:$0x3f] %v2312
  %v2315 = vmul.f32 %v2161, 0.1
  %v2316 = vrot.slane %v2193, 4
  %v2317 = vrot.slane %v2203, 4
  %v2318 = vsel %vm83, %v2316, %v2317
  %v2320 = vmul.f32 %v2193, %v2318
  %v2321 = vmul.f32 %v2315, %v2320
  %2322 = vst [vmem:[%s1 + $0x118] sm:$0x1f] %v2315
  %2323 = vst [vmem:[%s1 + $0x140] sm:$0x1f] %v2321
  %v2324 = vmul.f32 %v2167, 0.1
  %v2325 = vrot.slane %v2193, 5
  %v2326 = vrot.slane %v2203, 5
  %v2327 = vsel %vm89, %v2325, %v2326
  %v2329 = vmul.f32 %v2193, %v2327
  %v2330 = vmul.f32 %v2324, %v2329
  %2331 = vst [vmem:[%s1 + $0x120] sm:$0xf] %v2324
  %2332 = vst [vmem:[%s1 + $0x148] sm:$0xf] %v2330
  %v2333 = vmul.f32 %v2173, 0.1
  %v2334 = vrot.slane %v2193, 6
  %v2335 = vrot.slane %v2203, 6
  %v2336 = vsel %vm95, %v2334, %v2335
  %v2338 = vmul.f32 %v2193, %v2336
  %v2339 = vmul.f32 %v2333, %v2338
  %2340 = vst [vmem:[%s1 + $0x11d] sm:$0x7] %v2333
  %2341 = vst [vmem:[%s1 + $0x145] sm:$0x7] %v2339
  %v2342 = vmul.f32 %v2179, 0.1
  %v2343 = vrot.slane %v2193, 7
  %v2344 = vrot.slane %v2203, 7
  %v2345 = vsel %vm101, %v2343, %v2344
  %v2347 = vmul.f32 %v2193, %v2345
  %v2348 = vmul.f32 %v2342, %v2347
  %2349 = vst [vmem:[%s1 + $0x116] sm:$0x3] %v2342
  %2350 = vst [vmem:[%s1 + $0x13e] sm:$0x3] %v2348
  %v2351 = vmul.f32 %v2181, 0.1
  %v2352 = vmul.f32 %v2193, %v2203
  %v2353 = vmul.f32 %v2351, %v2352
  %2354 = vst [vmem:[%s1 + $0x10f] sm:$0x1] %v2351
  %2355 = vst [vmem:[%s1 + $0x137] sm:$0x1] %v2353
  %2356 = vst [vmem:[%s1 + $0x124] sm:$0xf] 0.0
  %2357 = vst [vmem:[%s1 + $0x14c] sm:$0xf] 0.0
  %2358 = vst [vmem:[%s1 + $0x150] sm:$0xff] %v2237
  %2359 = vst [vmem:[%s1 + $0x158] sm:$0x1] %v2249
  %2360 = vst [vmem:[%s1 + $0x159] sm:$0xff] %v2250
  %2361 = vst [vmem:[%s1 + $0x161] sm:$0x1] %v2251
  %2362 = vst [vmem:[%s1 + $0x162] sm:$0xff] %v2284
  %2363 = vst [vmem:[%s1 + $0x16a] sm:$0x1] %v2285
  %2364 = vst [vmem:[%s1 + $0x16b] sm:$0xff] %v2134
  %2365 = vst [vmem:[%s1 + $0x173] sm:$0x1] %v2135
  %2366 = vst [vmem:[%s1 + $0x174] sm:$0xff] %v1632
  %2367 = vst [vmem:[%s1 + $0x17c] sm:$0x1] %v1633
  %2368 = vst [vmem:[%s1 + $0x17d] sm:$0x7] 0.0
  %v2369 = vld [vmem:[%s1] sm:$0xff]
  %v2370 = vld [vmem:[%s1 + $0x80] sm:$0xff]
  %v2371 = vadd.f32 %v2369, %v2370
  %v2372 = vmax.f32 %v2369, %v2370
  %v2373 = vmin.f32 %v2369, %v2370
  %v2374 = vld [vmem:[%s1 + $0x100] sm:$0xff]
  %v2375 = vadd.f32 %v2371, %v2374
  %v2376 = vmax.f32 %v2372, %v2374
  %v2377 = vmin.f32 %v2373, %v2374
  %v2378 = vmul.f32 %v2375, 0.33333334
  %2379 = vst [vmem:[%s1 + $0x180] sm:$0xff] %v2378
  %2380 = vst [vmem:[%s1 + $0x200] sm:$0xff] %v2376
  %2381 = vst [vmem:[%s1 + $0x280] sm:$0xff] %v2377
  %v2382 = vld [vmem:[%s1 + $0x8] sm:$0xff]
  %v2383 = vld [vmem:[%s1 + $0x88] sm:$0xff]
  %v2384 = vadd.f32 %v2382, %v2383
  %v2385 = vmax.f32 %v2382, %v2383
  %v2386 = vmin.f32 %v2382, %v2383
  %v2387 = vld [vmem:[%s1 + $0x108] sm:$0xff]
  %v2388 = vadd.f32 %v2384, %v2387
  %v2389 = vmax.f32 %v2385, %v2387
  %v2390 = vmin.f32 %v2386, %v2387
  %v2391 = vmul.f32 %v2388, 0.33333334
  %2392 = vst [vmem:[%s1 + $0x188] sm:$0xff] %v2391
  %2393 = vst [vmem:[%s1 + $0x208] sm:$0xff] %v2389
  %2394 = vst [vmem:[%s1 + $0x288] sm:$0xff] %v2390
  %v2395 = vld [vmem:[%s1 + $0x10] sm:$0xff]
  %v2396 = vld [vmem:[%s1 + $0x90] sm:$0xff]
  %v2397 = vadd.f32 %v2395, %v2396
  %v2398 = vmax.f32 %v2395, %v2396
  %v2399 = vmin.f32 %v2395, %v2396
  %v2400 = vld [vmem:[%s1 + $0x110] sm:$0xff]
  %v2401 = vadd.f32 %v2397, %v2400
  %v2402 = vmax.f32 %v2398, %v2400
  %v2403 = vmin.f32 %v2399, %v2400
  %v2404 = vmul.f32 %v2401, 0.33333334
  %2405 = vst [vmem:[%s1 + $0x190] sm:$0xff] %v2404
  %2406 = vst [vmem:[%s1 + $0x210] sm:$0xff] %v2402
  %2407 = vst [vmem:[%s1 + $0x290] sm:$0xff] %v2403
  %v2408 = vld [vmem:[%s1 + $0x18] sm:$0xff]
  %v2409 = vld [vmem:[%s1 + $0x98] sm:$0xff]
  %v2410 = vadd.f32 %v2408, %v2409
  %v2411 = vmax.f32 %v2408, %v2409
  %v2412 = vmin.f32 %v2408, %v2409
  %v2413 = vld [vmem:[%s1 + $0x118] sm:$0xff]
  %v2414 = vadd.f32 %v2410, %v2413
  %v2415 = vmax.f32 %v2411, %v2413
  %v2416 = vmin.f32 %v2412, %v2413
  %v2417 = vmul.f32 %v2414, 0.33333334
  %2418 = vst [vmem:[%s1 + $0x198] sm:$0xff] %v2417
  %2419 = vst [vmem:[%s1 + $0x218] sm:$0xff] %v2415
  %2420 = vst [vmem:[%s1 + $0x298] sm:$0xff] %v2416
  %v2421 = vld [vmem:[%s1 + $0x20] sm:$0xff]
  %v2422 = vld [vmem:[%s1 + $0xa0] sm:$0xff]
  %v2423 = vadd.f32 %v2421, %v2422
  %v2424 = vmax.f32 %v2421, %v2422
  %v2425 = vmin.f32 %v2421, %v2422
  %v2426 = vld [vmem:[%s1 + $0x120] sm:$0xff]
  %v2427 = vadd.f32 %v2423, %v2426
  %v2428 = vmax.f32 %v2424, %v2426
  %v2429 = vmin.f32 %v2425, %v2426
  %v2430 = vmul.f32 %v2427, 0.33333334
  %2431 = vst [vmem:[%s1 + $0x1a0] sm:$0xff] %v2430
  %2432 = vst [vmem:[%s1 + $0x220] sm:$0xff] %v2428
  %2433 = vst [vmem:[%s1 + $0x2a0] sm:$0xff] %v2429
  %v2434 = vld [vmem:[%s1 + $0x28] sm:$0xff]
  %v2435 = vld [vmem:[%s1 + $0xa8] sm:$0xff]
  %v2436 = vadd.f32 %v2434, %v2435
  %v2437 = vmax.f32 %v2434, %v2435
  %v2438 = vmin.f32 %v2434, %v2435
  %v2439 = vld [vmem:[%s1 + $0x128] sm:$0xff]
  %v2440 = vadd.f32 %v2436, %v2439
  %v2441 = vmax.f32 %v2437, %v2439
  %v2442 = vmin.f32 %v2438, %v2439
  %v2443 = vmul.f32 %v2440, 0.33333334
  %2444 = vst [vmem:[%s1 + $0x1a8] sm:$0xff] %v2443
  %2445 = vst [vmem:[%s1 + $0x228] sm:$0xff] %v2441
  %2446 = vst [vmem:[%s1 + $0x2a8] sm:$0xff] %v2442
  %v2447 = vld [vmem:[%s1 + $0x30] sm:$0xff]
  %v2448 = vld [vmem:[%s1 + $0xb0] sm:$0xff]
  %v2449 = vadd.f32 %v2447, %v2448
  %v2450 = vmax.f32 %v2447, %v2448
  %v2451 = vmin.f32 %v2447, %v2448
  %v2452 = vld [vmem:[%s1 + $0x130] sm:$0xff]
  %v2453 = vadd.f32 %v2449, %v2452
  %v2454 = vmax.f32 %v2450, %v2452
  %v2455 = vmin.f32 %v2451, %v2452
  %v2456 = vmul.f32 %v2453, 0.33333334
  %2457 = vst [vmem:[%s1 + $0x1b0] sm:$0xff] %v2456
  %2458 = vst [vmem:[%s1 + $0x230] sm:$0xff] %v2454
  %2459 = vst [vmem:[%s1 + $0x2b0] sm:$0xff] %v2455
  %v2460 = vld [vmem:[%s1 + $0x38] sm:$0xff]
  %v2461 = vld [vmem:[%s1 + $0xb8] sm:$0xff]
  %v2462 = vadd.f32 %v2460, %v2461
  %v2463 = vmax.f32 %v2460, %v2461
  %v2464 = vmin.f32 %v2460, %v2461
  %v2465 = vld [vmem:[%s1 + $0x138] sm:$0xff]
  %v2466 = vadd.f32 %v2462, %v2465
  %v2467 = vmax.f32 %v2463, %v2465
  %v2468 = vmin.f32 %v2464, %v2465
  %v2469 = vmul.f32 %v2466, 0.33333334
  %2470 = vst [vmem:[%s1 + $0x1b8] sm:$0xff] %v2469
  %2471 = vst [vmem:[%s1 + $0x238] sm:$0xff] %v2467
  %2472 = vst [vmem:[%s1 + $0x2b8] sm:$0xff] %v2468
  %v2473 = vld [vmem:[%s1 + $0x40] sm:$0xff]
  %v2474 = vld [vmem:[%s1 + $0xc0] sm:$0xff]
  %v2475 = vadd.f32 %v2473, %v2474
  %v2476 = vmax.f32 %v2473, %v2474
  %v2477 = vmin.f32 %v2473, %v2474
  %v2478 = vld [vmem:[%s1 + $0x140] sm:$0xff]
  %v2479 = vadd.f32 %v2475, %v2478
  %v2480 = vmax.f32 %v2476, %v2478
  %v2481 = vmin.f32 %v2477, %v2478
  %v2482 = vmul.f32 %v2479, 0.33333334
  %2483 = vst [vmem:[%s1 + $0x1c0] sm:$0xff] %v2482
  %2484 = vst [vmem:[%s1 + $0x240] sm:$0xff] %v2480
  %2485 = vst [vmem:[%s1 + $0x2c0] sm:$0xff] %v2481
  %v2486 = vld [vmem:[%s1 + $0x48] sm:$0xff]
  %v2487 = vld [vmem:[%s1 + $0xc8] sm:$0xff]
  %v2488 = vadd.f32 %v2486, %v2487
  %v2489 = vmax.f32 %v2486, %v2487
  %v2490 = vmin.f32 %v2486, %v2487
  %v2491 = vld [vmem:[%s1 + $0x148] sm:$0xff]
  %v2492 = vadd.f32 %v2488, %v2491
  %v2493 = vmax.f32 %v2489, %v2491
  %v2494 = vmin.f32 %v2490, %v2491
  %v2495 = vmul.f32 %v2492, 0.33333334
  %2496 = vst [vmem:[%s1 + $0x1c8] sm:$0xff] %v2495
  %2497 = vst [vmem:[%s1 + $0x248] sm:$0xff] %v2493
  %2498 = vst [vmem:[%s1 + $0x2c8] sm:$0xff] %v2494
  %v2499 = vld [vmem:[%s1 + $0x50] sm:$0xff]
  %v2500 = vld [vmem:[%s1 + $0xd0] sm:$0xff]
  %v2501 = vadd.f32 %v2499, %v2500
  %v2502 = vmax.f32 %v2499, %v2500
  %v2503 = vmin.f32 %v2499, %v2500
  %v2504 = vld [vmem:[%s1 + $0x150] sm:$0xff]
  %v2505 = vadd.f32 %v2501, %v2504
  %v2506 = vmax.f32 %v2502, %v2504
  %v2507 = vmin.f32 %v2503, %v2504
  %v2508 = vmul.f32 %v2505, 0.33333334
  %2509 = vst [vmem:[%s1 + $0x1d0] sm:$0xff] %v2508
  %2510 = vst [vmem:[%s1 + $0x250] sm:$0xff] %v2506
  %2511 = vst [vmem:[%s1 + $0x2d0] sm:$0xff] %v2507
  %v2512 = vld [vmem:[%s1 + $0x58] sm:$0xff]
  %v2513 = vld [vmem:[%s1 + $0xd8] sm:$0xff]
  %v2514 = vadd.f32 %v2512, %v2513
  %v2515 = vmax.f32 %v2512, %v2513
  %v2516 = vmin.f32 %v2512, %v2513
  %v2517 = vld [vmem:[%s1 + $0x158] sm:$0xff]
  %v2518 = vadd.f32 %v2514, %v2517
  %v2519 = vmax.f32 %v2515, %v2517
  %v2520 = vmin.f32 %v2516, %v2517
  %v2521 = vmul.f32 %v2518, 0.33333334
  %2522 = vst [vmem:[%s1 + $0x1d8] sm:$0xff] %v2521
  %2523 = vst [vmem:[%s1 + $0x258] sm:$0xff] %v2519
  %2524 = vst [vmem:[%s1 + $0x2d8] sm:$0xff] %v2520
  %v2525 = vld [vmem:[%s1 + $0x60] sm:$0xff]
  %v2526 = vld [vmem:[%s1 + $0xe0] sm:$0xff]
  %v2527 = vadd.f32 %v2525, %v2526
  %v2528 = vmax.f32 %v2525, %v2526
  %v2529 = vmin.f32 %v2525, %v2526
  %v2530 = vld [vmem:[%s1 + $0x160] sm:$0xff]
  %v2531 = vadd.f32 %v2527, %v2530
  %v2532 = vmax.f32 %v2528, %v2530
  %v2533 = vmin.f32 %v2529, %v2530
  %v2534 = vmul.f32 %v2531, 0.33333334
  %2535 = vst [vmem:[%s1 + $0x1e0] sm:$0xff] %v2534
  %2536 = vst [vmem:[%s1 + $0x260] sm:$0xff] %v2532
  %2537 = vst [vmem:[%s1 + $0x2e0] sm:$0xff] %v2533
  %v2538 = vld [vmem:[%s1 + $0x68] sm:$0xff]
  %v2539 = vld [vmem:[%s1 + $0xe8] sm:$0xff]
  %v2540 = vadd.f32 %v2538, %v2539
  %v2541 = vmax.f32 %v2538, %v2539
  %v2542 = vmin.f32 %v2538, %v2539
  %v2543 = vld [vmem:[%s1 + $0x168] sm:$0xff]
  %v2544 = vadd.f32 %v2540, %v2543
  %v2545 = vmax.f32 %v2541, %v2543
  %v2546 = vmin.f32 %v2542, %v2543
  %v2547 = vmul.f32 %v2544, 0.33333334
  %2548 = vst [vmem:[%s1 + $0x1e8] sm:$0xff] %v2547
  %2549 = vst [vmem:[%s1 + $0x268] sm:$0xff] %v2545
  %2550 = vst [vmem:[%s1 + $0x2e8] sm:$0xff] %v2546
  %v2551 = vld [vmem:[%s1 + $0x70] sm:$0xff]
  %v2552 = vld [vmem:[%s1 + $0xf0] sm:$0xff]
  %v2553 = vadd.f32 %v2551, %v2552
  %v2554 = vmax.f32 %v2551, %v2552
  %v2555 = vmin.f32 %v2551, %v2552
  %v2556 = vld [vmem:[%s1 + $0x170] sm:$0xff]
  %v2557 = vadd.f32 %v2553, %v2556
  %v2558 = vmax.f32 %v2554, %v2556
  %v2559 = vmin.f32 %v2555, %v2556
  %v2560 = vmul.f32 %v2557, 0.33333334
  %2561 = vst [vmem:[%s1 + $0x1f0] sm:$0xff] %v2560
  %2562 = vst [vmem:[%s1 + $0x270] sm:$0xff] %v2558
  %2563 = vst [vmem:[%s1 + $0x2f0] sm:$0xff] %v2559
  %v2564 = vld [vmem:[%s1 + $0x78] sm:$0xff]
  %v2565 = vld [vmem:[%s1 + $0xf8] sm:$0xff]
  %v2566 = vadd.f32 %v2564, %v2565
  %v2567 = vmax.f32 %v2564, %v2565
  %v2568 = vmin.f32 %v2564, %v2565
  %v2569 = vld [vmem:[%s1 + $0x178] sm:$0xff]
  %v2570 = vadd.f32 %v2566, %v2569
  %v2571 = vmax.f32 %v2567, %v2569
  %v2572 = vmin.f32 %v2568, %v2569
  %v2573 = vmul.f32 %v2570, 0.33333334
  %2574 = vst [vmem:[%s1 + $0x1f8] sm:$0xff] %v2573
  %2575 = vst [vmem:[%s1 + $0x278] sm:$0xff] %v2571
  %2576 = vst [vmem:[%s1 + $0x2f8] sm:$0xff] %v2572
  // Predicated region
  $region6: #{alphanet_forward.2} parent=0 // pred_check
    _
  $region7: #{alphanet_forward.2} parent=0 // pred_check_branch
    %2578 = sbr.rel (0) target = $region9
  $region8: #{alphanet_forward.2} parent=0 // pred_region
    _
  $region9: #{alphanet_forward.2} parent=0 // pred_fallthru
    _
  // Predicated region
  $region10: #{alphanet_forward.2} parent=0 // pred_check
    _
  $region11: #{alphanet_forward.2} parent=0 // pred_check_branch
    %2580 = sbr.rel (0) target = $region13
  $region12: #{alphanet_forward.2} parent=0 // pred_region
    _
  $region13: #{alphanet_forward.2} parent=0 // pred_fallthru
    _

</llo_original>
